<compile_context>
chip_gen: v5e
topology: v5e:2x2
jax: 0.10.0
libtpu: 0.0.40
codegen_flags: <defaults>
</compile_context>

<pallas_src>
import functools

import jax
import jax.numpy as jnp
from jax import lax
from jax.experimental import pallas as pl
from jax.experimental.pallas import tpu as pltpu

LANE = 128


def _round_up(n, m=LANE):
    return ((n + m - 1) // m) * m


def _nbytes(shape, dtype):
    n = 1
    for s in shape:
        n *= int(s)
    return n * jnp.dtype(dtype).itemsize


# ---------------------------------------------------------------------------
# Fused Pallas kernel: whole autoencoder forward pass
# ---------------------------------------------------------------------------

def _fused_ae_kernel(x_ref,                                   # (T, Bp, Hp)  bf16 padded input
                     enc_wih_ref, enc_whh_ref, enc_b_ref,     # (L,Hp,4Hp) bf16 x2, (L,1,4Hp) f32
                     dec_wih_ref, dec_whh_ref, dec_b_ref,     # (L,Hp,4Hp) bf16 x2, (L,1,4Hp) f32
                     fce_w_ref, fce_b_ref,                    # (Hp, Hp) bf16, (1, Hp) f32
                     fcd_w_ref, fcd_b_ref,                    # (Hp, Fp) bf16, (1, Fp) f32
                     out_ref,                                 # (T, Bp, Fp) f32
                     act_ref,                                 # scratch (T, Bp, Hp)  bf16
                     gin_ref,                                 # scratch (T, Bp, 4Hp) f32
                     *, n_layers, seq_len, hp, unroll):
    T, Hp = seq_len, hp
    Bp = x_ref.shape[1]
    f32 = jnp.float32

    def input_proj(src_ref, wih_bf16, b_f32):
        # Batched x-side gate projection for the whole sequence: one big MXU call.
        xs = src_ref[...].reshape(T * Bp, Hp)                               # bf16
        g = jnp.dot(xs, wih_bf16, preferred_element_type=f32) + b_f32       # (T*Bp, 4Hp) f32
        gin_ref[...] = g.reshape(T, Bp, 4 * Hp)

    def recurrence(whh_bf16, gin_const, write_to_act):
        """Serial time loop: only h @ W_hh^T + gate nonlinearities remain per step.

        Zero-padding invariant: padded gate pre-activations are exactly 0 and c starts at
        0 (i=f=o=0.5, g=0), so padded lanes of h/c stay exactly 0 throughout.
        """
        def step(t, carry):
            h, c = carry
            hh = jnp.dot(h.astype(jnp.bfloat16), whh_bf16,
                         preferred_element_type=f32)                         # (Bp, 4Hp)
            gates = (gin_const if gin_const is not None else gin_ref[t]) + hh
            # Gate slices are whole 128-lane tiles (lane-aligned), order i, f, g, o.
            i = jax.nn.sigmoid(gates[:, 0 * Hp:1 * Hp])
            f = jax.nn.sigmoid(gates[:, 1 * Hp:2 * Hp])
            g = jnp.tanh(gates[:, 2 * Hp:3 * Hp])
            o = jax.nn.sigmoid(gates[:, 3 * Hp:4 * Hp])
            c_new = f * c + i * g
            h_new = o * jnp.tanh(c_new)
            if write_to_act:
                act_ref[t] = h_new.astype(act_ref.dtype)
            return (h_new, c_new)

        init = (jnp.zeros((Bp, Hp), f32), jnp.zeros((Bp, Hp), f32))
        h_last, _ = lax.fori_loop(0, T, step, init, unroll=unroll)
        return h_last

    # ------------------------- encoder LSTM stack -------------------------
    h_last = None
    for l in range(n_layers):
        src = x_ref if l == 0 else act_ref
        input_proj(src, enc_wih_ref[l], enc_b_ref[l])
        top = (l == n_layers - 1)
        # Only the final hidden state of the top encoder layer is consumed.
        h_last = recurrence(enc_whh_ref[l], None, write_to_act=not top)

    # ------------------------- fc_enc (bottleneck) -------------------------
    # dropout_enc is identity in eval mode.
    encoded = (jnp.dot(h_last.astype(jnp.bfloat16), fce_w_ref[...],
                       preferred_element_type=f32) + fce_b_ref[...])         # (Bp, Hp)
    encoded_bf16 = encoded.astype(jnp.bfloat16)

    # ------------------------- decoder LSTM stack -------------------------
    for l in range(n_layers):
        if l == 0:
            # Repeated bottleneck input: its gate projection is constant over time --
            # compute it ONCE and reuse it every step (never materialize (T,B,E)).
            gin_const = (jnp.dot(encoded_bf16, dec_wih_ref[0],
                                 preferred_element_type=f32) + dec_b_ref[0])  # (Bp, 4Hp)
            recurrence(dec_whh_ref[0], gin_const, write_to_act=True)
        else:
            input_proj(act_ref, dec_wih_ref[l], dec_b_ref[l])
            recurrence(dec_whh_ref[l], None, write_to_act=True)

    # ------------------------- fc_dec on the whole slab -------------------------
    # dropout_dec is identity in eval mode. One well-shaped (T*Bp, Hp) x (Hp, Fp) matmul,
    # then a single lane-dense (T, Bp, Fp) store.
    hs = act_ref[...].reshape(T * Bp, Hp)
    rec = jnp.dot(hs, fcd_w_ref[...], preferred_element_type=f32) + fcd_b_ref[...]
    out_ref[...] = rec.reshape(T, Bp, out_ref.shape[2]).astype(out_ref.dtype)


# ---------------------------------------------------------------------------
# One-time weight preparation (PyTorch conventions -> transposed, lane-padded)
# ---------------------------------------------------------------------------

def _prep_lstm_layer(w_ih, w_hh, b_ih, b_hh, hp):
    """PyTorch (4H, Din)/(4H, H)/(4H,)/(4H,) -> W_ih^T (hp,4hp) bf16, W_hh^T (hp,4hp) bf16,
    bias (1,4hp) f32 (= b_ih + b_hh). Gate-major 128-lane column blocks, order i,f,g,o.
    All padding is zero so padded lanes of h/c stay exactly 0."""
    H = w_hh.shape[1]
    din = w_ih.shape[1]
    wih = jnp.zeros((hp, 4 * hp), jnp.float32)
    whh = jnp.zeros((hp, 4 * hp), jnp.float32)
    b = jnp.zeros((1, 4 * hp), jnp.float32)
    for k in range(4):
        wih = wih.at[:din, k * hp:k * hp + H].set(w_ih[k * H:(k + 1) * H, :].T)
        whh = whh.at[:H, k * hp:k * hp + H].set(w_hh[k * H:(k + 1) * H, :].T)
        b = b.at[0, k * hp:k * hp + H].set(
            b_ih[k * H:(k + 1) * H] + b_hh[k * H:(k + 1) * H])
    return wih.astype(jnp.bfloat16), whh.astype(jnp.bfloat16), b


def _pad_linear(w, b, rows, cols):
    """PyTorch Linear W (out, in), b (out,) -> padded W^T (rows, cols) bf16, b (1, cols) f32."""
    wt = jnp.zeros((rows, cols), jnp.float32).at[:w.shape[1], :w.shape[0]].set(w.T)
    bp = jnp.zeros((1, cols), jnp.float32).at[0, :b.shape[0]].set(b)
    return wt.astype(jnp.bfloat16), bp


def prepare_weights(params, *, n_layers, hidden_dim, embedding_dim, n_features):
    """Run ONCE; outputs are passed to the jitted forward (no per-call re-prep)."""
    Hp = _round_up(max(hidden_dim, embedding_dim, n_features))
    Fp = _round_up(n_features)
    enc = [_prep_lstm_layer(*params["enc"][l], Hp) for l in range(n_layers)]
    dec = [_prep_lstm_layer(*params["dec"][l], Hp) for l in range(n_layers)]
    prepped = dict(
        enc_wih=jnp.stack([p[0] for p in enc]),
        enc_whh=jnp.stack([p[1] for p in enc]),
        enc_b=jnp.stack([p[2] for p in enc]),
        dec_wih=jnp.stack([p[0] for p in dec]),
        dec_whh=jnp.stack([p[1] for p in dec]),
        dec_b=jnp.stack([p[2] for p in dec]),
    )
    prepped["fce_w"], prepped["fce_b"] = _pad_linear(
        params["fc_enc_w"], params["fc_enc_b"], Hp, Hp)
    prepped["fcd_w"], prepped["fcd_b"] = _pad_linear(
        params["fc_dec_w"], params["fc_dec_b"], Hp, Fp)
    return prepped


# ---------------------------------------------------------------------------
# Forward pass (mirrors LSTMAutoencoder.forward, inference/eval mode)
# ---------------------------------------------------------------------------

def lstm_autoencoder_forward(x_btf, prepped, *, n_layers, hidden_dim, embedding_dim,
                             n_features):
    B, T, F = x_btf.shape
    Hp = _round_up(max(hidden_dim, embedding_dim, n_features))   # shared padded lane width
    Fp = _round_up(F)                                            # lane-dense output width
    Bp = _round_up(B, 16)                                        # sublane-dense for bf16 slabs

    # input: batch_first -> time-major, batch/feature zero-padded, bf16 slab
    x_tbf = jnp.transpose(x_btf, (1, 0, 2))                                   # (T, B, F)
    x_pad = (jnp.zeros((T, Bp, Hp), jnp.bfloat16)
             .at[:, :B, :F].set(x_tbf.astype(jnp.bfloat16)))

    # explicit scoped-VMEM budget (defaults are 16/32 MiB; cap at 64 MiB for v7x)
    L = n_layers
    total = (_nbytes((T, Bp, Hp), jnp.bfloat16)                 # x
             + 2 * _nbytes((L, Hp, 4 * Hp), jnp.bfloat16) * 2   # enc/dec W_ih + W_hh
             + 2 * _nbytes((L, 1, 4 * Hp), jnp.float32)         # enc/dec biases
             + _nbytes((Hp, Hp), jnp.bfloat16) + _nbytes((Hp, Fp), jnp.bfloat16)
             + _nbytes((1, Hp), jnp.float32) + _nbytes((1, Fp), jnp.float32)
             + _nbytes((T, Bp, Fp), jnp.float32)                # out
             + _nbytes((T, Bp, Hp), jnp.bfloat16)               # act scratch
             + _nbytes((T, Bp, 4 * Hp), jnp.float32))           # gate-input scratch
    vmem_limit = int(min(max(2 * total, 32 << 20), 64 << 20))

    kernel = functools.partial(_fused_ae_kernel, n_layers=n_layers, seq_len=T, hp=Hp,
                               unroll=max(1, min(8, T)))

    out_pad = pl.pallas_call(
        kernel,
        out_shape=jax.ShapeDtypeStruct((T, Bp, Fp), jnp.float32),
        in_specs=[pl.BlockSpec(memory_space=pltpu.MemorySpace.VMEM)] * 11,
        out_specs=pl.BlockSpec(memory_space=pltpu.MemorySpace.VMEM),
        scratch_shapes=[pltpu.VMEM((T, Bp, Hp), jnp.bfloat16),       # inter-layer activations
                        pltpu.VMEM((T, Bp, 4 * Hp), jnp.float32)],   # precomputed x-projections
        compiler_params=pltpu.CompilerParams(vmem_limit_bytes=vmem_limit),
    )(x_pad,
      prepped["enc_wih"], prepped["enc_whh"], prepped["enc_b"],
      prepped["dec_wih"], prepped["dec_whh"], prepped["dec_b"],
      prepped["fce_w"], prepped["fce_b"], prepped["fcd_w"], prepped["fcd_b"])

    # strip batch/lane padding, back to batch_first
    return jnp.transpose(out_pad[:, :B, :F], (1, 0, 2))          # (B, T, F) f32


# ---------------------------------------------------------------------------
# Pure-JAX f32 reference (for tolerance check)
# ---------------------------------------------------------------------------

def _lstm_stack_ref(x_tbd, layers):
    T, B, _ = x_tbd.shape
    seq = x_tbd
    h = None
    for (w_ih, w_hh, b_ih, b_hh) in layers:
        H = w_hh.shape[1]
        h = jnp.zeros((B, H), jnp.float32)
        c = jnp.zeros((B, H), jnp.float32)
        outs = []
        for t in range(T):
            gates = seq[t] @ w_ih.T + b_ih + h @ w_hh.T + b_hh
            i, f, g, o = jnp.split(gates, 4, axis=-1)
            i, f, o = jax.nn.sigmoid(i), jax.nn.sigmoid(f), jax.nn.sigmoid(o)
            g = jnp.tanh(g)
            c = f * c + i * g
            h = o * jnp.tanh(c)
            outs.append(h)
        seq = jnp.stack(outs)
    return seq, h


def lstm_autoencoder_ref(x_btf, params):
    x = jnp.transpose(x_btf, (1, 0, 2)).astype(jnp.float32)      # (T, B, F)
    T = x.shape[0]
    _, h_enc = _lstm_stack_ref(x, params["enc"])
    encoded = h_enc @ params["fc_enc_w"].T + params["fc_enc_b"]
    dec_in = jnp.broadcast_to(encoded[None], (T,) + encoded.shape)
    out_dec, _ = _lstm_stack_ref(dec_in, params["dec"])
    rec = out_dec @ params["fc_dec_w"].T + params["fc_dec_b"]
    return jnp.transpose(rec, (1, 0, 2))


# ---------------------------------------------------------------------------
# Parameter construction (deterministic, PyTorch-shaped)
# ---------------------------------------------------------------------------

def init_params(key, n_features, embedding_dim, hidden_dim, n_layers):
    def uniform(k, shape, bound):
        return jax.random.uniform(k, shape, jnp.float32, -bound, bound)

    params = {"enc": [], "dec": []}
    H = hidden_dim
    bound = 1.0 / float(jnp.sqrt(H))

    for l in range(n_layers):                       # encoder stack
        din = n_features if l == 0 else H
        key, k1, k2, k3, k4 = jax.random.split(key, 5)
        params["enc"].append((uniform(k1, (4 * H, din), bound),
                              uniform(k2, (4 * H, H), bound),
                              uniform(k3, (4 * H,), bound),
                              uniform(k4, (4 * H,), bound)))

    for l in range(n_layers):                       # decoder stack
        din = embedding_dim if l == 0 else H
        key, k1, k2, k3, k4 = jax.random.split(key, 5)
        params["dec"].append((uniform(k1, (4 * H, din), bound),
                              uniform(k2, (4 * H, H), bound),
                              uniform(k3, (4 * H,), bound),
                              uniform(k4, (4 * H,), bound)))

    key, k1, k2, k3, k4 = jax.random.split(key, 5)
    b_fc = 1.0 / float(jnp.sqrt(H))
    params["fc_enc_w"] = uniform(k1, (embedding_dim, H), b_fc)
    params["fc_enc_b"] = uniform(k2, (embedding_dim,), b_fc)
    params["fc_dec_w"] = uniform(k3, (n_features, H), b_fc)
    params["fc_dec_b"] = uniform(k4, (n_features,), b_fc)
    return params


# ---------------------------------------------------------------------------
# Main
# ---------------------------------------------------------------------------

if __name__ == "__main__":
    batch, seq_len = 2, 8
    n_features, embedding_dim, hidden_dim, n_layers = 4, 16, 32, 2

    key = jax.random.PRNGKey(0)
    key, kx, kp = jax.random.split(key, 3)
    x = jax.random.normal(kx, (batch, seq_len, n_features), jnp.float32)
    params = init_params(kp, n_features, embedding_dim, hidden_dim, n_layers)

    # One-time weight prep (hoisted out of the per-call forward).
    prepped = prepare_weights(params, n_layers=n_layers, hidden_dim=hidden_dim,
                              embedding_dim=embedding_dim, n_features=n_features)

    fwd = jax.jit(functools.partial(
        lstm_autoencoder_forward,
        n_layers=n_layers, hidden_dim=hidden_dim,
        embedding_dim=embedding_dim, n_features=n_features))

    out = jax.block_until_ready(fwd(x, prepped))

    assert out.shape == (batch, seq_len, n_features), out.shape
    assert out.dtype == jnp.float32

    # Tolerance check vs pure-JAX f32 reference (kernel uses bf16 MXU operands).
    ref = jax.block_until_ready(lstm_autoencoder_ref(x, params))
    assert bool(jnp.allclose(out, ref, atol=5e-2, rtol=5e-2)), (
        float(jnp.max(jnp.abs(out - ref))))

    print("KERNEL_OK")
</pallas_src>

<mosaic_0001>
module attributes {stable_mosaic.version = 11 : i64} {
  func.func @_fused_ae_kernel(%arg0: memref<8x16x128xbf16, #tpu.memory_space<vmem>>, %arg1: memref<2x128x512xbf16, #tpu.memory_space<vmem>>, %arg2: memref<2x128x512xbf16, #tpu.memory_space<vmem>>, %arg3: memref<2x1x512xf32, #tpu.memory_space<vmem>>, %arg4: memref<2x128x512xbf16, #tpu.memory_space<vmem>>, %arg5: memref<2x128x512xbf16, #tpu.memory_space<vmem>>, %arg6: memref<2x1x512xf32, #tpu.memory_space<vmem>>, %arg7: memref<128x128xbf16, #tpu.memory_space<vmem>>, %arg8: memref<1x128xf32, #tpu.memory_space<vmem>>, %arg9: memref<128x128xbf16, #tpu.memory_space<vmem>>, %arg10: memref<1x128xf32, #tpu.memory_space<vmem>>, %arg11: memref<8x16x128xf32, #tpu.memory_space<vmem>>, %arg12: memref<8x16x128xbf16, #tpu.memory_space<vmem>>, %arg13: memref<8x16x512xf32, #tpu.memory_space<vmem>>) attributes {dimension_semantics = [], scalar_prefetch = 0 : i64, scratch_operands = 2 : i64, tpu.core_type = #tpu.core_type<tc>} {
    %c0 = arith.constant 0 : index
    %c0_0 = arith.constant 0 : index
    %c0_1 = arith.constant 0 : index
    %0 = vector.load %arg1[%c0, %c0_0, %c0_1] : memref<2x128x512xbf16, #tpu.memory_space<vmem>>, vector<1x128x512xbf16>
    %1 = vector.shape_cast %0 : vector<1x128x512xbf16> to vector<128x512xbf16>
    %c0_2 = arith.constant 0 : index
    %c0_3 = arith.constant 0 : index
    %c0_4 = arith.constant 0 : index
    %2 = vector.load %arg3[%c0_2, %c0_3, %c0_4] : memref<2x1x512xf32, #tpu.memory_space<vmem>>, vector<1x1x512xf32>
    %3 = vector.shape_cast %2 : vector<1x1x512xf32> to vector<1x512xf32>
    %c0_5 = arith.constant 0 : index
    %c0_6 = arith.constant 0 : index
    %c0_7 = arith.constant 0 : index
    %4 = vector.load %arg0[%c0_5, %c0_6, %c0_7] : memref<8x16x128xbf16, #tpu.memory_space<vmem>>, vector<8x16x128xbf16>
    %5 = vector.shape_cast %4 : vector<8x16x128xbf16> to vector<128x128xbf16>
    %cst = arith.constant dense<0.000000e+00> : vector<128x512xf32>
    %6 = tpu.matmul %5, %1, %cst {dimension_numbers = #tpu.dot_dimension_numbers<[1], [0], [0], [1], [0, 0, 1, 1], [], []>} : vector<128x128xbf16>, vector<128x512xbf16>, vector<128x512xf32> -> vector<128x512xf32>
    %7 = vector.broadcast %3 : vector<1x512xf32> to vector<128x512xf32>
    %8 = arith.addf %6, %7 : vector<128x512xf32>
    %9 = vector.shape_cast %8 : vector<128x512xf32> to vector<8x16x512xf32>
    %c0_8 = arith.constant 0 : index
    %c0_9 = arith.constant 0 : index
    %c0_10 = arith.constant 0 : index
    %10 = vector.load %arg13[%c0_8, %c0_9, %c0_10] : memref<8x16x512xf32, #tpu.memory_space<vmem>>, vector<8x16x512xf32>
    tpu.vector_store %arg13[%c0_8, %c0_9, %c0_10], %9 {strides = array<i32>} : memref<8x16x512xf32, #tpu.memory_space<vmem>>, vector<8x16x512xf32>,
    %c0_11 = arith.constant 0 : index
    %c0_12 = arith.constant 0 : index
    %c0_13 = arith.constant 0 : index
    %11 = vector.load %arg2[%c0_11, %c0_12, %c0_13] : memref<2x128x512xbf16, #tpu.memory_space<vmem>>, vector<1x128x512xbf16>
    %12 = vector.shape_cast %11 : vector<1x128x512xbf16> to vector<128x512xbf16>
    %cst_14 = arith.constant 0.000000e+00 : f32
    %13 = vector.broadcast %cst_14 : f32 to vector<16x128xf32>
    %cst_15 = arith.constant 0.000000e+00 : f32
    %14 = vector.broadcast %cst_15 : f32 to vector<16x128xf32>
    %c0_i32 = arith.constant 0 : i32
    %15 = arith.truncf %13 : vector<16x128xf32> to vector<16x128xbf16>
    %cst_16 = arith.constant dense<0.000000e+00> : vector<16x512xf32>
    %16 = tpu.matmul %15, %12, %cst_16 {dimension_numbers = #tpu.dot_dimension_numbers<[1], [0], [0], [1], [0, 0, 1, 1], [], []>} : vector<16x128xbf16>, vector<128x512xbf16>, vector<16x512xf32> -> vector<16x512xf32>
    %17 = arith.index_cast %c0_i32 : i32 to index
    %c0_17 = arith.constant 0 : index
    %c0_18 = arith.constant 0 : index
    %18 = vector.load %arg13[%17, %c0_17, %c0_18] : memref<8x16x512xf32, #tpu.memory_space<vmem>>, vector<1x16x512xf32>
    %19 = vector.shape_cast %18 : vector<1x16x512xf32> to vector<16x512xf32>
    %20 = arith.addf %19, %16 : vector<16x512xf32>
    %21 = vector.extract_strided_slice %20 {offsets = [0, 0], sizes = [16, 128], strides = [1, 1]} : vector<16x512xf32> to vector<16x128xf32>
    %22 = arith.negf %21 : vector<16x128xf32>
    %23 = math.exp %22 : vector<16x128xf32>
    %cst_19 = arith.constant 1.000000e+00 : f32
    %24 = vector.broadcast %cst_19 : f32 to vector<16x128xf32>
    %25 = arith.addf %24, %23 : vector<16x128xf32>
    %26 = arith.divf %24, %25 : vector<16x128xf32>
    %27 = vector.extract_strided_slice %20 {offsets = [0, 128], sizes = [16, 128], strides = [1, 1]} : vector<16x512xf32> to vector<16x128xf32>
    %28 = arith.negf %27 : vector<16x128xf32>
    %29 = math.exp %28 : vector<16x128xf32>
    %cst_20 = arith.constant 1.000000e+00 : f32
    %30 = vector.broadcast %cst_20 : f32 to vector<16x128xf32>
    %31 = arith.addf %30, %29 : vector<16x128xf32>
    %32 = arith.divf %30, %31 : vector<16x128xf32>
    %33 = vector.extract_strided_slice %20 {offsets = [0, 256], sizes = [16, 128], strides = [1, 1]} : vector<16x512xf32> to vector<16x128xf32>
    %34 = math.tanh %33 : vector<16x128xf32>
    %35 = vector.extract_strided_slice %20 {offsets = [0, 384], sizes = [16, 128], strides = [1, 1]} : vector<16x512xf32> to vector<16x128xf32>
    %36 = arith.negf %35 : vector<16x128xf32>
    %37 = math.exp %36 : vector<16x128xf32>
    %cst_21 = arith.constant 1.000000e+00 : f32
    %38 = vector.broadcast %cst_21 : f32 to vector<16x128xf32>
    %39 = arith.addf %38, %37 : vector<16x128xf32>
    %40 = arith.divf %38, %39 : vector<16x128xf32>
    %41 = arith.mulf %32, %14 : vector<16x128xf32>
    %42 = arith.mulf %26, %34 : vector<16x128xf32>
    %43 = arith.addf %41, %42 : vector<16x128xf32>
    %44 = math.tanh %43 : vector<16x128xf32>
    %45 = arith.mulf %40, %44 : vector<16x128xf32>
    %46 = arith.truncf %45 : vector<16x128xf32> to vector<16x128xbf16>
    %47 = arith.index_cast %c0_i32 : i32 to index
    %c0_22 = arith.constant 0 : index
    %c0_23 = arith.constant 0 : index
    %48 = vector.load %arg12[%47, %c0_22, %c0_23] : memref<8x16x128xbf16, #tpu.memory_space<vmem>>, vector<1x16x128xbf16>
    %49 = vector.shape_cast %48 : vector<1x16x128xbf16> to vector<16x128xbf16>
    %50 = vector.shape_cast %46 : vector<16x128xbf16> to vector<1x16x128xbf16>
    tpu.vector_store %arg12[%47, %c0_22, %c0_23], %50 {strides = array<i32>} : memref<8x16x128xbf16, #tpu.memory_space<vmem>>, vector<1x16x128xbf16>,
    %c1_i32 = arith.constant 1 : i32
    %51 = arith.truncf %45 : vector<16x128xf32> to vector<16x128xbf16>
    %cst_24 = arith.constant dense<0.000000e+00> : vector<16x512xf32>
    %52 = tpu.matmul %51, %12, %cst_24 {dimension_numbers = #tpu.dot_dimension_numbers<[1], [0], [0], [1], [0, 0, 1, 1], [], []>} : vector<16x128xbf16>, vector<128x512xbf16>, vector<16x512xf32> -> vector<16x512xf32>
    %53 = arith.index_cast %c1_i32 : i32 to index
    %c0_25 = arith.constant 0 : index
    %c0_26 = arith.constant 0 : index
    %54 = vector.load %arg13[%53, %c0_25, %c0_26] : memref<8x16x512xf32, #tpu.memory_space<vmem>>, vector<1x16x512xf32>
    %55 = vector.shape_cast %54 : vector<1x16x512xf32> to vector<16x512xf32>
    %56 = arith.addf %55, %52 : vector<16x512xf32>
    %57 = vector.extract_strided_slice %56 {offsets = [0, 0], sizes = [16, 128], strides = [1, 1]} : vector<16x512xf32> to vector<16x128xf32>
    %58 = arith.negf %57 : vector<16x128xf32>
    %59 = math.exp %58 : vector<16x128xf32>
    %cst_27 = arith.constant 1.000000e+00 : f32
    %60 = vector.broadcast %cst_27 : f32 to vector<16x128xf32>
    %61 = arith.addf %60, %59 : vector<16x128xf32>
    %62 = arith.divf %60, %61 : vector<16x128xf32>
    %63 = vector.extract_strided_slice %56 {offsets = [0, 128], sizes = [16, 128], strides = [1, 1]} : vector<16x512xf32> to vector<16x128xf32>
    %64 = arith.negf %63 : vector<16x128xf32>
    %65 = math.exp %64 : vector<16x128xf32>
    %cst_28 = arith.constant 1.000000e+00 : f32
    %66 = vector.broadcast %cst_28 : f32 to vector<16x128xf32>
    %67 = arith.addf %66, %65 : vector<16x128xf32>
    %68 = arith.divf %66, %67 : vector<16x128xf32>
    %69 = vector.extract_strided_slice %56 {offsets = [0, 256], sizes = [16, 128], strides = [1, 1]} : vector<16x512xf32> to vector<16x128xf32>
    %70 = math.tanh %69 : vector<16x128xf32>
    %71 = vector.extract_strided_slice %56 {offsets = [0, 384], sizes = [16, 128], strides = [1, 1]} : vector<16x512xf32> to vector<16x128xf32>
    %72 = arith.negf %71 : vector<16x128xf32>
    %73 = math.exp %72 : vector<16x128xf32>
    %cst_29 = arith.constant 1.000000e+00 : f32
    %74 = vector.broadcast %cst_29 : f32 to vector<16x128xf32>
    %75 = arith.addf %74, %73 : vector<16x128xf32>
    %76 = arith.divf %74, %75 : vector<16x128xf32>
    %77 = arith.mulf %68, %43 : vector<16x128xf32>
    %78 = arith.mulf %62, %70 : vector<16x128xf32>
    %79 = arith.addf %77, %78 : vector<16x128xf32>
    %80 = math.tanh %79 : vector<16x128xf32>
    %81 = arith.mulf %76, %80 : vector<16x128xf32>
    %82 = arith.truncf %81 : vector<16x128xf32> to vector<16x128xbf16>
    %83 = arith.index_cast %c1_i32 : i32 to index
    %c0_30 = arith.constant 0 : index
    %c0_31 = arith.constant 0 : index
    %84 = vector.load %arg12[%83, %c0_30, %c0_31] : memref<8x16x128xbf16, #tpu.memory_space<vmem>>, vector<1x16x128xbf16>
    %85 = vector.shape_cast %84 : vector<1x16x128xbf16> to vector<16x128xbf16>
    %86 = vector.shape_cast %82 : vector<16x128xbf16> to vector<1x16x128xbf16>
    tpu.vector_store %arg12[%83, %c0_30, %c0_31], %86 {strides = array<i32>} : memref<8x16x128xbf16, #tpu.memory_space<vmem>>, vector<1x16x128xbf16>,
    %c2_i32 = arith.constant 2 : i32
    %87 = arith.truncf %81 : vector<16x128xf32> to vector<16x128xbf16>
    %cst_32 = arith.constant dense<0.000000e+00> : vector<16x512xf32>
    %88 = tpu.matmul %87, %12, %cst_32 {dimension_numbers = #tpu.dot_dimension_numbers<[1], [0], [0], [1], [0, 0, 1, 1], [], []>} : vector<16x128xbf16>, vector<128x512xbf16>, vector<16x512xf32> -> vector<16x512xf32>
    %89 = arith.index_cast %c2_i32 : i32 to index
    %c0_33 = arith.constant 0 : index
    %c0_34 = arith.constant 0 : index
    %90 = vector.load %arg13[%89, %c0_33, %c0_34] : memref<8x16x512xf32, #tpu.memory_space<vmem>>, vector<1x16x512xf32>
    %91 = vector.shape_cast %90 : vector<1x16x512xf32> to vector<16x512xf32>
    %92 = arith.addf %91, %88 : vector<16x512xf32>
    %93 = vector.extract_strided_slice %92 {offsets = [0, 0], sizes = [16, 128], strides = [1, 1]} : vector<16x512xf32> to vector<16x128xf32>
    %94 = arith.negf %93 : vector<16x128xf32>
    %95 = math.exp %94 : vector<16x128xf32>
    %cst_35 = arith.constant 1.000000e+00 : f32
    %96 = vector.broadcast %cst_35 : f32 to vector<16x128xf32>
    %97 = arith.addf %96, %95 : vector<16x128xf32>
    %98 = arith.divf %96, %97 : vector<16x128xf32>
    %99 = vector.extract_strided_slice %92 {offsets = [0, 128], sizes = [16, 128], strides = [1, 1]} : vector<16x512xf32> to vector<16x128xf32>
    %100 = arith.negf %99 : vector<16x128xf32>
    %101 = math.exp %100 : vector<16x128xf32>
    %cst_36 = arith.constant 1.000000e+00 : f32
    %102 = vector.broadcast %cst_36 : f32 to vector<16x128xf32>
    %103 = arith.addf %102, %101 : vector<16x128xf32>
    %104 = arith.divf %102, %103 : vector<16x128xf32>
    %105 = vector.extract_strided_slice %92 {offsets = [0, 256], sizes = [16, 128], strides = [1, 1]} : vector<16x512xf32> to vector<16x128xf32>
    %106 = math.tanh %105 : vector<16x128xf32>
    %107 = vector.extract_strided_slice %92 {offsets = [0, 384], sizes = [16, 128], strides = [1, 1]} : vector<16x512xf32> to vector<16x128xf32>
    %108 = arith.negf %107 : vector<16x128xf32>
    %109 = math.exp %108 : vector<16x128xf32>
    %cst_37 = arith.constant 1.000000e+00 : f32
    %110 = vector.broadcast %cst_37 : f32 to vector<16x128xf32>
    %111 = arith.addf %110, %109 : vector<16x128xf32>
    %112 = arith.divf %110, %111 : vector<16x128xf32>
    %113 = arith.mulf %104, %79 : vector<16x128xf32>
    %114 = arith.mulf %98, %106 : vector<16x128xf32>
    %115 = arith.addf %113, %114 : vector<16x128xf32>
    %116 = math.tanh %115 : vector<16x128xf32>
    %117 = arith.mulf %112, %116 : vector<16x128xf32>
    %118 = arith.truncf %117 : vector<16x128xf32> to vector<16x128xbf16>
    %119 = arith.index_cast %c2_i32 : i32 to index
    %c0_38 = arith.constant 0 : index
    %c0_39 = arith.constant 0 : index
    %120 = vector.load %arg12[%119, %c0_38, %c0_39] : memref<8x16x128xbf16, #tpu.memory_space<vmem>>, vector<1x16x128xbf16>
    %121 = vector.shape_cast %120 : vector<1x16x128xbf16> to vector<16x128xbf16>
    %122 = vector.shape_cast %118 : vector<16x128xbf16> to vector<1x16x128xbf16>
    tpu.vector_store %arg12[%119, %c0_38, %c0_39], %122 {strides = array<i32>} : memref<8x16x128xbf16, #tpu.memory_space<vmem>>, vector<1x16x128xbf16>,
    %c3_i32 = arith.constant 3 : i32
    %123 = arith.truncf %117 : vector<16x128xf32> to vector<16x128xbf16>
    %cst_40 = arith.constant dense<0.000000e+00> : vector<16x512xf32>
    %124 = tpu.matmul %123, %12, %cst_40 {dimension_numbers = #tpu.dot_dimension_numbers<[1], [0], [0], [1], [0, 0, 1, 1], [], []>} : vector<16x128xbf16>, vector<128x512xbf16>, vector<16x512xf32> -> vector<16x512xf32>
    %125 = arith.index_cast %c3_i32 : i32 to index
    %c0_41 = arith.constant 0 : index
    %c0_42 = arith.constant 0 : index
    %126 = vector.load %arg13[%125, %c0_41, %c0_42] : memref<8x16x512xf32, #tpu.memory_space<vmem>>, vector<1x16x512xf32>
    %127 = vector.shape_cast %126 : vector<1x16x512xf32> to vector<16x512xf32>
    %128 = arith.addf %127, %124 : vector<16x512xf32>
    %129 = vector.extract_strided_slice %128 {offsets = [0, 0], sizes = [16, 128], strides = [1, 1]} : vector<16x512xf32> to vector<16x128xf32>
    %130 = arith.negf %129 : vector<16x128xf32>
    %131 = math.exp %130 : vector<16x128xf32>
    %cst_43 = arith.constant 1.000000e+00 : f32
    %132 = vector.broadcast %cst_43 : f32 to vector<16x128xf32>
    %133 = arith.addf %132, %131 : vector<16x128xf32>
    %134 = arith.divf %132, %133 : vector<16x128xf32>
    %135 = vector.extract_strided_slice %128 {offsets = [0, 128], sizes = [16, 128], strides = [1, 1]} : vector<16x512xf32> to vector<16x128xf32>
    %136 = arith.negf %135 : vector<16x128xf32>
    %137 = math.exp %136 : vector<16x128xf32>
    %cst_44 = arith.constant 1.000000e+00 : f32
    %138 = vector.broadcast %cst_44 : f32 to vector<16x128xf32>
    %139 = arith.addf %138, %137 : vector<16x128xf32>
    %140 = arith.divf %138, %139 : vector<16x128xf32>
    %141 = vector.extract_strided_slice %128 {offsets = [0, 256], sizes = [16, 128], strides = [1, 1]} : vector<16x512xf32> to vector<16x128xf32>
    %142 = math.tanh %141 : vector<16x128xf32>
    %143 = vector.extract_strided_slice %128 {offsets = [0, 384], sizes = [16, 128], strides = [1, 1]} : vector<16x512xf32> to vector<16x128xf32>
    %144 = arith.negf %143 : vector<16x128xf32>
    %145 = math.exp %144 : vector<16x128xf32>
    %cst_45 = arith.constant 1.000000e+00 : f32
    %146 = vector.broadcast %cst_45 : f32 to vector<16x128xf32>
    %147 = arith.addf %146, %145 : vector<16x128xf32>
    %148 = arith.divf %146, %147 : vector<16x128xf32>
    %149 = arith.mulf %140, %115 : vector<16x128xf32>
    %150 = arith.mulf %134, %142 : vector<16x128xf32>
    %151 = arith.addf %149, %150 : vector<16x128xf32>
    %152 = math.tanh %151 : vector<16x128xf32>
    %153 = arith.mulf %148, %152 : vector<16x128xf32>
    %154 = arith.truncf %153 : vector<16x128xf32> to vector<16x128xbf16>
    %155 = arith.index_cast %c3_i32 : i32 to index
    %c0_46 = arith.constant 0 : index
    %c0_47 = arith.constant 0 : index
    %156 = vector.load %arg12[%155, %c0_46, %c0_47] : memref<8x16x128xbf16, #tpu.memory_space<vmem>>, vector<1x16x128xbf16>
    %157 = vector.shape_cast %156 : vector<1x16x128xbf16> to vector<16x128xbf16>
    %158 = vector.shape_cast %154 : vector<16x128xbf16> to vector<1x16x128xbf16>
    tpu.vector_store %arg12[%155, %c0_46, %c0_47], %158 {strides = array<i32>} : memref<8x16x128xbf16, #tpu.memory_space<vmem>>, vector<1x16x128xbf16>,
    %c4_i32 = arith.constant 4 : i32
    %159 = arith.truncf %153 : vector<16x128xf32> to vector<16x128xbf16>
    %cst_48 = arith.constant dense<0.000000e+00> : vector<16x512xf32>
    %160 = tpu.matmul %159, %12, %cst_48 {dimension_numbers = #tpu.dot_dimension_numbers<[1], [0], [0], [1], [0, 0, 1, 1], [], []>} : vector<16x128xbf16>, vector<128x512xbf16>, vector<16x512xf32> -> vector<16x512xf32>
    %161 = arith.index_cast %c4_i32 : i32 to index
    %c0_49 = arith.constant 0 : index
    %c0_50 = arith.constant 0 : index
    %162 = vector.load %arg13[%161, %c0_49, %c0_50] : memref<8x16x512xf32, #tpu.memory_space<vmem>>, vector<1x16x512xf32>
    %163 = vector.shape_cast %162 : vector<1x16x512xf32> to vector<16x512xf32>
    %164 = arith.addf %163, %160 : vector<16x512xf32>
    %165 = vector.extract_strided_slice %164 {offsets = [0, 0], sizes = [16, 128], strides = [1, 1]} : vector<16x512xf32> to vector<16x128xf32>
    %166 = arith.negf %165 : vector<16x128xf32>
    %167 = math.exp %166 : vector<16x128xf32>
    %cst_51 = arith.constant 1.000000e+00 : f32
    %168 = vector.broadcast %cst_51 : f32 to vector<16x128xf32>
    %169 = arith.addf %168, %167 : vector<16x128xf32>
    %170 = arith.divf %168, %169 : vector<16x128xf32>
    %171 = vector.extract_strided_slice %164 {offsets = [0, 128], sizes = [16, 128], strides = [1, 1]} : vector<16x512xf32> to vector<16x128xf32>
    %172 = arith.negf %171 : vector<16x128xf32>
    %173 = math.exp %172 : vector<16x128xf32>
    %cst_52 = arith.constant 1.000000e+00 : f32
    %174 = vector.broadcast %cst_52 : f32 to vector<16x128xf32>
    %175 = arith.addf %174, %173 : vector<16x128xf32>
    %176 = arith.divf %174, %175 : vector<16x128xf32>
    %177 = vector.extract_strided_slice %164 {offsets = [0, 256], sizes = [16, 128], strides = [1, 1]} : vector<16x512xf32> to vector<16x128xf32>
    %178 = math.tanh %177 : vector<16x128xf32>
    %179 = vector.extract_strided_slice %164 {offsets = [0, 384], sizes = [16, 128], strides = [1, 1]} : vector<16x512xf32> to vector<16x128xf32>
    %180 = arith.negf %179 : vector<16x128xf32>
    %181 = math.exp %180 : vector<16x128xf32>
    %cst_53 = arith.constant 1.000000e+00 : f32
    %182 = vector.broadcast %cst_53 : f32 to vector<16x128xf32>
    %183 = arith.addf %182, %181 : vector<16x128xf32>
    %184 = arith.divf %182, %183 : vector<16x128xf32>
    %185 = arith.mulf %176, %151 : vector<16x128xf32>
    %186 = arith.mulf %170, %178 : vector<16x128xf32>
    %187 = arith.addf %185, %186 : vector<16x128xf32>
    %188 = math.tanh %187 : vector<16x128xf32>
    %189 = arith.mulf %184, %188 : vector<16x128xf32>
    %190 = arith.truncf %189 : vector<16x128xf32> to vector<16x128xbf16>
    %191 = arith.index_cast %c4_i32 : i32 to index
    %c0_54 = arith.constant 0 : index
    %c0_55 = arith.constant 0 : index
    %192 = vector.load %arg12[%191, %c0_54, %c0_55] : memref<8x16x128xbf16, #tpu.memory_space<vmem>>, vector<1x16x128xbf16>
    %193 = vector.shape_cast %192 : vector<1x16x128xbf16> to vector<16x128xbf16>
    %194 = vector.shape_cast %190 : vector<16x128xbf16> to vector<1x16x128xbf16>
    tpu.vector_store %arg12[%191, %c0_54, %c0_55], %194 {strides = array<i32>} : memref<8x16x128xbf16, #tpu.memory_space<vmem>>, vector<1x16x128xbf16>,
    %c5_i32 = arith.constant 5 : i32
    %195 = arith.truncf %189 : vector<16x128xf32> to vector<16x128xbf16>
    %cst_56 = arith.constant dense<0.000000e+00> : vector<16x512xf32>
    %196 = tpu.matmul %195, %12, %cst_56 {dimension_numbers = #tpu.dot_dimension_numbers<[1], [0], [0], [1], [0, 0, 1, 1], [], []>} : vector<16x128xbf16>, vector<128x512xbf16>, vector<16x512xf32> -> vector<16x512xf32>
    %197 = arith.index_cast %c5_i32 : i32 to index
    %c0_57 = arith.constant 0 : index
    %c0_58 = arith.constant 0 : index
    %198 = vector.load %arg13[%197, %c0_57, %c0_58] : memref<8x16x512xf32, #tpu.memory_space<vmem>>, vector<1x16x512xf32>
    %199 = vector.shape_cast %198 : vector<1x16x512xf32> to vector<16x512xf32>
    %200 = arith.addf %199, %196 : vector<16x512xf32>
    %201 = vector.extract_strided_slice %200 {offsets = [0, 0], sizes = [16, 128], strides = [1, 1]} : vector<16x512xf32> to vector<16x128xf32>
    %202 = arith.negf %201 : vector<16x128xf32>
    %203 = math.exp %202 : vector<16x128xf32>
    %cst_59 = arith.constant 1.000000e+00 : f32
    %204 = vector.broadcast %cst_59 : f32 to vector<16x128xf32>
    %205 = arith.addf %204, %203 : vector<16x128xf32>
    %206 = arith.divf %204, %205 : vector<16x128xf32>
    %207 = vector.extract_strided_slice %200 {offsets = [0, 128], sizes = [16, 128], strides = [1, 1]} : vector<16x512xf32> to vector<16x128xf32>
    %208 = arith.negf %207 : vector<16x128xf32>
    %209 = math.exp %208 : vector<16x128xf32>
    %cst_60 = arith.constant 1.000000e+00 : f32
    %210 = vector.broadcast %cst_60 : f32 to vector<16x128xf32>
    %211 = arith.addf %210, %209 : vector<16x128xf32>
    %212 = arith.divf %210, %211 : vector<16x128xf32>
    %213 = vector.extract_strided_slice %200 {offsets = [0, 256], sizes = [16, 128], strides = [1, 1]} : vector<16x512xf32> to vector<16x128xf32>
    %214 = math.tanh %213 : vector<16x128xf32>
    %215 = vector.extract_strided_slice %200 {offsets = [0, 384], sizes = [16, 128], strides = [1, 1]} : vector<16x512xf32> to vector<16x128xf32>
    %216 = arith.negf %215 : vector<16x128xf32>
    %217 = math.exp %216 : vector<16x128xf32>
    %cst_61 = arith.constant 1.000000e+00 : f32
    %218 = vector.broadcast %cst_61 : f32 to vector<16x128xf32>
    %219 = arith.addf %218, %217 : vector<16x128xf32>
    %220 = arith.divf %218, %219 : vector<16x128xf32>
    %221 = arith.mulf %212, %187 : vector<16x128xf32>
    %222 = arith.mulf %206, %214 : vector<16x128xf32>
    %223 = arith.addf %221, %222 : vector<16x128xf32>
    %224 = math.tanh %223 : vector<16x128xf32>
    %225 = arith.mulf %220, %224 : vector<16x128xf32>
    %226 = arith.truncf %225 : vector<16x128xf32> to vector<16x128xbf16>
    %227 = arith.index_cast %c5_i32 : i32 to index
    %c0_62 = arith.constant 0 : index
    %c0_63 = arith.constant 0 : index
    %228 = vector.load %arg12[%227, %c0_62, %c0_63] : memref<8x16x128xbf16, #tpu.memory_space<vmem>>, vector<1x16x128xbf16>
    %229 = vector.shape_cast %228 : vector<1x16x128xbf16> to vector<16x128xbf16>
    %230 = vector.shape_cast %226 : vector<16x128xbf16> to vector<1x16x128xbf16>
    tpu.vector_store %arg12[%227, %c0_62, %c0_63], %230 {strides = array<i32>} : memref<8x16x128xbf16, #tpu.memory_space<vmem>>, vector<1x16x128xbf16>,
    %c6_i32 = arith.constant 6 : i32
    %231 = arith.truncf %225 : vector<16x128xf32> to vector<16x128xbf16>
    %cst_64 = arith.constant dense<0.000000e+00> : vector<16x512xf32>
    %232 = tpu.matmul %231, %12, %cst_64 {dimension_numbers = #tpu.dot_dimension_numbers<[1], [0], [0], [1], [0, 0, 1, 1], [], []>} : vector<16x128xbf16>, vector<128x512xbf16>, vector<16x512xf32> -> vector<16x512xf32>
    %233 = arith.index_cast %c6_i32 : i32 to index
    %c0_65 = arith.constant 0 : index
    %c0_66 = arith.constant 0 : index
    %234 = vector.load %arg13[%233, %c0_65, %c0_66] : memref<8x16x512xf32, #tpu.memory_space<vmem>>, vector<1x16x512xf32>
    %235 = vector.shape_cast %234 : vector<1x16x512xf32> to vector<16x512xf32>
    %236 = arith.addf %235, %232 : vector<16x512xf32>
    %237 = vector.extract_strided_slice %236 {offsets = [0, 0], sizes = [16, 128], strides = [1, 1]} : vector<16x512xf32> to vector<16x128xf32>
    %238 = arith.negf %237 : vector<16x128xf32>
    %239 = math.exp %238 : vector<16x128xf32>
    %cst_67 = arith.constant 1.000000e+00 : f32
    %240 = vector.broadcast %cst_67 : f32 to vector<16x128xf32>
    %241 = arith.addf %240, %239 : vector<16x128xf32>
    %242 = arith.divf %240, %241 : vector<16x128xf32>
    %243 = vector.extract_strided_slice %236 {offsets = [0, 128], sizes = [16, 128], strides = [1, 1]} : vector<16x512xf32> to vector<16x128xf32>
    %244 = arith.negf %243 : vector<16x128xf32>
    %245 = math.exp %244 : vector<16x128xf32>
    %cst_68 = arith.constant 1.000000e+00 : f32
    %246 = vector.broadcast %cst_68 : f32 to vector<16x128xf32>
    %247 = arith.addf %246, %245 : vector<16x128xf32>
    %248 = arith.divf %246, %247 : vector<16x128xf32>
    %249 = vector.extract_strided_slice %236 {offsets = [0, 256], sizes = [16, 128], strides = [1, 1]} : vector<16x512xf32> to vector<16x128xf32>
    %250 = math.tanh %249 : vector<16x128xf32>
    %251 = vector.extract_strided_slice %236 {offsets = [0, 384], sizes = [16, 128], strides = [1, 1]} : vector<16x512xf32> to vector<16x128xf32>
    %252 = arith.negf %251 : vector<16x128xf32>
    %253 = math.exp %252 : vector<16x128xf32>
    %cst_69 = arith.constant 1.000000e+00 : f32
    %254 = vector.broadcast %cst_69 : f32 to vector<16x128xf32>
    %255 = arith.addf %254, %253 : vector<16x128xf32>
    %256 = arith.divf %254, %255 : vector<16x128xf32>
    %257 = arith.mulf %248, %223 : vector<16x128xf32>
    %258 = arith.mulf %242, %250 : vector<16x128xf32>
    %259 = arith.addf %257, %258 : vector<16x128xf32>
    %260 = math.tanh %259 : vector<16x128xf32>
    %261 = arith.mulf %256, %260 : vector<16x128xf32>
    %262 = arith.truncf %261 : vector<16x128xf32> to vector<16x128xbf16>
    %263 = arith.index_cast %c6_i32 : i32 to index
    %c0_70 = arith.constant 0 : index
    %c0_71 = arith.constant 0 : index
    %264 = vector.load %arg12[%263, %c0_70, %c0_71] : memref<8x16x128xbf16, #tpu.memory_space<vmem>>, vector<1x16x128xbf16>
    %265 = vector.shape_cast %264 : vector<1x16x128xbf16> to vector<16x128xbf16>
    %266 = vector.shape_cast %262 : vector<16x128xbf16> to vector<1x16x128xbf16>
    tpu.vector_store %arg12[%263, %c0_70, %c0_71], %266 {strides = array<i32>} : memref<8x16x128xbf16, #tpu.memory_space<vmem>>, vector<1x16x128xbf16>,
    %c7_i32 = arith.constant 7 : i32
    %267 = arith.truncf %261 : vector<16x128xf32> to vector<16x128xbf16>
    %cst_72 = arith.constant dense<0.000000e+00> : vector<16x512xf32>
    %268 = tpu.matmul %267, %12, %cst_72 {dimension_numbers = #tpu.dot_dimension_numbers<[1], [0], [0], [1], [0, 0, 1, 1], [], []>} : vector<16x128xbf16>, vector<128x512xbf16>, vector<16x512xf32> -> vector<16x512xf32>
    %269 = arith.index_cast %c7_i32 : i32 to index
    %c0_73 = arith.constant 0 : index
    %c0_74 = arith.constant 0 : index
    %270 = vector.load %arg13[%269, %c0_73, %c0_74] : memref<8x16x512xf32, #tpu.memory_space<vmem>>, vector<1x16x512xf32>
    %271 = vector.shape_cast %270 : vector<1x16x512xf32> to vector<16x512xf32>
    %272 = arith.addf %271, %268 : vector<16x512xf32>
    %273 = vector.extract_strided_slice %272 {offsets = [0, 0], sizes = [16, 128], strides = [1, 1]} : vector<16x512xf32> to vector<16x128xf32>
    %274 = arith.negf %273 : vector<16x128xf32>
    %275 = math.exp %274 : vector<16x128xf32>
    %cst_75 = arith.constant 1.000000e+00 : f32
    %276 = vector.broadcast %cst_75 : f32 to vector<16x128xf32>
    %277 = arith.addf %276, %275 : vector<16x128xf32>
    %278 = arith.divf %276, %277 : vector<16x128xf32>
    %279 = vector.extract_strided_slice %272 {offsets = [0, 128], sizes = [16, 128], strides = [1, 1]} : vector<16x512xf32> to vector<16x128xf32>
    %280 = arith.negf %279 : vector<16x128xf32>
    %281 = math.exp %280 : vector<16x128xf32>
    %cst_76 = arith.constant 1.000000e+00 : f32
    %282 = vector.broadcast %cst_76 : f32 to vector<16x128xf32>
    %283 = arith.addf %282, %281 : vector<16x128xf32>
    %284 = arith.divf %282, %283 : vector<16x128xf32>
    %285 = vector.extract_strided_slice %272 {offsets = [0, 256], sizes = [16, 128], strides = [1, 1]} : vector<16x512xf32> to vector<16x128xf32>
    %286 = math.tanh %285 : vector<16x128xf32>
    %287 = vector.extract_strided_slice %272 {offsets = [0, 384], sizes = [16, 128], strides = [1, 1]} : vector<16x512xf32> to vector<16x128xf32>
    %288 = arith.negf %287 : vector<16x128xf32>
    %289 = math.exp %288 : vector<16x128xf32>
    %cst_77 = arith.constant 1.000000e+00 : f32
    %290 = vector.broadcast %cst_77 : f32 to vector<16x128xf32>
    %291 = arith.addf %290, %289 : vector<16x128xf32>
    %292 = arith.divf %290, %291 : vector<16x128xf32>
    %293 = arith.mulf %284, %259 : vector<16x128xf32>
    %294 = arith.mulf %278, %286 : vector<16x128xf32>
    %295 = arith.addf %293, %294 : vector<16x128xf32>
    %296 = math.tanh %295 : vector<16x128xf32>
    %297 = arith.mulf %292, %296 : vector<16x128xf32>
    %298 = arith.truncf %297 : vector<16x128xf32> to vector<16x128xbf16>
    %299 = arith.index_cast %c7_i32 : i32 to index
    %c0_78 = arith.constant 0 : index
    %c0_79 = arith.constant 0 : index
    %300 = vector.load %arg12[%299, %c0_78, %c0_79] : memref<8x16x128xbf16, #tpu.memory_space<vmem>>, vector<1x16x128xbf16>
    %301 = vector.shape_cast %300 : vector<1x16x128xbf16> to vector<16x128xbf16>
    %302 = vector.shape_cast %298 : vector<16x128xbf16> to vector<1x16x128xbf16>
    tpu.vector_store %arg12[%299, %c0_78, %c0_79], %302 {strides = array<i32>} : memref<8x16x128xbf16, #tpu.memory_space<vmem>>, vector<1x16x128xbf16>,
    %c8_i32 = arith.constant 8 : i32
    %c1 = arith.constant 1 : index
    %c0_80 = arith.constant 0 : index
    %c0_81 = arith.constant 0 : index
    %303 = vector.load %arg1[%c1, %c0_80, %c0_81] : memref<2x128x512xbf16, #tpu.memory_space<vmem>>, vector<1x128x512xbf16>
    %304 = vector.shape_cast %303 : vector<1x128x512xbf16> to vector<128x512xbf16>
    %c1_82 = arith.constant 1 : index
    %c0_83 = arith.constant 0 : index
    %c0_84 = arith.constant 0 : index
    %305 = vector.load %arg3[%c1_82, %c0_83, %c0_84] : memref<2x1x512xf32, #tpu.memory_space<vmem>>, vector<1x1x512xf32>
    %306 = vector.shape_cast %305 : vector<1x1x512xf32> to vector<1x512xf32>
    %c0_85 = arith.constant 0 : index
    %c0_86 = arith.constant 0 : index
    %c0_87 = arith.constant 0 : index
    %307 = vector.load %arg12[%c0_85, %c0_86, %c0_87] : memref<8x16x128xbf16, #tpu.memory_space<vmem>>, vector<8x16x128xbf16>
    %308 = vector.shape_cast %307 : vector<8x16x128xbf16> to vector<128x128xbf16>
    %cst_88 = arith.constant dense<0.000000e+00> : vector<128x512xf32>
    %309 = tpu.matmul %308, %304, %cst_88 {dimension_numbers = #tpu.dot_dimension_numbers<[1], [0], [0], [1], [0, 0, 1, 1], [], []>} : vector<128x128xbf16>, vector<128x512xbf16>, vector<128x512xf32> -> vector<128x512xf32>
    %310 = vector.broadcast %306 : vector<1x512xf32> to vector<128x512xf32>
    %311 = arith.addf %309, %310 : vector<128x512xf32>
    %312 = vector.shape_cast %311 : vector<128x512xf32> to vector<8x16x512xf32>
    %c0_89 = arith.constant 0 : index
    %c0_90 = arith.constant 0 : index
    %c0_91 = arith.constant 0 : index
    %313 = vector.load %arg13[%c0_89, %c0_90, %c0_91] : memref<8x16x512xf32, #tpu.memory_space<vmem>>, vector<8x16x512xf32>
    tpu.vector_store %arg13[%c0_89, %c0_90, %c0_91], %312 {strides = array<i32>} : memref<8x16x512xf32, #tpu.memory_space<vmem>>, vector<8x16x512xf32>,
    %c1_92 = arith.constant 1 : index
    %c0_93 = arith.constant 0 : index
    %c0_94 = arith.constant 0 : index
    %314 = vector.load %arg2[%c1_92, %c0_93, %c0_94] : memref<2x128x512xbf16, #tpu.memory_space<vmem>>, vector<1x128x512xbf16>
    %315 = vector.shape_cast %314 : vector<1x128x512xbf16> to vector<128x512xbf16>
    %cst_95 = arith.constant 0.000000e+00 : f32
    %316 = vector.broadcast %cst_95 : f32 to vector<16x128xf32>
    %cst_96 = arith.constant 0.000000e+00 : f32
    %317 = vector.broadcast %cst_96 : f32 to vector<16x128xf32>
    %c0_i32_97 = arith.constant 0 : i32
    %318 = arith.truncf %316 : vector<16x128xf32> to vector<16x128xbf16>
    %cst_98 = arith.constant dense<0.000000e+00> : vector<16x512xf32>
    %319 = tpu.matmul %318, %315, %cst_98 {dimension_numbers = #tpu.dot_dimension_numbers<[1], [0], [0], [1], [0, 0, 1, 1], [], []>} : vector<16x128xbf16>, vector<128x512xbf16>, vector<16x512xf32> -> vector<16x512xf32>
    %320 = arith.index_cast %c0_i32_97 : i32 to index
    %c0_99 = arith.constant 0 : index
    %c0_100 = arith.constant 0 : index
    %321 = vector.load %arg13[%320, %c0_99, %c0_100] : memref<8x16x512xf32, #tpu.memory_space<vmem>>, vector<1x16x512xf32>
    %322 = vector.shape_cast %321 : vector<1x16x512xf32> to vector<16x512xf32>
    %323 = arith.addf %322, %319 : vector<16x512xf32>
    %324 = vector.extract_strided_slice %323 {offsets = [0, 0], sizes = [16, 128], strides = [1, 1]} : vector<16x512xf32> to vector<16x128xf32>
    %325 = arith.negf %324 : vector<16x128xf32>
    %326 = math.exp %325 : vector<16x128xf32>
    %cst_101 = arith.constant 1.000000e+00 : f32
    %327 = vector.broadcast %cst_101 : f32 to vector<16x128xf32>
    %328 = arith.addf %327, %326 : vector<16x128xf32>
    %329 = arith.divf %327, %328 : vector<16x128xf32>
    %330 = vector.extract_strided_slice %323 {offsets = [0, 128], sizes = [16, 128], strides = [1, 1]} : vector<16x512xf32> to vector<16x128xf32>
    %331 = arith.negf %330 : vector<16x128xf32>
    %332 = math.exp %331 : vector<16x128xf32>
    %cst_102 = arith.constant 1.000000e+00 : f32
    %333 = vector.broadcast %cst_102 : f32 to vector<16x128xf32>
    %334 = arith.addf %333, %332 : vector<16x128xf32>
    %335 = arith.divf %333, %334 : vector<16x128xf32>
    %336 = vector.extract_strided_slice %323 {offsets = [0, 256], sizes = [16, 128], strides = [1, 1]} : vector<16x512xf32> to vector<16x128xf32>
    %337 = math.tanh %336 : vector<16x128xf32>
    %338 = vector.extract_strided_slice %323 {offsets = [0, 384], sizes = [16, 128], strides = [1, 1]} : vector<16x512xf32> to vector<16x128xf32>
    %339 = arith.negf %338 : vector<16x128xf32>
    %340 = math.exp %339 : vector<16x128xf32>
    %cst_103 = arith.constant 1.000000e+00 : f32
    %341 = vector.broadcast %cst_103 : f32 to vector<16x128xf32>
    %342 = arith.addf %341, %340 : vector<16x128xf32>
    %343 = arith.divf %341, %342 : vector<16x128xf32>
    %344 = arith.mulf %335, %317 : vector<16x128xf32>
    %345 = arith.mulf %329, %337 : vector<16x128xf32>
    %346 = arith.addf %344, %345 : vector<16x128xf32>
    %347 = math.tanh %346 : vector<16x128xf32>
    %348 = arith.mulf %343, %347 : vector<16x128xf32>
    %c1_i32_104 = arith.constant 1 : i32
    %349 = arith.truncf %348 : vector<16x128xf32> to vector<16x128xbf16>
    %cst_105 = arith.constant dense<0.000000e+00> : vector<16x512xf32>
    %350 = tpu.matmul %349, %315, %cst_105 {dimension_numbers = #tpu.dot_dimension_numbers<[1], [0], [0], [1], [0, 0, 1, 1], [], []>} : vector<16x128xbf16>, vector<128x512xbf16>, vector<16x512xf32> -> vector<16x512xf32>
    %351 = arith.index_cast %c1_i32_104 : i32 to index
    %c0_106 = arith.constant 0 : index
    %c0_107 = arith.constant 0 : index
    %352 = vector.load %arg13[%351, %c0_106, %c0_107] : memref<8x16x512xf32, #tpu.memory_space<vmem>>, vector<1x16x512xf32>
    %353 = vector.shape_cast %352 : vector<1x16x512xf32> to vector<16x512xf32>
    %354 = arith.addf %353, %350 : vector<16x512xf32>
    %355 = vector.extract_strided_slice %354 {offsets = [0, 0], sizes = [16, 128], strides = [1, 1]} : vector<16x512xf32> to vector<16x128xf32>
    %356 = arith.negf %355 : vector<16x128xf32>
    %357 = math.exp %356 : vector<16x128xf32>
    %cst_108 = arith.constant 1.000000e+00 : f32
    %358 = vector.broadcast %cst_108 : f32 to vector<16x128xf32>
    %359 = arith.addf %358, %357 : vector<16x128xf32>
    %360 = arith.divf %358, %359 : vector<16x128xf32>
    %361 = vector.extract_strided_slice %354 {offsets = [0, 128], sizes = [16, 128], strides = [1, 1]} : vector<16x512xf32> to vector<16x128xf32>
    %362 = arith.negf %361 : vector<16x128xf32>
    %363 = math.exp %362 : vector<16x128xf32>
    %cst_109 = arith.constant 1.000000e+00 : f32
    %364 = vector.broadcast %cst_109 : f32 to vector<16x128xf32>
    %365 = arith.addf %364, %363 : vector<16x128xf32>
    %366 = arith.divf %364, %365 : vector<16x128xf32>
    %367 = vector.extract_strided_slice %354 {offsets = [0, 256], sizes = [16, 128], strides = [1, 1]} : vector<16x512xf32> to vector<16x128xf32>
    %368 = math.tanh %367 : vector<16x128xf32>
    %369 = vector.extract_strided_slice %354 {offsets = [0, 384], sizes = [16, 128], strides = [1, 1]} : vector<16x512xf32> to vector<16x128xf32>
    %370 = arith.negf %369 : vector<16x128xf32>
    %371 = math.exp %370 : vector<16x128xf32>
    %cst_110 = arith.constant 1.000000e+00 : f32
    %372 = vector.broadcast %cst_110 : f32 to vector<16x128xf32>
    %373 = arith.addf %372, %371 : vector<16x128xf32>
    %374 = arith.divf %372, %373 : vector<16x128xf32>
    %375 = arith.mulf %366, %346 : vector<16x128xf32>
    %376 = arith.mulf %360, %368 : vector<16x128xf32>
    %377 = arith.addf %375, %376 : vector<16x128xf32>
    %378 = math.tanh %377 : vector<16x128xf32>
    %379 = arith.mulf %374, %378 : vector<16x128xf32>
    %c2_i32_111 = arith.constant 2 : i32
    %380 = arith.truncf %379 : vector<16x128xf32> to vector<16x128xbf16>
    %cst_112 = arith.constant dense<0.000000e+00> : vector<16x512xf32>
    %381 = tpu.matmul %380, %315, %cst_112 {dimension_numbers = #tpu.dot_dimension_numbers<[1], [0], [0], [1], [0, 0, 1, 1], [], []>} : vector<16x128xbf16>, vector<128x512xbf16>, vector<16x512xf32> -> vector<16x512xf32>
    %382 = arith.index_cast %c2_i32_111 : i32 to index
    %c0_113 = arith.constant 0 : index
    %c0_114 = arith.constant 0 : index
    %383 = vector.load %arg13[%382, %c0_113, %c0_114] : memref<8x16x512xf32, #tpu.memory_space<vmem>>, vector<1x16x512xf32>
    %384 = vector.shape_cast %383 : vector<1x16x512xf32> to vector<16x512xf32>
    %385 = arith.addf %384, %381 : vector<16x512xf32>
    %386 = vector.extract_strided_slice %385 {offsets = [0, 0], sizes = [16, 128], strides = [1, 1]} : vector<16x512xf32> to vector<16x128xf32>
    %387 = arith.negf %386 : vector<16x128xf32>
    %388 = math.exp %387 : vector<16x128xf32>
    %cst_115 = arith.constant 1.000000e+00 : f32
    %389 = vector.broadcast %cst_115 : f32 to vector<16x128xf32>
    %390 = arith.addf %389, %388 : vector<16x128xf32>
    %391 = arith.divf %389, %390 : vector<16x128xf32>
    %392 = vector.extract_strided_slice %385 {offsets = [0, 128], sizes = [16, 128], strides = [1, 1]} : vector<16x512xf32> to vector<16x128xf32>
    %393 = arith.negf %392 : vector<16x128xf32>
    %394 = math.exp %393 : vector<16x128xf32>
    %cst_116 = arith.constant 1.000000e+00 : f32
    %395 = vector.broadcast %cst_116 : f32 to vector<16x128xf32>
    %396 = arith.addf %395, %394 : vector<16x128xf32>
    %397 = arith.divf %395, %396 : vector<16x128xf32>
    %398 = vector.extract_strided_slice %385 {offsets = [0, 256], sizes = [16, 128], strides = [1, 1]} : vector<16x512xf32> to vector<16x128xf32>
    %399 = math.tanh %398 : vector<16x128xf32>
    %400 = vector.extract_strided_slice %385 {offsets = [0, 384], sizes = [16, 128], strides = [1, 1]} : vector<16x512xf32> to vector<16x128xf32>
    %401 = arith.negf %400 : vector<16x128xf32>
    %402 = math.exp %401 : vector<16x128xf32>
    %cst_117 = arith.constant 1.000000e+00 : f32
    %403 = vector.broadcast %cst_117 : f32 to vector<16x128xf32>
    %404 = arith.addf %403, %402 : vector<16x128xf32>
    %405 = arith.divf %403, %404 : vector<16x128xf32>
    %406 = arith.mulf %397, %377 : vector<16x128xf32>
    %407 = arith.mulf %391, %399 : vector<16x128xf32>
    %408 = arith.addf %406, %407 : vector<16x128xf32>
    %409 = math.tanh %408 : vector<16x128xf32>
    %410 = arith.mulf %405, %409 : vector<16x128xf32>
    %c3_i32_118 = arith.constant 3 : i32
    %411 = arith.truncf %410 : vector<16x128xf32> to vector<16x128xbf16>
    %cst_119 = arith.constant dense<0.000000e+00> : vector<16x512xf32>
    %412 = tpu.matmul %411, %315, %cst_119 {dimension_numbers = #tpu.dot_dimension_numbers<[1], [0], [0], [1], [0, 0, 1, 1], [], []>} : vector<16x128xbf16>, vector<128x512xbf16>, vector<16x512xf32> -> vector<16x512xf32>
    %413 = arith.index_cast %c3_i32_118 : i32 to index
    %c0_120 = arith.constant 0 : index
    %c0_121 = arith.constant 0 : index
    %414 = vector.load %arg13[%413, %c0_120, %c0_121] : memref<8x16x512xf32, #tpu.memory_space<vmem>>, vector<1x16x512xf32>
    %415 = vector.shape_cast %414 : vector<1x16x512xf32> to vector<16x512xf32>
    %416 = arith.addf %415, %412 : vector<16x512xf32>
    %417 = vector.extract_strided_slice %416 {offsets = [0, 0], sizes = [16, 128], strides = [1, 1]} : vector<16x512xf32> to vector<16x128xf32>
    %418 = arith.negf %417 : vector<16x128xf32>
    %419 = math.exp %418 : vector<16x128xf32>
    %cst_122 = arith.constant 1.000000e+00 : f32
    %420 = vector.broadcast %cst_122 : f32 to vector<16x128xf32>
    %421 = arith.addf %420, %419 : vector<16x128xf32>
    %422 = arith.divf %420, %421 : vector<16x128xf32>
    %423 = vector.extract_strided_slice %416 {offsets = [0, 128], sizes = [16, 128], strides = [1, 1]} : vector<16x512xf32> to vector<16x128xf32>
    %424 = arith.negf %423 : vector<16x128xf32>
    %425 = math.exp %424 : vector<16x128xf32>
    %cst_123 = arith.constant 1.000000e+00 : f32
    %426 = vector.broadcast %cst_123 : f32 to vector<16x128xf32>
    %427 = arith.addf %426, %425 : vector<16x128xf32>
    %428 = arith.divf %426, %427 : vector<16x128xf32>
    %429 = vector.extract_strided_slice %416 {offsets = [0, 256], sizes = [16, 128], strides = [1, 1]} : vector<16x512xf32> to vector<16x128xf32>
    %430 = math.tanh %429 : vector<16x128xf32>
    %431 = vector.extract_strided_slice %416 {offsets = [0, 384], sizes = [16, 128], strides = [1, 1]} : vector<16x512xf32> to vector<16x128xf32>
    %432 = arith.negf %431 : vector<16x128xf32>
    %433 = math.exp %432 : vector<16x128xf32>
    %cst_124 = arith.constant 1.000000e+00 : f32
    %434 = vector.broadcast %cst_124 : f32 to vector<16x128xf32>
    %435 = arith.addf %434, %433 : vector<16x128xf32>
    %436 = arith.divf %434, %435 : vector<16x128xf32>
    %437 = arith.mulf %428, %408 : vector<16x128xf32>
    %438 = arith.mulf %422, %430 : vector<16x128xf32>
    %439 = arith.addf %437, %438 : vector<16x128xf32>
    %440 = math.tanh %439 : vector<16x128xf32>
    %441 = arith.mulf %436, %440 : vector<16x128xf32>
    %c4_i32_125 = arith.constant 4 : i32
    %442 = arith.truncf %441 : vector<16x128xf32> to vector<16x128xbf16>
    %cst_126 = arith.constant dense<0.000000e+00> : vector<16x512xf32>
    %443 = tpu.matmul %442, %315, %cst_126 {dimension_numbers = #tpu.dot_dimension_numbers<[1], [0], [0], [1], [0, 0, 1, 1], [], []>} : vector<16x128xbf16>, vector<128x512xbf16>, vector<16x512xf32> -> vector<16x512xf32>
    %444 = arith.index_cast %c4_i32_125 : i32 to index
    %c0_127 = arith.constant 0 : index
    %c0_128 = arith.constant 0 : index
    %445 = vector.load %arg13[%444, %c0_127, %c0_128] : memref<8x16x512xf32, #tpu.memory_space<vmem>>, vector<1x16x512xf32>
    %446 = vector.shape_cast %445 : vector<1x16x512xf32> to vector<16x512xf32>
    %447 = arith.addf %446, %443 : vector<16x512xf32>
    %448 = vector.extract_strided_slice %447 {offsets = [0, 0], sizes = [16, 128], strides = [1, 1]} : vector<16x512xf32> to vector<16x128xf32>
    %449 = arith.negf %448 : vector<16x128xf32>
    %450 = math.exp %449 : vector<16x128xf32>
    %cst_129 = arith.constant 1.000000e+00 : f32
    %451 = vector.broadcast %cst_129 : f32 to vector<16x128xf32>
    %452 = arith.addf %451, %450 : vector<16x128xf32>
    %453 = arith.divf %451, %452 : vector<16x128xf32>
    %454 = vector.extract_strided_slice %447 {offsets = [0, 128], sizes = [16, 128], strides = [1, 1]} : vector<16x512xf32> to vector<16x128xf32>
    %455 = arith.negf %454 : vector<16x128xf32>
    %456 = math.exp %455 : vector<16x128xf32>
    %cst_130 = arith.constant 1.000000e+00 : f32
    %457 = vector.broadcast %cst_130 : f32 to vector<16x128xf32>
    %458 = arith.addf %457, %456 : vector<16x128xf32>
    %459 = arith.divf %457, %458 : vector<16x128xf32>
    %460 = vector.extract_strided_slice %447 {offsets = [0, 256], sizes = [16, 128], strides = [1, 1]} : vector<16x512xf32> to vector<16x128xf32>
    %461 = math.tanh %460 : vector<16x128xf32>
    %462 = vector.extract_strided_slice %447 {offsets = [0, 384], sizes = [16, 128], strides = [1, 1]} : vector<16x512xf32> to vector<16x128xf32>
    %463 = arith.negf %462 : vector<16x128xf32>
    %464 = math.exp %463 : vector<16x128xf32>
    %cst_131 = arith.constant 1.000000e+00 : f32
    %465 = vector.broadcast %cst_131 : f32 to vector<16x128xf32>
    %466 = arith.addf %465, %464 : vector<16x128xf32>
    %467 = arith.divf %465, %466 : vector<16x128xf32>
    %468 = arith.mulf %459, %439 : vector<16x128xf32>
    %469 = arith.mulf %453, %461 : vector<16x128xf32>
    %470 = arith.addf %468, %469 : vector<16x128xf32>
    %471 = math.tanh %470 : vector<16x128xf32>
    %472 = arith.mulf %467, %471 : vector<16x128xf32>
    %c5_i32_132 = arith.constant 5 : i32
    %473 = arith.truncf %472 : vector<16x128xf32> to vector<16x128xbf16>
    %cst_133 = arith.constant dense<0.000000e+00> : vector<16x512xf32>
    %474 = tpu.matmul %473, %315, %cst_133 {dimension_numbers = #tpu.dot_dimension_numbers<[1], [0], [0], [1], [0, 0, 1, 1], [], []>} : vector<16x128xbf16>, vector<128x512xbf16>, vector<16x512xf32> -> vector<16x512xf32>
    %475 = arith.index_cast %c5_i32_132 : i32 to index
    %c0_134 = arith.constant 0 : index
    %c0_135 = arith.constant 0 : index
    %476 = vector.load %arg13[%475, %c0_134, %c0_135] : memref<8x16x512xf32, #tpu.memory_space<vmem>>, vector<1x16x512xf32>
    %477 = vector.shape_cast %476 : vector<1x16x512xf32> to vector<16x512xf32>
    %478 = arith.addf %477, %474 : vector<16x512xf32>
    %479 = vector.extract_strided_slice %478 {offsets = [0, 0], sizes = [16, 128], strides = [1, 1]} : vector<16x512xf32> to vector<16x128xf32>
    %480 = arith.negf %479 : vector<16x128xf32>
    %481 = math.exp %480 : vector<16x128xf32>
    %cst_136 = arith.constant 1.000000e+00 : f32
    %482 = vector.broadcast %cst_136 : f32 to vector<16x128xf32>
    %483 = arith.addf %482, %481 : vector<16x128xf32>
    %484 = arith.divf %482, %483 : vector<16x128xf32>
    %485 = vector.extract_strided_slice %478 {offsets = [0, 128], sizes = [16, 128], strides = [1, 1]} : vector<16x512xf32> to vector<16x128xf32>
    %486 = arith.negf %485 : vector<16x128xf32>
    %487 = math.exp %486 : vector<16x128xf32>
    %cst_137 = arith.constant 1.000000e+00 : f32
    %488 = vector.broadcast %cst_137 : f32 to vector<16x128xf32>
    %489 = arith.addf %488, %487 : vector<16x128xf32>
    %490 = arith.divf %488, %489 : vector<16x128xf32>
    %491 = vector.extract_strided_slice %478 {offsets = [0, 256], sizes = [16, 128], strides = [1, 1]} : vector<16x512xf32> to vector<16x128xf32>
    %492 = math.tanh %491 : vector<16x128xf32>
    %493 = vector.extract_strided_slice %478 {offsets = [0, 384], sizes = [16, 128], strides = [1, 1]} : vector<16x512xf32> to vector<16x128xf32>
    %494 = arith.negf %493 : vector<16x128xf32>
    %495 = math.exp %494 : vector<16x128xf32>
    %cst_138 = arith.constant 1.000000e+00 : f32
    %496 = vector.broadcast %cst_138 : f32 to vector<16x128xf32>
    %497 = arith.addf %496, %495 : vector<16x128xf32>
    %498 = arith.divf %496, %497 : vector<16x128xf32>
    %499 = arith.mulf %490, %470 : vector<16x128xf32>
    %500 = arith.mulf %484, %492 : vector<16x128xf32>
    %501 = arith.addf %499, %500 : vector<16x128xf32>
    %502 = math.tanh %501 : vector<16x128xf32>
    %503 = arith.mulf %498, %502 : vector<16x128xf32>
    %c6_i32_139 = arith.constant 6 : i32
    %504 = arith.truncf %503 : vector<16x128xf32> to vector<16x128xbf16>
    %cst_140 = arith.constant dense<0.000000e+00> : vector<16x512xf32>
    %505 = tpu.matmul %504, %315, %cst_140 {dimension_numbers = #tpu.dot_dimension_numbers<[1], [0], [0], [1], [0, 0, 1, 1], [], []>} : vector<16x128xbf16>, vector<128x512xbf16>, vector<16x512xf32> -> vector<16x512xf32>
    %506 = arith.index_cast %c6_i32_139 : i32 to index
    %c0_141 = arith.constant 0 : index
    %c0_142 = arith.constant 0 : index
    %507 = vector.load %arg13[%506, %c0_141, %c0_142] : memref<8x16x512xf32, #tpu.memory_space<vmem>>, vector<1x16x512xf32>
    %508 = vector.shape_cast %507 : vector<1x16x512xf32> to vector<16x512xf32>
    %509 = arith.addf %508, %505 : vector<16x512xf32>
    %510 = vector.extract_strided_slice %509 {offsets = [0, 0], sizes = [16, 128], strides = [1, 1]} : vector<16x512xf32> to vector<16x128xf32>
    %511 = arith.negf %510 : vector<16x128xf32>
    %512 = math.exp %511 : vector<16x128xf32>
    %cst_143 = arith.constant 1.000000e+00 : f32
    %513 = vector.broadcast %cst_143 : f32 to vector<16x128xf32>
    %514 = arith.addf %513, %512 : vector<16x128xf32>
    %515 = arith.divf %513, %514 : vector<16x128xf32>
    %516 = vector.extract_strided_slice %509 {offsets = [0, 128], sizes = [16, 128], strides = [1, 1]} : vector<16x512xf32> to vector<16x128xf32>
    %517 = arith.negf %516 : vector<16x128xf32>
    %518 = math.exp %517 : vector<16x128xf32>
    %cst_144 = arith.constant 1.000000e+00 : f32
    %519 = vector.broadcast %cst_144 : f32 to vector<16x128xf32>
    %520 = arith.addf %519, %518 : vector<16x128xf32>
    %521 = arith.divf %519, %520 : vector<16x128xf32>
    %522 = vector.extract_strided_slice %509 {offsets = [0, 256], sizes = [16, 128], strides = [1, 1]} : vector<16x512xf32> to vector<16x128xf32>
    %523 = math.tanh %522 : vector<16x128xf32>
    %524 = vector.extract_strided_slice %509 {offsets = [0, 384], sizes = [16, 128], strides = [1, 1]} : vector<16x512xf32> to vector<16x128xf32>
    %525 = arith.negf %524 : vector<16x128xf32>
    %526 = math.exp %525 : vector<16x128xf32>
    %cst_145 = arith.constant 1.000000e+00 : f32
    %527 = vector.broadcast %cst_145 : f32 to vector<16x128xf32>
    %528 = arith.addf %527, %526 : vector<16x128xf32>
    %529 = arith.divf %527, %528 : vector<16x128xf32>
    %530 = arith.mulf %521, %501 : vector<16x128xf32>
    %531 = arith.mulf %515, %523 : vector<16x128xf32>
    %532 = arith.addf %530, %531 : vector<16x128xf32>
    %533 = math.tanh %532 : vector<16x128xf32>
    %534 = arith.mulf %529, %533 : vector<16x128xf32>
    %c7_i32_146 = arith.constant 7 : i32
    %535 = arith.truncf %534 : vector<16x128xf32> to vector<16x128xbf16>
    %cst_147 = arith.constant dense<0.000000e+00> : vector<16x512xf32>
    %536 = tpu.matmul %535, %315, %cst_147 {dimension_numbers = #tpu.dot_dimension_numbers<[1], [0], [0], [1], [0, 0, 1, 1], [], []>} : vector<16x128xbf16>, vector<128x512xbf16>, vector<16x512xf32> -> vector<16x512xf32>
    %537 = arith.index_cast %c7_i32_146 : i32 to index
    %c0_148 = arith.constant 0 : index
    %c0_149 = arith.constant 0 : index
    %538 = vector.load %arg13[%537, %c0_148, %c0_149] : memref<8x16x512xf32, #tpu.memory_space<vmem>>, vector<1x16x512xf32>
    %539 = vector.shape_cast %538 : vector<1x16x512xf32> to vector<16x512xf32>
    %540 = arith.addf %539, %536 : vector<16x512xf32>
    %541 = vector.extract_strided_slice %540 {offsets = [0, 0], sizes = [16, 128], strides = [1, 1]} : vector<16x512xf32> to vector<16x128xf32>
    %542 = arith.negf %541 : vector<16x128xf32>
    %543 = math.exp %542 : vector<16x128xf32>
    %cst_150 = arith.constant 1.000000e+00 : f32
    %544 = vector.broadcast %cst_150 : f32 to vector<16x128xf32>
    %545 = arith.addf %544, %543 : vector<16x128xf32>
    %546 = arith.divf %544, %545 : vector<16x128xf32>
    %547 = vector.extract_strided_slice %540 {offsets = [0, 128], sizes = [16, 128], strides = [1, 1]} : vector<16x512xf32> to vector<16x128xf32>
    %548 = arith.negf %547 : vector<16x128xf32>
    %549 = math.exp %548 : vector<16x128xf32>
    %cst_151 = arith.constant 1.000000e+00 : f32
    %550 = vector.broadcast %cst_151 : f32 to vector<16x128xf32>
    %551 = arith.addf %550, %549 : vector<16x128xf32>
    %552 = arith.divf %550, %551 : vector<16x128xf32>
    %553 = vector.extract_strided_slice %540 {offsets = [0, 256], sizes = [16, 128], strides = [1, 1]} : vector<16x512xf32> to vector<16x128xf32>
    %554 = math.tanh %553 : vector<16x128xf32>
    %555 = vector.extract_strided_slice %540 {offsets = [0, 384], sizes = [16, 128], strides = [1, 1]} : vector<16x512xf32> to vector<16x128xf32>
    %556 = arith.negf %555 : vector<16x128xf32>
    %557 = math.exp %556 : vector<16x128xf32>
    %cst_152 = arith.constant 1.000000e+00 : f32
    %558 = vector.broadcast %cst_152 : f32 to vector<16x128xf32>
    %559 = arith.addf %558, %557 : vector<16x128xf32>
    %560 = arith.divf %558, %559 : vector<16x128xf32>
    %561 = arith.mulf %552, %532 : vector<16x128xf32>
    %562 = arith.mulf %546, %554 : vector<16x128xf32>
    %563 = arith.addf %561, %562 : vector<16x128xf32>
    %564 = math.tanh %563 : vector<16x128xf32>
    %565 = arith.mulf %560, %564 : vector<16x128xf32>
    %c8_i32_153 = arith.constant 8 : i32
    %566 = arith.truncf %565 : vector<16x128xf32> to vector<16x128xbf16>
    %c0_154 = arith.constant 0 : index
    %c0_155 = arith.constant 0 : index
    %567 = vector.load %arg7[%c0_154, %c0_155] : memref<128x128xbf16, #tpu.memory_space<vmem>>, vector<128x128xbf16>
    %cst_156 = arith.constant dense<0.000000e+00> : vector<16x128xf32>
    %568 = tpu.matmul %566, %567, %cst_156 {dimension_numbers = #tpu.dot_dimension_numbers<[1], [0], [0], [1], [0, 0, 1, 1], [], []>} : vector<16x128xbf16>, vector<128x128xbf16>, vector<16x128xf32> -> vector<16x128xf32>
    %c0_157 = arith.constant 0 : index
    %c0_158 = arith.constant 0 : index
    %569 = vector.load %arg8[%c0_157, %c0_158] : memref<1x128xf32, #tpu.memory_space<vmem>>, vector<1x128xf32>
    %570 = vector.broadcast %569 : vector<1x128xf32> to vector<16x128xf32>
    %571 = arith.addf %568, %570 : vector<16x128xf32>
    %572 = arith.truncf %571 : vector<16x128xf32> to vector<16x128xbf16>
    %c0_159 = arith.constant 0 : index
    %c0_160 = arith.constant 0 : index
    %c0_161 = arith.constant 0 : index
    %573 = vector.load %arg4[%c0_159, %c0_160, %c0_161] : memref<2x128x512xbf16, #tpu.memory_space<vmem>>, vector<1x128x512xbf16>
    %574 = vector.shape_cast %573 : vector<1x128x512xbf16> to vector<128x512xbf16>
    %cst_162 = arith.constant dense<0.000000e+00> : vector<16x512xf32>
    %575 = tpu.matmul %572, %574, %cst_162 {dimension_numbers = #tpu.dot_dimension_numbers<[1], [0], [0], [1], [0, 0, 1, 1], [], []>} : vector<16x128xbf16>, vector<128x512xbf16>, vector<16x512xf32> -> vector<16x512xf32>
    %c0_163 = arith.constant 0 : index
    %c0_164 = arith.constant 0 : index
    %c0_165 = arith.constant 0 : index
    %576 = vector.load %arg6[%c0_163, %c0_164, %c0_165] : memref<2x1x512xf32, #tpu.memory_space<vmem>>, vector<1x1x512xf32>
    %577 = vector.shape_cast %576 : vector<1x1x512xf32> to vector<1x512xf32>
    %578 = vector.broadcast %577 : vector<1x512xf32> to vector<16x512xf32>
    %579 = arith.addf %575, %578 : vector<16x512xf32>
    %c0_166 = arith.constant 0 : index
    %c0_167 = arith.constant 0 : index
    %c0_168 = arith.constant 0 : index
    %580 = vector.load %arg5[%c0_166, %c0_167, %c0_168] : memref<2x128x512xbf16, #tpu.memory_space<vmem>>, vector<1x128x512xbf16>
    %581 = vector.shape_cast %580 : vector<1x128x512xbf16> to vector<128x512xbf16>
    %cst_169 = arith.constant 0.000000e+00 : f32
    %582 = vector.broadcast %cst_169 : f32 to vector<16x128xf32>
    %cst_170 = arith.constant 0.000000e+00 : f32
    %583 = vector.broadcast %cst_170 : f32 to vector<16x128xf32>
    %c0_i32_171 = arith.constant 0 : i32
    %584 = arith.truncf %582 : vector<16x128xf32> to vector<16x128xbf16>
    %cst_172 = arith.constant dense<0.000000e+00> : vector<16x512xf32>
    %585 = tpu.matmul %584, %581, %cst_172 {dimension_numbers = #tpu.dot_dimension_numbers<[1], [0], [0], [1], [0, 0, 1, 1], [], []>} : vector<16x128xbf16>, vector<128x512xbf16>, vector<16x512xf32> -> vector<16x512xf32>
    %586 = arith.addf %579, %585 : vector<16x512xf32>
    %587 = vector.extract_strided_slice %586 {offsets = [0, 0], sizes = [16, 128], strides = [1, 1]} : vector<16x512xf32> to vector<16x128xf32>
    %588 = arith.negf %587 : vector<16x128xf32>
    %589 = math.exp %588 : vector<16x128xf32>
    %cst_173 = arith.constant 1.000000e+00 : f32
    %590 = vector.broadcast %cst_173 : f32 to vector<16x128xf32>
    %591 = arith.addf %590, %589 : vector<16x128xf32>
    %592 = arith.divf %590, %591 : vector<16x128xf32>
    %593 = vector.extract_strided_slice %586 {offsets = [0, 128], sizes = [16, 128], strides = [1, 1]} : vector<16x512xf32> to vector<16x128xf32>
    %594 = arith.negf %593 : vector<16x128xf32>
    %595 = math.exp %594 : vector<16x128xf32>
    %cst_174 = arith.constant 1.000000e+00 : f32
    %596 = vector.broadcast %cst_174 : f32 to vector<16x128xf32>
    %597 = arith.addf %596, %595 : vector<16x128xf32>
    %598 = arith.divf %596, %597 : vector<16x128xf32>
    %599 = vector.extract_strided_slice %586 {offsets = [0, 256], sizes = [16, 128], strides = [1, 1]} : vector<16x512xf32> to vector<16x128xf32>
    %600 = math.tanh %599 : vector<16x128xf32>
    %601 = vector.extract_strided_slice %586 {offsets = [0, 384], sizes = [16, 128], strides = [1, 1]} : vector<16x512xf32> to vector<16x128xf32>
    %602 = arith.negf %601 : vector<16x128xf32>
    %603 = math.exp %602 : vector<16x128xf32>
    %cst_175 = arith.constant 1.000000e+00 : f32
    %604 = vector.broadcast %cst_175 : f32 to vector<16x128xf32>
    %605 = arith.addf %604, %603 : vector<16x128xf32>
    %606 = arith.divf %604, %605 : vector<16x128xf32>
    %607 = arith.mulf %598, %583 : vector<16x128xf32>
    %608 = arith.mulf %592, %600 : vector<16x128xf32>
    %609 = arith.addf %607, %608 : vector<16x128xf32>
    %610 = math.tanh %609 : vector<16x128xf32>
    %611 = arith.mulf %606, %610 : vector<16x128xf32>
    %612 = arith.truncf %611 : vector<16x128xf32> to vector<16x128xbf16>
    %613 = arith.index_cast %c0_i32_171 : i32 to index
    %c0_176 = arith.constant 0 : index
    %c0_177 = arith.constant 0 : index
    %614 = vector.load %arg12[%613, %c0_176, %c0_177] : memref<8x16x128xbf16, #tpu.memory_space<vmem>>, vector<1x16x128xbf16>
    %615 = vector.shape_cast %614 : vector<1x16x128xbf16> to vector<16x128xbf16>
    %616 = vector.shape_cast %612 : vector<16x128xbf16> to vector<1x16x128xbf16>
    tpu.vector_store %arg12[%613, %c0_176, %c0_177], %616 {strides = array<i32>} : memref<8x16x128xbf16, #tpu.memory_space<vmem>>, vector<1x16x128xbf16>,
    %c1_i32_178 = arith.constant 1 : i32
    %617 = arith.truncf %611 : vector<16x128xf32> to vector<16x128xbf16>
    %cst_179 = arith.constant dense<0.000000e+00> : vector<16x512xf32>
    %618 = tpu.matmul %617, %581, %cst_179 {dimension_numbers = #tpu.dot_dimension_numbers<[1], [0], [0], [1], [0, 0, 1, 1], [], []>} : vector<16x128xbf16>, vector<128x512xbf16>, vector<16x512xf32> -> vector<16x512xf32>
    %619 = arith.addf %579, %618 : vector<16x512xf32>
    %620 = vector.extract_strided_slice %619 {offsets = [0, 0], sizes = [16, 128], strides = [1, 1]} : vector<16x512xf32> to vector<16x128xf32>
    %621 = arith.negf %620 : vector<16x128xf32>
    %622 = math.exp %621 : vector<16x128xf32>
    %cst_180 = arith.constant 1.000000e+00 : f32
    %623 = vector.broadcast %cst_180 : f32 to vector<16x128xf32>
    %624 = arith.addf %623, %622 : vector<16x128xf32>
    %625 = arith.divf %623, %624 : vector<16x128xf32>
    %626 = vector.extract_strided_slice %619 {offsets = [0, 128], sizes = [16, 128], strides = [1, 1]} : vector<16x512xf32> to vector<16x128xf32>
    %627 = arith.negf %626 : vector<16x128xf32>
    %628 = math.exp %627 : vector<16x128xf32>
    %cst_181 = arith.constant 1.000000e+00 : f32
    %629 = vector.broadcast %cst_181 : f32 to vector<16x128xf32>
    %630 = arith.addf %629, %628 : vector<16x128xf32>
    %631 = arith.divf %629, %630 : vector<16x128xf32>
    %632 = vector.extract_strided_slice %619 {offsets = [0, 256], sizes = [16, 128], strides = [1, 1]} : vector<16x512xf32> to vector<16x128xf32>
    %633 = math.tanh %632 : vector<16x128xf32>
    %634 = vector.extract_strided_slice %619 {offsets = [0, 384], sizes = [16, 128], strides = [1, 1]} : vector<16x512xf32> to vector<16x128xf32>
    %635 = arith.negf %634 : vector<16x128xf32>
    %636 = math.exp %635 : vector<16x128xf32>
    %cst_182 = arith.constant 1.000000e+00 : f32
    %637 = vector.broadcast %cst_182 : f32 to vector<16x128xf32>
    %638 = arith.addf %637, %636 : vector<16x128xf32>
    %639 = arith.divf %637, %638 : vector<16x128xf32>
    %640 = arith.mulf %631, %609 : vector<16x128xf32>
    %641 = arith.mulf %625, %633 : vector<16x128xf32>
    %642 = arith.addf %640, %641 : vector<16x128xf32>
    %643 = math.tanh %642 : vector<16x128xf32>
    %644 = arith.mulf %639, %643 : vector<16x128xf32>
    %645 = arith.truncf %644 : vector<16x128xf32> to vector<16x128xbf16>
    %646 = arith.index_cast %c1_i32_178 : i32 to index
    %c0_183 = arith.constant 0 : index
    %c0_184 = arith.constant 0 : index
    %647 = vector.load %arg12[%646, %c0_183, %c0_184] : memref<8x16x128xbf16, #tpu.memory_space<vmem>>, vector<1x16x128xbf16>
    %648 = vector.shape_cast %647 : vector<1x16x128xbf16> to vector<16x128xbf16>
    %649 = vector.shape_cast %645 : vector<16x128xbf16> to vector<1x16x128xbf16>
    tpu.vector_store %arg12[%646, %c0_183, %c0_184], %649 {strides = array<i32>} : memref<8x16x128xbf16, #tpu.memory_space<vmem>>, vector<1x16x128xbf16>,
    %c2_i32_185 = arith.constant 2 : i32
    %650 = arith.truncf %644 : vector<16x128xf32> to vector<16x128xbf16>
    %cst_186 = arith.constant dense<0.000000e+00> : vector<16x512xf32>
    %651 = tpu.matmul %650, %581, %cst_186 {dimension_numbers = #tpu.dot_dimension_numbers<[1], [0], [0], [1], [0, 0, 1, 1], [], []>} : vector<16x128xbf16>, vector<128x512xbf16>, vector<16x512xf32> -> vector<16x512xf32>
    %652 = arith.addf %579, %651 : vector<16x512xf32>
    %653 = vector.extract_strided_slice %652 {offsets = [0, 0], sizes = [16, 128], strides = [1, 1]} : vector<16x512xf32> to vector<16x128xf32>
    %654 = arith.negf %653 : vector<16x128xf32>
    %655 = math.exp %654 : vector<16x128xf32>
    %cst_187 = arith.constant 1.000000e+00 : f32
    %656 = vector.broadcast %cst_187 : f32 to vector<16x128xf32>
    %657 = arith.addf %656, %655 : vector<16x128xf32>
    %658 = arith.divf %656, %657 : vector<16x128xf32>
    %659 = vector.extract_strided_slice %652 {offsets = [0, 128], sizes = [16, 128], strides = [1, 1]} : vector<16x512xf32> to vector<16x128xf32>
    %660 = arith.negf %659 : vector<16x128xf32>
    %661 = math.exp %660 : vector<16x128xf32>
    %cst_188 = arith.constant 1.000000e+00 : f32
    %662 = vector.broadcast %cst_188 : f32 to vector<16x128xf32>
    %663 = arith.addf %662, %661 : vector<16x128xf32>
    %664 = arith.divf %662, %663 : vector<16x128xf32>
    %665 = vector.extract_strided_slice %652 {offsets = [0, 256], sizes = [16, 128], strides = [1, 1]} : vector<16x512xf32> to vector<16x128xf32>
    %666 = math.tanh %665 : vector<16x128xf32>
    %667 = vector.extract_strided_slice %652 {offsets = [0, 384], sizes = [16, 128], strides = [1, 1]} : vector<16x512xf32> to vector<16x128xf32>
    %668 = arith.negf %667 : vector<16x128xf32>
    %669 = math.exp %668 : vector<16x128xf32>
    %cst_189 = arith.constant 1.000000e+00 : f32
    %670 = vector.broadcast %cst_189 : f32 to vector<16x128xf32>
    %671 = arith.addf %670, %669 : vector<16x128xf32>
    %672 = arith.divf %670, %671 : vector<16x128xf32>
    %673 = arith.mulf %664, %642 : vector<16x128xf32>
    %674 = arith.mulf %658, %666 : vector<16x128xf32>
    %675 = arith.addf %673, %674 : vector<16x128xf32>
    %676 = math.tanh %675 : vector<16x128xf32>
    %677 = arith.mulf %672, %676 : vector<16x128xf32>
    %678 = arith.truncf %677 : vector<16x128xf32> to vector<16x128xbf16>
    %679 = arith.index_cast %c2_i32_185 : i32 to index
    %c0_190 = arith.constant 0 : index
    %c0_191 = arith.constant 0 : index
    %680 = vector.load %arg12[%679, %c0_190, %c0_191] : memref<8x16x128xbf16, #tpu.memory_space<vmem>>, vector<1x16x128xbf16>
    %681 = vector.shape_cast %680 : vector<1x16x128xbf16> to vector<16x128xbf16>
    %682 = vector.shape_cast %678 : vector<16x128xbf16> to vector<1x16x128xbf16>
    tpu.vector_store %arg12[%679, %c0_190, %c0_191], %682 {strides = array<i32>} : memref<8x16x128xbf16, #tpu.memory_space<vmem>>, vector<1x16x128xbf16>,
    %c3_i32_192 = arith.constant 3 : i32
    %683 = arith.truncf %677 : vector<16x128xf32> to vector<16x128xbf16>
    %cst_193 = arith.constant dense<0.000000e+00> : vector<16x512xf32>
    %684 = tpu.matmul %683, %581, %cst_193 {dimension_numbers = #tpu.dot_dimension_numbers<[1], [0], [0], [1], [0, 0, 1, 1], [], []>} : vector<16x128xbf16>, vector<128x512xbf16>, vector<16x512xf32> -> vector<16x512xf32>
    %685 = arith.addf %579, %684 : vector<16x512xf32>
    %686 = vector.extract_strided_slice %685 {offsets = [0, 0], sizes = [16, 128], strides = [1, 1]} : vector<16x512xf32> to vector<16x128xf32>
    %687 = arith.negf %686 : vector<16x128xf32>
    %688 = math.exp %687 : vector<16x128xf32>
    %cst_194 = arith.constant 1.000000e+00 : f32
    %689 = vector.broadcast %cst_194 : f32 to vector<16x128xf32>
    %690 = arith.addf %689, %688 : vector<16x128xf32>
    %691 = arith.divf %689, %690 : vector<16x128xf32>
    %692 = vector.extract_strided_slice %685 {offsets = [0, 128], sizes = [16, 128], strides = [1, 1]} : vector<16x512xf32> to vector<16x128xf32>
    %693 = arith.negf %692 : vector<16x128xf32>
    %694 = math.exp %693 : vector<16x128xf32>
    %cst_195 = arith.constant 1.000000e+00 : f32
    %695 = vector.broadcast %cst_195 : f32 to vector<16x128xf32>
    %696 = arith.addf %695, %694 : vector<16x128xf32>
    %697 = arith.divf %695, %696 : vector<16x128xf32>
    %698 = vector.extract_strided_slice %685 {offsets = [0, 256], sizes = [16, 128], strides = [1, 1]} : vector<16x512xf32> to vector<16x128xf32>
    %699 = math.tanh %698 : vector<16x128xf32>
    %700 = vector.extract_strided_slice %685 {offsets = [0, 384], sizes = [16, 128], strides = [1, 1]} : vector<16x512xf32> to vector<16x128xf32>
    %701 = arith.negf %700 : vector<16x128xf32>
    %702 = math.exp %701 : vector<16x128xf32>
    %cst_196 = arith.constant 1.000000e+00 : f32
    %703 = vector.broadcast %cst_196 : f32 to vector<16x128xf32>
    %704 = arith.addf %703, %702 : vector<16x128xf32>
    %705 = arith.divf %703, %704 : vector<16x128xf32>
    %706 = arith.mulf %697, %675 : vector<16x128xf32>
    %707 = arith.mulf %691, %699 : vector<16x128xf32>
    %708 = arith.addf %706, %707 : vector<16x128xf32>
    %709 = math.tanh %708 : vector<16x128xf32>
    %710 = arith.mulf %705, %709 : vector<16x128xf32>
    %711 = arith.truncf %710 : vector<16x128xf32> to vector<16x128xbf16>
    %712 = arith.index_cast %c3_i32_192 : i32 to index
    %c0_197 = arith.constant 0 : index
    %c0_198 = arith.constant 0 : index
    %713 = vector.load %arg12[%712, %c0_197, %c0_198] : memref<8x16x128xbf16, #tpu.memory_space<vmem>>, vector<1x16x128xbf16>
    %714 = vector.shape_cast %713 : vector<1x16x128xbf16> to vector<16x128xbf16>
    %715 = vector.shape_cast %711 : vector<16x128xbf16> to vector<1x16x128xbf16>
    tpu.vector_store %arg12[%712, %c0_197, %c0_198], %715 {strides = array<i32>} : memref<8x16x128xbf16, #tpu.memory_space<vmem>>, vector<1x16x128xbf16>,
    %c4_i32_199 = arith.constant 4 : i32
    %716 = arith.truncf %710 : vector<16x128xf32> to vector<16x128xbf16>
    %cst_200 = arith.constant dense<0.000000e+00> : vector<16x512xf32>
    %717 = tpu.matmul %716, %581, %cst_200 {dimension_numbers = #tpu.dot_dimension_numbers<[1], [0], [0], [1], [0, 0, 1, 1], [], []>} : vector<16x128xbf16>, vector<128x512xbf16>, vector<16x512xf32> -> vector<16x512xf32>
    %718 = arith.addf %579, %717 : vector<16x512xf32>
    %719 = vector.extract_strided_slice %718 {offsets = [0, 0], sizes = [16, 128], strides = [1, 1]} : vector<16x512xf32> to vector<16x128xf32>
    %720 = arith.negf %719 : vector<16x128xf32>
    %721 = math.exp %720 : vector<16x128xf32>
    %cst_201 = arith.constant 1.000000e+00 : f32
    %722 = vector.broadcast %cst_201 : f32 to vector<16x128xf32>
    %723 = arith.addf %722, %721 : vector<16x128xf32>
    %724 = arith.divf %722, %723 : vector<16x128xf32>
    %725 = vector.extract_strided_slice %718 {offsets = [0, 128], sizes = [16, 128], strides = [1, 1]} : vector<16x512xf32> to vector<16x128xf32>
    %726 = arith.negf %725 : vector<16x128xf32>
    %727 = math.exp %726 : vector<16x128xf32>
    %cst_202 = arith.constant 1.000000e+00 : f32
    %728 = vector.broadcast %cst_202 : f32 to vector<16x128xf32>
    %729 = arith.addf %728, %727 : vector<16x128xf32>
    %730 = arith.divf %728, %729 : vector<16x128xf32>
    %731 = vector.extract_strided_slice %718 {offsets = [0, 256], sizes = [16, 128], strides = [1, 1]} : vector<16x512xf32> to vector<16x128xf32>
    %732 = math.tanh %731 : vector<16x128xf32>
    %733 = vector.extract_strided_slice %718 {offsets = [0, 384], sizes = [16, 128], strides = [1, 1]} : vector<16x512xf32> to vector<16x128xf32>
    %734 = arith.negf %733 : vector<16x128xf32>
    %735 = math.exp %734 : vector<16x128xf32>
    %cst_203 = arith.constant 1.000000e+00 : f32
    %736 = vector.broadcast %cst_203 : f32 to vector<16x128xf32>
    %737 = arith.addf %736, %735 : vector<16x128xf32>
    %738 = arith.divf %736, %737 : vector<16x128xf32>
    %739 = arith.mulf %730, %708 : vector<16x128xf32>
    %740 = arith.mulf %724, %732 : vector<16x128xf32>
    %741 = arith.addf %739, %740 : vector<16x128xf32>
    %742 = math.tanh %741 : vector<16x128xf32>
    %743 = arith.mulf %738, %742 : vector<16x128xf32>
    %744 = arith.truncf %743 : vector<16x128xf32> to vector<16x128xbf16>
    %745 = arith.index_cast %c4_i32_199 : i32 to index
    %c0_204 = arith.constant 0 : index
    %c0_205 = arith.constant 0 : index
    %746 = vector.load %arg12[%745, %c0_204, %c0_205] : memref<8x16x128xbf16, #tpu.memory_space<vmem>>, vector<1x16x128xbf16>
    %747 = vector.shape_cast %746 : vector<1x16x128xbf16> to vector<16x128xbf16>
    %748 = vector.shape_cast %744 : vector<16x128xbf16> to vector<1x16x128xbf16>
    tpu.vector_store %arg12[%745, %c0_204, %c0_205], %748 {strides = array<i32>} : memref<8x16x128xbf16, #tpu.memory_space<vmem>>, vector<1x16x128xbf16>,
    %c5_i32_206 = arith.constant 5 : i32
    %749 = arith.truncf %743 : vector<16x128xf32> to vector<16x128xbf16>
    %cst_207 = arith.constant dense<0.000000e+00> : vector<16x512xf32>
    %750 = tpu.matmul %749, %581, %cst_207 {dimension_numbers = #tpu.dot_dimension_numbers<[1], [0], [0], [1], [0, 0, 1, 1], [], []>} : vector<16x128xbf16>, vector<128x512xbf16>, vector<16x512xf32> -> vector<16x512xf32>
    %751 = arith.addf %579, %750 : vector<16x512xf32>
    %752 = vector.extract_strided_slice %751 {offsets = [0, 0], sizes = [16, 128], strides = [1, 1]} : vector<16x512xf32> to vector<16x128xf32>
    %753 = arith.negf %752 : vector<16x128xf32>
    %754 = math.exp %753 : vector<16x128xf32>
    %cst_208 = arith.constant 1.000000e+00 : f32
    %755 = vector.broadcast %cst_208 : f32 to vector<16x128xf32>
    %756 = arith.addf %755, %754 : vector<16x128xf32>
    %757 = arith.divf %755, %756 : vector<16x128xf32>
    %758 = vector.extract_strided_slice %751 {offsets = [0, 128], sizes = [16, 128], strides = [1, 1]} : vector<16x512xf32> to vector<16x128xf32>
    %759 = arith.negf %758 : vector<16x128xf32>
    %760 = math.exp %759 : vector<16x128xf32>
    %cst_209 = arith.constant 1.000000e+00 : f32
    %761 = vector.broadcast %cst_209 : f32 to vector<16x128xf32>
    %762 = arith.addf %761, %760 : vector<16x128xf32>
    %763 = arith.divf %761, %762 : vector<16x128xf32>
    %764 = vector.extract_strided_slice %751 {offsets = [0, 256], sizes = [16, 128], strides = [1, 1]} : vector<16x512xf32> to vector<16x128xf32>
    %765 = math.tanh %764 : vector<16x128xf32>
    %766 = vector.extract_strided_slice %751 {offsets = [0, 384], sizes = [16, 128], strides = [1, 1]} : vector<16x512xf32> to vector<16x128xf32>
    %767 = arith.negf %766 : vector<16x128xf32>
    %768 = math.exp %767 : vector<16x128xf32>
    %cst_210 = arith.constant 1.000000e+00 : f32
    %769 = vector.broadcast %cst_210 : f32 to vector<16x128xf32>
    %770 = arith.addf %769, %768 : vector<16x128xf32>
    %771 = arith.divf %769, %770 : vector<16x128xf32>
    %772 = arith.mulf %763, %741 : vector<16x128xf32>
    %773 = arith.mulf %757, %765 : vector<16x128xf32>
    %774 = arith.addf %772, %773 : vector<16x128xf32>
    %775 = math.tanh %774 : vector<16x128xf32>
    %776 = arith.mulf %771, %775 : vector<16x128xf32>
    %777 = arith.truncf %776 : vector<16x128xf32> to vector<16x128xbf16>
    %778 = arith.index_cast %c5_i32_206 : i32 to index
    %c0_211 = arith.constant 0 : index
    %c0_212 = arith.constant 0 : index
    %779 = vector.load %arg12[%778, %c0_211, %c0_212] : memref<8x16x128xbf16, #tpu.memory_space<vmem>>, vector<1x16x128xbf16>
    %780 = vector.shape_cast %779 : vector<1x16x128xbf16> to vector<16x128xbf16>
    %781 = vector.shape_cast %777 : vector<16x128xbf16> to vector<1x16x128xbf16>
    tpu.vector_store %arg12[%778, %c0_211, %c0_212], %781 {strides = array<i32>} : memref<8x16x128xbf16, #tpu.memory_space<vmem>>, vector<1x16x128xbf16>,
    %c6_i32_213 = arith.constant 6 : i32
    %782 = arith.truncf %776 : vector<16x128xf32> to vector<16x128xbf16>
    %cst_214 = arith.constant dense<0.000000e+00> : vector<16x512xf32>
    %783 = tpu.matmul %782, %581, %cst_214 {dimension_numbers = #tpu.dot_dimension_numbers<[1], [0], [0], [1], [0, 0, 1, 1], [], []>} : vector<16x128xbf16>, vector<128x512xbf16>, vector<16x512xf32> -> vector<16x512xf32>
    %784 = arith.addf %579, %783 : vector<16x512xf32>
    %785 = vector.extract_strided_slice %784 {offsets = [0, 0], sizes = [16, 128], strides = [1, 1]} : vector<16x512xf32> to vector<16x128xf32>
    %786 = arith.negf %785 : vector<16x128xf32>
    %787 = math.exp %786 : vector<16x128xf32>
    %cst_215 = arith.constant 1.000000e+00 : f32
    %788 = vector.broadcast %cst_215 : f32 to vector<16x128xf32>
    %789 = arith.addf %788, %787 : vector<16x128xf32>
    %790 = arith.divf %788, %789 : vector<16x128xf32>
    %791 = vector.extract_strided_slice %784 {offsets = [0, 128], sizes = [16, 128], strides = [1, 1]} : vector<16x512xf32> to vector<16x128xf32>
    %792 = arith.negf %791 : vector<16x128xf32>
    %793 = math.exp %792 : vector<16x128xf32>
    %cst_216 = arith.constant 1.000000e+00 : f32
    %794 = vector.broadcast %cst_216 : f32 to vector<16x128xf32>
    %795 = arith.addf %794, %793 : vector<16x128xf32>
    %796 = arith.divf %794, %795 : vector<16x128xf32>
    %797 = vector.extract_strided_slice %784 {offsets = [0, 256], sizes = [16, 128], strides = [1, 1]} : vector<16x512xf32> to vector<16x128xf32>
    %798 = math.tanh %797 : vector<16x128xf32>
    %799 = vector.extract_strided_slice %784 {offsets = [0, 384], sizes = [16, 128], strides = [1, 1]} : vector<16x512xf32> to vector<16x128xf32>
    %800 = arith.negf %799 : vector<16x128xf32>
    %801 = math.exp %800 : vector<16x128xf32>
    %cst_217 = arith.constant 1.000000e+00 : f32
    %802 = vector.broadcast %cst_217 : f32 to vector<16x128xf32>
    %803 = arith.addf %802, %801 : vector<16x128xf32>
    %804 = arith.divf %802, %803 : vector<16x128xf32>
    %805 = arith.mulf %796, %774 : vector<16x128xf32>
    %806 = arith.mulf %790, %798 : vector<16x128xf32>
    %807 = arith.addf %805, %806 : vector<16x128xf32>
    %808 = math.tanh %807 : vector<16x128xf32>
    %809 = arith.mulf %804, %808 : vector<16x128xf32>
    %810 = arith.truncf %809 : vector<16x128xf32> to vector<16x128xbf16>
    %811 = arith.index_cast %c6_i32_213 : i32 to index
    %c0_218 = arith.constant 0 : index
    %c0_219 = arith.constant 0 : index
    %812 = vector.load %arg12[%811, %c0_218, %c0_219] : memref<8x16x128xbf16, #tpu.memory_space<vmem>>, vector<1x16x128xbf16>
    %813 = vector.shape_cast %812 : vector<1x16x128xbf16> to vector<16x128xbf16>
    %814 = vector.shape_cast %810 : vector<16x128xbf16> to vector<1x16x128xbf16>
    tpu.vector_store %arg12[%811, %c0_218, %c0_219], %814 {strides = array<i32>} : memref<8x16x128xbf16, #tpu.memory_space<vmem>>, vector<1x16x128xbf16>,
    %c7_i32_220 = arith.constant 7 : i32
    %815 = arith.truncf %809 : vector<16x128xf32> to vector<16x128xbf16>
    %cst_221 = arith.constant dense<0.000000e+00> : vector<16x512xf32>
    %816 = tpu.matmul %815, %581, %cst_221 {dimension_numbers = #tpu.dot_dimension_numbers<[1], [0], [0], [1], [0, 0, 1, 1], [], []>} : vector<16x128xbf16>, vector<128x512xbf16>, vector<16x512xf32> -> vector<16x512xf32>
    %817 = arith.addf %579, %816 : vector<16x512xf32>
    %818 = vector.extract_strided_slice %817 {offsets = [0, 0], sizes = [16, 128], strides = [1, 1]} : vector<16x512xf32> to vector<16x128xf32>
    %819 = arith.negf %818 : vector<16x128xf32>
    %820 = math.exp %819 : vector<16x128xf32>
    %cst_222 = arith.constant 1.000000e+00 : f32
    %821 = vector.broadcast %cst_222 : f32 to vector<16x128xf32>
    %822 = arith.addf %821, %820 : vector<16x128xf32>
    %823 = arith.divf %821, %822 : vector<16x128xf32>
    %824 = vector.extract_strided_slice %817 {offsets = [0, 128], sizes = [16, 128], strides = [1, 1]} : vector<16x512xf32> to vector<16x128xf32>
    %825 = arith.negf %824 : vector<16x128xf32>
    %826 = math.exp %825 : vector<16x128xf32>
    %cst_223 = arith.constant 1.000000e+00 : f32
    %827 = vector.broadcast %cst_223 : f32 to vector<16x128xf32>
    %828 = arith.addf %827, %826 : vector<16x128xf32>
    %829 = arith.divf %827, %828 : vector<16x128xf32>
    %830 = vector.extract_strided_slice %817 {offsets = [0, 256], sizes = [16, 128], strides = [1, 1]} : vector<16x512xf32> to vector<16x128xf32>
    %831 = math.tanh %830 : vector<16x128xf32>
    %832 = vector.extract_strided_slice %817 {offsets = [0, 384], sizes = [16, 128], strides = [1, 1]} : vector<16x512xf32> to vector<16x128xf32>
    %833 = arith.negf %832 : vector<16x128xf32>
    %834 = math.exp %833 : vector<16x128xf32>
    %cst_224 = arith.constant 1.000000e+00 : f32
    %835 = vector.broadcast %cst_224 : f32 to vector<16x128xf32>
    %836 = arith.addf %835, %834 : vector<16x128xf32>
    %837 = arith.divf %835, %836 : vector<16x128xf32>
    %838 = arith.mulf %829, %807 : vector<16x128xf32>
    %839 = arith.mulf %823, %831 : vector<16x128xf32>
    %840 = arith.addf %838, %839 : vector<16x128xf32>
    %841 = math.tanh %840 : vector<16x128xf32>
    %842 = arith.mulf %837, %841 : vector<16x128xf32>
    %843 = arith.truncf %842 : vector<16x128xf32> to vector<16x128xbf16>
    %844 = arith.index_cast %c7_i32_220 : i32 to index
    %c0_225 = arith.constant 0 : index
    %c0_226 = arith.constant 0 : index
    %845 = vector.load %arg12[%844, %c0_225, %c0_226] : memref<8x16x128xbf16, #tpu.memory_space<vmem>>, vector<1x16x128xbf16>
    %846 = vector.shape_cast %845 : vector<1x16x128xbf16> to vector<16x128xbf16>
    %847 = vector.shape_cast %843 : vector<16x128xbf16> to vector<1x16x128xbf16>
    tpu.vector_store %arg12[%844, %c0_225, %c0_226], %847 {strides = array<i32>} : memref<8x16x128xbf16, #tpu.memory_space<vmem>>, vector<1x16x128xbf16>,
    %c8_i32_227 = arith.constant 8 : i32
    %c1_228 = arith.constant 1 : index
    %c0_229 = arith.constant 0 : index
    %c0_230 = arith.constant 0 : index
    %848 = vector.load %arg4[%c1_228, %c0_229, %c0_230] : memref<2x128x512xbf16, #tpu.memory_space<vmem>>, vector<1x128x512xbf16>
    %849 = vector.shape_cast %848 : vector<1x128x512xbf16> to vector<128x512xbf16>
    %c1_231 = arith.constant 1 : index
    %c0_232 = arith.constant 0 : index
    %c0_233 = arith.constant 0 : index
    %850 = vector.load %arg6[%c1_231, %c0_232, %c0_233] : memref<2x1x512xf32, #tpu.memory_space<vmem>>, vector<1x1x512xf32>
    %851 = vector.shape_cast %850 : vector<1x1x512xf32> to vector<1x512xf32>
    %c0_234 = arith.constant 0 : index
    %c0_235 = arith.constant 0 : index
    %c0_236 = arith.constant 0 : index
    %852 = vector.load %arg12[%c0_234, %c0_235, %c0_236] : memref<8x16x128xbf16, #tpu.memory_space<vmem>>, vector<8x16x128xbf16>
    %853 = vector.shape_cast %852 : vector<8x16x128xbf16> to vector<128x128xbf16>
    %cst_237 = arith.constant dense<0.000000e+00> : vector<128x512xf32>
    %854 = tpu.matmul %853, %849, %cst_237 {dimension_numbers = #tpu.dot_dimension_numbers<[1], [0], [0], [1], [0, 0, 1, 1], [], []>} : vector<128x128xbf16>, vector<128x512xbf16>, vector<128x512xf32> -> vector<128x512xf32>
    %855 = vector.broadcast %851 : vector<1x512xf32> to vector<128x512xf32>
    %856 = arith.addf %854, %855 : vector<128x512xf32>
    %857 = vector.shape_cast %856 : vector<128x512xf32> to vector<8x16x512xf32>
    %c0_238 = arith.constant 0 : index
    %c0_239 = arith.constant 0 : index
    %c0_240 = arith.constant 0 : index
    %858 = vector.load %arg13[%c0_238, %c0_239, %c0_240] : memref<8x16x512xf32, #tpu.memory_space<vmem>>, vector<8x16x512xf32>
    tpu.vector_store %arg13[%c0_238, %c0_239, %c0_240], %857 {strides = array<i32>} : memref<8x16x512xf32, #tpu.memory_space<vmem>>, vector<8x16x512xf32>,
    %c1_241 = arith.constant 1 : index
    %c0_242 = arith.constant 0 : index
    %c0_243 = arith.constant 0 : index
    %859 = vector.load %arg5[%c1_241, %c0_242, %c0_243] : memref<2x128x512xbf16, #tpu.memory_space<vmem>>, vector<1x128x512xbf16>
    %860 = vector.shape_cast %859 : vector<1x128x512xbf16> to vector<128x512xbf16>
    %cst_244 = arith.constant 0.000000e+00 : f32
    %861 = vector.broadcast %cst_244 : f32 to vector<16x128xf32>
    %cst_245 = arith.constant 0.000000e+00 : f32
    %862 = vector.broadcast %cst_245 : f32 to vector<16x128xf32>
    %c0_i32_246 = arith.constant 0 : i32
    %863 = arith.truncf %861 : vector<16x128xf32> to vector<16x128xbf16>
    %cst_247 = arith.constant dense<0.000000e+00> : vector<16x512xf32>
    %864 = tpu.matmul %863, %860, %cst_247 {dimension_numbers = #tpu.dot_dimension_numbers<[1], [0], [0], [1], [0, 0, 1, 1], [], []>} : vector<16x128xbf16>, vector<128x512xbf16>, vector<16x512xf32> -> vector<16x512xf32>
    %865 = arith.index_cast %c0_i32_246 : i32 to index
    %c0_248 = arith.constant 0 : index
    %c0_249 = arith.constant 0 : index
    %866 = vector.load %arg13[%865, %c0_248, %c0_249] : memref<8x16x512xf32, #tpu.memory_space<vmem>>, vector<1x16x512xf32>
    %867 = vector.shape_cast %866 : vector<1x16x512xf32> to vector<16x512xf32>
    %868 = arith.addf %867, %864 : vector<16x512xf32>
    %869 = vector.extract_strided_slice %868 {offsets = [0, 0], sizes = [16, 128], strides = [1, 1]} : vector<16x512xf32> to vector<16x128xf32>
    %870 = arith.negf %869 : vector<16x128xf32>
    %871 = math.exp %870 : vector<16x128xf32>
    %cst_250 = arith.constant 1.000000e+00 : f32
    %872 = vector.broadcast %cst_250 : f32 to vector<16x128xf32>
    %873 = arith.addf %872, %871 : vector<16x128xf32>
    %874 = arith.divf %872, %873 : vector<16x128xf32>
    %875 = vector.extract_strided_slice %868 {offsets = [0, 128], sizes = [16, 128], strides = [1, 1]} : vector<16x512xf32> to vector<16x128xf32>
    %876 = arith.negf %875 : vector<16x128xf32>
    %877 = math.exp %876 : vector<16x128xf32>
    %cst_251 = arith.constant 1.000000e+00 : f32
    %878 = vector.broadcast %cst_251 : f32 to vector<16x128xf32>
    %879 = arith.addf %878, %877 : vector<16x128xf32>
    %880 = arith.divf %878, %879 : vector<16x128xf32>
    %881 = vector.extract_strided_slice %868 {offsets = [0, 256], sizes = [16, 128], strides = [1, 1]} : vector<16x512xf32> to vector<16x128xf32>
    %882 = math.tanh %881 : vector<16x128xf32>
    %883 = vector.extract_strided_slice %868 {offsets = [0, 384], sizes = [16, 128], strides = [1, 1]} : vector<16x512xf32> to vector<16x128xf32>
    %884 = arith.negf %883 : vector<16x128xf32>
    %885 = math.exp %884 : vector<16x128xf32>
    %cst_252 = arith.constant 1.000000e+00 : f32
    %886 = vector.broadcast %cst_252 : f32 to vector<16x128xf32>
    %887 = arith.addf %886, %885 : vector<16x128xf32>
    %888 = arith.divf %886, %887 : vector<16x128xf32>
    %889 = arith.mulf %880, %862 : vector<16x128xf32>
    %890 = arith.mulf %874, %882 : vector<16x128xf32>
    %891 = arith.addf %889, %890 : vector<16x128xf32>
    %892 = math.tanh %891 : vector<16x128xf32>
    %893 = arith.mulf %888, %892 : vector<16x128xf32>
    %894 = arith.truncf %893 : vector<16x128xf32> to vector<16x128xbf16>
    %895 = arith.index_cast %c0_i32_246 : i32 to index
    %c0_253 = arith.constant 0 : index
    %c0_254 = arith.constant 0 : index
    %896 = vector.load %arg12[%895, %c0_253, %c0_254] : memref<8x16x128xbf16, #tpu.memory_space<vmem>>, vector<1x16x128xbf16>
    %897 = vector.shape_cast %896 : vector<1x16x128xbf16> to vector<16x128xbf16>
    %898 = vector.shape_cast %894 : vector<16x128xbf16> to vector<1x16x128xbf16>
    tpu.vector_store %arg12[%895, %c0_253, %c0_254], %898 {strides = array<i32>} : memref<8x16x128xbf16, #tpu.memory_space<vmem>>, vector<1x16x128xbf16>,
    %c1_i32_255 = arith.constant 1 : i32
    %899 = arith.truncf %893 : vector<16x128xf32> to vector<16x128xbf16>
    %cst_256 = arith.constant dense<0.000000e+00> : vector<16x512xf32>
    %900 = tpu.matmul %899, %860, %cst_256 {dimension_numbers = #tpu.dot_dimension_numbers<[1], [0], [0], [1], [0, 0, 1, 1], [], []>} : vector<16x128xbf16>, vector<128x512xbf16>, vector<16x512xf32> -> vector<16x512xf32>
    %901 = arith.index_cast %c1_i32_255 : i32 to index
    %c0_257 = arith.constant 0 : index
    %c0_258 = arith.constant 0 : index
    %902 = vector.load %arg13[%901, %c0_257, %c0_258] : memref<8x16x512xf32, #tpu.memory_space<vmem>>, vector<1x16x512xf32>
    %903 = vector.shape_cast %902 : vector<1x16x512xf32> to vector<16x512xf32>
    %904 = arith.addf %903, %900 : vector<16x512xf32>
    %905 = vector.extract_strided_slice %904 {offsets = [0, 0], sizes = [16, 128], strides = [1, 1]} : vector<16x512xf32> to vector<16x128xf32>
    %906 = arith.negf %905 : vector<16x128xf32>
    %907 = math.exp %906 : vector<16x128xf32>
    %cst_259 = arith.constant 1.000000e+00 : f32
    %908 = vector.broadcast %cst_259 : f32 to vector<16x128xf32>
    %909 = arith.addf %908, %907 : vector<16x128xf32>
    %910 = arith.divf %908, %909 : vector<16x128xf32>
    %911 = vector.extract_strided_slice %904 {offsets = [0, 128], sizes = [16, 128], strides = [1, 1]} : vector<16x512xf32> to vector<16x128xf32>
    %912 = arith.negf %911 : vector<16x128xf32>
    %913 = math.exp %912 : vector<16x128xf32>
    %cst_260 = arith.constant 1.000000e+00 : f32
    %914 = vector.broadcast %cst_260 : f32 to vector<16x128xf32>
    %915 = arith.addf %914, %913 : vector<16x128xf32>
    %916 = arith.divf %914, %915 : vector<16x128xf32>
    %917 = vector.extract_strided_slice %904 {offsets = [0, 256], sizes = [16, 128], strides = [1, 1]} : vector<16x512xf32> to vector<16x128xf32>
    %918 = math.tanh %917 : vector<16x128xf32>
    %919 = vector.extract_strided_slice %904 {offsets = [0, 384], sizes = [16, 128], strides = [1, 1]} : vector<16x512xf32> to vector<16x128xf32>
    %920 = arith.negf %919 : vector<16x128xf32>
    %921 = math.exp %920 : vector<16x128xf32>
    %cst_261 = arith.constant 1.000000e+00 : f32
    %922 = vector.broadcast %cst_261 : f32 to vector<16x128xf32>
    %923 = arith.addf %922, %921 : vector<16x128xf32>
    %924 = arith.divf %922, %923 : vector<16x128xf32>
    %925 = arith.mulf %916, %891 : vector<16x128xf32>
    %926 = arith.mulf %910, %918 : vector<16x128xf32>
    %927 = arith.addf %925, %926 : vector<16x128xf32>
    %928 = math.tanh %927 : vector<16x128xf32>
    %929 = arith.mulf %924, %928 : vector<16x128xf32>
    %930 = arith.truncf %929 : vector<16x128xf32> to vector<16x128xbf16>
    %931 = arith.index_cast %c1_i32_255 : i32 to index
    %c0_262 = arith.constant 0 : index
    %c0_263 = arith.constant 0 : index
    %932 = vector.load %arg12[%931, %c0_262, %c0_263] : memref<8x16x128xbf16, #tpu.memory_space<vmem>>, vector<1x16x128xbf16>
    %933 = vector.shape_cast %932 : vector<1x16x128xbf16> to vector<16x128xbf16>
    %934 = vector.shape_cast %930 : vector<16x128xbf16> to vector<1x16x128xbf16>
    tpu.vector_store %arg12[%931, %c0_262, %c0_263], %934 {strides = array<i32>} : memref<8x16x128xbf16, #tpu.memory_space<vmem>>, vector<1x16x128xbf16>,
    %c2_i32_264 = arith.constant 2 : i32
    %935 = arith.truncf %929 : vector<16x128xf32> to vector<16x128xbf16>
    %cst_265 = arith.constant dense<0.000000e+00> : vector<16x512xf32>
    %936 = tpu.matmul %935, %860, %cst_265 {dimension_numbers = #tpu.dot_dimension_numbers<[1], [0], [0], [1], [0, 0, 1, 1], [], []>} : vector<16x128xbf16>, vector<128x512xbf16>, vector<16x512xf32> -> vector<16x512xf32>
    %937 = arith.index_cast %c2_i32_264 : i32 to index
    %c0_266 = arith.constant 0 : index
    %c0_267 = arith.constant 0 : index
    %938 = vector.load %arg13[%937, %c0_266, %c0_267] : memref<8x16x512xf32, #tpu.memory_space<vmem>>, vector<1x16x512xf32>
    %939 = vector.shape_cast %938 : vector<1x16x512xf32> to vector<16x512xf32>
    %940 = arith.addf %939, %936 : vector<16x512xf32>
    %941 = vector.extract_strided_slice %940 {offsets = [0, 0], sizes = [16, 128], strides = [1, 1]} : vector<16x512xf32> to vector<16x128xf32>
    %942 = arith.negf %941 : vector<16x128xf32>
    %943 = math.exp %942 : vector<16x128xf32>
    %cst_268 = arith.constant 1.000000e+00 : f32
    %944 = vector.broadcast %cst_268 : f32 to vector<16x128xf32>
    %945 = arith.addf %944, %943 : vector<16x128xf32>
    %946 = arith.divf %944, %945 : vector<16x128xf32>
    %947 = vector.extract_strided_slice %940 {offsets = [0, 128], sizes = [16, 128], strides = [1, 1]} : vector<16x512xf32> to vector<16x128xf32>
    %948 = arith.negf %947 : vector<16x128xf32>
    %949 = math.exp %948 : vector<16x128xf32>
    %cst_269 = arith.constant 1.000000e+00 : f32
    %950 = vector.broadcast %cst_269 : f32 to vector<16x128xf32>
    %951 = arith.addf %950, %949 : vector<16x128xf32>
    %952 = arith.divf %950, %951 : vector<16x128xf32>
    %953 = vector.extract_strided_slice %940 {offsets = [0, 256], sizes = [16, 128], strides = [1, 1]} : vector<16x512xf32> to vector<16x128xf32>
    %954 = math.tanh %953 : vector<16x128xf32>
    %955 = vector.extract_strided_slice %940 {offsets = [0, 384], sizes = [16, 128], strides = [1, 1]} : vector<16x512xf32> to vector<16x128xf32>
    %956 = arith.negf %955 : vector<16x128xf32>
    %957 = math.exp %956 : vector<16x128xf32>
    %cst_270 = arith.constant 1.000000e+00 : f32
    %958 = vector.broadcast %cst_270 : f32 to vector<16x128xf32>
    %959 = arith.addf %958, %957 : vector<16x128xf32>
    %960 = arith.divf %958, %959 : vector<16x128xf32>
    %961 = arith.mulf %952, %927 : vector<16x128xf32>
    %962 = arith.mulf %946, %954 : vector<16x128xf32>
    %963 = arith.addf %961, %962 : vector<16x128xf32>
    %964 = math.tanh %963 : vector<16x128xf32>
    %965 = arith.mulf %960, %964 : vector<16x128xf32>
    %966 = arith.truncf %965 : vector<16x128xf32> to vector<16x128xbf16>
    %967 = arith.index_cast %c2_i32_264 : i32 to index
    %c0_271 = arith.constant 0 : index
    %c0_272 = arith.constant 0 : index
    %968 = vector.load %arg12[%967, %c0_271, %c0_272] : memref<8x16x128xbf16, #tpu.memory_space<vmem>>, vector<1x16x128xbf16>
    %969 = vector.shape_cast %968 : vector<1x16x128xbf16> to vector<16x128xbf16>
    %970 = vector.shape_cast %966 : vector<16x128xbf16> to vector<1x16x128xbf16>
    tpu.vector_store %arg12[%967, %c0_271, %c0_272], %970 {strides = array<i32>} : memref<8x16x128xbf16, #tpu.memory_space<vmem>>, vector<1x16x128xbf16>,
    %c3_i32_273 = arith.constant 3 : i32
    %971 = arith.truncf %965 : vector<16x128xf32> to vector<16x128xbf16>
    %cst_274 = arith.constant dense<0.000000e+00> : vector<16x512xf32>
    %972 = tpu.matmul %971, %860, %cst_274 {dimension_numbers = #tpu.dot_dimension_numbers<[1], [0], [0], [1], [0, 0, 1, 1], [], []>} : vector<16x128xbf16>, vector<128x512xbf16>, vector<16x512xf32> -> vector<16x512xf32>
    %973 = arith.index_cast %c3_i32_273 : i32 to index
    %c0_275 = arith.constant 0 : index
    %c0_276 = arith.constant 0 : index
    %974 = vector.load %arg13[%973, %c0_275, %c0_276] : memref<8x16x512xf32, #tpu.memory_space<vmem>>, vector<1x16x512xf32>
    %975 = vector.shape_cast %974 : vector<1x16x512xf32> to vector<16x512xf32>
    %976 = arith.addf %975, %972 : vector<16x512xf32>
    %977 = vector.extract_strided_slice %976 {offsets = [0, 0], sizes = [16, 128], strides = [1, 1]} : vector<16x512xf32> to vector<16x128xf32>
    %978 = arith.negf %977 : vector<16x128xf32>
    %979 = math.exp %978 : vector<16x128xf32>
    %cst_277 = arith.constant 1.000000e+00 : f32
    %980 = vector.broadcast %cst_277 : f32 to vector<16x128xf32>
    %981 = arith.addf %980, %979 : vector<16x128xf32>
    %982 = arith.divf %980, %981 : vector<16x128xf32>
    %983 = vector.extract_strided_slice %976 {offsets = [0, 128], sizes = [16, 128], strides = [1, 1]} : vector<16x512xf32> to vector<16x128xf32>
    %984 = arith.negf %983 : vector<16x128xf32>
    %985 = math.exp %984 : vector<16x128xf32>
    %cst_278 = arith.constant 1.000000e+00 : f32
    %986 = vector.broadcast %cst_278 : f32 to vector<16x128xf32>
    %987 = arith.addf %986, %985 : vector<16x128xf32>
    %988 = arith.divf %986, %987 : vector<16x128xf32>
    %989 = vector.extract_strided_slice %976 {offsets = [0, 256], sizes = [16, 128], strides = [1, 1]} : vector<16x512xf32> to vector<16x128xf32>
    %990 = math.tanh %989 : vector<16x128xf32>
    %991 = vector.extract_strided_slice %976 {offsets = [0, 384], sizes = [16, 128], strides = [1, 1]} : vector<16x512xf32> to vector<16x128xf32>
    %992 = arith.negf %991 : vector<16x128xf32>
    %993 = math.exp %992 : vector<16x128xf32>
    %cst_279 = arith.constant 1.000000e+00 : f32
    %994 = vector.broadcast %cst_279 : f32 to vector<16x128xf32>
    %995 = arith.addf %994, %993 : vector<16x128xf32>
    %996 = arith.divf %994, %995 : vector<16x128xf32>
    %997 = arith.mulf %988, %963 : vector<16x128xf32>
    %998 = arith.mulf %982, %990 : vector<16x128xf32>
    %999 = arith.addf %997, %998 : vector<16x128xf32>
    %1000 = math.tanh %999 : vector<16x128xf32>
    %1001 = arith.mulf %996, %1000 : vector<16x128xf32>
    %1002 = arith.truncf %1001 : vector<16x128xf32> to vector<16x128xbf16>
    %1003 = arith.index_cast %c3_i32_273 : i32 to index
    %c0_280 = arith.constant 0 : index
    %c0_281 = arith.constant 0 : index
    %1004 = vector.load %arg12[%1003, %c0_280, %c0_281] : memref<8x16x128xbf16, #tpu.memory_space<vmem>>, vector<1x16x128xbf16>
    %1005 = vector.shape_cast %1004 : vector<1x16x128xbf16> to vector<16x128xbf16>
    %1006 = vector.shape_cast %1002 : vector<16x128xbf16> to vector<1x16x128xbf16>
    tpu.vector_store %arg12[%1003, %c0_280, %c0_281], %1006 {strides = array<i32>} : memref<8x16x128xbf16, #tpu.memory_space<vmem>>, vector<1x16x128xbf16>,
    %c4_i32_282 = arith.constant 4 : i32
    %1007 = arith.truncf %1001 : vector<16x128xf32> to vector<16x128xbf16>
    %cst_283 = arith.constant dense<0.000000e+00> : vector<16x512xf32>
    %1008 = tpu.matmul %1007, %860, %cst_283 {dimension_numbers = #tpu.dot_dimension_numbers<[1], [0], [0], [1], [0, 0, 1, 1], [], []>} : vector<16x128xbf16>, vector<128x512xbf16>, vector<16x512xf32> -> vector<16x512xf32>
    %1009 = arith.index_cast %c4_i32_282 : i32 to index
    %c0_284 = arith.constant 0 : index
    %c0_285 = arith.constant 0 : index
    %1010 = vector.load %arg13[%1009, %c0_284, %c0_285] : memref<8x16x512xf32, #tpu.memory_space<vmem>>, vector<1x16x512xf32>
    %1011 = vector.shape_cast %1010 : vector<1x16x512xf32> to vector<16x512xf32>
    %1012 = arith.addf %1011, %1008 : vector<16x512xf32>
    %1013 = vector.extract_strided_slice %1012 {offsets = [0, 0], sizes = [16, 128], strides = [1, 1]} : vector<16x512xf32> to vector<16x128xf32>
    %1014 = arith.negf %1013 : vector<16x128xf32>
    %1015 = math.exp %1014 : vector<16x128xf32>
    %cst_286 = arith.constant 1.000000e+00 : f32
    %1016 = vector.broadcast %cst_286 : f32 to vector<16x128xf32>
    %1017 = arith.addf %1016, %1015 : vector<16x128xf32>
    %1018 = arith.divf %1016, %1017 : vector<16x128xf32>
    %1019 = vector.extract_strided_slice %1012 {offsets = [0, 128], sizes = [16, 128], strides = [1, 1]} : vector<16x512xf32> to vector<16x128xf32>
    %1020 = arith.negf %1019 : vector<16x128xf32>
    %1021 = math.exp %1020 : vector<16x128xf32>
    %cst_287 = arith.constant 1.000000e+00 : f32
    %1022 = vector.broadcast %cst_287 : f32 to vector<16x128xf32>
    %1023 = arith.addf %1022, %1021 : vector<16x128xf32>
    %1024 = arith.divf %1022, %1023 : vector<16x128xf32>
    %1025 = vector.extract_strided_slice %1012 {offsets = [0, 256], sizes = [16, 128], strides = [1, 1]} : vector<16x512xf32> to vector<16x128xf32>
    %1026 = math.tanh %1025 : vector<16x128xf32>
    %1027 = vector.extract_strided_slice %1012 {offsets = [0, 384], sizes = [16, 128], strides = [1, 1]} : vector<16x512xf32> to vector<16x128xf32>
    %1028 = arith.negf %1027 : vector<16x128xf32>
    %1029 = math.exp %1028 : vector<16x128xf32>
    %cst_288 = arith.constant 1.000000e+00 : f32
    %1030 = vector.broadcast %cst_288 : f32 to vector<16x128xf32>
    %1031 = arith.addf %1030, %1029 : vector<16x128xf32>
    %1032 = arith.divf %1030, %1031 : vector<16x128xf32>
    %1033 = arith.mulf %1024, %999 : vector<16x128xf32>
    %1034 = arith.mulf %1018, %1026 : vector<16x128xf32>
    %1035 = arith.addf %1033, %1034 : vector<16x128xf32>
    %1036 = math.tanh %1035 : vector<16x128xf32>
    %1037 = arith.mulf %1032, %1036 : vector<16x128xf32>
    %1038 = arith.truncf %1037 : vector<16x128xf32> to vector<16x128xbf16>
    %1039 = arith.index_cast %c4_i32_282 : i32 to index
    %c0_289 = arith.constant 0 : index
    %c0_290 = arith.constant 0 : index
    %1040 = vector.load %arg12[%1039, %c0_289, %c0_290] : memref<8x16x128xbf16, #tpu.memory_space<vmem>>, vector<1x16x128xbf16>
    %1041 = vector.shape_cast %1040 : vector<1x16x128xbf16> to vector<16x128xbf16>
    %1042 = vector.shape_cast %1038 : vector<16x128xbf16> to vector<1x16x128xbf16>
    tpu.vector_store %arg12[%1039, %c0_289, %c0_290], %1042 {strides = array<i32>} : memref<8x16x128xbf16, #tpu.memory_space<vmem>>, vector<1x16x128xbf16>,
    %c5_i32_291 = arith.constant 5 : i32
    %1043 = arith.truncf %1037 : vector<16x128xf32> to vector<16x128xbf16>
    %cst_292 = arith.constant dense<0.000000e+00> : vector<16x512xf32>
    %1044 = tpu.matmul %1043, %860, %cst_292 {dimension_numbers = #tpu.dot_dimension_numbers<[1], [0], [0], [1], [0, 0, 1, 1], [], []>} : vector<16x128xbf16>, vector<128x512xbf16>, vector<16x512xf32> -> vector<16x512xf32>
    %1045 = arith.index_cast %c5_i32_291 : i32 to index
    %c0_293 = arith.constant 0 : index
    %c0_294 = arith.constant 0 : index
    %1046 = vector.load %arg13[%1045, %c0_293, %c0_294] : memref<8x16x512xf32, #tpu.memory_space<vmem>>, vector<1x16x512xf32>
    %1047 = vector.shape_cast %1046 : vector<1x16x512xf32> to vector<16x512xf32>
    %1048 = arith.addf %1047, %1044 : vector<16x512xf32>
    %1049 = vector.extract_strided_slice %1048 {offsets = [0, 0], sizes = [16, 128], strides = [1, 1]} : vector<16x512xf32> to vector<16x128xf32>
    %1050 = arith.negf %1049 : vector<16x128xf32>
    %1051 = math.exp %1050 : vector<16x128xf32>
    %cst_295 = arith.constant 1.000000e+00 : f32
    %1052 = vector.broadcast %cst_295 : f32 to vector<16x128xf32>
    %1053 = arith.addf %1052, %1051 : vector<16x128xf32>
    %1054 = arith.divf %1052, %1053 : vector<16x128xf32>
    %1055 = vector.extract_strided_slice %1048 {offsets = [0, 128], sizes = [16, 128], strides = [1, 1]} : vector<16x512xf32> to vector<16x128xf32>
    %1056 = arith.negf %1055 : vector<16x128xf32>
    %1057 = math.exp %1056 : vector<16x128xf32>
    %cst_296 = arith.constant 1.000000e+00 : f32
    %1058 = vector.broadcast %cst_296 : f32 to vector<16x128xf32>
    %1059 = arith.addf %1058, %1057 : vector<16x128xf32>
    %1060 = arith.divf %1058, %1059 : vector<16x128xf32>
    %1061 = vector.extract_strided_slice %1048 {offsets = [0, 256], sizes = [16, 128], strides = [1, 1]} : vector<16x512xf32> to vector<16x128xf32>
    %1062 = math.tanh %1061 : vector<16x128xf32>
    %1063 = vector.extract_strided_slice %1048 {offsets = [0, 384], sizes = [16, 128], strides = [1, 1]} : vector<16x512xf32> to vector<16x128xf32>
    %1064 = arith.negf %1063 : vector<16x128xf32>
    %1065 = math.exp %1064 : vector<16x128xf32>
    %cst_297 = arith.constant 1.000000e+00 : f32
    %1066 = vector.broadcast %cst_297 : f32 to vector<16x128xf32>
    %1067 = arith.addf %1066, %1065 : vector<16x128xf32>
    %1068 = arith.divf %1066, %1067 : vector<16x128xf32>
    %1069 = arith.mulf %1060, %1035 : vector<16x128xf32>
    %1070 = arith.mulf %1054, %1062 : vector<16x128xf32>
    %1071 = arith.addf %1069, %1070 : vector<16x128xf32>
    %1072 = math.tanh %1071 : vector<16x128xf32>
    %1073 = arith.mulf %1068, %1072 : vector<16x128xf32>
    %1074 = arith.truncf %1073 : vector<16x128xf32> to vector<16x128xbf16>
    %1075 = arith.index_cast %c5_i32_291 : i32 to index
    %c0_298 = arith.constant 0 : index
    %c0_299 = arith.constant 0 : index
    %1076 = vector.load %arg12[%1075, %c0_298, %c0_299] : memref<8x16x128xbf16, #tpu.memory_space<vmem>>, vector<1x16x128xbf16>
    %1077 = vector.shape_cast %1076 : vector<1x16x128xbf16> to vector<16x128xbf16>
    %1078 = vector.shape_cast %1074 : vector<16x128xbf16> to vector<1x16x128xbf16>
    tpu.vector_store %arg12[%1075, %c0_298, %c0_299], %1078 {strides = array<i32>} : memref<8x16x128xbf16, #tpu.memory_space<vmem>>, vector<1x16x128xbf16>,
    %c6_i32_300 = arith.constant 6 : i32
    %1079 = arith.truncf %1073 : vector<16x128xf32> to vector<16x128xbf16>
    %cst_301 = arith.constant dense<0.000000e+00> : vector<16x512xf32>
    %1080 = tpu.matmul %1079, %860, %cst_301 {dimension_numbers = #tpu.dot_dimension_numbers<[1], [0], [0], [1], [0, 0, 1, 1], [], []>} : vector<16x128xbf16>, vector<128x512xbf16>, vector<16x512xf32> -> vector<16x512xf32>
    %1081 = arith.index_cast %c6_i32_300 : i32 to index
    %c0_302 = arith.constant 0 : index
    %c0_303 = arith.constant 0 : index
    %1082 = vector.load %arg13[%1081, %c0_302, %c0_303] : memref<8x16x512xf32, #tpu.memory_space<vmem>>, vector<1x16x512xf32>
    %1083 = vector.shape_cast %1082 : vector<1x16x512xf32> to vector<16x512xf32>
    %1084 = arith.addf %1083, %1080 : vector<16x512xf32>
    %1085 = vector.extract_strided_slice %1084 {offsets = [0, 0], sizes = [16, 128], strides = [1, 1]} : vector<16x512xf32> to vector<16x128xf32>
    %1086 = arith.negf %1085 : vector<16x128xf32>
    %1087 = math.exp %1086 : vector<16x128xf32>
    %cst_304 = arith.constant 1.000000e+00 : f32
    %1088 = vector.broadcast %cst_304 : f32 to vector<16x128xf32>
    %1089 = arith.addf %1088, %1087 : vector<16x128xf32>
    %1090 = arith.divf %1088, %1089 : vector<16x128xf32>
    %1091 = vector.extract_strided_slice %1084 {offsets = [0, 128], sizes = [16, 128], strides = [1, 1]} : vector<16x512xf32> to vector<16x128xf32>
    %1092 = arith.negf %1091 : vector<16x128xf32>
    %1093 = math.exp %1092 : vector<16x128xf32>
    %cst_305 = arith.constant 1.000000e+00 : f32
    %1094 = vector.broadcast %cst_305 : f32 to vector<16x128xf32>
    %1095 = arith.addf %1094, %1093 : vector<16x128xf32>
    %1096 = arith.divf %1094, %1095 : vector<16x128xf32>
    %1097 = vector.extract_strided_slice %1084 {offsets = [0, 256], sizes = [16, 128], strides = [1, 1]} : vector<16x512xf32> to vector<16x128xf32>
    %1098 = math.tanh %1097 : vector<16x128xf32>
    %1099 = vector.extract_strided_slice %1084 {offsets = [0, 384], sizes = [16, 128], strides = [1, 1]} : vector<16x512xf32> to vector<16x128xf32>
    %1100 = arith.negf %1099 : vector<16x128xf32>
    %1101 = math.exp %1100 : vector<16x128xf32>
    %cst_306 = arith.constant 1.000000e+00 : f32
    %1102 = vector.broadcast %cst_306 : f32 to vector<16x128xf32>
    %1103 = arith.addf %1102, %1101 : vector<16x128xf32>
    %1104 = arith.divf %1102, %1103 : vector<16x128xf32>
    %1105 = arith.mulf %1096, %1071 : vector<16x128xf32>
    %1106 = arith.mulf %1090, %1098 : vector<16x128xf32>
    %1107 = arith.addf %1105, %1106 : vector<16x128xf32>
    %1108 = math.tanh %1107 : vector<16x128xf32>
    %1109 = arith.mulf %1104, %1108 : vector<16x128xf32>
    %1110 = arith.truncf %1109 : vector<16x128xf32> to vector<16x128xbf16>
    %1111 = arith.index_cast %c6_i32_300 : i32 to index
    %c0_307 = arith.constant 0 : index
    %c0_308 = arith.constant 0 : index
    %1112 = vector.load %arg12[%1111, %c0_307, %c0_308] : memref<8x16x128xbf16, #tpu.memory_space<vmem>>, vector<1x16x128xbf16>
    %1113 = vector.shape_cast %1112 : vector<1x16x128xbf16> to vector<16x128xbf16>
    %1114 = vector.shape_cast %1110 : vector<16x128xbf16> to vector<1x16x128xbf16>
    tpu.vector_store %arg12[%1111, %c0_307, %c0_308], %1114 {strides = array<i32>} : memref<8x16x128xbf16, #tpu.memory_space<vmem>>, vector<1x16x128xbf16>,
    %c7_i32_309 = arith.constant 7 : i32
    %1115 = arith.truncf %1109 : vector<16x128xf32> to vector<16x128xbf16>
    %cst_310 = arith.constant dense<0.000000e+00> : vector<16x512xf32>
    %1116 = tpu.matmul %1115, %860, %cst_310 {dimension_numbers = #tpu.dot_dimension_numbers<[1], [0], [0], [1], [0, 0, 1, 1], [], []>} : vector<16x128xbf16>, vector<128x512xbf16>, vector<16x512xf32> -> vector<16x512xf32>
    %1117 = arith.index_cast %c7_i32_309 : i32 to index
    %c0_311 = arith.constant 0 : index
    %c0_312 = arith.constant 0 : index
    %1118 = vector.load %arg13[%1117, %c0_311, %c0_312] : memref<8x16x512xf32, #tpu.memory_space<vmem>>, vector<1x16x512xf32>
    %1119 = vector.shape_cast %1118 : vector<1x16x512xf32> to vector<16x512xf32>
    %1120 = arith.addf %1119, %1116 : vector<16x512xf32>
    %1121 = vector.extract_strided_slice %1120 {offsets = [0, 0], sizes = [16, 128], strides = [1, 1]} : vector<16x512xf32> to vector<16x128xf32>
    %1122 = arith.negf %1121 : vector<16x128xf32>
    %1123 = math.exp %1122 : vector<16x128xf32>
    %cst_313 = arith.constant 1.000000e+00 : f32
    %1124 = vector.broadcast %cst_313 : f32 to vector<16x128xf32>
    %1125 = arith.addf %1124, %1123 : vector<16x128xf32>
    %1126 = arith.divf %1124, %1125 : vector<16x128xf32>
    %1127 = vector.extract_strided_slice %1120 {offsets = [0, 128], sizes = [16, 128], strides = [1, 1]} : vector<16x512xf32> to vector<16x128xf32>
    %1128 = arith.negf %1127 : vector<16x128xf32>
    %1129 = math.exp %1128 : vector<16x128xf32>
    %cst_314 = arith.constant 1.000000e+00 : f32
    %1130 = vector.broadcast %cst_314 : f32 to vector<16x128xf32>
    %1131 = arith.addf %1130, %1129 : vector<16x128xf32>
    %1132 = arith.divf %1130, %1131 : vector<16x128xf32>
    %1133 = vector.extract_strided_slice %1120 {offsets = [0, 256], sizes = [16, 128], strides = [1, 1]} : vector<16x512xf32> to vector<16x128xf32>
    %1134 = math.tanh %1133 : vector<16x128xf32>
    %1135 = vector.extract_strided_slice %1120 {offsets = [0, 384], sizes = [16, 128], strides = [1, 1]} : vector<16x512xf32> to vector<16x128xf32>
    %1136 = arith.negf %1135 : vector<16x128xf32>
    %1137 = math.exp %1136 : vector<16x128xf32>
    %cst_315 = arith.constant 1.000000e+00 : f32
    %1138 = vector.broadcast %cst_315 : f32 to vector<16x128xf32>
    %1139 = arith.addf %1138, %1137 : vector<16x128xf32>
    %1140 = arith.divf %1138, %1139 : vector<16x128xf32>
    %1141 = arith.mulf %1132, %1107 : vector<16x128xf32>
    %1142 = arith.mulf %1126, %1134 : vector<16x128xf32>
    %1143 = arith.addf %1141, %1142 : vector<16x128xf32>
    %1144 = math.tanh %1143 : vector<16x128xf32>
    %1145 = arith.mulf %1140, %1144 : vector<16x128xf32>
    %1146 = arith.truncf %1145 : vector<16x128xf32> to vector<16x128xbf16>
    %1147 = arith.index_cast %c7_i32_309 : i32 to index
    %c0_316 = arith.constant 0 : index
    %c0_317 = arith.constant 0 : index
    %1148 = vector.load %arg12[%1147, %c0_316, %c0_317] : memref<8x16x128xbf16, #tpu.memory_space<vmem>>, vector<1x16x128xbf16>
    %1149 = vector.shape_cast %1148 : vector<1x16x128xbf16> to vector<16x128xbf16>
    %1150 = vector.shape_cast %1146 : vector<16x128xbf16> to vector<1x16x128xbf16>
    tpu.vector_store %arg12[%1147, %c0_316, %c0_317], %1150 {strides = array<i32>} : memref<8x16x128xbf16, #tpu.memory_space<vmem>>, vector<1x16x128xbf16>,
    %c8_i32_318 = arith.constant 8 : i32
    %c0_319 = arith.constant 0 : index
    %c0_320 = arith.constant 0 : index
    %c0_321 = arith.constant 0 : index
    %1151 = vector.load %arg12[%c0_319, %c0_320, %c0_321] : memref<8x16x128xbf16, #tpu.memory_space<vmem>>, vector<8x16x128xbf16>
    %1152 = vector.shape_cast %1151 : vector<8x16x128xbf16> to vector<128x128xbf16>
    %c0_322 = arith.constant 0 : index
    %c0_323 = arith.constant 0 : index
    %1153 = vector.load %arg9[%c0_322, %c0_323] : memref<128x128xbf16, #tpu.memory_space<vmem>>, vector<128x128xbf16>
    %cst_324 = arith.constant dense<0.000000e+00> : vector<128x128xf32>
    %1154 = tpu.matmul %1152, %1153, %cst_324 {dimension_numbers = #tpu.dot_dimension_numbers<[1], [0], [0], [1], [0, 0, 1, 1], [], []>} : vector<128x128xbf16>, vector<128x128xbf16>, vector<128x128xf32> -> vector<128x128xf32>
    %c0_325 = arith.constant 0 : index
    %c0_326 = arith.constant 0 : index
    %1155 = vector.load %arg10[%c0_325, %c0_326] : memref<1x128xf32, #tpu.memory_space<vmem>>, vector<1x128xf32>
    %1156 = vector.broadcast %1155 : vector<1x128xf32> to vector<128x128xf32>
    %1157 = arith.addf %1154, %1156 : vector<128x128xf32>
    %1158 = vector.shape_cast %1157 : vector<128x128xf32> to vector<8x16x128xf32>
    %c0_327 = arith.constant 0 : index
    %c0_328 = arith.constant 0 : index
    %c0_329 = arith.constant 0 : index
    %1159 = vector.load %arg11[%c0_327, %c0_328, %c0_329] : memref<8x16x128xf32, #tpu.memory_space<vmem>>, vector<8x16x128xf32>
    tpu.vector_store %arg11[%c0_327, %c0_328, %c0_329], %1158 {strides = array<i32>} : memref<8x16x128xf32, #tpu.memory_space<vmem>>, vector<8x16x128xf32>,
    return
  }
}

</mosaic_0001>

<llo_original>
// kernel: lstm_autoencoder_forward.1
$region0: #{lstm_autoencoder_forward.1}
  #allocation0 [shape = 'u32[]', space=smem, size = 0x4, offset = 0x4, fixed_abs, tag = 'smem constant byte address 0x4 - core index']
  #allocation1 [shape = 'u32[72,128]{1,0:T(1,128)}', space=vmem, size = 0x9000, scoped, tag = 'internal scratch']
  #allocation2 [shape = 'bf16[8,16,128]{2,1,0:T(8,128)(2,1)}', space=vmem, size = 0x8000, scoped, tag = 'scratch operand']
  #allocation3 [shape = 'f32[8,16,512]{2,1,0:T(8,128)}', space=vmem, size = 0x40000, scoped, tag = 'scratch operand']
  %s0 = inlined_call_operand.vmem [shape: bf16[8,16,128], index: 0, kind: input, shape index: {}]
  %s1 = inlined_call_operand.hbm [shape: bf16[2,128,512], index: 1, kind: input, shape index: {}]
  %s2 = inlined_call_operand.hbm [shape: bf16[2,128,512], index: 2, kind: input, shape index: {}]
  %s3 = inlined_call_operand.vmem [shape: f32[2,1,512], index: 3, kind: input, shape index: {}]
  %s4 = inlined_call_operand.hbm [shape: bf16[2,128,512], index: 4, kind: input, shape index: {}]
  %s5 = inlined_call_operand.hbm [shape: bf16[2,128,512], index: 5, kind: input, shape index: {}]
  %s6 = inlined_call_operand.vmem [shape: f32[2,1,512], index: 6, kind: input, shape index: {}]
  %s7 = inlined_call_operand.vmem [shape: bf16[128,128], index: 7, kind: input, shape index: {}]
  %s8 = inlined_call_operand.vmem [shape: f32[1,128], index: 8, kind: input, shape index: {}]
  %s9 = inlined_call_operand.hbm [shape: bf16[128,128], index: 9, kind: input, shape index: {}]
  %s10 = inlined_call_operand.vmem [shape: f32[1,128], index: 10, kind: input, shape index: {}]
  %s11 = inlined_call_operand.vmem [shape: f32[8,16,128], index: 11, kind: output, shape index: {}]
  %s12 = sld [smem:[#allocation0]]
  $region74: #{lstm_autoencoder_forward.1} parent=0
    _
  %s14 = ssub.s32 1, %s12
  %s15 = scalar_select 0, %s14, %s12
  $region1: #{lstm_autoencoder_forward.1} parent=0
    #allocation4 [shape = 'u8[262144]{0}', space=vmem, size = 0x40000, scoped, tag = 'input window, operand 1, single buffered']
    #allocation5 [shape = 's32[1]{0}', space=sflag, size = 0x4, scoped, tag = 'scoped memory for lstm_autoencoder_forward.1']
    #allocation6 [shape = 'u8[262144]{0}', space=vmem, size = 0x40000, scoped, tag = 'input window, operand 2, single buffered']
    #allocation7 [shape = 's32[1]{0}', space=sflag, size = 0x4, scoped, tag = 'scoped memory for lstm_autoencoder_forward.1']
    #allocation8 [shape = 'u8[262144]{0}', space=vmem, size = 0x40000, scoped, tag = 'input window, operand 4, single buffered']
    #allocation9 [shape = 'u8[262144]{0}', space=vmem, size = 0x40000, scoped, tag = 'input window, operand 5, single buffered']
    #allocation10 [shape = 's32[1]{0}', space=sflag, size = 0x4, scoped, tag = 'scoped memory for lstm_autoencoder_forward.1']
    #allocation11 [shape = 'u8[32768]{0}', space=vmem, size = 0x8000, scoped, tag = 'input window, operand 9, single buffered']
    %16 = vsyncpa [#allocation5], 0
    %17 = vsyncpa [#allocation7], 0
    %18 = vsyncpa [#allocation10], 0
    // Predicated region
    $region2: #{lstm_autoencoder_forward.1} parent=1 // pred_check
      _
    $region3: #{lstm_autoencoder_forward.1} parent=1 // pred_check_branch
      %20 = sbr.rel (0) target = $region5
    $region4: #{lstm_autoencoder_forward.1} parent=1 // pred_region
      _
    $region5: #{lstm_autoencoder_forward.1} parent=1 // pred_fallthru
      _
    // Predicated region
    $region6: #{lstm_autoencoder_forward.1} parent=1 // pred_check
      _
    $region7: #{lstm_autoencoder_forward.1} parent=1 // pred_check_branch
      %22 = sbr.rel (0) target = $region9
    $region8: #{lstm_autoencoder_forward.1} parent=1 // pred_region
      %24 = vsyncadd [#allocation5], 0
      %s25 = sshll.u32 %s1, 4
      %s26 = int_to_ptr.hbm [resolvable:$true] %s25
      %s27 = sshll.u32 [#allocation4], 4
      %s28 = int_to_ptr.vmem [resolvable:$true] %s27
      %33 = dma.hbm_to_vmem [thread:$0]  %s26, 8192, %s28, [#allocation5], 256, 256, 16
    $region9: #{lstm_autoencoder_forward.1} parent=1 // pred_fallthru
      _
    // Predicated region
    $region10: #{lstm_autoencoder_forward.1} parent=1 // pred_check
      _
    $region11: #{lstm_autoencoder_forward.1} parent=1 // pred_check_branch
      %35 = sbr.rel (0) target = $region13
    $region12: #{lstm_autoencoder_forward.1} parent=1 // pred_region
      %37 = vsyncadd [#allocation7], 0
      %s38 = sshll.u32 %s2, 4
      %s39 = int_to_ptr.hbm [resolvable:$true] %s38
      %s40 = sshll.u32 [#allocation6], 4
      %s41 = int_to_ptr.vmem [resolvable:$true] %s40
      %46 = dma.hbm_to_vmem [thread:$0]  %s39, 8192, %s41, [#allocation7], 256, 256, 16
    $region13: #{lstm_autoencoder_forward.1} parent=1 // pred_fallthru
      _
    // Predicated region
    $region14: #{lstm_autoencoder_forward.1} parent=1 // pred_check
      _
    $region15: #{lstm_autoencoder_forward.1} parent=1 // pred_check_branch
      %48 = sbr.rel (0) target = $region17
    $region16: #{lstm_autoencoder_forward.1} parent=1 // pred_region
      _
    $region17: #{lstm_autoencoder_forward.1} parent=1 // pred_fallthru
      _
    // Predicated region
    $region18: #{lstm_autoencoder_forward.1} parent=1 // pred_check
      _
    $region19: #{lstm_autoencoder_forward.1} parent=1 // pred_check_branch
      %50 = sbr.rel (0) target = $region21
    $region20: #{lstm_autoencoder_forward.1} parent=1 // pred_region
      %52 = vsyncadd [#allocation7], 0
      %s53 = sshll.u32 %s4, 4
      %s54 = int_to_ptr.hbm [resolvable:$true] %s53
      %s55 = sshll.u32 [#allocation8], 4
      %s56 = int_to_ptr.vmem [resolvable:$true] %s55
      %61 = dma.hbm_to_vmem [thread:$0]  %s54, 8192, %s56, [#allocation7], 256, 256, 16
    $region21: #{lstm_autoencoder_forward.1} parent=1 // pred_fallthru
      _
    // Predicated region
    $region22: #{lstm_autoencoder_forward.1} parent=1 // pred_check
      _
    $region23: #{lstm_autoencoder_forward.1} parent=1 // pred_check_branch
      %63 = sbr.rel (0) target = $region25
    $region24: #{lstm_autoencoder_forward.1} parent=1 // pred_region
      %65 = vsyncadd [#allocation10], 0
      %s66 = sshll.u32 %s5, 4
      %s67 = int_to_ptr.hbm [resolvable:$true] %s66
      %s68 = sshll.u32 [#allocation9], 4
      %s69 = int_to_ptr.vmem [resolvable:$true] %s68
      %74 = dma.hbm_to_vmem [thread:$0]  %s67, 8192, %s69, [#allocation10], 256, 256, 16
    $region25: #{lstm_autoencoder_forward.1} parent=1 // pred_fallthru
      _
    // Predicated region
    $region26: #{lstm_autoencoder_forward.1} parent=1 // pred_check
      _
    $region27: #{lstm_autoencoder_forward.1} parent=1 // pred_check_branch
      %76 = sbr.rel (0) target = $region29
    $region28: #{lstm_autoencoder_forward.1} parent=1 // pred_region
      _
    $region29: #{lstm_autoencoder_forward.1} parent=1 // pred_fallthru
      _
    // Predicated region
    $region30: #{lstm_autoencoder_forward.1} parent=1 // pred_check
      _
    $region31: #{lstm_autoencoder_forward.1} parent=1 // pred_check_branch
      %78 = sbr.rel (0) target = $region33
    $region32: #{lstm_autoencoder_forward.1} parent=1 // pred_region
      _
    $region33: #{lstm_autoencoder_forward.1} parent=1 // pred_fallthru
      _
    // Predicated region
    $region34: #{lstm_autoencoder_forward.1} parent=1 // pred_check
      _
    $region35: #{lstm_autoencoder_forward.1} parent=1 // pred_check_branch
      %80 = sbr.rel (0) target = $region37
    $region36: #{lstm_autoencoder_forward.1} parent=1 // pred_region
      _
    $region37: #{lstm_autoencoder_forward.1} parent=1 // pred_fallthru
      _
    // Predicated region
    $region38: #{lstm_autoencoder_forward.1} parent=1 // pred_check
      _
    $region39: #{lstm_autoencoder_forward.1} parent=1 // pred_check_branch
      %82 = sbr.rel (0) target = $region41
    $region40: #{lstm_autoencoder_forward.1} parent=1 // pred_region
      %84 = vsyncadd [#allocation10], 0
      %s85 = sshll.u32 %s9, 4
      %s86 = int_to_ptr.hbm [resolvable:$true] %s85
      %s87 = sshll.u32 [#allocation11], 4
      %s88 = int_to_ptr.vmem [resolvable:$true] %s87
      %93 = dma.hbm_to_vmem [thread:$0]  %s86, 1024, %s88, [#allocation10], 64, 64, 4
    $region41: #{lstm_autoencoder_forward.1} parent=1 // pred_fallthru
      _
    // Predicated region
    $region42: #{lstm_autoencoder_forward.1} parent=1 // pred_check
      _
    $region43: #{lstm_autoencoder_forward.1} parent=1 // pred_check_branch
      %95 = sbr.rel (0) target = $region45
    $region44: #{lstm_autoencoder_forward.1} parent=1 // pred_region
      _
    $region45: #{lstm_autoencoder_forward.1} parent=1 // pred_fallthru
      _
    // Predicated region
    $region46: #{lstm_autoencoder_forward.1} parent=1 // pred_check
      _
    $region47: #{lstm_autoencoder_forward.1} parent=1 // pred_check_branch
      %97 = sbr.rel (0) target = $region49
    $region48: #{lstm_autoencoder_forward.1} parent=1 // pred_region
      %99 = dma.done [#allocation5], 8192
    $region49: #{lstm_autoencoder_forward.1} parent=1 // pred_fallthru
      _
    // Predicated region
    $region50: #{lstm_autoencoder_forward.1} parent=1 // pred_check
      _
    $region51: #{lstm_autoencoder_forward.1} parent=1 // pred_check_branch
      %101 = sbr.rel (0) target = $region53
    $region52: #{lstm_autoencoder_forward.1} parent=1 // pred_region
      %103 = dma.done [#allocation7], 8192
    $region53: #{lstm_autoencoder_forward.1} parent=1 // pred_fallthru
      _
    // Predicated region
    $region54: #{lstm_autoencoder_forward.1} parent=1 // pred_check
      _
    $region55: #{lstm_autoencoder_forward.1} parent=1 // pred_check_branch
      %105 = sbr.rel (0) target = $region57
    $region56: #{lstm_autoencoder_forward.1} parent=1 // pred_region
      %107 = dma.done [#allocation7], 8192
    $region57: #{lstm_autoencoder_forward.1} parent=1 // pred_fallthru
      _
    // Predicated region
    $region58: #{lstm_autoencoder_forward.1} parent=1 // pred_check
      _
    $region59: #{lstm_autoencoder_forward.1} parent=1 // pred_check_branch
      %109 = sbr.rel (0) target = $region61
    $region60: #{lstm_autoencoder_forward.1} parent=1 // pred_region
      %111 = dma.done [#allocation10], 8192
    $region61: #{lstm_autoencoder_forward.1} parent=1 // pred_fallthru
      _
    // Predicated region
    $region62: #{lstm_autoencoder_forward.1} parent=1 // pred_check
      _
    $region63: #{lstm_autoencoder_forward.1} parent=1 // pred_check_branch
      %113 = sbr.rel (0) target = $region65
    $region64: #{lstm_autoencoder_forward.1} parent=1 // pred_region
      %115 = dma.done [#allocation10], 1024
    $region65: #{lstm_autoencoder_forward.1} parent=1 // pred_fallthru
      _
    %v117 = vld [vmem:[#allocation4] sm:$0xff]
    %v118 = vld [vmem:[#allocation4 + $0x8] sm:$0xff]
    %v119 = vld [vmem:[#allocation4 + $0x10] sm:$0xff]
    %v120 = vld [vmem:[#allocation4 + $0x18] sm:$0xff]
    %v121 = vld [vmem:[#allocation4 + $0x20] sm:$0xff]
    %v122 = vld [vmem:[#allocation4 + $0x28] sm:$0xff]
    %v123 = vld [vmem:[#allocation4 + $0x30] sm:$0xff]
    %v124 = vld [vmem:[#allocation4 + $0x38] sm:$0xff]
    %v125 = vld [vmem:[#allocation4 + $0x40] sm:$0xff]
    %v126 = vld [vmem:[#allocation4 + $0x48] sm:$0xff]
    %v127 = vld [vmem:[#allocation4 + $0x50] sm:$0xff]
    %v128 = vld [vmem:[#allocation4 + $0x58] sm:$0xff]
    %v129 = vld [vmem:[#allocation4 + $0x60] sm:$0xff]
    %v130 = vld [vmem:[#allocation4 + $0x68] sm:$0xff]
    %v131 = vld [vmem:[#allocation4 + $0x70] sm:$0xff]
    %v132 = vld [vmem:[#allocation4 + $0x78] sm:$0xff]
    %v133 = vld [vmem:[#allocation4 + $0x80] sm:$0xff]
    %v134 = vld [vmem:[#allocation4 + $0x88] sm:$0xff]
    %v135 = vld [vmem:[#allocation4 + $0x90] sm:$0xff]
    %v136 = vld [vmem:[#allocation4 + $0x98] sm:$0xff]
    %v137 = vld [vmem:[#allocation4 + $0xa0] sm:$0xff]
    %v138 = vld [vmem:[#allocation4 + $0xa8] sm:$0xff]
    %v139 = vld [vmem:[#allocation4 + $0xb0] sm:$0xff]
    %v140 = vld [vmem:[#allocation4 + $0xb8] sm:$0xff]
    %v141 = vld [vmem:[#allocation4 + $0xc0] sm:$0xff]
    %v142 = vld [vmem:[#allocation4 + $0xc8] sm:$0xff]
    %v143 = vld [vmem:[#allocation4 + $0xd0] sm:$0xff]
    %v144 = vld [vmem:[#allocation4 + $0xd8] sm:$0xff]
    %v145 = vld [vmem:[#allocation4 + $0xe0] sm:$0xff]
    %v146 = vld [vmem:[#allocation4 + $0xe8] sm:$0xff]
    %v147 = vld [vmem:[#allocation4 + $0xf0] sm:$0xff]
    %v148 = vld [vmem:[#allocation4 + $0xf8] sm:$0xff]
    %v149 = vld [vmem:[%s3] sm:$0xf]
    %v150 = vld [vmem:[%s0] sm:$0xf]
    %v151 = vld [vmem:[%s0 + $0x4] sm:$0xf]
    %v152 = vld [vmem:[%s0 + $0x8] sm:$0xf]
    %v153 = vld [vmem:[%s0 + $0xc] sm:$0xf]
    %v154 = vld [vmem:[%s0 + $0x10] sm:$0xf]
    %v155 = vld [vmem:[%s0 + $0x14] sm:$0xf]
    %v156 = vld [vmem:[%s0 + $0x18] sm:$0xf]
    %v157 = vld [vmem:[%s0 + $0x1c] sm:$0xf]
    %v158 = vld [vmem:[%s0 + $0x20] sm:$0xf]
    %v159 = vld [vmem:[%s0 + $0x24] sm:$0xf]
    %v160 = vld [vmem:[%s0 + $0x28] sm:$0xf]
    %v161 = vld [vmem:[%s0 + $0x2c] sm:$0xf]
    %v162 = vld [vmem:[%s0 + $0x30] sm:$0xf]
    %v163 = vld [vmem:[%s0 + $0x34] sm:$0xf]
    %v164 = vld [vmem:[%s0 + $0x38] sm:$0xf]
    %v165 = vld [vmem:[%s0 + $0x3c] sm:$0xf]
    %v167 = vperm.slane %v149, 0
    %v168 = vperm.slane %v149, 1
    %v169 = vperm.slane %v149, 2
    %v170 = vperm.slane %v149, 3
    %v191 = vunpack.c.l.b16 %v150
    %v192 = vunpack.c.l.b16 %v151
    %v193 = vunpack.c.l.b16 %v152
    %v194 = vunpack.c.l.b16 %v153
    %v195 = vunpack.c.l.b16 %v154
    %v196 = vunpack.c.l.b16 %v155
    %v197 = vunpack.c.l.b16 %v156
    %v198 = vunpack.c.l.b16 %v157
    %v199 = vunpack.c.l.b16 %v158
    %v200 = vunpack.c.l.b16 %v159
    %v201 = vunpack.c.l.b16 %v160
    %v202 = vunpack.c.l.b16 %v161
    %v203 = vunpack.c.l.b16 %v162
    %v204 = vunpack.c.l.b16 %v163
    %v205 = vunpack.c.l.b16 %v164
    %v206 = vunpack.c.l.b16 %v165
    %v207 = vpack.c.b16 %v192, %v191
    %v208 = vpack.c.b16 %v194, %v193
    %v209 = vpack.c.b16 %v196, %v195
    %v210 = vpack.c.b16 %v198, %v197
    %v211 = vpack.c.b16 %v200, %v199
    %v212 = vpack.c.b16 %v202, %v201
    %v213 = vpack.c.b16 %v204, %v203
    %v214 = vpack.c.b16 %v206, %v205
    %v255 = vunpack.c.l.b16 %v117
    %v256 = vunpack.c.h.b16 %v117
    %v257 = vunpack.c.l.b16 %v118
    %v258 = vunpack.c.h.b16 %v118
    %v259 = vunpack.c.l.b16 %v119
    %v260 = vunpack.c.h.b16 %v119
    %v261 = vunpack.c.l.b16 %v120
    %v262 = vunpack.c.h.b16 %v120
    %v263 = vunpack.c.l.b16 %v121
    %v264 = vunpack.c.h.b16 %v121
    %v265 = vunpack.c.l.b16 %v122
    %v266 = vunpack.c.h.b16 %v122
    %v267 = vunpack.c.l.b16 %v123
    %v268 = vunpack.c.h.b16 %v123
    %v269 = vunpack.c.l.b16 %v124
    %v270 = vunpack.c.h.b16 %v124
    %v271 = vunpack.c.l.b16 %v125
    %v272 = vunpack.c.h.b16 %v125
    %v273 = vunpack.c.l.b16 %v126
    %v274 = vunpack.c.h.b16 %v126
    %v275 = vunpack.c.l.b16 %v127
    %v276 = vunpack.c.h.b16 %v127
    %v277 = vunpack.c.l.b16 %v128
    %v278 = vunpack.c.h.b16 %v128
    %v279 = vunpack.c.l.b16 %v129
    %v280 = vunpack.c.h.b16 %v129
    %v281 = vunpack.c.l.b16 %v130
    %v282 = vunpack.c.h.b16 %v130
    %v283 = vunpack.c.l.b16 %v131
    %v284 = vunpack.c.h.b16 %v131
    %v285 = vunpack.c.l.b16 %v132
    %v286 = vunpack.c.h.b16 %v132
    %v287 = vunpack.c.l.b16 %v133
    %v288 = vunpack.c.h.b16 %v133
    %v289 = vunpack.c.l.b16 %v134
    %v290 = vunpack.c.h.b16 %v134
    %v291 = vunpack.c.l.b16 %v135
    %v292 = vunpack.c.h.b16 %v135
    %v293 = vunpack.c.l.b16 %v136
    %v294 = vunpack.c.h.b16 %v136
    %v295 = vunpack.c.l.b16 %v137
    %v296 = vunpack.c.h.b16 %v137
    %v297 = vunpack.c.l.b16 %v138
    %v298 = vunpack.c.h.b16 %v138
    %v299 = vunpack.c.l.b16 %v139
    %v300 = vunpack.c.h.b16 %v139
    %v301 = vunpack.c.l.b16 %v140
    %v302 = vunpack.c.h.b16 %v140
    %v303 = vunpack.c.l.b16 %v141
    %v304 = vunpack.c.h.b16 %v141
    %v305 = vunpack.c.l.b16 %v142
    %v306 = vunpack.c.h.b16 %v142
    %v307 = vunpack.c.l.b16 %v143
    %v308 = vunpack.c.h.b16 %v143
    %v309 = vunpack.c.l.b16 %v144
    %v310 = vunpack.c.h.b16 %v144
    %v311 = vunpack.c.l.b16 %v145
    %v312 = vunpack.c.h.b16 %v145
    %v313 = vunpack.c.l.b16 %v146
    %v314 = vunpack.c.h.b16 %v146
    %v315 = vunpack.c.l.b16 %v147
    %v316 = vunpack.c.h.b16 %v147
    %v317 = vunpack.c.l.b16 %v148
    %v318 = vunpack.c.h.b16 %v148
    %v319 = vpack.c.b16 %v259, %v255
    %v320 = vpack.c.b16 %v260, %v256
    %v321 = vpack.c.b16 %v261, %v257
    %v322 = vpack.c.b16 %v262, %v258
    %v323 = vpack.c.b16 %v267, %v263
    %v324 = vpack.c.b16 %v268, %v264
    %v325 = vpack.c.b16 %v269, %v265
    %v326 = vpack.c.b16 %v270, %v266
    %v327 = vpack.c.b16 %v275, %v271
    %v328 = vpack.c.b16 %v276, %v272
    %v329 = vpack.c.b16 %v277, %v273
    %v330 = vpack.c.b16 %v278, %v274
    %v331 = vpack.c.b16 %v283, %v279
    %v332 = vpack.c.b16 %v284, %v280
    %v333 = vpack.c.b16 %v285, %v281
    %v334 = vpack.c.b16 %v286, %v282
    %v335 = vpack.c.b16 %v291, %v287
    %v336 = vpack.c.b16 %v292, %v288
    %v337 = vpack.c.b16 %v293, %v289
    %v338 = vpack.c.b16 %v294, %v290
    %v339 = vpack.c.b16 %v299, %v295
    %v340 = vpack.c.b16 %v300, %v296
    %v341 = vpack.c.b16 %v301, %v297
    %v342 = vpack.c.b16 %v302, %v298
    %v343 = vpack.c.b16 %v307, %v303
    %v344 = vpack.c.b16 %v308, %v304
    %v345 = vpack.c.b16 %v309, %v305
    %v346 = vpack.c.b16 %v310, %v306
    %v347 = vpack.c.b16 %v315, %v311
    %v348 = vpack.c.b16 %v316, %v312
    %v349 = vpack.c.b16 %v317, %v313
    %v350 = vpack.c.b16 %v318, %v314
    %383 = vmatpush.bf16.msra.mxu0 %v347
    %384 = vmatpush.bf16.msra.mxu0 %v343
    %385 = vmatpush.bf16.msra.mxu0 %v339
    %386 = vmatpush.bf16.msra.mxu0 %v335
    %387 = vmatpush.bf16.msra.mxu0 %v331
    %388 = vmatpush.bf16.msra.mxu0 %v327
    %389 = vmatpush.bf16.msra.mxu0 %v323
    %390 = vmatpush.bf16.msra.mxu0 %v319
    %391 = vmatmul.bf16.gmra.mxu0 %v207
    %v392 = vpop.f32.mrf.mxu0
    %v393 = vadd.f32 %v167, %v392
    %v394 = vpop.f32.mrf.mxu0
    %v395 = vadd.f32 %v167, %v394
    %396 = vmatmul.bf16.gmra.mxu0 %v208
    %v397 = vpop.f32.mrf.mxu0
    %v398 = vadd.f32 %v167, %v397
    %v399 = vpop.f32.mrf.mxu0
    %v400 = vadd.f32 %v167, %v399
    %401 = vmatmul.bf16.gmra.mxu0 %v209
    %v402 = vpop.f32.mrf.mxu0
    %v403 = vadd.f32 %v167, %v402
    %v404 = vpop.f32.mrf.mxu0
    %v405 = vadd.f32 %v167, %v404
    %406 = vmatmul.bf16.gmra.mxu0 %v210
    %v407 = vpop.f32.mrf.mxu0
    %v408 = vadd.f32 %v167, %v407
    %v409 = vpop.f32.mrf.mxu0
    %v410 = vadd.f32 %v167, %v409
    %411 = vmatmul.bf16.gmra.mxu0 %v211
    %v412 = vpop.f32.mrf.mxu0
    %v413 = vadd.f32 %v167, %v412
    %v414 = vpop.f32.mrf.mxu0
    %v415 = vadd.f32 %v167, %v414
    %416 = vmatmul.bf16.gmra.mxu0 %v212
    %v417 = vpop.f32.mrf.mxu0
    %v418 = vadd.f32 %v167, %v417
    %v419 = vpop.f32.mrf.mxu0
    %v420 = vadd.f32 %v167, %v419
    %421 = vmatmul.bf16.gmra.mxu0 %v213
    %v422 = vpop.f32.mrf.mxu0
    %v423 = vadd.f32 %v167, %v422
    %v424 = vpop.f32.mrf.mxu0
    %v425 = vadd.f32 %v167, %v424
    %426 = vmatmul.bf16.gmra.mxu0 %v214
    %v427 = vpop.f32.mrf.mxu0
    %v428 = vadd.f32 %v167, %v427
    %v429 = vpop.f32.mrf.mxu0
    %v430 = vadd.f32 %v167, %v429
    %431 = vdwg.mxu0
    %432 = vmatpush.bf16.msra.mxu0 %v348
    %433 = vmatpush.bf16.msra.mxu0 %v344
    %434 = vmatpush.bf16.msra.mxu0 %v340
    %435 = vmatpush.bf16.msra.mxu0 %v336
    %436 = vmatpush.bf16.msra.mxu0 %v332
    %437 = vmatpush.bf16.msra.mxu0 %v328
    %438 = vmatpush.bf16.msra.mxu0 %v324
    %439 = vmatpush.bf16.msra.mxu0 %v320
    %440 = vmatmul.bf16.gmra.mxu0 %v207
    %v441 = vpop.f32.mrf.mxu0
    %v442 = vadd.f32 %v168, %v441
    %v443 = vpop.f32.mrf.mxu0
    %v444 = vadd.f32 %v168, %v443
    %445 = vmatmul.bf16.gmra.mxu0 %v208
    %v446 = vpop.f32.mrf.mxu0
    %v447 = vadd.f32 %v168, %v446
    %v448 = vpop.f32.mrf.mxu0
    %v449 = vadd.f32 %v168, %v448
    %450 = vmatmul.bf16.gmra.mxu0 %v209
    %v451 = vpop.f32.mrf.mxu0
    %v452 = vadd.f32 %v168, %v451
    %v453 = vpop.f32.mrf.mxu0
    %v454 = vadd.f32 %v168, %v453
    %455 = vmatmul.bf16.gmra.mxu0 %v210
    %v456 = vpop.f32.mrf.mxu0
    %v457 = vadd.f32 %v168, %v456
    %v458 = vpop.f32.mrf.mxu0
    %v459 = vadd.f32 %v168, %v458
    %460 = vmatmul.bf16.gmra.mxu0 %v211
    %v461 = vpop.f32.mrf.mxu0
    %v462 = vadd.f32 %v168, %v461
    %v463 = vpop.f32.mrf.mxu0
    %v464 = vadd.f32 %v168, %v463
    %465 = vmatmul.bf16.gmra.mxu0 %v212
    %v466 = vpop.f32.mrf.mxu0
    %v467 = vadd.f32 %v168, %v466
    %v468 = vpop.f32.mrf.mxu0
    %v469 = vadd.f32 %v168, %v468
    %470 = vmatmul.bf16.gmra.mxu0 %v213
    %v471 = vpop.f32.mrf.mxu0
    %v472 = vadd.f32 %v168, %v471
    %v473 = vpop.f32.mrf.mxu0
    %v474 = vadd.f32 %v168, %v473
    %475 = vmatmul.bf16.gmra.mxu0 %v214
    %v476 = vpop.f32.mrf.mxu0
    %v477 = vadd.f32 %v168, %v476
    %v478 = vpop.f32.mrf.mxu0
    %v479 = vadd.f32 %v168, %v478
    %480 = vdwg.mxu0
    %481 = vmatpush.bf16.msra.mxu0 %v349
    %482 = vmatpush.bf16.msra.mxu0 %v345
    %483 = vmatpush.bf16.msra.mxu0 %v341
    %484 = vmatpush.bf16.msra.mxu0 %v337
    %485 = vmatpush.bf16.msra.mxu0 %v333
    %486 = vmatpush.bf16.msra.mxu0 %v329
    %487 = vmatpush.bf16.msra.mxu0 %v325
    %488 = vmatpush.bf16.msra.mxu0 %v321
    %489 = vmatmul.bf16.gmra.mxu0 %v207
    %v490 = vpop.f32.mrf.mxu0
    %v491 = vadd.f32 %v169, %v490
    %v492 = vpop.f32.mrf.mxu0
    %v493 = vadd.f32 %v169, %v492
    %494 = vmatmul.bf16.gmra.mxu0 %v208
    %v495 = vpop.f32.mrf.mxu0
    %v496 = vadd.f32 %v169, %v495
    %v497 = vpop.f32.mrf.mxu0
    %v498 = vadd.f32 %v169, %v497
    %499 = vmatmul.bf16.gmra.mxu0 %v209
    %v500 = vpop.f32.mrf.mxu0
    %v501 = vadd.f32 %v169, %v500
    %v502 = vpop.f32.mrf.mxu0
    %v503 = vadd.f32 %v169, %v502
    %504 = vmatmul.bf16.gmra.mxu0 %v210
    %v505 = vpop.f32.mrf.mxu0
    %v506 = vadd.f32 %v169, %v505
    %v507 = vpop.f32.mrf.mxu0
    %v508 = vadd.f32 %v169, %v507
    %509 = vmatmul.bf16.gmra.mxu0 %v211
    %v510 = vpop.f32.mrf.mxu0
    %v511 = vadd.f32 %v169, %v510
    %v512 = vpop.f32.mrf.mxu0
    %v513 = vadd.f32 %v169, %v512
    %514 = vmatmul.bf16.gmra.mxu0 %v212
    %v515 = vpop.f32.mrf.mxu0
    %v516 = vadd.f32 %v169, %v515
    %v517 = vpop.f32.mrf.mxu0
    %v518 = vadd.f32 %v169, %v517
    %519 = vmatmul.bf16.gmra.mxu0 %v213
    %v520 = vpop.f32.mrf.mxu0
    %v521 = vadd.f32 %v169, %v520
    %v522 = vpop.f32.mrf.mxu0
    %v523 = vadd.f32 %v169, %v522
    %524 = vmatmul.bf16.gmra.mxu0 %v214
    %v525 = vpop.f32.mrf.mxu0
    %v526 = vadd.f32 %v169, %v525
    %v527 = vpop.f32.mrf.mxu0
    %v528 = vadd.f32 %v169, %v527
    %529 = vdwg.mxu0
    %530 = vmatpush.bf16.msra.mxu0 %v350
    %531 = vmatpush.bf16.msra.mxu0 %v346
    %532 = vmatpush.bf16.msra.mxu0 %v342
    %533 = vmatpush.bf16.msra.mxu0 %v338
    %534 = vmatpush.bf16.msra.mxu0 %v334
    %535 = vmatpush.bf16.msra.mxu0 %v330
    %536 = vmatpush.bf16.msra.mxu0 %v326
    %537 = vmatpush.bf16.msra.mxu0 %v322
    %538 = vmatmul.bf16.gmra.mxu0 %v207
    %v539 = vpop.f32.mrf.mxu0
    %v540 = vadd.f32 %v170, %v539
    %v541 = vpop.f32.mrf.mxu0
    %v542 = vadd.f32 %v170, %v541
    %543 = vmatmul.bf16.gmra.mxu0 %v208
    %v544 = vpop.f32.mrf.mxu0
    %v545 = vadd.f32 %v170, %v544
    %v546 = vpop.f32.mrf.mxu0
    %v547 = vadd.f32 %v170, %v546
    %548 = vmatmul.bf16.gmra.mxu0 %v209
    %v549 = vpop.f32.mrf.mxu0
    %v550 = vadd.f32 %v170, %v549
    %v551 = vpop.f32.mrf.mxu0
    %v552 = vadd.f32 %v170, %v551
    %553 = vmatmul.bf16.gmra.mxu0 %v210
    %v554 = vpop.f32.mrf.mxu0
    %v555 = vadd.f32 %v170, %v554
    %v556 = vpop.f32.mrf.mxu0
    %v557 = vadd.f32 %v170, %v556
    %558 = vmatmul.bf16.gmra.mxu0 %v211
    %v559 = vpop.f32.mrf.mxu0
    %v560 = vadd.f32 %v170, %v559
    %v561 = vpop.f32.mrf.mxu0
    %v562 = vadd.f32 %v170, %v561
    %563 = vmatmul.bf16.gmra.mxu0 %v212
    %v564 = vpop.f32.mrf.mxu0
    %v565 = vadd.f32 %v170, %v564
    %v566 = vpop.f32.mrf.mxu0
    %v567 = vadd.f32 %v170, %v566
    %568 = vmatmul.bf16.gmra.mxu0 %v213
    %v569 = vpop.f32.mrf.mxu0
    %v570 = vadd.f32 %v170, %v569
    %v571 = vpop.f32.mrf.mxu0
    %v572 = vadd.f32 %v170, %v571
    %573 = vmatmul.bf16.gmra.mxu0 %v214
    %v574 = vpop.f32.mrf.mxu0
    %v575 = vadd.f32 %v170, %v574
    %v576 = vpop.f32.mrf.mxu0
    %v577 = vadd.f32 %v170, %v576
    %578 = vdwg.mxu0
    %579 = vst [vmem:[#allocation3] sm:$0xff] %v393
    %580 = vst [vmem:[#allocation3 + $0x8] sm:$0xff] %v442
    %581 = vst [vmem:[#allocation3 + $0x10] sm:$0xff] %v491
    %582 = vst [vmem:[#allocation3 + $0x18] sm:$0xff] %v540
    %583 = vst [vmem:[#allocation3 + $0x20] sm:$0xff] %v395
    %584 = vst [vmem:[#allocation3 + $0x28] sm:$0xff] %v444
    %585 = vst [vmem:[#allocation3 + $0x30] sm:$0xff] %v493
    %586 = vst [vmem:[#allocation3 + $0x38] sm:$0xff] %v542
    %587 = vst [vmem:[#allocation3 + $0x40] sm:$0xff] %v398
    %588 = vst [vmem:[#allocation3 + $0x48] sm:$0xff] %v447
    %589 = vst [vmem:[#allocation3 + $0x50] sm:$0xff] %v496
    %590 = vst [vmem:[#allocation3 + $0x58] sm:$0xff] %v545
    %591 = vst [vmem:[#allocation3 + $0x60] sm:$0xff] %v400
    %592 = vst [vmem:[#allocation3 + $0x68] sm:$0xff] %v449
    %593 = vst [vmem:[#allocation3 + $0x70] sm:$0xff] %v498
    %594 = vst [vmem:[#allocation3 + $0x78] sm:$0xff] %v547
    %595 = vst [vmem:[#allocation3 + $0x80] sm:$0xff] %v403
    %596 = vst [vmem:[#allocation3 + $0x88] sm:$0xff] %v452
    %597 = vst [vmem:[#allocation3 + $0x90] sm:$0xff] %v501
    %598 = vst [vmem:[#allocation3 + $0x98] sm:$0xff] %v550
    %599 = vst [vmem:[#allocation3 + $0xa0] sm:$0xff] %v405
    %600 = vst [vmem:[#allocation3 + $0xa8] sm:$0xff] %v454
    %601 = vst [vmem:[#allocation3 + $0xb0] sm:$0xff] %v503
    %602 = vst [vmem:[#allocation3 + $0xb8] sm:$0xff] %v552
    %603 = vst [vmem:[#allocation3 + $0xc0] sm:$0xff] %v408
    %604 = vst [vmem:[#allocation3 + $0xc8] sm:$0xff] %v457
    %605 = vst [vmem:[#allocation3 + $0xd0] sm:$0xff] %v506
    %606 = vst [vmem:[#allocation3 + $0xd8] sm:$0xff] %v555
    %607 = vst [vmem:[#allocation3 + $0xe0] sm:$0xff] %v410
    %608 = vst [vmem:[#allocation3 + $0xe8] sm:$0xff] %v459
    %609 = vst [vmem:[#allocation3 + $0xf0] sm:$0xff] %v508
    %610 = vst [vmem:[#allocation3 + $0xf8] sm:$0xff] %v557
    %611 = vst [vmem:[#allocation3 + $0x100] sm:$0xff] %v413
    %612 = vst [vmem:[#allocation3 + $0x108] sm:$0xff] %v462
    %613 = vst [vmem:[#allocation3 + $0x110] sm:$0xff] %v511
    %614 = vst [vmem:[#allocation3 + $0x118] sm:$0xff] %v560
    %615 = vst [vmem:[#allocation3 + $0x120] sm:$0xff] %v415
    %616 = vst [vmem:[#allocation3 + $0x128] sm:$0xff] %v464
    %617 = vst [vmem:[#allocation3 + $0x130] sm:$0xff] %v513
    %618 = vst [vmem:[#allocation3 + $0x138] sm:$0xff] %v562
    %619 = vst [vmem:[#allocation3 + $0x140] sm:$0xff] %v418
    %620 = vst [vmem:[#allocation3 + $0x148] sm:$0xff] %v467
    %621 = vst [vmem:[#allocation3 + $0x150] sm:$0xff] %v516
    %622 = vst [vmem:[#allocation3 + $0x158] sm:$0xff] %v565
    %623 = vst [vmem:[#allocation3 + $0x160] sm:$0xff] %v420
    %624 = vst [vmem:[#allocation3 + $0x168] sm:$0xff] %v469
    %625 = vst [vmem:[#allocation3 + $0x170] sm:$0xff] %v518
    %626 = vst [vmem:[#allocation3 + $0x178] sm:$0xff] %v567
    %627 = vst [vmem:[#allocation3 + $0x180] sm:$0xff] %v423
    %628 = vst [vmem:[#allocation3 + $0x188] sm:$0xff] %v472
    %629 = vst [vmem:[#allocation3 + $0x190] sm:$0xff] %v521
    %630 = vst [vmem:[#allocation3 + $0x198] sm:$0xff] %v570
    %631 = vst [vmem:[#allocation3 + $0x1a0] sm:$0xff] %v425
    %632 = vst [vmem:[#allocation3 + $0x1a8] sm:$0xff] %v474
    %633 = vst [vmem:[#allocation3 + $0x1b0] sm:$0xff] %v523
    %634 = vst [vmem:[#allocation3 + $0x1b8] sm:$0xff] %v572
    %635 = vst [vmem:[#allocation3 + $0x1c0] sm:$0xff] %v428
    %636 = vst [vmem:[#allocation3 + $0x1c8] sm:$0xff] %v477
    %637 = vst [vmem:[#allocation3 + $0x1d0] sm:$0xff] %v526
    %638 = vst [vmem:[#allocation3 + $0x1d8] sm:$0xff] %v575
    %639 = vst [vmem:[#allocation3 + $0x1e0] sm:$0xff] %v430
    %640 = vst [vmem:[#allocation3 + $0x1e8] sm:$0xff] %v479
    %641 = vst [vmem:[#allocation3 + $0x1f0] sm:$0xff] %v528
    %642 = vst [vmem:[#allocation3 + $0x1f8] sm:$0xff] %v577
    %v643 = vld [vmem:[#allocation6] sm:$0xff]
    %v644 = vld [vmem:[#allocation6 + $0x8] sm:$0xff]
    %v645 = vld [vmem:[#allocation6 + $0x10] sm:$0xff]
    %v646 = vld [vmem:[#allocation6 + $0x18] sm:$0xff]
    %v647 = vld [vmem:[#allocation6 + $0x20] sm:$0xff]
    %v648 = vld [vmem:[#allocation6 + $0x28] sm:$0xff]
    %v649 = vld [vmem:[#allocation6 + $0x30] sm:$0xff]
    %v650 = vld [vmem:[#allocation6 + $0x38] sm:$0xff]
    %v651 = vld [vmem:[#allocation6 + $0x40] sm:$0xff]
    %v652 = vld [vmem:[#allocation6 + $0x48] sm:$0xff]
    %v653 = vld [vmem:[#allocation6 + $0x50] sm:$0xff]
    %v654 = vld [vmem:[#allocation6 + $0x58] sm:$0xff]
    %v655 = vld [vmem:[#allocation6 + $0x60] sm:$0xff]
    %v656 = vld [vmem:[#allocation6 + $0x68] sm:$0xff]
    %v657 = vld [vmem:[#allocation6 + $0x70] sm:$0xff]
    %v658 = vld [vmem:[#allocation6 + $0x78] sm:$0xff]
    %v659 = vld [vmem:[#allocation6 + $0x80] sm:$0xff]
    %v660 = vld [vmem:[#allocation6 + $0x88] sm:$0xff]
    %v661 = vld [vmem:[#allocation6 + $0x90] sm:$0xff]
    %v662 = vld [vmem:[#allocation6 + $0x98] sm:$0xff]
    %v663 = vld [vmem:[#allocation6 + $0xa0] sm:$0xff]
    %v664 = vld [vmem:[#allocation6 + $0xa8] sm:$0xff]
    %v665 = vld [vmem:[#allocation6 + $0xb0] sm:$0xff]
    %v666 = vld [vmem:[#allocation6 + $0xb8] sm:$0xff]
    %v667 = vld [vmem:[#allocation6 + $0xc0] sm:$0xff]
    %v668 = vld [vmem:[#allocation6 + $0xc8] sm:$0xff]
    %v669 = vld [vmem:[#allocation6 + $0xd0] sm:$0xff]
    %v670 = vld [vmem:[#allocation6 + $0xd8] sm:$0xff]
    %v671 = vld [vmem:[#allocation6 + $0xe0] sm:$0xff]
    %v672 = vld [vmem:[#allocation6 + $0xe8] sm:$0xff]
    %v673 = vld [vmem:[#allocation6 + $0xf0] sm:$0xff]
    %v674 = vld [vmem:[#allocation6 + $0xf8] sm:$0xff]
    %v707 = vunpack.c.l.b16 %v643
    %v708 = vunpack.c.h.b16 %v643
    %v709 = vunpack.c.l.b16 %v644
    %v710 = vunpack.c.h.b16 %v644
    %v711 = vunpack.c.l.b16 %v645
    %v712 = vunpack.c.h.b16 %v645
    %v713 = vunpack.c.l.b16 %v646
    %v714 = vunpack.c.h.b16 %v646
    %v715 = vunpack.c.l.b16 %v647
    %v716 = vunpack.c.h.b16 %v647
    %v717 = vunpack.c.l.b16 %v648
    %v718 = vunpack.c.h.b16 %v648
    %v719 = vunpack.c.l.b16 %v649
    %v720 = vunpack.c.h.b16 %v649
    %v721 = vunpack.c.l.b16 %v650
    %v722 = vunpack.c.h.b16 %v650
    %v723 = vunpack.c.l.b16 %v651
    %v724 = vunpack.c.h.b16 %v651
    %v725 = vunpack.c.l.b16 %v652
    %v726 = vunpack.c.h.b16 %v652
    %v727 = vunpack.c.l.b16 %v653
    %v728 = vunpack.c.h.b16 %v653
    %v729 = vunpack.c.l.b16 %v654
    %v730 = vunpack.c.h.b16 %v654
    %v731 = vunpack.c.l.b16 %v655
    %v732 = vunpack.c.h.b16 %v655
    %v733 = vunpack.c.l.b16 %v656
    %v734 = vunpack.c.h.b16 %v656
    %v735 = vunpack.c.l.b16 %v657
    %v736 = vunpack.c.h.b16 %v657
    %v737 = vunpack.c.l.b16 %v658
    %v738 = vunpack.c.h.b16 %v658
    %v739 = vunpack.c.l.b16 %v659
    %v740 = vunpack.c.h.b16 %v659
    %v741 = vunpack.c.l.b16 %v660
    %v742 = vunpack.c.h.b16 %v660
    %v743 = vunpack.c.l.b16 %v661
    %v744 = vunpack.c.h.b16 %v661
    %v745 = vunpack.c.l.b16 %v662
    %v746 = vunpack.c.h.b16 %v662
    %v747 = vunpack.c.l.b16 %v663
    %v748 = vunpack.c.h.b16 %v663
    %v749 = vunpack.c.l.b16 %v664
    %v750 = vunpack.c.h.b16 %v664
    %v751 = vunpack.c.l.b16 %v665
    %v752 = vunpack.c.h.b16 %v665
    %v753 = vunpack.c.l.b16 %v666
    %v754 = vunpack.c.h.b16 %v666
    %v755 = vunpack.c.l.b16 %v667
    %v756 = vunpack.c.h.b16 %v667
    %v757 = vunpack.c.l.b16 %v668
    %v758 = vunpack.c.h.b16 %v668
    %v759 = vunpack.c.l.b16 %v669
    %v760 = vunpack.c.h.b16 %v669
    %v761 = vunpack.c.l.b16 %v670
    %v762 = vunpack.c.h.b16 %v670
    %v763 = vunpack.c.l.b16 %v671
    %v764 = vunpack.c.h.b16 %v671
    %v765 = vunpack.c.l.b16 %v672
    %v766 = vunpack.c.h.b16 %v672
    %v767 = vunpack.c.l.b16 %v673
    %v768 = vunpack.c.h.b16 %v673
    %v769 = vunpack.c.l.b16 %v674
    %v770 = vunpack.c.h.b16 %v674
    %v771 = vpack.c.b16 %v711, %v707
    %v772 = vpack.c.b16 %v712, %v708
    %v773 = vpack.c.b16 %v713, %v709
    %v774 = vpack.c.b16 %v714, %v710
    %v775 = vpack.c.b16 %v719, %v715
    %v776 = vpack.c.b16 %v720, %v716
    %v777 = vpack.c.b16 %v721, %v717
    %v778 = vpack.c.b16 %v722, %v718
    %v779 = vpack.c.b16 %v727, %v723
    %v780 = vpack.c.b16 %v728, %v724
    %v781 = vpack.c.b16 %v729, %v725
    %v782 = vpack.c.b16 %v730, %v726
    %v783 = vpack.c.b16 %v735, %v731
    %v784 = vpack.c.b16 %v736, %v732
    %v785 = vpack.c.b16 %v737, %v733
    %v786 = vpack.c.b16 %v738, %v734
    %v787 = vpack.c.b16 %v743, %v739
    %v788 = vpack.c.b16 %v744, %v740
    %v789 = vpack.c.b16 %v745, %v741
    %v790 = vpack.c.b16 %v746, %v742
    %v791 = vpack.c.b16 %v751, %v747
    %v792 = vpack.c.b16 %v752, %v748
    %v793 = vpack.c.b16 %v753, %v749
    %v794 = vpack.c.b16 %v754, %v750
    %v795 = vpack.c.b16 %v759, %v755
    %v796 = vpack.c.b16 %v760, %v756
    %v797 = vpack.c.b16 %v761, %v757
    %v798 = vpack.c.b16 %v762, %v758
    %v799 = vpack.c.b16 %v767, %v763
    %v800 = vpack.c.b16 %v768, %v764
    %v801 = vpack.c.b16 %v769, %v765
    %v802 = vpack.c.b16 %v770, %v766
    %835 = vmatpush.bf16.msra.mxu0 %v799
    %836 = vmatpush.bf16.msra.mxu0 %v795
    %837 = vmatpush.bf16.msra.mxu0 %v791
    %838 = vmatpush.bf16.msra.mxu0 %v787
    %839 = vmatpush.bf16.msra.mxu0 %v783
    %840 = vmatpush.bf16.msra.mxu0 %v779
    %841 = vmatpush.bf16.msra.mxu0 %v775
    %842 = vmatpush.bf16.msra.mxu0 %v771
    %843 = vmatmul.bf16.gmra.mxu0 0
    %v844 = vpop.f32.mrf.mxu0
    %v845 = vadd.f32 0.0, %v844
    %v846 = vpop.f32.mrf.mxu0
    %v847 = vadd.f32 0.0, %v846
    %848 = vdwg.mxu0
    %849 = vmatpush.bf16.msra.mxu0 %v800
    %850 = vmatpush.bf16.msra.mxu0 %v796
    %851 = vmatpush.bf16.msra.mxu0 %v792
    %852 = vmatpush.bf16.msra.mxu0 %v788
    %853 = vmatpush.bf16.msra.mxu0 %v784
    %854 = vmatpush.bf16.msra.mxu0 %v780
    %855 = vmatpush.bf16.msra.mxu0 %v776
    %856 = vmatpush.bf16.msra.mxu0 %v772
    %857 = vmatmul.bf16.gmra.mxu0 0
    %v858 = vpop.f32.mrf.mxu0
    %v859 = vadd.f32 0.0, %v858
    %v860 = vpop.f32.mrf.mxu0
    %v861 = vadd.f32 0.0, %v860
    %862 = vdwg.mxu0
    %863 = vmatpush.bf16.msra.mxu0 %v801
    %864 = vmatpush.bf16.msra.mxu0 %v797
    %865 = vmatpush.bf16.msra.mxu0 %v793
    %866 = vmatpush.bf16.msra.mxu0 %v789
    %867 = vmatpush.bf16.msra.mxu0 %v785
    %868 = vmatpush.bf16.msra.mxu0 %v781
    %869 = vmatpush.bf16.msra.mxu0 %v777
    %870 = vmatpush.bf16.msra.mxu0 %v773
    %871 = vmatmul.bf16.gmra.mxu0 0
    %v872 = vpop.f32.mrf.mxu0
    %v873 = vadd.f32 0.0, %v872
    %v874 = vpop.f32.mrf.mxu0
    %v875 = vadd.f32 0.0, %v874
    %876 = vdwg.mxu0
    %877 = vmatpush.bf16.msra.mxu0 %v802
    %878 = vmatpush.bf16.msra.mxu0 %v798
    %879 = vmatpush.bf16.msra.mxu0 %v794
    %880 = vmatpush.bf16.msra.mxu0 %v790
    %881 = vmatpush.bf16.msra.mxu0 %v786
    %882 = vmatpush.bf16.msra.mxu0 %v782
    %883 = vmatpush.bf16.msra.mxu0 %v778
    %884 = vmatpush.bf16.msra.mxu0 %v774
    %885 = vmatmul.bf16.gmra.mxu0 0
    %v886 = vpop.f32.mrf.mxu0
    %v887 = vadd.f32 0.0, %v886
    %v888 = vpop.f32.mrf.mxu0
    %v889 = vadd.f32 0.0, %v888
    %890 = vdwg.mxu0
    %v891 = vld [vmem:[#allocation3] sm:$0xff]
    %v892 = vld [vmem:[#allocation3 + $0x8] sm:$0xff]
    %v893 = vld [vmem:[#allocation3 + $0x10] sm:$0xff]
    %v894 = vld [vmem:[#allocation3 + $0x18] sm:$0xff]
    %v895 = vld [vmem:[#allocation3 + $0x20] sm:$0xff]
    %v896 = vld [vmem:[#allocation3 + $0x28] sm:$0xff]
    %v897 = vld [vmem:[#allocation3 + $0x30] sm:$0xff]
    %v898 = vld [vmem:[#allocation3 + $0x38] sm:$0xff]
    %v899 = vadd.f32 %v891, %v845
    %v900 = vadd.f32 %v892, %v859
    %v901 = vadd.f32 %v893, %v873
    %v902 = vadd.f32 %v894, %v887
    %v903 = vadd.f32 %v895, %v847
    %v904 = vadd.f32 %v896, %v861
    %v905 = vadd.f32 %v897, %v875
    %v906 = vadd.f32 %v898, %v889
    %v907 = vxor.u32 %v899, 2147483648
    %v908 = vxor.u32 %v903, 2147483648
    %v909 = vmul.f32 %v907, 1.442695
    %v910 = vpow.pop %v909
    %v911 = vmul.f32 %v908, 1.442695
    %v912 = vpow.pop %v911
    %v913 = vadd.f32 %v910, 1.0
    %v914 = vadd.f32 %v912, 1.0
    %v915 = vrcp.pop %v913
    %v916 = vmul.f32 %v913, %v915
    %v917 = vsub.f32 1.0, %v916
    %v918 = vmul.f32 %v915, %v917
    %v919 = vadd.f32 %v915, %v918
    %vm920 = vweird.f32 %v913
    %vm921 = vweird.f32 %v915
    %vm922 = vmor %vm920, %vm921
    %v923 = vsel %vm922, %v915, %v919
    %v924 = vand.u32 2147483647, %v913
    %vm925 = vcmp.eq.f32.partialorder %v924, 8.507059e+37
    %v926 = vand.u32 %v913, 2147483648
    %v927 = vor.u32 1.1754944e-38, %v926
    %v928 = vsel %vm925, %v927, %v923
    %v929 = vmul.f32 1.0, %v928
    %v930 = vrcp.pop %v914
    %v931 = vmul.f32 %v914, %v930
    %v932 = vsub.f32 1.0, %v931
    %v933 = vmul.f32 %v930, %v932
    %v934 = vadd.f32 %v930, %v933
    %vm935 = vweird.f32 %v914
    %vm936 = vweird.f32 %v930
    %vm937 = vmor %vm935, %vm936
    %v938 = vsel %vm937, %v930, %v934
    %v939 = vand.u32 2147483647, %v914
    %vm940 = vcmp.eq.f32.partialorder %v939, 8.507059e+37
    %v941 = vand.u32 %v914, 2147483648
    %v942 = vor.u32 1.1754944e-38, %v941
    %v943 = vsel %vm940, %v942, %v938
    %v944 = vmul.f32 1.0, %v943
    %v945 = vxor.u32 %v900, 2147483648
    %v946 = vxor.u32 %v904, 2147483648
    %v947 = vmul.f32 %v945, 1.442695
    %v948 = vpow.pop %v947
    %v949 = vmul.f32 %v946, 1.442695
    %v950 = vpow.pop %v949
    %v951 = vadd.f32 %v948, 1.0
    %v952 = vadd.f32 %v950, 1.0
    %v953 = vrcp.pop %v951
    %v954 = vmul.f32 %v951, %v953
    %v955 = vsub.f32 1.0, %v954
    %v956 = vmul.f32 %v953, %v955
    %v957 = vadd.f32 %v953, %v956
    %vm958 = vweird.f32 %v951
    %vm959 = vweird.f32 %v953
    %vm960 = vmor %vm958, %vm959
    %v961 = vsel %vm960, %v953, %v957
    %v962 = vand.u32 2147483647, %v951
    %vm963 = vcmp.eq.f32.partialorder %v962, 8.507059e+37
    %v964 = vand.u32 %v951, 2147483648
    %v965 = vor.u32 1.1754944e-38, %v964
    %v966 = vsel %vm963, %v965, %v961
    %v967 = vmul.f32 1.0, %v966
    %v968 = vrcp.pop %v952
    %v969 = vmul.f32 %v952, %v968
    %v970 = vsub.f32 1.0, %v969
    %v971 = vmul.f32 %v968, %v970
    %v972 = vadd.f32 %v968, %v971
    %vm973 = vweird.f32 %v952
    %vm974 = vweird.f32 %v968
    %vm975 = vmor %vm973, %vm974
    %v976 = vsel %vm975, %v968, %v972
    %v977 = vand.u32 2147483647, %v952
    %vm978 = vcmp.eq.f32.partialorder %v977, 8.507059e+37
    %v979 = vand.u32 %v952, 2147483648
    %v980 = vor.u32 1.1754944e-38, %v979
    %v981 = vsel %vm978, %v980, %v976
    %v982 = vmul.f32 1.0, %v981
    %v983 = vtanh.pop %v901
    %v984 = vtanh.pop %v905
    %v985 = vxor.u32 %v902, 2147483648
    %v986 = vxor.u32 %v906, 2147483648
    %v987 = vmul.f32 %v985, 1.442695
    %v988 = vpow.pop %v987
    %v989 = vmul.f32 %v986, 1.442695
    %v990 = vpow.pop %v989
    %v991 = vadd.f32 %v988, 1.0
    %v992 = vadd.f32 %v990, 1.0
    %v993 = vrcp.pop %v991
    %v994 = vmul.f32 %v991, %v993
    %v995 = vsub.f32 1.0, %v994
    %v996 = vmul.f32 %v993, %v995
    %v997 = vadd.f32 %v993, %v996
    %vm998 = vweird.f32 %v991
    %vm999 = vweird.f32 %v993
    %vm1000 = vmor %vm998, %vm999
    %v1001 = vsel %vm1000, %v993, %v997
    %v1002 = vand.u32 2147483647, %v991
    %vm1003 = vcmp.eq.f32.partialorder %v1002, 8.507059e+37
    %v1004 = vand.u32 %v991, 2147483648
    %v1005 = vor.u32 1.1754944e-38, %v1004
    %v1006 = vsel %vm1003, %v1005, %v1001
    %v1007 = vmul.f32 1.0, %v1006
    %v1008 = vrcp.pop %v992
    %v1009 = vmul.f32 %v992, %v1008
    %v1010 = vsub.f32 1.0, %v1009
    %v1011 = vmul.f32 %v1008, %v1010
    %v1012 = vadd.f32 %v1008, %v1011
    %vm1013 = vweird.f32 %v992
    %vm1014 = vweird.f32 %v1008
    %vm1015 = vmor %vm1013, %vm1014
    %v1016 = vsel %vm1015, %v1008, %v1012
    %v1017 = vand.u32 2147483647, %v992
    %vm1018 = vcmp.eq.f32.partialorder %v1017, 8.507059e+37
    %v1019 = vand.u32 %v992, 2147483648
    %v1020 = vor.u32 1.1754944e-38, %v1019
    %v1021 = vsel %vm1018, %v1020, %v1016
    %v1022 = vmul.f32 1.0, %v1021
    %v1023 = vmul.f32 %v967, 0.0
    %v1024 = vmul.f32 %v982, 0.0
    %v1025 = vmul.f32 %v929, %v983
    %v1026 = vmul.f32 %v944, %v984
    %v1027 = vadd.f32 %v1023, %v1025
    %v1028 = vadd.f32 %v1024, %v1026
    %v1029 = vtanh.pop %v1027
    %v1030 = vtanh.pop %v1028
    %v1031 = vmul.f32 %v1007, %v1029
    %v1032 = vmul.f32 %v1022, %v1030
    %v1033 = vpack.c.bf16 %v1031, %v1031
    %v1034 = vpack.c.bf16 %v1032, %v1032
    %1035 = vst [vmem:[#allocation2] sm:$0xf] %v1033
    %1036 = vst [vmem:[#allocation2 + $0x4] sm:$0xf] %v1034
    %v1039 = vunpack.c.l.b16 %v1033
    %v1040 = vunpack.c.l.b16 %v1034
    %v1041 = vpack.c.b16 %v1040, %v1039
    %1043 = vmatpush.bf16.msra.mxu0 %v799
    %1044 = vmatpush.bf16.msra.mxu0 %v795
    %1045 = vmatpush.bf16.msra.mxu0 %v791
    %1046 = vmatpush.bf16.msra.mxu0 %v787
    %1047 = vmatpush.bf16.msra.mxu0 %v783
    %1048 = vmatpush.bf16.msra.mxu0 %v779
    %1049 = vmatpush.bf16.msra.mxu0 %v775
    %1050 = vmatpush.bf16.msra.mxu0 %v771
    %1051 = vmatmul.bf16.gmra.mxu0 %v1041
    %v1052 = vpop.f32.mrf.mxu0
    %v1053 = vadd.f32 0.0, %v1052
    %v1054 = vpop.f32.mrf.mxu0
    %v1055 = vadd.f32 0.0, %v1054
    %1056 = vdwg.mxu0
    %1057 = vmatpush.bf16.msra.mxu0 %v800
    %1058 = vmatpush.bf16.msra.mxu0 %v796
    %1059 = vmatpush.bf16.msra.mxu0 %v792
    %1060 = vmatpush.bf16.msra.mxu0 %v788
    %1061 = vmatpush.bf16.msra.mxu0 %v784
    %1062 = vmatpush.bf16.msra.mxu0 %v780
    %1063 = vmatpush.bf16.msra.mxu0 %v776
    %1064 = vmatpush.bf16.msra.mxu0 %v772
    %1065 = vmatmul.bf16.gmra.mxu0 %v1041
    %v1066 = vpop.f32.mrf.mxu0
    %v1067 = vadd.f32 0.0, %v1066
    %v1068 = vpop.f32.mrf.mxu0
    %v1069 = vadd.f32 0.0, %v1068
    %1070 = vdwg.mxu0
    %1071 = vmatpush.bf16.msra.mxu0 %v801
    %1072 = vmatpush.bf16.msra.mxu0 %v797
    %1073 = vmatpush.bf16.msra.mxu0 %v793
    %1074 = vmatpush.bf16.msra.mxu0 %v789
    %1075 = vmatpush.bf16.msra.mxu0 %v785
    %1076 = vmatpush.bf16.msra.mxu0 %v781
    %1077 = vmatpush.bf16.msra.mxu0 %v777
    %1078 = vmatpush.bf16.msra.mxu0 %v773
    %1079 = vmatmul.bf16.gmra.mxu0 %v1041
    %v1080 = vpop.f32.mrf.mxu0
    %v1081 = vadd.f32 0.0, %v1080
    %v1082 = vpop.f32.mrf.mxu0
    %v1083 = vadd.f32 0.0, %v1082
    %1084 = vdwg.mxu0
    %1085 = vmatpush.bf16.msra.mxu0 %v802
    %1086 = vmatpush.bf16.msra.mxu0 %v798
    %1087 = vmatpush.bf16.msra.mxu0 %v794
    %1088 = vmatpush.bf16.msra.mxu0 %v790
    %1089 = vmatpush.bf16.msra.mxu0 %v786
    %1090 = vmatpush.bf16.msra.mxu0 %v782
    %1091 = vmatpush.bf16.msra.mxu0 %v778
    %1092 = vmatpush.bf16.msra.mxu0 %v774
    %1093 = vmatmul.bf16.gmra.mxu0 %v1041
    %v1094 = vpop.f32.mrf.mxu0
    %v1095 = vadd.f32 0.0, %v1094
    %v1096 = vpop.f32.mrf.mxu0
    %v1097 = vadd.f32 0.0, %v1096
    %1098 = vdwg.mxu0
    %s1099 = scalar_lea.vmem [#allocation3], 64
    %v1100 = vld [vmem:[%s1099] sm:$0xff]
    %v1101 = vld [vmem:[%s1099 + $0x8] sm:$0xff]
    %v1102 = vld [vmem:[%s1099 + $0x10] sm:$0xff]
    %v1103 = vld [vmem:[%s1099 + $0x18] sm:$0xff]
    %v1104 = vld [vmem:[%s1099 + $0x20] sm:$0xff]
    %v1105 = vld [vmem:[%s1099 + $0x28] sm:$0xff]
    %v1106 = vld [vmem:[%s1099 + $0x30] sm:$0xff]
    %v1107 = vld [vmem:[%s1099 + $0x38] sm:$0xff]
    %v1108 = vadd.f32 %v1100, %v1053
    %v1109 = vadd.f32 %v1101, %v1067
    %v1110 = vadd.f32 %v1102, %v1081
    %v1111 = vadd.f32 %v1103, %v1095
    %v1112 = vadd.f32 %v1104, %v1055
    %v1113 = vadd.f32 %v1105, %v1069
    %v1114 = vadd.f32 %v1106, %v1083
    %v1115 = vadd.f32 %v1107, %v1097
    %v1116 = vxor.u32 %v1108, 2147483648
    %v1117 = vxor.u32 %v1112, 2147483648
    %v1118 = vmul.f32 %v1116, 1.442695
    %v1119 = vpow.pop %v1118
    %v1120 = vmul.f32 %v1117, 1.442695
    %v1121 = vpow.pop %v1120
    %v1122 = vadd.f32 %v1119, 1.0
    %v1123 = vadd.f32 %v1121, 1.0
    %v1124 = vrcp.pop %v1122
    %v1125 = vmul.f32 %v1122, %v1124
    %v1126 = vsub.f32 1.0, %v1125
    %v1127 = vmul.f32 %v1124, %v1126
    %v1128 = vadd.f32 %v1124, %v1127
    %vm1129 = vweird.f32 %v1122
    %vm1130 = vweird.f32 %v1124
    %vm1131 = vmor %vm1129, %vm1130
    %v1132 = vsel %vm1131, %v1124, %v1128
    %v1133 = vand.u32 2147483647, %v1122
    %vm1134 = vcmp.eq.f32.partialorder %v1133, 8.507059e+37
    %v1135 = vand.u32 %v1122, 2147483648
    %v1136 = vor.u32 1.1754944e-38, %v1135
    %v1137 = vsel %vm1134, %v1136, %v1132
    %v1138 = vmul.f32 1.0, %v1137
    %v1139 = vrcp.pop %v1123
    %v1140 = vmul.f32 %v1123, %v1139
    %v1141 = vsub.f32 1.0, %v1140
    %v1142 = vmul.f32 %v1139, %v1141
    %v1143 = vadd.f32 %v1139, %v1142
    %vm1144 = vweird.f32 %v1123
    %vm1145 = vweird.f32 %v1139
    %vm1146 = vmor %vm1144, %vm1145
    %v1147 = vsel %vm1146, %v1139, %v1143
    %v1148 = vand.u32 2147483647, %v1123
    %vm1149 = vcmp.eq.f32.partialorder %v1148, 8.507059e+37
    %v1150 = vand.u32 %v1123, 2147483648
    %v1151 = vor.u32 1.1754944e-38, %v1150
    %v1152 = vsel %vm1149, %v1151, %v1147
    %v1153 = vmul.f32 1.0, %v1152
    %v1154 = vxor.u32 %v1109, 2147483648
    %v1155 = vxor.u32 %v1113, 2147483648
    %v1156 = vmul.f32 %v1154, 1.442695
    %v1157 = vpow.pop %v1156
    %v1158 = vmul.f32 %v1155, 1.442695
    %v1159 = vpow.pop %v1158
    %v1160 = vadd.f32 %v1157, 1.0
    %v1161 = vadd.f32 %v1159, 1.0
    %v1162 = vrcp.pop %v1160
    %v1163 = vmul.f32 %v1160, %v1162
    %v1164 = vsub.f32 1.0, %v1163
    %v1165 = vmul.f32 %v1162, %v1164
    %v1166 = vadd.f32 %v1162, %v1165
    %vm1167 = vweird.f32 %v1160
    %vm1168 = vweird.f32 %v1162
    %vm1169 = vmor %vm1167, %vm1168
    %v1170 = vsel %vm1169, %v1162, %v1166
    %v1171 = vand.u32 2147483647, %v1160
    %vm1172 = vcmp.eq.f32.partialorder %v1171, 8.507059e+37
    %v1173 = vand.u32 %v1160, 2147483648
    %v1174 = vor.u32 1.1754944e-38, %v1173
    %v1175 = vsel %vm1172, %v1174, %v1170
    %v1176 = vmul.f32 1.0, %v1175
    %v1177 = vrcp.pop %v1161
    %v1178 = vmul.f32 %v1161, %v1177
    %v1179 = vsub.f32 1.0, %v1178
    %v1180 = vmul.f32 %v1177, %v1179
    %v1181 = vadd.f32 %v1177, %v1180
    %vm1182 = vweird.f32 %v1161
    %vm1183 = vweird.f32 %v1177
    %vm1184 = vmor %vm1182, %vm1183
    %v1185 = vsel %vm1184, %v1177, %v1181
    %v1186 = vand.u32 2147483647, %v1161
    %vm1187 = vcmp.eq.f32.partialorder %v1186, 8.507059e+37
    %v1188 = vand.u32 %v1161, 2147483648
    %v1189 = vor.u32 1.1754944e-38, %v1188
    %v1190 = vsel %vm1187, %v1189, %v1185
    %v1191 = vmul.f32 1.0, %v1190
    %v1192 = vtanh.pop %v1110
    %v1193 = vtanh.pop %v1114
    %v1194 = vxor.u32 %v1111, 2147483648
    %v1195 = vxor.u32 %v1115, 2147483648
    %v1196 = vmul.f32 %v1194, 1.442695
    %v1197 = vpow.pop %v1196
    %v1198 = vmul.f32 %v1195, 1.442695
    %v1199 = vpow.pop %v1198
    %v1200 = vadd.f32 %v1197, 1.0
    %v1201 = vadd.f32 %v1199, 1.0
    %v1202 = vrcp.pop %v1200
    %v1203 = vmul.f32 %v1200, %v1202
    %v1204 = vsub.f32 1.0, %v1203
    %v1205 = vmul.f32 %v1202, %v1204
    %v1206 = vadd.f32 %v1202, %v1205
    %vm1207 = vweird.f32 %v1200
    %vm1208 = vweird.f32 %v1202
    %vm1209 = vmor %vm1207, %vm1208
    %v1210 = vsel %vm1209, %v1202, %v1206
    %v1211 = vand.u32 2147483647, %v1200
    %vm1212 = vcmp.eq.f32.partialorder %v1211, 8.507059e+37
    %v1213 = vand.u32 %v1200, 2147483648
    %v1214 = vor.u32 1.1754944e-38, %v1213
    %v1215 = vsel %vm1212, %v1214, %v1210
    %v1216 = vmul.f32 1.0, %v1215
    %v1217 = vrcp.pop %v1201
    %v1218 = vmul.f32 %v1201, %v1217
    %v1219 = vsub.f32 1.0, %v1218
    %v1220 = vmul.f32 %v1217, %v1219
    %v1221 = vadd.f32 %v1217, %v1220
    %vm1222 = vweird.f32 %v1201
    %vm1223 = vweird.f32 %v1217
    %vm1224 = vmor %vm1222, %vm1223
    %v1225 = vsel %vm1224, %v1217, %v1221
    %v1226 = vand.u32 2147483647, %v1201
    %vm1227 = vcmp.eq.f32.partialorder %v1226, 8.507059e+37
    %v1228 = vand.u32 %v1201, 2147483648
    %v1229 = vor.u32 1.1754944e-38, %v1228
    %v1230 = vsel %vm1227, %v1229, %v1225
    %v1231 = vmul.f32 1.0, %v1230
    %v1232 = vmul.f32 %v1176, %v1027
    %v1233 = vmul.f32 %v1191, %v1028
    %v1234 = vmul.f32 %v1138, %v1192
    %v1235 = vmul.f32 %v1153, %v1193
    %v1236 = vadd.f32 %v1232, %v1234
    %v1237 = vadd.f32 %v1233, %v1235
    %v1238 = vtanh.pop %v1236
    %v1239 = vtanh.pop %v1237
    %v1240 = vmul.f32 %v1216, %v1238
    %v1241 = vmul.f32 %v1231, %v1239
    %v1242 = vpack.c.bf16 %v1240, %v1240
    %v1243 = vpack.c.bf16 %v1241, %v1241
    %s1244 = scalar_lea.vmem [#allocation2], 8
    %1245 = vst [vmem:[%s1244] sm:$0xf] %v1242
    %1246 = vst [vmem:[%s1244 + $0x4] sm:$0xf] %v1243
    %v1249 = vunpack.c.l.b16 %v1242
    %v1250 = vunpack.c.l.b16 %v1243
    %v1251 = vpack.c.b16 %v1250, %v1249
    %1253 = vmatpush.bf16.msra.mxu0 %v799
    %1254 = vmatpush.bf16.msra.mxu0 %v795
    %1255 = vmatpush.bf16.msra.mxu0 %v791
    %1256 = vmatpush.bf16.msra.mxu0 %v787
    %1257 = vmatpush.bf16.msra.mxu0 %v783
    %1258 = vmatpush.bf16.msra.mxu0 %v779
    %1259 = vmatpush.bf16.msra.mxu0 %v775
    %1260 = vmatpush.bf16.msra.mxu0 %v771
    %1261 = vmatmul.bf16.gmra.mxu0 %v1251
    %v1262 = vpop.f32.mrf.mxu0
    %v1263 = vadd.f32 0.0, %v1262
    %v1264 = vpop.f32.mrf.mxu0
    %v1265 = vadd.f32 0.0, %v1264
    %1266 = vdwg.mxu0
    %1267 = vmatpush.bf16.msra.mxu0 %v800
    %1268 = vmatpush.bf16.msra.mxu0 %v796
    %1269 = vmatpush.bf16.msra.mxu0 %v792
    %1270 = vmatpush.bf16.msra.mxu0 %v788
    %1271 = vmatpush.bf16.msra.mxu0 %v784
    %1272 = vmatpush.bf16.msra.mxu0 %v780
    %1273 = vmatpush.bf16.msra.mxu0 %v776
    %1274 = vmatpush.bf16.msra.mxu0 %v772
    %1275 = vmatmul.bf16.gmra.mxu0 %v1251
    %v1276 = vpop.f32.mrf.mxu0
    %v1277 = vadd.f32 0.0, %v1276
    %v1278 = vpop.f32.mrf.mxu0
    %v1279 = vadd.f32 0.0, %v1278
    %1280 = vdwg.mxu0
    %1281 = vmatpush.bf16.msra.mxu0 %v801
    %1282 = vmatpush.bf16.msra.mxu0 %v797
    %1283 = vmatpush.bf16.msra.mxu0 %v793
    %1284 = vmatpush.bf16.msra.mxu0 %v789
    %1285 = vmatpush.bf16.msra.mxu0 %v785
    %1286 = vmatpush.bf16.msra.mxu0 %v781
    %1287 = vmatpush.bf16.msra.mxu0 %v777
    %1288 = vmatpush.bf16.msra.mxu0 %v773
    %1289 = vmatmul.bf16.gmra.mxu0 %v1251
    %v1290 = vpop.f32.mrf.mxu0
    %v1291 = vadd.f32 0.0, %v1290
    %v1292 = vpop.f32.mrf.mxu0
    %v1293 = vadd.f32 0.0, %v1292
    %1294 = vdwg.mxu0
    %1295 = vmatpush.bf16.msra.mxu0 %v802
    %1296 = vmatpush.bf16.msra.mxu0 %v798
    %1297 = vmatpush.bf16.msra.mxu0 %v794
    %1298 = vmatpush.bf16.msra.mxu0 %v790
    %1299 = vmatpush.bf16.msra.mxu0 %v786
    %1300 = vmatpush.bf16.msra.mxu0 %v782
    %1301 = vmatpush.bf16.msra.mxu0 %v778
    %1302 = vmatpush.bf16.msra.mxu0 %v774
    %1303 = vmatmul.bf16.gmra.mxu0 %v1251
    %v1304 = vpop.f32.mrf.mxu0
    %v1305 = vadd.f32 0.0, %v1304
    %v1306 = vpop.f32.mrf.mxu0
    %v1307 = vadd.f32 0.0, %v1306
    %1308 = vdwg.mxu0
    %s1309 = scalar_lea.vmem [#allocation3], 128
    %v1310 = vld [vmem:[%s1309] sm:$0xff]
    %v1311 = vld [vmem:[%s1309 + $0x8] sm:$0xff]
    %v1312 = vld [vmem:[%s1309 + $0x10] sm:$0xff]
    %v1313 = vld [vmem:[%s1309 + $0x18] sm:$0xff]
    %v1314 = vld [vmem:[%s1309 + $0x20] sm:$0xff]
    %v1315 = vld [vmem:[%s1309 + $0x28] sm:$0xff]
    %v1316 = vld [vmem:[%s1309 + $0x30] sm:$0xff]
    %v1317 = vld [vmem:[%s1309 + $0x38] sm:$0xff]
    %v1318 = vadd.f32 %v1310, %v1263
    %v1319 = vadd.f32 %v1311, %v1277
    %v1320 = vadd.f32 %v1312, %v1291
    %v1321 = vadd.f32 %v1313, %v1305
    %v1322 = vadd.f32 %v1314, %v1265
    %v1323 = vadd.f32 %v1315, %v1279
    %v1324 = vadd.f32 %v1316, %v1293
    %v1325 = vadd.f32 %v1317, %v1307
    %v1326 = vxor.u32 %v1318, 2147483648
    %v1327 = vxor.u32 %v1322, 2147483648
    %v1328 = vmul.f32 %v1326, 1.442695
    %v1329 = vpow.pop %v1328
    %v1330 = vmul.f32 %v1327, 1.442695
    %v1331 = vpow.pop %v1330
    %v1332 = vadd.f32 %v1329, 1.0
    %v1333 = vadd.f32 %v1331, 1.0
    %v1334 = vrcp.pop %v1332
    %v1335 = vmul.f32 %v1332, %v1334
    %v1336 = vsub.f32 1.0, %v1335
    %v1337 = vmul.f32 %v1334, %v1336
    %v1338 = vadd.f32 %v1334, %v1337
    %vm1339 = vweird.f32 %v1332
    %vm1340 = vweird.f32 %v1334
    %vm1341 = vmor %vm1339, %vm1340
    %v1342 = vsel %vm1341, %v1334, %v1338
    %v1343 = vand.u32 2147483647, %v1332
    %vm1344 = vcmp.eq.f32.partialorder %v1343, 8.507059e+37
    %v1345 = vand.u32 %v1332, 2147483648
    %v1346 = vor.u32 1.1754944e-38, %v1345
    %v1347 = vsel %vm1344, %v1346, %v1342
    %v1348 = vmul.f32 1.0, %v1347
    %v1349 = vrcp.pop %v1333
    %v1350 = vmul.f32 %v1333, %v1349
    %v1351 = vsub.f32 1.0, %v1350
    %v1352 = vmul.f32 %v1349, %v1351
    %v1353 = vadd.f32 %v1349, %v1352
    %vm1354 = vweird.f32 %v1333
    %vm1355 = vweird.f32 %v1349
    %vm1356 = vmor %vm1354, %vm1355
    %v1357 = vsel %vm1356, %v1349, %v1353
    %v1358 = vand.u32 2147483647, %v1333
    %vm1359 = vcmp.eq.f32.partialorder %v1358, 8.507059e+37
    %v1360 = vand.u32 %v1333, 2147483648
    %v1361 = vor.u32 1.1754944e-38, %v1360
    %v1362 = vsel %vm1359, %v1361, %v1357
    %v1363 = vmul.f32 1.0, %v1362
    %v1364 = vxor.u32 %v1319, 2147483648
    %v1365 = vxor.u32 %v1323, 2147483648
    %v1366 = vmul.f32 %v1364, 1.442695
    %v1367 = vpow.pop %v1366
    %v1368 = vmul.f32 %v1365, 1.442695
    %v1369 = vpow.pop %v1368
    %v1370 = vadd.f32 %v1367, 1.0
    %v1371 = vadd.f32 %v1369, 1.0
    %v1372 = vrcp.pop %v1370
    %v1373 = vmul.f32 %v1370, %v1372
    %v1374 = vsub.f32 1.0, %v1373
    %v1375 = vmul.f32 %v1372, %v1374
    %v1376 = vadd.f32 %v1372, %v1375
    %vm1377 = vweird.f32 %v1370
    %vm1378 = vweird.f32 %v1372
    %vm1379 = vmor %vm1377, %vm1378
    %v1380 = vsel %vm1379, %v1372, %v1376
    %v1381 = vand.u32 2147483647, %v1370
    %vm1382 = vcmp.eq.f32.partialorder %v1381, 8.507059e+37
    %v1383 = vand.u32 %v1370, 2147483648
    %v1384 = vor.u32 1.1754944e-38, %v1383
    %v1385 = vsel %vm1382, %v1384, %v1380
    %v1386 = vmul.f32 1.0, %v1385
    %v1387 = vrcp.pop %v1371
    %v1388 = vmul.f32 %v1371, %v1387
    %v1389 = vsub.f32 1.0, %v1388
    %v1390 = vmul.f32 %v1387, %v1389
    %v1391 = vadd.f32 %v1387, %v1390
    %vm1392 = vweird.f32 %v1371
    %vm1393 = vweird.f32 %v1387
    %vm1394 = vmor %vm1392, %vm1393
    %v1395 = vsel %vm1394, %v1387, %v1391
    %v1396 = vand.u32 2147483647, %v1371
    %vm1397 = vcmp.eq.f32.partialorder %v1396, 8.507059e+37
    %v1398 = vand.u32 %v1371, 2147483648
    %v1399 = vor.u32 1.1754944e-38, %v1398
    %v1400 = vsel %vm1397, %v1399, %v1395
    %v1401 = vmul.f32 1.0, %v1400
    %v1402 = vtanh.pop %v1320
    %v1403 = vtanh.pop %v1324
    %v1404 = vxor.u32 %v1321, 2147483648
    %v1405 = vxor.u32 %v1325, 2147483648
    %v1406 = vmul.f32 %v1404, 1.442695
    %v1407 = vpow.pop %v1406
    %v1408 = vmul.f32 %v1405, 1.442695
    %v1409 = vpow.pop %v1408
    %v1410 = vadd.f32 %v1407, 1.0
    %v1411 = vadd.f32 %v1409, 1.0
    %v1412 = vrcp.pop %v1410
    %v1413 = vmul.f32 %v1410, %v1412
    %v1414 = vsub.f32 1.0, %v1413
    %v1415 = vmul.f32 %v1412, %v1414
    %v1416 = vadd.f32 %v1412, %v1415
    %vm1417 = vweird.f32 %v1410
    %vm1418 = vweird.f32 %v1412
    %vm1419 = vmor %vm1417, %vm1418
    %v1420 = vsel %vm1419, %v1412, %v1416
    %v1421 = vand.u32 2147483647, %v1410
    %vm1422 = vcmp.eq.f32.partialorder %v1421, 8.507059e+37
    %v1423 = vand.u32 %v1410, 2147483648
    %v1424 = vor.u32 1.1754944e-38, %v1423
    %v1425 = vsel %vm1422, %v1424, %v1420
    %v1426 = vmul.f32 1.0, %v1425
    %v1427 = vrcp.pop %v1411
    %v1428 = vmul.f32 %v1411, %v1427
    %v1429 = vsub.f32 1.0, %v1428
    %v1430 = vmul.f32 %v1427, %v1429
    %v1431 = vadd.f32 %v1427, %v1430
    %vm1432 = vweird.f32 %v1411
    %vm1433 = vweird.f32 %v1427
    %vm1434 = vmor %vm1432, %vm1433
    %v1435 = vsel %vm1434, %v1427, %v1431
    %v1436 = vand.u32 2147483647, %v1411
    %vm1437 = vcmp.eq.f32.partialorder %v1436, 8.507059e+37
    %v1438 = vand.u32 %v1411, 2147483648
    %v1439 = vor.u32 1.1754944e-38, %v1438
    %v1440 = vsel %vm1437, %v1439, %v1435
    %v1441 = vmul.f32 1.0, %v1440
    %v1442 = vmul.f32 %v1386, %v1236
    %v1443 = vmul.f32 %v1401, %v1237
    %v1444 = vmul.f32 %v1348, %v1402
    %v1445 = vmul.f32 %v1363, %v1403
    %v1446 = vadd.f32 %v1442, %v1444
    %v1447 = vadd.f32 %v1443, %v1445
    %v1448 = vtanh.pop %v1446
    %v1449 = vtanh.pop %v1447
    %v1450 = vmul.f32 %v1426, %v1448
    %v1451 = vmul.f32 %v1441, %v1449
    %v1452 = vpack.c.bf16 %v1450, %v1450
    %v1453 = vpack.c.bf16 %v1451, %v1451
    %s1454 = scalar_lea.vmem [#allocation2], 16
    %1455 = vst [vmem:[%s1454] sm:$0xf] %v1452
    %1456 = vst [vmem:[%s1454 + $0x4] sm:$0xf] %v1453
    %v1459 = vunpack.c.l.b16 %v1452
    %v1460 = vunpack.c.l.b16 %v1453
    %v1461 = vpack.c.b16 %v1460, %v1459
    %1463 = vmatpush.bf16.msra.mxu0 %v799
    %1464 = vmatpush.bf16.msra.mxu0 %v795
    %1465 = vmatpush.bf16.msra.mxu0 %v791
    %1466 = vmatpush.bf16.msra.mxu0 %v787
    %1467 = vmatpush.bf16.msra.mxu0 %v783
    %1468 = vmatpush.bf16.msra.mxu0 %v779
    %1469 = vmatpush.bf16.msra.mxu0 %v775
    %1470 = vmatpush.bf16.msra.mxu0 %v771
    %1471 = vmatmul.bf16.gmra.mxu0 %v1461
    %v1472 = vpop.f32.mrf.mxu0
    %v1473 = vadd.f32 0.0, %v1472
    %v1474 = vpop.f32.mrf.mxu0
    %v1475 = vadd.f32 0.0, %v1474
    %1476 = vdwg.mxu0
    %1477 = vmatpush.bf16.msra.mxu0 %v800
    %1478 = vmatpush.bf16.msra.mxu0 %v796
    %1479 = vmatpush.bf16.msra.mxu0 %v792
    %1480 = vmatpush.bf16.msra.mxu0 %v788
    %1481 = vmatpush.bf16.msra.mxu0 %v784
    %1482 = vmatpush.bf16.msra.mxu0 %v780
    %1483 = vmatpush.bf16.msra.mxu0 %v776
    %1484 = vmatpush.bf16.msra.mxu0 %v772
    %1485 = vmatmul.bf16.gmra.mxu0 %v1461
    %v1486 = vpop.f32.mrf.mxu0
    %v1487 = vadd.f32 0.0, %v1486
    %v1488 = vpop.f32.mrf.mxu0
    %v1489 = vadd.f32 0.0, %v1488
    %1490 = vdwg.mxu0
    %1491 = vmatpush.bf16.msra.mxu0 %v801
    %1492 = vmatpush.bf16.msra.mxu0 %v797
    %1493 = vmatpush.bf16.msra.mxu0 %v793
    %1494 = vmatpush.bf16.msra.mxu0 %v789
    %1495 = vmatpush.bf16.msra.mxu0 %v785
    %1496 = vmatpush.bf16.msra.mxu0 %v781
    %1497 = vmatpush.bf16.msra.mxu0 %v777
    %1498 = vmatpush.bf16.msra.mxu0 %v773
    %1499 = vmatmul.bf16.gmra.mxu0 %v1461
    %v1500 = vpop.f32.mrf.mxu0
    %v1501 = vadd.f32 0.0, %v1500
    %v1502 = vpop.f32.mrf.mxu0
    %v1503 = vadd.f32 0.0, %v1502
    %1504 = vdwg.mxu0
    %1505 = vmatpush.bf16.msra.mxu0 %v802
    %1506 = vmatpush.bf16.msra.mxu0 %v798
    %1507 = vmatpush.bf16.msra.mxu0 %v794
    %1508 = vmatpush.bf16.msra.mxu0 %v790
    %1509 = vmatpush.bf16.msra.mxu0 %v786
    %1510 = vmatpush.bf16.msra.mxu0 %v782
    %1511 = vmatpush.bf16.msra.mxu0 %v778
    %1512 = vmatpush.bf16.msra.mxu0 %v774
    %1513 = vmatmul.bf16.gmra.mxu0 %v1461
    %v1514 = vpop.f32.mrf.mxu0
    %v1515 = vadd.f32 0.0, %v1514
    %v1516 = vpop.f32.mrf.mxu0
    %v1517 = vadd.f32 0.0, %v1516
    %1518 = vdwg.mxu0
    %s1519 = scalar_lea.vmem [#allocation3], 192
    %v1520 = vld [vmem:[%s1519] sm:$0xff]
    %v1521 = vld [vmem:[%s1519 + $0x8] sm:$0xff]
    %v1522 = vld [vmem:[%s1519 + $0x10] sm:$0xff]
    %v1523 = vld [vmem:[%s1519 + $0x18] sm:$0xff]
    %v1524 = vld [vmem:[%s1519 + $0x20] sm:$0xff]
    %v1525 = vld [vmem:[%s1519 + $0x28] sm:$0xff]
    %v1526 = vld [vmem:[%s1519 + $0x30] sm:$0xff]
    %v1527 = vld [vmem:[%s1519 + $0x38] sm:$0xff]
    %v1528 = vadd.f32 %v1520, %v1473
    %v1529 = vadd.f32 %v1521, %v1487
    %v1530 = vadd.f32 %v1522, %v1501
    %v1531 = vadd.f32 %v1523, %v1515
    %v1532 = vadd.f32 %v1524, %v1475
    %v1533 = vadd.f32 %v1525, %v1489
    %v1534 = vadd.f32 %v1526, %v1503
    %v1535 = vadd.f32 %v1527, %v1517
    %v1536 = vxor.u32 %v1528, 2147483648
    %v1537 = vxor.u32 %v1532, 2147483648
    %v1538 = vmul.f32 %v1536, 1.442695
    %v1539 = vpow.pop %v1538
    %v1540 = vmul.f32 %v1537, 1.442695
    %v1541 = vpow.pop %v1540
    %v1542 = vadd.f32 %v1539, 1.0
    %v1543 = vadd.f32 %v1541, 1.0
    %v1544 = vrcp.pop %v1542
    %v1545 = vmul.f32 %v1542, %v1544
    %v1546 = vsub.f32 1.0, %v1545
    %v1547 = vmul.f32 %v1544, %v1546
    %v1548 = vadd.f32 %v1544, %v1547
    %vm1549 = vweird.f32 %v1542
    %vm1550 = vweird.f32 %v1544
    %vm1551 = vmor %vm1549, %vm1550
    %v1552 = vsel %vm1551, %v1544, %v1548
    %v1553 = vand.u32 2147483647, %v1542
    %vm1554 = vcmp.eq.f32.partialorder %v1553, 8.507059e+37
    %v1555 = vand.u32 %v1542, 2147483648
    %v1556 = vor.u32 1.1754944e-38, %v1555
    %v1557 = vsel %vm1554, %v1556, %v1552
    %v1558 = vmul.f32 1.0, %v1557
    %v1559 = vrcp.pop %v1543
    %v1560 = vmul.f32 %v1543, %v1559
    %v1561 = vsub.f32 1.0, %v1560
    %v1562 = vmul.f32 %v1559, %v1561
    %v1563 = vadd.f32 %v1559, %v1562
    %vm1564 = vweird.f32 %v1543
    %vm1565 = vweird.f32 %v1559
    %vm1566 = vmor %vm1564, %vm1565
    %v1567 = vsel %vm1566, %v1559, %v1563
    %v1568 = vand.u32 2147483647, %v1543
    %vm1569 = vcmp.eq.f32.partialorder %v1568, 8.507059e+37
    %v1570 = vand.u32 %v1543, 2147483648
    %v1571 = vor.u32 1.1754944e-38, %v1570
    %v1572 = vsel %vm1569, %v1571, %v1567
    %v1573 = vmul.f32 1.0, %v1572
    %v1574 = vxor.u32 %v1529, 2147483648
    %v1575 = vxor.u32 %v1533, 2147483648
    %v1576 = vmul.f32 %v1574, 1.442695
    %v1577 = vpow.pop %v1576
    %v1578 = vmul.f32 %v1575, 1.442695
    %v1579 = vpow.pop %v1578
    %v1580 = vadd.f32 %v1577, 1.0
    %v1581 = vadd.f32 %v1579, 1.0
    %v1582 = vrcp.pop %v1580
    %v1583 = vmul.f32 %v1580, %v1582
    %v1584 = vsub.f32 1.0, %v1583
    %v1585 = vmul.f32 %v1582, %v1584
    %v1586 = vadd.f32 %v1582, %v1585
    %vm1587 = vweird.f32 %v1580
    %vm1588 = vweird.f32 %v1582
    %vm1589 = vmor %vm1587, %vm1588
    %v1590 = vsel %vm1589, %v1582, %v1586
    %v1591 = vand.u32 2147483647, %v1580
    %vm1592 = vcmp.eq.f32.partialorder %v1591, 8.507059e+37
    %v1593 = vand.u32 %v1580, 2147483648
    %v1594 = vor.u32 1.1754944e-38, %v1593
    %v1595 = vsel %vm1592, %v1594, %v1590
    %v1596 = vmul.f32 1.0, %v1595
    %v1597 = vrcp.pop %v1581
    %v1598 = vmul.f32 %v1581, %v1597
    %v1599 = vsub.f32 1.0, %v1598
    %v1600 = vmul.f32 %v1597, %v1599
    %v1601 = vadd.f32 %v1597, %v1600
    %vm1602 = vweird.f32 %v1581
    %vm1603 = vweird.f32 %v1597
    %vm1604 = vmor %vm1602, %vm1603
    %v1605 = vsel %vm1604, %v1597, %v1601
    %v1606 = vand.u32 2147483647, %v1581
    %vm1607 = vcmp.eq.f32.partialorder %v1606, 8.507059e+37
    %v1608 = vand.u32 %v1581, 2147483648
    %v1609 = vor.u32 1.1754944e-38, %v1608
    %v1610 = vsel %vm1607, %v1609, %v1605
    %v1611 = vmul.f32 1.0, %v1610
    %v1612 = vtanh.pop %v1530
    %v1613 = vtanh.pop %v1534
    %v1614 = vxor.u32 %v1531, 2147483648
    %v1615 = vxor.u32 %v1535, 2147483648
    %v1616 = vmul.f32 %v1614, 1.442695
    %v1617 = vpow.pop %v1616
    %v1618 = vmul.f32 %v1615, 1.442695
    %v1619 = vpow.pop %v1618
    %v1620 = vadd.f32 %v1617, 1.0
    %v1621 = vadd.f32 %v1619, 1.0
    %v1622 = vrcp.pop %v1620
    %v1623 = vmul.f32 %v1620, %v1622
    %v1624 = vsub.f32 1.0, %v1623
    %v1625 = vmul.f32 %v1622, %v1624
    %v1626 = vadd.f32 %v1622, %v1625
    %vm1627 = vweird.f32 %v1620
    %vm1628 = vweird.f32 %v1622
    %vm1629 = vmor %vm1627, %vm1628
    %v1630 = vsel %vm1629, %v1622, %v1626
    %v1631 = vand.u32 2147483647, %v1620
    %vm1632 = vcmp.eq.f32.partialorder %v1631, 8.507059e+37
    %v1633 = vand.u32 %v1620, 2147483648
    %v1634 = vor.u32 1.1754944e-38, %v1633
    %v1635 = vsel %vm1632, %v1634, %v1630
    %v1636 = vmul.f32 1.0, %v1635
    %v1637 = vrcp.pop %v1621
    %v1638 = vmul.f32 %v1621, %v1637
    %v1639 = vsub.f32 1.0, %v1638
    %v1640 = vmul.f32 %v1637, %v1639
    %v1641 = vadd.f32 %v1637, %v1640
    %vm1642 = vweird.f32 %v1621
    %vm1643 = vweird.f32 %v1637
    %vm1644 = vmor %vm1642, %vm1643
    %v1645 = vsel %vm1644, %v1637, %v1641
    %v1646 = vand.u32 2147483647, %v1621
    %vm1647 = vcmp.eq.f32.partialorder %v1646, 8.507059e+37
    %v1648 = vand.u32 %v1621, 2147483648
    %v1649 = vor.u32 1.1754944e-38, %v1648
    %v1650 = vsel %vm1647, %v1649, %v1645
    %v1651 = vmul.f32 1.0, %v1650
    %v1652 = vmul.f32 %v1596, %v1446
    %v1653 = vmul.f32 %v1611, %v1447
    %v1654 = vmul.f32 %v1558, %v1612
    %v1655 = vmul.f32 %v1573, %v1613
    %v1656 = vadd.f32 %v1652, %v1654
    %v1657 = vadd.f32 %v1653, %v1655
    %v1658 = vtanh.pop %v1656
    %v1659 = vtanh.pop %v1657
    %v1660 = vmul.f32 %v1636, %v1658
    %v1661 = vmul.f32 %v1651, %v1659
    %v1662 = vpack.c.bf16 %v1660, %v1660
    %v1663 = vpack.c.bf16 %v1661, %v1661
    %s1664 = scalar_lea.vmem [#allocation2], 24
    %1665 = vst [vmem:[%s1664] sm:$0xf] %v1662
    %1666 = vst [vmem:[%s1664 + $0x4] sm:$0xf] %v1663
    %v1669 = vunpack.c.l.b16 %v1662
    %v1670 = vunpack.c.l.b16 %v1663
    %v1671 = vpack.c.b16 %v1670, %v1669
    %1673 = vmatpush.bf16.msra.mxu0 %v799
    %1674 = vmatpush.bf16.msra.mxu0 %v795
    %1675 = vmatpush.bf16.msra.mxu0 %v791
    %1676 = vmatpush.bf16.msra.mxu0 %v787
    %1677 = vmatpush.bf16.msra.mxu0 %v783
    %1678 = vmatpush.bf16.msra.mxu0 %v779
    %1679 = vmatpush.bf16.msra.mxu0 %v775
    %1680 = vmatpush.bf16.msra.mxu0 %v771
    %1681 = vmatmul.bf16.gmra.mxu0 %v1671
    %v1682 = vpop.f32.mrf.mxu0
    %v1683 = vadd.f32 0.0, %v1682
    %v1684 = vpop.f32.mrf.mxu0
    %v1685 = vadd.f32 0.0, %v1684
    %1686 = vdwg.mxu0
    %1687 = vmatpush.bf16.msra.mxu0 %v800
    %1688 = vmatpush.bf16.msra.mxu0 %v796
    %1689 = vmatpush.bf16.msra.mxu0 %v792
    %1690 = vmatpush.bf16.msra.mxu0 %v788
    %1691 = vmatpush.bf16.msra.mxu0 %v784
    %1692 = vmatpush.bf16.msra.mxu0 %v780
    %1693 = vmatpush.bf16.msra.mxu0 %v776
    %1694 = vmatpush.bf16.msra.mxu0 %v772
    %1695 = vmatmul.bf16.gmra.mxu0 %v1671
    %v1696 = vpop.f32.mrf.mxu0
    %v1697 = vadd.f32 0.0, %v1696
    %v1698 = vpop.f32.mrf.mxu0
    %v1699 = vadd.f32 0.0, %v1698
    %1700 = vdwg.mxu0
    %1701 = vmatpush.bf16.msra.mxu0 %v801
    %1702 = vmatpush.bf16.msra.mxu0 %v797
    %1703 = vmatpush.bf16.msra.mxu0 %v793
    %1704 = vmatpush.bf16.msra.mxu0 %v789
    %1705 = vmatpush.bf16.msra.mxu0 %v785
    %1706 = vmatpush.bf16.msra.mxu0 %v781
    %1707 = vmatpush.bf16.msra.mxu0 %v777
    %1708 = vmatpush.bf16.msra.mxu0 %v773
    %1709 = vmatmul.bf16.gmra.mxu0 %v1671
    %v1710 = vpop.f32.mrf.mxu0
    %v1711 = vadd.f32 0.0, %v1710
    %v1712 = vpop.f32.mrf.mxu0
    %v1713 = vadd.f32 0.0, %v1712
    %1714 = vdwg.mxu0
    %1715 = vmatpush.bf16.msra.mxu0 %v802
    %1716 = vmatpush.bf16.msra.mxu0 %v798
    %1717 = vmatpush.bf16.msra.mxu0 %v794
    %1718 = vmatpush.bf16.msra.mxu0 %v790
    %1719 = vmatpush.bf16.msra.mxu0 %v786
    %1720 = vmatpush.bf16.msra.mxu0 %v782
    %1721 = vmatpush.bf16.msra.mxu0 %v778
    %1722 = vmatpush.bf16.msra.mxu0 %v774
    %1723 = vmatmul.bf16.gmra.mxu0 %v1671
    %v1724 = vpop.f32.mrf.mxu0
    %v1725 = vadd.f32 0.0, %v1724
    %v1726 = vpop.f32.mrf.mxu0
    %v1727 = vadd.f32 0.0, %v1726
    %1728 = vdwg.mxu0
    %s1729 = scalar_lea.vmem [#allocation3], 256
    %v1730 = vld [vmem:[%s1729] sm:$0xff]
    %v1731 = vld [vmem:[%s1729 + $0x8] sm:$0xff]
    %v1732 = vld [vmem:[%s1729 + $0x10] sm:$0xff]
    %v1733 = vld [vmem:[%s1729 + $0x18] sm:$0xff]
    %v1734 = vld [vmem:[%s1729 + $0x20] sm:$0xff]
    %v1735 = vld [vmem:[%s1729 + $0x28] sm:$0xff]
    %v1736 = vld [vmem:[%s1729 + $0x30] sm:$0xff]
    %v1737 = vld [vmem:[%s1729 + $0x38] sm:$0xff]
    %v1738 = vadd.f32 %v1730, %v1683
    %v1739 = vadd.f32 %v1731, %v1697
    %v1740 = vadd.f32 %v1732, %v1711
    %v1741 = vadd.f32 %v1733, %v1725
    %v1742 = vadd.f32 %v1734, %v1685
    %v1743 = vadd.f32 %v1735, %v1699
    %v1744 = vadd.f32 %v1736, %v1713
    %v1745 = vadd.f32 %v1737, %v1727
    %v1746 = vxor.u32 %v1738, 2147483648
    %v1747 = vxor.u32 %v1742, 2147483648
    %v1748 = vmul.f32 %v1746, 1.442695
    %v1749 = vpow.pop %v1748
    %v1750 = vmul.f32 %v1747, 1.442695
    %v1751 = vpow.pop %v1750
    %v1752 = vadd.f32 %v1749, 1.0
    %v1753 = vadd.f32 %v1751, 1.0
    %v1754 = vrcp.pop %v1752
    %v1755 = vmul.f32 %v1752, %v1754
    %v1756 = vsub.f32 1.0, %v1755
    %v1757 = vmul.f32 %v1754, %v1756
    %v1758 = vadd.f32 %v1754, %v1757
    %vm1759 = vweird.f32 %v1752
    %vm1760 = vweird.f32 %v1754
    %vm1761 = vmor %vm1759, %vm1760
    %v1762 = vsel %vm1761, %v1754, %v1758
    %v1763 = vand.u32 2147483647, %v1752
    %vm1764 = vcmp.eq.f32.partialorder %v1763, 8.507059e+37
    %v1765 = vand.u32 %v1752, 2147483648
    %v1766 = vor.u32 1.1754944e-38, %v1765
    %v1767 = vsel %vm1764, %v1766, %v1762
    %v1768 = vmul.f32 1.0, %v1767
    %v1769 = vrcp.pop %v1753
    %v1770 = vmul.f32 %v1753, %v1769
    %v1771 = vsub.f32 1.0, %v1770
    %v1772 = vmul.f32 %v1769, %v1771
    %v1773 = vadd.f32 %v1769, %v1772
    %vm1774 = vweird.f32 %v1753
    %vm1775 = vweird.f32 %v1769
    %vm1776 = vmor %vm1774, %vm1775
    %v1777 = vsel %vm1776, %v1769, %v1773
    %v1778 = vand.u32 2147483647, %v1753
    %vm1779 = vcmp.eq.f32.partialorder %v1778, 8.507059e+37
    %v1780 = vand.u32 %v1753, 2147483648
    %v1781 = vor.u32 1.1754944e-38, %v1780
    %v1782 = vsel %vm1779, %v1781, %v1777
    %v1783 = vmul.f32 1.0, %v1782
    %v1784 = vxor.u32 %v1739, 2147483648
    %v1785 = vxor.u32 %v1743, 2147483648
    %v1786 = vmul.f32 %v1784, 1.442695
    %v1787 = vpow.pop %v1786
    %v1788 = vmul.f32 %v1785, 1.442695
    %v1789 = vpow.pop %v1788
    %v1790 = vadd.f32 %v1787, 1.0
    %v1791 = vadd.f32 %v1789, 1.0
    %v1792 = vrcp.pop %v1790
    %v1793 = vmul.f32 %v1790, %v1792
    %v1794 = vsub.f32 1.0, %v1793
    %v1795 = vmul.f32 %v1792, %v1794
    %v1796 = vadd.f32 %v1792, %v1795
    %vm1797 = vweird.f32 %v1790
    %vm1798 = vweird.f32 %v1792
    %vm1799 = vmor %vm1797, %vm1798
    %v1800 = vsel %vm1799, %v1792, %v1796
    %v1801 = vand.u32 2147483647, %v1790
    %vm1802 = vcmp.eq.f32.partialorder %v1801, 8.507059e+37
    %v1803 = vand.u32 %v1790, 2147483648
    %v1804 = vor.u32 1.1754944e-38, %v1803
    %v1805 = vsel %vm1802, %v1804, %v1800
    %v1806 = vmul.f32 1.0, %v1805
    %v1807 = vrcp.pop %v1791
    %v1808 = vmul.f32 %v1791, %v1807
    %v1809 = vsub.f32 1.0, %v1808
    %v1810 = vmul.f32 %v1807, %v1809
    %v1811 = vadd.f32 %v1807, %v1810
    %vm1812 = vweird.f32 %v1791
    %vm1813 = vweird.f32 %v1807
    %vm1814 = vmor %vm1812, %vm1813
    %v1815 = vsel %vm1814, %v1807, %v1811
    %v1816 = vand.u32 2147483647, %v1791
    %vm1817 = vcmp.eq.f32.partialorder %v1816, 8.507059e+37
    %v1818 = vand.u32 %v1791, 2147483648
    %v1819 = vor.u32 1.1754944e-38, %v1818
    %v1820 = vsel %vm1817, %v1819, %v1815
    %v1821 = vmul.f32 1.0, %v1820
    %v1822 = vtanh.pop %v1740
    %v1823 = vtanh.pop %v1744
    %v1824 = vxor.u32 %v1741, 2147483648
    %v1825 = vxor.u32 %v1745, 2147483648
    %v1826 = vmul.f32 %v1824, 1.442695
    %v1827 = vpow.pop %v1826
    %v1828 = vmul.f32 %v1825, 1.442695
    %v1829 = vpow.pop %v1828
    %v1830 = vadd.f32 %v1827, 1.0
    %v1831 = vadd.f32 %v1829, 1.0
    %v1832 = vrcp.pop %v1830
    %v1833 = vmul.f32 %v1830, %v1832
    %v1834 = vsub.f32 1.0, %v1833
    %v1835 = vmul.f32 %v1832, %v1834
    %v1836 = vadd.f32 %v1832, %v1835
    %vm1837 = vweird.f32 %v1830
    %vm1838 = vweird.f32 %v1832
    %vm1839 = vmor %vm1837, %vm1838
    %v1840 = vsel %vm1839, %v1832, %v1836
    %v1841 = vand.u32 2147483647, %v1830
    %vm1842 = vcmp.eq.f32.partialorder %v1841, 8.507059e+37
    %v1843 = vand.u32 %v1830, 2147483648
    %v1844 = vor.u32 1.1754944e-38, %v1843
    %v1845 = vsel %vm1842, %v1844, %v1840
    %v1846 = vmul.f32 1.0, %v1845
    %v1847 = vrcp.pop %v1831
    %v1848 = vmul.f32 %v1831, %v1847
    %v1849 = vsub.f32 1.0, %v1848
    %v1850 = vmul.f32 %v1847, %v1849
    %v1851 = vadd.f32 %v1847, %v1850
    %vm1852 = vweird.f32 %v1831
    %vm1853 = vweird.f32 %v1847
    %vm1854 = vmor %vm1852, %vm1853
    %v1855 = vsel %vm1854, %v1847, %v1851
    %v1856 = vand.u32 2147483647, %v1831
    %vm1857 = vcmp.eq.f32.partialorder %v1856, 8.507059e+37
    %v1858 = vand.u32 %v1831, 2147483648
    %v1859 = vor.u32 1.1754944e-38, %v1858
    %v1860 = vsel %vm1857, %v1859, %v1855
    %v1861 = vmul.f32 1.0, %v1860
    %v1862 = vmul.f32 %v1806, %v1656
    %v1863 = vmul.f32 %v1821, %v1657
    %v1864 = vmul.f32 %v1768, %v1822
    %v1865 = vmul.f32 %v1783, %v1823
    %v1866 = vadd.f32 %v1862, %v1864
    %v1867 = vadd.f32 %v1863, %v1865
    %v1868 = vtanh.pop %v1866
    %v1869 = vtanh.pop %v1867
    %v1870 = vmul.f32 %v1846, %v1868
    %v1871 = vmul.f32 %v1861, %v1869
    %v1872 = vpack.c.bf16 %v1870, %v1870
    %v1873 = vpack.c.bf16 %v1871, %v1871
    %s1874 = scalar_lea.vmem [#allocation2], 32
    %1875 = vst [vmem:[%s1874] sm:$0xf] %v1872
    %1876 = vst [vmem:[%s1874 + $0x4] sm:$0xf] %v1873
    %v1879 = vunpack.c.l.b16 %v1872
    %v1880 = vunpack.c.l.b16 %v1873
    %v1881 = vpack.c.b16 %v1880, %v1879
    %1883 = vmatpush.bf16.msra.mxu0 %v799
    %1884 = vmatpush.bf16.msra.mxu0 %v795
    %1885 = vmatpush.bf16.msra.mxu0 %v791
    %1886 = vmatpush.bf16.msra.mxu0 %v787
    %1887 = vmatpush.bf16.msra.mxu0 %v783
    %1888 = vmatpush.bf16.msra.mxu0 %v779
    %1889 = vmatpush.bf16.msra.mxu0 %v775
    %1890 = vmatpush.bf16.msra.mxu0 %v771
    %1891 = vmatmul.bf16.gmra.mxu0 %v1881
    %v1892 = vpop.f32.mrf.mxu0
    %v1893 = vadd.f32 0.0, %v1892
    %v1894 = vpop.f32.mrf.mxu0
    %v1895 = vadd.f32 0.0, %v1894
    %1896 = vdwg.mxu0
    %1897 = vmatpush.bf16.msra.mxu0 %v800
    %1898 = vmatpush.bf16.msra.mxu0 %v796
    %1899 = vmatpush.bf16.msra.mxu0 %v792
    %1900 = vmatpush.bf16.msra.mxu0 %v788
    %1901 = vmatpush.bf16.msra.mxu0 %v784
    %1902 = vmatpush.bf16.msra.mxu0 %v780
    %1903 = vmatpush.bf16.msra.mxu0 %v776
    %1904 = vmatpush.bf16.msra.mxu0 %v772
    %1905 = vmatmul.bf16.gmra.mxu0 %v1881
    %v1906 = vpop.f32.mrf.mxu0
    %v1907 = vadd.f32 0.0, %v1906
    %v1908 = vpop.f32.mrf.mxu0
    %v1909 = vadd.f32 0.0, %v1908
    %1910 = vdwg.mxu0
    %1911 = vmatpush.bf16.msra.mxu0 %v801
    %1912 = vmatpush.bf16.msra.mxu0 %v797
    %1913 = vmatpush.bf16.msra.mxu0 %v793
    %1914 = vmatpush.bf16.msra.mxu0 %v789
    %1915 = vmatpush.bf16.msra.mxu0 %v785
    %1916 = vmatpush.bf16.msra.mxu0 %v781
    %1917 = vmatpush.bf16.msra.mxu0 %v777
    %1918 = vmatpush.bf16.msra.mxu0 %v773
    %1919 = vmatmul.bf16.gmra.mxu0 %v1881
    %v1920 = vpop.f32.mrf.mxu0
    %v1921 = vadd.f32 0.0, %v1920
    %v1922 = vpop.f32.mrf.mxu0
    %v1923 = vadd.f32 0.0, %v1922
    %1924 = vdwg.mxu0
    %1925 = vmatpush.bf16.msra.mxu0 %v802
    %1926 = vmatpush.bf16.msra.mxu0 %v798
    %1927 = vmatpush.bf16.msra.mxu0 %v794
    %1928 = vmatpush.bf16.msra.mxu0 %v790
    %1929 = vmatpush.bf16.msra.mxu0 %v786
    %1930 = vmatpush.bf16.msra.mxu0 %v782
    %1931 = vmatpush.bf16.msra.mxu0 %v778
    %1932 = vmatpush.bf16.msra.mxu0 %v774
    %1933 = vmatmul.bf16.gmra.mxu0 %v1881
    %v1934 = vpop.f32.mrf.mxu0
    %v1935 = vadd.f32 0.0, %v1934
    %v1936 = vpop.f32.mrf.mxu0
    %v1937 = vadd.f32 0.0, %v1936
    %1938 = vdwg.mxu0
    %s1939 = scalar_lea.vmem [#allocation3], 320
    %v1940 = vld [vmem:[%s1939] sm:$0xff]
    %v1941 = vld [vmem:[%s1939 + $0x8] sm:$0xff]
    %v1942 = vld [vmem:[%s1939 + $0x10] sm:$0xff]
    %v1943 = vld [vmem:[%s1939 + $0x18] sm:$0xff]
    %v1944 = vld [vmem:[%s1939 + $0x20] sm:$0xff]
    %v1945 = vld [vmem:[%s1939 + $0x28] sm:$0xff]
    %v1946 = vld [vmem:[%s1939 + $0x30] sm:$0xff]
    %v1947 = vld [vmem:[%s1939 + $0x38] sm:$0xff]
    %v1948 = vadd.f32 %v1940, %v1893
    %v1949 = vadd.f32 %v1941, %v1907
    %v1950 = vadd.f32 %v1942, %v1921
    %v1951 = vadd.f32 %v1943, %v1935
    %v1952 = vadd.f32 %v1944, %v1895
    %v1953 = vadd.f32 %v1945, %v1909
    %v1954 = vadd.f32 %v1946, %v1923
    %v1955 = vadd.f32 %v1947, %v1937
    %v1956 = vxor.u32 %v1948, 2147483648
    %v1957 = vxor.u32 %v1952, 2147483648
    %v1958 = vmul.f32 %v1956, 1.442695
    %v1959 = vpow.pop %v1958
    %v1960 = vmul.f32 %v1957, 1.442695
    %v1961 = vpow.pop %v1960
    %v1962 = vadd.f32 %v1959, 1.0
    %v1963 = vadd.f32 %v1961, 1.0
    %v1964 = vrcp.pop %v1962
    %v1965 = vmul.f32 %v1962, %v1964
    %v1966 = vsub.f32 1.0, %v1965
    %v1967 = vmul.f32 %v1964, %v1966
    %v1968 = vadd.f32 %v1964, %v1967
    %vm1969 = vweird.f32 %v1962
    %vm1970 = vweird.f32 %v1964
    %vm1971 = vmor %vm1969, %vm1970
    %v1972 = vsel %vm1971, %v1964, %v1968
    %v1973 = vand.u32 2147483647, %v1962
    %vm1974 = vcmp.eq.f32.partialorder %v1973, 8.507059e+37
    %v1975 = vand.u32 %v1962, 2147483648
    %v1976 = vor.u32 1.1754944e-38, %v1975
    %v1977 = vsel %vm1974, %v1976, %v1972
    %v1978 = vmul.f32 1.0, %v1977
    %v1979 = vrcp.pop %v1963
    %v1980 = vmul.f32 %v1963, %v1979
    %v1981 = vsub.f32 1.0, %v1980
    %v1982 = vmul.f32 %v1979, %v1981
    %v1983 = vadd.f32 %v1979, %v1982
    %vm1984 = vweird.f32 %v1963
    %vm1985 = vweird.f32 %v1979
    %vm1986 = vmor %vm1984, %vm1985
    %v1987 = vsel %vm1986, %v1979, %v1983
    %v1988 = vand.u32 2147483647, %v1963
    %vm1989 = vcmp.eq.f32.partialorder %v1988, 8.507059e+37
    %v1990 = vand.u32 %v1963, 2147483648
    %v1991 = vor.u32 1.1754944e-38, %v1990
    %v1992 = vsel %vm1989, %v1991, %v1987
    %v1993 = vmul.f32 1.0, %v1992
    %v1994 = vxor.u32 %v1949, 2147483648
    %v1995 = vxor.u32 %v1953, 2147483648
    %v1996 = vmul.f32 %v1994, 1.442695
    %v1997 = vpow.pop %v1996
    %v1998 = vmul.f32 %v1995, 1.442695
    %v1999 = vpow.pop %v1998
    %v2000 = vadd.f32 %v1997, 1.0
    %v2001 = vadd.f32 %v1999, 1.0
    %v2002 = vrcp.pop %v2000
    %v2003 = vmul.f32 %v2000, %v2002
    %v2004 = vsub.f32 1.0, %v2003
    %v2005 = vmul.f32 %v2002, %v2004
    %v2006 = vadd.f32 %v2002, %v2005
    %vm2007 = vweird.f32 %v2000
    %vm2008 = vweird.f32 %v2002
    %vm2009 = vmor %vm2007, %vm2008
    %v2010 = vsel %vm2009, %v2002, %v2006
    %v2011 = vand.u32 2147483647, %v2000
    %vm2012 = vcmp.eq.f32.partialorder %v2011, 8.507059e+37
    %v2013 = vand.u32 %v2000, 2147483648
    %v2014 = vor.u32 1.1754944e-38, %v2013
    %v2015 = vsel %vm2012, %v2014, %v2010
    %v2016 = vmul.f32 1.0, %v2015
    %v2017 = vrcp.pop %v2001
    %v2018 = vmul.f32 %v2001, %v2017
    %v2019 = vsub.f32 1.0, %v2018
    %v2020 = vmul.f32 %v2017, %v2019
    %v2021 = vadd.f32 %v2017, %v2020
    %vm2022 = vweird.f32 %v2001
    %vm2023 = vweird.f32 %v2017
    %vm2024 = vmor %vm2022, %vm2023
    %v2025 = vsel %vm2024, %v2017, %v2021
    %v2026 = vand.u32 2147483647, %v2001
    %vm2027 = vcmp.eq.f32.partialorder %v2026, 8.507059e+37
    %v2028 = vand.u32 %v2001, 2147483648
    %v2029 = vor.u32 1.1754944e-38, %v2028
    %v2030 = vsel %vm2027, %v2029, %v2025
    %v2031 = vmul.f32 1.0, %v2030
    %v2032 = vtanh.pop %v1950
    %v2033 = vtanh.pop %v1954
    %v2034 = vxor.u32 %v1951, 2147483648
    %v2035 = vxor.u32 %v1955, 2147483648
    %v2036 = vmul.f32 %v2034, 1.442695
    %v2037 = vpow.pop %v2036
    %v2038 = vmul.f32 %v2035, 1.442695
    %v2039 = vpow.pop %v2038
    %v2040 = vadd.f32 %v2037, 1.0
    %v2041 = vadd.f32 %v2039, 1.0
    %v2042 = vrcp.pop %v2040
    %v2043 = vmul.f32 %v2040, %v2042
    %v2044 = vsub.f32 1.0, %v2043
    %v2045 = vmul.f32 %v2042, %v2044
    %v2046 = vadd.f32 %v2042, %v2045
    %vm2047 = vweird.f32 %v2040
    %vm2048 = vweird.f32 %v2042
    %vm2049 = vmor %vm2047, %vm2048
    %v2050 = vsel %vm2049, %v2042, %v2046
    %v2051 = vand.u32 2147483647, %v2040
    %vm2052 = vcmp.eq.f32.partialorder %v2051, 8.507059e+37
    %v2053 = vand.u32 %v2040, 2147483648
    %v2054 = vor.u32 1.1754944e-38, %v2053
    %v2055 = vsel %vm2052, %v2054, %v2050
    %v2056 = vmul.f32 1.0, %v2055
    %v2057 = vrcp.pop %v2041
    %v2058 = vmul.f32 %v2041, %v2057
    %v2059 = vsub.f32 1.0, %v2058
    %v2060 = vmul.f32 %v2057, %v2059
    %v2061 = vadd.f32 %v2057, %v2060
    %vm2062 = vweird.f32 %v2041
    %vm2063 = vweird.f32 %v2057
    %vm2064 = vmor %vm2062, %vm2063
    %v2065 = vsel %vm2064, %v2057, %v2061
    %v2066 = vand.u32 2147483647, %v2041
    %vm2067 = vcmp.eq.f32.partialorder %v2066, 8.507059e+37
    %v2068 = vand.u32 %v2041, 2147483648
    %v2069 = vor.u32 1.1754944e-38, %v2068
    %v2070 = vsel %vm2067, %v2069, %v2065
    %v2071 = vmul.f32 1.0, %v2070
    %v2072 = vmul.f32 %v2016, %v1866
    %v2073 = vmul.f32 %v2031, %v1867
    %v2074 = vmul.f32 %v1978, %v2032
    %v2075 = vmul.f32 %v1993, %v2033
    %v2076 = vadd.f32 %v2072, %v2074
    %v2077 = vadd.f32 %v2073, %v2075
    %v2078 = vtanh.pop %v2076
    %v2079 = vtanh.pop %v2077
    %v2080 = vmul.f32 %v2056, %v2078
    %v2081 = vmul.f32 %v2071, %v2079
    %v2082 = vpack.c.bf16 %v2080, %v2080
    %v2083 = vpack.c.bf16 %v2081, %v2081
    %s2084 = scalar_lea.vmem [#allocation2], 40
    %2085 = vst [vmem:[%s2084] sm:$0xf] %v2082
    %2086 = vst [vmem:[%s2084 + $0x4] sm:$0xf] %v2083
    %v2089 = vunpack.c.l.b16 %v2082
    %v2090 = vunpack.c.l.b16 %v2083
    %v2091 = vpack.c.b16 %v2090, %v2089
    %2093 = vmatpush.bf16.msra.mxu0 %v799
    %2094 = vmatpush.bf16.msra.mxu0 %v795
    %2095 = vmatpush.bf16.msra.mxu0 %v791
    %2096 = vmatpush.bf16.msra.mxu0 %v787
    %2097 = vmatpush.bf16.msra.mxu0 %v783
    %2098 = vmatpush.bf16.msra.mxu0 %v779
    %2099 = vmatpush.bf16.msra.mxu0 %v775
    %2100 = vmatpush.bf16.msra.mxu0 %v771
    %2101 = vmatmul.bf16.gmra.mxu0 %v2091
    %v2102 = vpop.f32.mrf.mxu0
    %v2103 = vadd.f32 0.0, %v2102
    %v2104 = vpop.f32.mrf.mxu0
    %v2105 = vadd.f32 0.0, %v2104
    %2106 = vdwg.mxu0
    %2107 = vmatpush.bf16.msra.mxu0 %v800
    %2108 = vmatpush.bf16.msra.mxu0 %v796
    %2109 = vmatpush.bf16.msra.mxu0 %v792
    %2110 = vmatpush.bf16.msra.mxu0 %v788
    %2111 = vmatpush.bf16.msra.mxu0 %v784
    %2112 = vmatpush.bf16.msra.mxu0 %v780
    %2113 = vmatpush.bf16.msra.mxu0 %v776
    %2114 = vmatpush.bf16.msra.mxu0 %v772
    %2115 = vmatmul.bf16.gmra.mxu0 %v2091
    %v2116 = vpop.f32.mrf.mxu0
    %v2117 = vadd.f32 0.0, %v2116
    %v2118 = vpop.f32.mrf.mxu0
    %v2119 = vadd.f32 0.0, %v2118
    %2120 = vdwg.mxu0
    %2121 = vmatpush.bf16.msra.mxu0 %v801
    %2122 = vmatpush.bf16.msra.mxu0 %v797
    %2123 = vmatpush.bf16.msra.mxu0 %v793
    %2124 = vmatpush.bf16.msra.mxu0 %v789
    %2125 = vmatpush.bf16.msra.mxu0 %v785
    %2126 = vmatpush.bf16.msra.mxu0 %v781
    %2127 = vmatpush.bf16.msra.mxu0 %v777
    %2128 = vmatpush.bf16.msra.mxu0 %v773
    %2129 = vmatmul.bf16.gmra.mxu0 %v2091
    %v2130 = vpop.f32.mrf.mxu0
    %v2131 = vadd.f32 0.0, %v2130
    %v2132 = vpop.f32.mrf.mxu0
    %v2133 = vadd.f32 0.0, %v2132
    %2134 = vdwg.mxu0
    %2135 = vmatpush.bf16.msra.mxu0 %v802
    %2136 = vmatpush.bf16.msra.mxu0 %v798
    %2137 = vmatpush.bf16.msra.mxu0 %v794
    %2138 = vmatpush.bf16.msra.mxu0 %v790
    %2139 = vmatpush.bf16.msra.mxu0 %v786
    %2140 = vmatpush.bf16.msra.mxu0 %v782
    %2141 = vmatpush.bf16.msra.mxu0 %v778
    %2142 = vmatpush.bf16.msra.mxu0 %v774
    %2143 = vmatmul.bf16.gmra.mxu0 %v2091
    %v2144 = vpop.f32.mrf.mxu0
    %v2145 = vadd.f32 0.0, %v2144
    %v2146 = vpop.f32.mrf.mxu0
    %v2147 = vadd.f32 0.0, %v2146
    %2148 = vdwg.mxu0
    %s2149 = scalar_lea.vmem [#allocation3], 384
    %v2150 = vld [vmem:[%s2149] sm:$0xff]
    %v2151 = vld [vmem:[%s2149 + $0x8] sm:$0xff]
    %v2152 = vld [vmem:[%s2149 + $0x10] sm:$0xff]
    %v2153 = vld [vmem:[%s2149 + $0x18] sm:$0xff]
    %v2154 = vld [vmem:[%s2149 + $0x20] sm:$0xff]
    %v2155 = vld [vmem:[%s2149 + $0x28] sm:$0xff]
    %v2156 = vld [vmem:[%s2149 + $0x30] sm:$0xff]
    %v2157 = vld [vmem:[%s2149 + $0x38] sm:$0xff]
    %v2158 = vadd.f32 %v2150, %v2103
    %v2159 = vadd.f32 %v2151, %v2117
    %v2160 = vadd.f32 %v2152, %v2131
    %v2161 = vadd.f32 %v2153, %v2145
    %v2162 = vadd.f32 %v2154, %v2105
    %v2163 = vadd.f32 %v2155, %v2119
    %v2164 = vadd.f32 %v2156, %v2133
    %v2165 = vadd.f32 %v2157, %v2147
    %v2166 = vxor.u32 %v2158, 2147483648
    %v2167 = vxor.u32 %v2162, 2147483648
    %v2168 = vmul.f32 %v2166, 1.442695
    %v2169 = vpow.pop %v2168
    %v2170 = vmul.f32 %v2167, 1.442695
    %v2171 = vpow.pop %v2170
    %v2172 = vadd.f32 %v2169, 1.0
    %v2173 = vadd.f32 %v2171, 1.0
    %v2174 = vrcp.pop %v2172
    %v2175 = vmul.f32 %v2172, %v2174
    %v2176 = vsub.f32 1.0, %v2175
    %v2177 = vmul.f32 %v2174, %v2176
    %v2178 = vadd.f32 %v2174, %v2177
    %vm2179 = vweird.f32 %v2172
    %vm2180 = vweird.f32 %v2174
    %vm2181 = vmor %vm2179, %vm2180
    %v2182 = vsel %vm2181, %v2174, %v2178
    %v2183 = vand.u32 2147483647, %v2172
    %vm2184 = vcmp.eq.f32.partialorder %v2183, 8.507059e+37
    %v2185 = vand.u32 %v2172, 2147483648
    %v2186 = vor.u32 1.1754944e-38, %v2185
    %v2187 = vsel %vm2184, %v2186, %v2182
    %v2188 = vmul.f32 1.0, %v2187
    %v2189 = vrcp.pop %v2173
    %v2190 = vmul.f32 %v2173, %v2189
    %v2191 = vsub.f32 1.0, %v2190
    %v2192 = vmul.f32 %v2189, %v2191
    %v2193 = vadd.f32 %v2189, %v2192
    %vm2194 = vweird.f32 %v2173
    %vm2195 = vweird.f32 %v2189
    %vm2196 = vmor %vm2194, %vm2195
    %v2197 = vsel %vm2196, %v2189, %v2193
    %v2198 = vand.u32 2147483647, %v2173
    %vm2199 = vcmp.eq.f32.partialorder %v2198, 8.507059e+37
    %v2200 = vand.u32 %v2173, 2147483648
    %v2201 = vor.u32 1.1754944e-38, %v2200
    %v2202 = vsel %vm2199, %v2201, %v2197
    %v2203 = vmul.f32 1.0, %v2202
    %v2204 = vxor.u32 %v2159, 2147483648
    %v2205 = vxor.u32 %v2163, 2147483648
    %v2206 = vmul.f32 %v2204, 1.442695
    %v2207 = vpow.pop %v2206
    %v2208 = vmul.f32 %v2205, 1.442695
    %v2209 = vpow.pop %v2208
    %v2210 = vadd.f32 %v2207, 1.0
    %v2211 = vadd.f32 %v2209, 1.0
    %v2212 = vrcp.pop %v2210
    %v2213 = vmul.f32 %v2210, %v2212
    %v2214 = vsub.f32 1.0, %v2213
    %v2215 = vmul.f32 %v2212, %v2214
    %v2216 = vadd.f32 %v2212, %v2215
    %vm2217 = vweird.f32 %v2210
    %vm2218 = vweird.f32 %v2212
    %vm2219 = vmor %vm2217, %vm2218
    %v2220 = vsel %vm2219, %v2212, %v2216
    %v2221 = vand.u32 2147483647, %v2210
    %vm2222 = vcmp.eq.f32.partialorder %v2221, 8.507059e+37
    %v2223 = vand.u32 %v2210, 2147483648
    %v2224 = vor.u32 1.1754944e-38, %v2223
    %v2225 = vsel %vm2222, %v2224, %v2220
    %v2226 = vmul.f32 1.0, %v2225
    %v2227 = vrcp.pop %v2211
    %v2228 = vmul.f32 %v2211, %v2227
    %v2229 = vsub.f32 1.0, %v2228
    %v2230 = vmul.f32 %v2227, %v2229
    %v2231 = vadd.f32 %v2227, %v2230
    %vm2232 = vweird.f32 %v2211
    %vm2233 = vweird.f32 %v2227
    %vm2234 = vmor %vm2232, %vm2233
    %v2235 = vsel %vm2234, %v2227, %v2231
    %v2236 = vand.u32 2147483647, %v2211
    %vm2237 = vcmp.eq.f32.partialorder %v2236, 8.507059e+37
    %v2238 = vand.u32 %v2211, 2147483648
    %v2239 = vor.u32 1.1754944e-38, %v2238
    %v2240 = vsel %vm2237, %v2239, %v2235
    %v2241 = vmul.f32 1.0, %v2240
    %v2242 = vtanh.pop %v2160
    %v2243 = vtanh.pop %v2164
    %v2244 = vxor.u32 %v2161, 2147483648
    %v2245 = vxor.u32 %v2165, 2147483648
    %v2246 = vmul.f32 %v2244, 1.442695
    %v2247 = vpow.pop %v2246
    %v2248 = vmul.f32 %v2245, 1.442695
    %v2249 = vpow.pop %v2248
    %v2250 = vadd.f32 %v2247, 1.0
    %v2251 = vadd.f32 %v2249, 1.0
    %v2252 = vrcp.pop %v2250
    %v2253 = vmul.f32 %v2250, %v2252
    %v2254 = vsub.f32 1.0, %v2253
    %v2255 = vmul.f32 %v2252, %v2254
    %v2256 = vadd.f32 %v2252, %v2255
    %vm2257 = vweird.f32 %v2250
    %vm2258 = vweird.f32 %v2252
    %vm2259 = vmor %vm2257, %vm2258
    %v2260 = vsel %vm2259, %v2252, %v2256
    %v2261 = vand.u32 2147483647, %v2250
    %vm2262 = vcmp.eq.f32.partialorder %v2261, 8.507059e+37
    %v2263 = vand.u32 %v2250, 2147483648
    %v2264 = vor.u32 1.1754944e-38, %v2263
    %v2265 = vsel %vm2262, %v2264, %v2260
    %v2266 = vmul.f32 1.0, %v2265
    %v2267 = vrcp.pop %v2251
    %v2268 = vmul.f32 %v2251, %v2267
    %v2269 = vsub.f32 1.0, %v2268
    %v2270 = vmul.f32 %v2267, %v2269
    %v2271 = vadd.f32 %v2267, %v2270
    %vm2272 = vweird.f32 %v2251
    %vm2273 = vweird.f32 %v2267
    %vm2274 = vmor %vm2272, %vm2273
    %v2275 = vsel %vm2274, %v2267, %v2271
    %v2276 = vand.u32 2147483647, %v2251
    %vm2277 = vcmp.eq.f32.partialorder %v2276, 8.507059e+37
    %v2278 = vand.u32 %v2251, 2147483648
    %v2279 = vor.u32 1.1754944e-38, %v2278
    %v2280 = vsel %vm2277, %v2279, %v2275
    %v2281 = vmul.f32 1.0, %v2280
    %v2282 = vmul.f32 %v2226, %v2076
    %v2283 = vmul.f32 %v2241, %v2077
    %v2284 = vmul.f32 %v2188, %v2242
    %v2285 = vmul.f32 %v2203, %v2243
    %v2286 = vadd.f32 %v2282, %v2284
    %v2287 = vadd.f32 %v2283, %v2285
    %v2288 = vtanh.pop %v2286
    %v2289 = vtanh.pop %v2287
    %v2290 = vmul.f32 %v2266, %v2288
    %v2291 = vmul.f32 %v2281, %v2289
    %v2292 = vpack.c.bf16 %v2290, %v2290
    %v2293 = vpack.c.bf16 %v2291, %v2291
    %s2294 = scalar_lea.vmem [#allocation2], 48
    %2295 = vst [vmem:[%s2294] sm:$0xf] %v2292
    %2296 = vst [vmem:[%s2294 + $0x4] sm:$0xf] %v2293
    %v2299 = vunpack.c.l.b16 %v2292
    %v2300 = vunpack.c.l.b16 %v2293
    %v2301 = vpack.c.b16 %v2300, %v2299
    %2303 = vmatpush.bf16.msra.mxu0 %v799
    %2304 = vmatpush.bf16.msra.mxu0 %v795
    %2305 = vmatpush.bf16.msra.mxu0 %v791
    %2306 = vmatpush.bf16.msra.mxu0 %v787
    %2307 = vmatpush.bf16.msra.mxu0 %v783
    %2308 = vmatpush.bf16.msra.mxu0 %v779
    %2309 = vmatpush.bf16.msra.mxu0 %v775
    %2310 = vmatpush.bf16.msra.mxu0 %v771
    %2311 = vmatmul.bf16.gmra.mxu0 %v2301
    %v2312 = vpop.f32.mrf.mxu0
    %v2313 = vadd.f32 0.0, %v2312
    %v2314 = vpop.f32.mrf.mxu0
    %v2315 = vadd.f32 0.0, %v2314
    %2316 = vdwg.mxu0
    %2317 = vmatpush.bf16.msra.mxu0 %v800
    %2318 = vmatpush.bf16.msra.mxu0 %v796
    %2319 = vmatpush.bf16.msra.mxu0 %v792
    %2320 = vmatpush.bf16.msra.mxu0 %v788
    %2321 = vmatpush.bf16.msra.mxu0 %v784
    %2322 = vmatpush.bf16.msra.mxu0 %v780
    %2323 = vmatpush.bf16.msra.mxu0 %v776
    %2324 = vmatpush.bf16.msra.mxu0 %v772
    %2325 = vmatmul.bf16.gmra.mxu0 %v2301
    %v2326 = vpop.f32.mrf.mxu0
    %v2327 = vadd.f32 0.0, %v2326
    %v2328 = vpop.f32.mrf.mxu0
    %v2329 = vadd.f32 0.0, %v2328
    %2330 = vdwg.mxu0
    %2331 = vmatpush.bf16.msra.mxu0 %v801
    %2332 = vmatpush.bf16.msra.mxu0 %v797
    %2333 = vmatpush.bf16.msra.mxu0 %v793
    %2334 = vmatpush.bf16.msra.mxu0 %v789
    %2335 = vmatpush.bf16.msra.mxu0 %v785
    %2336 = vmatpush.bf16.msra.mxu0 %v781
    %2337 = vmatpush.bf16.msra.mxu0 %v777
    %2338 = vmatpush.bf16.msra.mxu0 %v773
    %2339 = vmatmul.bf16.gmra.mxu0 %v2301
    %v2340 = vpop.f32.mrf.mxu0
    %v2341 = vadd.f32 0.0, %v2340
    %v2342 = vpop.f32.mrf.mxu0
    %v2343 = vadd.f32 0.0, %v2342
    %2344 = vdwg.mxu0
    %2345 = vmatpush.bf16.msra.mxu0 %v802
    %2346 = vmatpush.bf16.msra.mxu0 %v798
    %2347 = vmatpush.bf16.msra.mxu0 %v794
    %2348 = vmatpush.bf16.msra.mxu0 %v790
    %2349 = vmatpush.bf16.msra.mxu0 %v786
    %2350 = vmatpush.bf16.msra.mxu0 %v782
    %2351 = vmatpush.bf16.msra.mxu0 %v778
    %2352 = vmatpush.bf16.msra.mxu0 %v774
    %2353 = vmatmul.bf16.gmra.mxu0 %v2301
    %v2354 = vpop.f32.mrf.mxu0
    %v2355 = vadd.f32 0.0, %v2354
    %v2356 = vpop.f32.mrf.mxu0
    %v2357 = vadd.f32 0.0, %v2356
    %2358 = vdwg.mxu0
    %s2359 = scalar_lea.vmem [#allocation3], 448
    %v2360 = vld [vmem:[%s2359] sm:$0xff]
    %v2361 = vld [vmem:[%s2359 + $0x8] sm:$0xff]
    %v2362 = vld [vmem:[%s2359 + $0x10] sm:$0xff]
    %v2363 = vld [vmem:[%s2359 + $0x18] sm:$0xff]
    %v2364 = vld [vmem:[%s2359 + $0x20] sm:$0xff]
    %v2365 = vld [vmem:[%s2359 + $0x28] sm:$0xff]
    %v2366 = vld [vmem:[%s2359 + $0x30] sm:$0xff]
    %v2367 = vld [vmem:[%s2359 + $0x38] sm:$0xff]
    %v2368 = vadd.f32 %v2360, %v2313
    %v2369 = vadd.f32 %v2361, %v2327
    %v2370 = vadd.f32 %v2362, %v2341
    %v2371 = vadd.f32 %v2363, %v2355
    %v2372 = vadd.f32 %v2364, %v2315
    %v2373 = vadd.f32 %v2365, %v2329
    %v2374 = vadd.f32 %v2366, %v2343
    %v2375 = vadd.f32 %v2367, %v2357
    %v2376 = vxor.u32 %v2368, 2147483648
    %v2377 = vxor.u32 %v2372, 2147483648
    %v2378 = vmul.f32 %v2376, 1.442695
    %v2379 = vpow.pop %v2378
    %v2380 = vmul.f32 %v2377, 1.442695
    %v2381 = vpow.pop %v2380
    %v2382 = vadd.f32 %v2379, 1.0
    %v2383 = vadd.f32 %v2381, 1.0
    %v2384 = vrcp.pop %v2382
    %v2385 = vmul.f32 %v2382, %v2384
    %v2386 = vsub.f32 1.0, %v2385
    %v2387 = vmul.f32 %v2384, %v2386
    %v2388 = vadd.f32 %v2384, %v2387
    %vm2389 = vweird.f32 %v2382
    %vm2390 = vweird.f32 %v2384
    %vm2391 = vmor %vm2389, %vm2390
    %v2392 = vsel %vm2391, %v2384, %v2388
    %v2393 = vand.u32 2147483647, %v2382
    %vm2394 = vcmp.eq.f32.partialorder %v2393, 8.507059e+37
    %v2395 = vand.u32 %v2382, 2147483648
    %v2396 = vor.u32 1.1754944e-38, %v2395
    %v2397 = vsel %vm2394, %v2396, %v2392
    %v2398 = vmul.f32 1.0, %v2397
    %v2399 = vrcp.pop %v2383
    %v2400 = vmul.f32 %v2383, %v2399
    %v2401 = vsub.f32 1.0, %v2400
    %v2402 = vmul.f32 %v2399, %v2401
    %v2403 = vadd.f32 %v2399, %v2402
    %vm2404 = vweird.f32 %v2383
    %vm2405 = vweird.f32 %v2399
    %vm2406 = vmor %vm2404, %vm2405
    %v2407 = vsel %vm2406, %v2399, %v2403
    %v2408 = vand.u32 2147483647, %v2383
    %vm2409 = vcmp.eq.f32.partialorder %v2408, 8.507059e+37
    %v2410 = vand.u32 %v2383, 2147483648
    %v2411 = vor.u32 1.1754944e-38, %v2410
    %v2412 = vsel %vm2409, %v2411, %v2407
    %v2413 = vmul.f32 1.0, %v2412
    %v2414 = vxor.u32 %v2369, 2147483648
    %v2415 = vxor.u32 %v2373, 2147483648
    %v2416 = vmul.f32 %v2414, 1.442695
    %v2417 = vpow.pop %v2416
    %v2418 = vmul.f32 %v2415, 1.442695
    %v2419 = vpow.pop %v2418
    %v2420 = vadd.f32 %v2417, 1.0
    %v2421 = vadd.f32 %v2419, 1.0
    %v2422 = vrcp.pop %v2420
    %v2423 = vmul.f32 %v2420, %v2422
    %v2424 = vsub.f32 1.0, %v2423
    %v2425 = vmul.f32 %v2422, %v2424
    %v2426 = vadd.f32 %v2422, %v2425
    %vm2427 = vweird.f32 %v2420
    %vm2428 = vweird.f32 %v2422
    %vm2429 = vmor %vm2427, %vm2428
    %v2430 = vsel %vm2429, %v2422, %v2426
    %v2431 = vand.u32 2147483647, %v2420
    %vm2432 = vcmp.eq.f32.partialorder %v2431, 8.507059e+37
    %v2433 = vand.u32 %v2420, 2147483648
    %v2434 = vor.u32 1.1754944e-38, %v2433
    %v2435 = vsel %vm2432, %v2434, %v2430
    %v2436 = vmul.f32 1.0, %v2435
    %v2437 = vrcp.pop %v2421
    %v2438 = vmul.f32 %v2421, %v2437
    %v2439 = vsub.f32 1.0, %v2438
    %v2440 = vmul.f32 %v2437, %v2439
    %v2441 = vadd.f32 %v2437, %v2440
    %vm2442 = vweird.f32 %v2421
    %vm2443 = vweird.f32 %v2437
    %vm2444 = vmor %vm2442, %vm2443
    %v2445 = vsel %vm2444, %v2437, %v2441
    %v2446 = vand.u32 2147483647, %v2421
    %vm2447 = vcmp.eq.f32.partialorder %v2446, 8.507059e+37
    %v2448 = vand.u32 %v2421, 2147483648
    %v2449 = vor.u32 1.1754944e-38, %v2448
    %v2450 = vsel %vm2447, %v2449, %v2445
    %v2451 = vmul.f32 1.0, %v2450
    %v2452 = vtanh.pop %v2370
    %v2453 = vtanh.pop %v2374
    %v2454 = vxor.u32 %v2371, 2147483648
    %v2455 = vxor.u32 %v2375, 2147483648
    %v2456 = vmul.f32 %v2454, 1.442695
    %v2457 = vpow.pop %v2456
    %v2458 = vmul.f32 %v2455, 1.442695
    %v2459 = vpow.pop %v2458
    %v2460 = vadd.f32 %v2457, 1.0
    %v2461 = vadd.f32 %v2459, 1.0
    %v2462 = vrcp.pop %v2460
    %v2463 = vmul.f32 %v2460, %v2462
    %v2464 = vsub.f32 1.0, %v2463
    %v2465 = vmul.f32 %v2462, %v2464
    %v2466 = vadd.f32 %v2462, %v2465
    %vm2467 = vweird.f32 %v2460
    %vm2468 = vweird.f32 %v2462
    %vm2469 = vmor %vm2467, %vm2468
    %v2470 = vsel %vm2469, %v2462, %v2466
    %v2471 = vand.u32 2147483647, %v2460
    %vm2472 = vcmp.eq.f32.partialorder %v2471, 8.507059e+37
    %v2473 = vand.u32 %v2460, 2147483648
    %v2474 = vor.u32 1.1754944e-38, %v2473
    %v2475 = vsel %vm2472, %v2474, %v2470
    %v2476 = vmul.f32 1.0, %v2475
    %v2477 = vrcp.pop %v2461
    %v2478 = vmul.f32 %v2461, %v2477
    %v2479 = vsub.f32 1.0, %v2478
    %v2480 = vmul.f32 %v2477, %v2479
    %v2481 = vadd.f32 %v2477, %v2480
    %vm2482 = vweird.f32 %v2461
    %vm2483 = vweird.f32 %v2477
    %vm2484 = vmor %vm2482, %vm2483
    %v2485 = vsel %vm2484, %v2477, %v2481
    %v2486 = vand.u32 2147483647, %v2461
    %vm2487 = vcmp.eq.f32.partialorder %v2486, 8.507059e+37
    %v2488 = vand.u32 %v2461, 2147483648
    %v2489 = vor.u32 1.1754944e-38, %v2488
    %v2490 = vsel %vm2487, %v2489, %v2485
    %v2491 = vmul.f32 1.0, %v2490
    %v2492 = vmul.f32 %v2436, %v2286
    %v2493 = vmul.f32 %v2451, %v2287
    %v2494 = vmul.f32 %v2398, %v2452
    %v2495 = vmul.f32 %v2413, %v2453
    %v2496 = vadd.f32 %v2492, %v2494
    %v2497 = vadd.f32 %v2493, %v2495
    %v2498 = vtanh.pop %v2496
    %v2499 = vtanh.pop %v2497
    %v2500 = vmul.f32 %v2476, %v2498
    %v2501 = vmul.f32 %v2491, %v2499
    %v2502 = vpack.c.bf16 %v2500, %v2500
    %v2503 = vpack.c.bf16 %v2501, %v2501
    %s2504 = scalar_lea.vmem [#allocation2], 56
    %2505 = vst [vmem:[%s2504] sm:$0xf] %v2502
    %2506 = vst [vmem:[%s2504 + $0x4] sm:$0xf] %v2503
    %s2507 = scalar_lea.vmem [#allocation4], 256
    %v2508 = vld [vmem:[%s2507] sm:$0xff]
    %v2509 = vld [vmem:[%s2507 + $0x8] sm:$0xff]
    %v2510 = vld [vmem:[%s2507 + $0x10] sm:$0xff]
    %v2511 = vld [vmem:[%s2507 + $0x18] sm:$0xff]
    %v2512 = vld [vmem:[%s2507 + $0x20] sm:$0xff]
    %v2513 = vld [vmem:[%s2507 + $0x28] sm:$0xff]
    %v2514 = vld [vmem:[%s2507 + $0x30] sm:$0xff]
    %v2515 = vld [vmem:[%s2507 + $0x38] sm:$0xff]
    %v2516 = vld [vmem:[%s2507 + $0x40] sm:$0xff]
    %v2517 = vld [vmem:[%s2507 + $0x48] sm:$0xff]
    %v2518 = vld [vmem:[%s2507 + $0x50] sm:$0xff]
    %v2519 = vld [vmem:[%s2507 + $0x58] sm:$0xff]
    %v2520 = vld [vmem:[%s2507 + $0x60] sm:$0xff]
    %v2521 = vld [vmem:[%s2507 + $0x68] sm:$0xff]
    %v2522 = vld [vmem:[%s2507 + $0x70] sm:$0xff]
    %v2523 = vld [vmem:[%s2507 + $0x78] sm:$0xff]
    %v2524 = vld [vmem:[%s2507 + $0x80] sm:$0xff]
    %v2525 = vld [vmem:[%s2507 + $0x88] sm:$0xff]
    %v2526 = vld [vmem:[%s2507 + $0x90] sm:$0xff]
    %v2527 = vld [vmem:[%s2507 + $0x98] sm:$0xff]
    %v2528 = vld [vmem:[%s2507 + $0xa0] sm:$0xff]
    %v2529 = vld [vmem:[%s2507 + $0xa8] sm:$0xff]
    %v2530 = vld [vmem:[%s2507 + $0xb0] sm:$0xff]
    %v2531 = vld [vmem:[%s2507 + $0xb8] sm:$0xff]
    %v2532 = vld [vmem:[%s2507 + $0xc0] sm:$0xff]
    %v2533 = vld [vmem:[%s2507 + $0xc8] sm:$0xff]
    %v2534 = vld [vmem:[%s2507 + $0xd0] sm:$0xff]
    %v2535 = vld [vmem:[%s2507 + $0xd8] sm:$0xff]
    %v2536 = vld [vmem:[%s2507 + $0xe0] sm:$0xff]
    %v2537 = vld [vmem:[%s2507 + $0xe8] sm:$0xff]
    %v2538 = vld [vmem:[%s2507 + $0xf0] sm:$0xff]
    %v2539 = vld [vmem:[%s2507 + $0xf8] sm:$0xff]
    %s2540 = scalar_lea.vmem %s3, 4
    %v2541 = vld [vmem:[%s2540] sm:$0xf]
    %v2542 = vld [vmem:[#allocation2] sm:$0xf]
    %v2543 = vld [vmem:[#allocation2 + $0x4] sm:$0xf]
    %v2544 = vld [vmem:[#allocation2 + $0x8] sm:$0xf]
    %v2545 = vld [vmem:[#allocation2 + $0xc] sm:$0xf]
    %v2546 = vld [vmem:[#allocation2 + $0x10] sm:$0xf]
    %v2547 = vld [vmem:[#allocation2 + $0x14] sm:$0xf]
    %v2548 = vld [vmem:[#allocation2 + $0x18] sm:$0xf]
    %v2549 = vld [vmem:[#allocation2 + $0x1c] sm:$0xf]
    %v2550 = vld [vmem:[#allocation2 + $0x20] sm:$0xf]
    %v2551 = vld [vmem:[#allocation2 + $0x24] sm:$0xf]
    %v2552 = vld [vmem:[#allocation2 + $0x28] sm:$0xf]
    %v2553 = vld [vmem:[#allocation2 + $0x2c] sm:$0xf]
    %v2554 = vld [vmem:[#allocation2 + $0x30] sm:$0xf]
    %v2555 = vld [vmem:[#allocation2 + $0x34] sm:$0xf]
    %v2556 = vld [vmem:[#allocation2 + $0x38] sm:$0xf]
    %v2557 = vld [vmem:[#allocation2 + $0x3c] sm:$0xf]
    %v2559 = vperm.slane %v2541, 0
    %v2560 = vperm.slane %v2541, 1
    %v2561 = vperm.slane %v2541, 2
    %v2562 = vperm.slane %v2541, 3
    %v2583 = vunpack.c.l.b16 %v2542
    %v2584 = vunpack.c.l.b16 %v2543
    %v2585 = vunpack.c.l.b16 %v2544
    %v2586 = vunpack.c.l.b16 %v2545
    %v2587 = vunpack.c.l.b16 %v2546
    %v2588 = vunpack.c.l.b16 %v2547
    %v2589 = vunpack.c.l.b16 %v2548
    %v2590 = vunpack.c.l.b16 %v2549
    %v2591 = vunpack.c.l.b16 %v2550
    %v2592 = vunpack.c.l.b16 %v2551
    %v2593 = vunpack.c.l.b16 %v2552
    %v2594 = vunpack.c.l.b16 %v2553
    %v2595 = vunpack.c.l.b16 %v2554
    %v2596 = vunpack.c.l.b16 %v2555
    %v2597 = vunpack.c.l.b16 %v2556
    %v2598 = vunpack.c.l.b16 %v2557
    %v2599 = vpack.c.b16 %v2584, %v2583
    %v2600 = vpack.c.b16 %v2586, %v2585
    %v2601 = vpack.c.b16 %v2588, %v2587
    %v2602 = vpack.c.b16 %v2590, %v2589
    %v2603 = vpack.c.b16 %v2592, %v2591
    %v2604 = vpack.c.b16 %v2594, %v2593
    %v2605 = vpack.c.b16 %v2596, %v2595
    %v2606 = vpack.c.b16 %v2598, %v2597
    %v2647 = vunpack.c.l.b16 %v2508
    %v2648 = vunpack.c.h.b16 %v2508
    %v2649 = vunpack.c.l.b16 %v2509
    %v2650 = vunpack.c.h.b16 %v2509
    %v2651 = vunpack.c.l.b16 %v2510
    %v2652 = vunpack.c.h.b16 %v2510
    %v2653 = vunpack.c.l.b16 %v2511
    %v2654 = vunpack.c.h.b16 %v2511
    %v2655 = vunpack.c.l.b16 %v2512
    %v2656 = vunpack.c.h.b16 %v2512
    %v2657 = vunpack.c.l.b16 %v2513
    %v2658 = vunpack.c.h.b16 %v2513
    %v2659 = vunpack.c.l.b16 %v2514
    %v2660 = vunpack.c.h.b16 %v2514
    %v2661 = vunpack.c.l.b16 %v2515
    %v2662 = vunpack.c.h.b16 %v2515
    %v2663 = vunpack.c.l.b16 %v2516
    %v2664 = vunpack.c.h.b16 %v2516
    %v2665 = vunpack.c.l.b16 %v2517
    %v2666 = vunpack.c.h.b16 %v2517
    %v2667 = vunpack.c.l.b16 %v2518
    %v2668 = vunpack.c.h.b16 %v2518
    %v2669 = vunpack.c.l.b16 %v2519
    %v2670 = vunpack.c.h.b16 %v2519
    %v2671 = vunpack.c.l.b16 %v2520
    %v2672 = vunpack.c.h.b16 %v2520
    %v2673 = vunpack.c.l.b16 %v2521
    %v2674 = vunpack.c.h.b16 %v2521
    %v2675 = vunpack.c.l.b16 %v2522
    %v2676 = vunpack.c.h.b16 %v2522
    %v2677 = vunpack.c.l.b16 %v2523
    %v2678 = vunpack.c.h.b16 %v2523
    %v2679 = vunpack.c.l.b16 %v2524
    %v2680 = vunpack.c.h.b16 %v2524
    %v2681 = vunpack.c.l.b16 %v2525
    %v2682 = vunpack.c.h.b16 %v2525
    %v2683 = vunpack.c.l.b16 %v2526
    %v2684 = vunpack.c.h.b16 %v2526
    %v2685 = vunpack.c.l.b16 %v2527
    %v2686 = vunpack.c.h.b16 %v2527
    %v2687 = vunpack.c.l.b16 %v2528
    %v2688 = vunpack.c.h.b16 %v2528
    %v2689 = vunpack.c.l.b16 %v2529
    %v2690 = vunpack.c.h.b16 %v2529
    %v2691 = vunpack.c.l.b16 %v2530
    %v2692 = vunpack.c.h.b16 %v2530
    %v2693 = vunpack.c.l.b16 %v2531
    %v2694 = vunpack.c.h.b16 %v2531
    %v2695 = vunpack.c.l.b16 %v2532
    %v2696 = vunpack.c.h.b16 %v2532
    %v2697 = vunpack.c.l.b16 %v2533
    %v2698 = vunpack.c.h.b16 %v2533
    %v2699 = vunpack.c.l.b16 %v2534
    %v2700 = vunpack.c.h.b16 %v2534
    %v2701 = vunpack.c.l.b16 %v2535
    %v2702 = vunpack.c.h.b16 %v2535
    %v2703 = vunpack.c.l.b16 %v2536
    %v2704 = vunpack.c.h.b16 %v2536
    %v2705 = vunpack.c.l.b16 %v2537
    %v2706 = vunpack.c.h.b16 %v2537
    %v2707 = vunpack.c.l.b16 %v2538
    %v2708 = vunpack.c.h.b16 %v2538
    %v2709 = vunpack.c.l.b16 %v2539
    %v2710 = vunpack.c.h.b16 %v2539
    %v2711 = vpack.c.b16 %v2651, %v2647
    %v2712 = vpack.c.b16 %v2652, %v2648
    %v2713 = vpack.c.b16 %v2653, %v2649
    %v2714 = vpack.c.b16 %v2654, %v2650
    %v2715 = vpack.c.b16 %v2659, %v2655
    %v2716 = vpack.c.b16 %v2660, %v2656
    %v2717 = vpack.c.b16 %v2661, %v2657
    %v2718 = vpack.c.b16 %v2662, %v2658
    %v2719 = vpack.c.b16 %v2667, %v2663
    %v2720 = vpack.c.b16 %v2668, %v2664
    %v2721 = vpack.c.b16 %v2669, %v2665
    %v2722 = vpack.c.b16 %v2670, %v2666
    %v2723 = vpack.c.b16 %v2675, %v2671
    %v2724 = vpack.c.b16 %v2676, %v2672
    %v2725 = vpack.c.b16 %v2677, %v2673
    %v2726 = vpack.c.b16 %v2678, %v2674
    %v2727 = vpack.c.b16 %v2683, %v2679
    %v2728 = vpack.c.b16 %v2684, %v2680
    %v2729 = vpack.c.b16 %v2685, %v2681
    %v2730 = vpack.c.b16 %v2686, %v2682
    %v2731 = vpack.c.b16 %v2691, %v2687
    %v2732 = vpack.c.b16 %v2692, %v2688
    %v2733 = vpack.c.b16 %v2693, %v2689
    %v2734 = vpack.c.b16 %v2694, %v2690
    %v2735 = vpack.c.b16 %v2699, %v2695
    %v2736 = vpack.c.b16 %v2700, %v2696
    %v2737 = vpack.c.b16 %v2701, %v2697
    %v2738 = vpack.c.b16 %v2702, %v2698
    %v2739 = vpack.c.b16 %v2707, %v2703
    %v2740 = vpack.c.b16 %v2708, %v2704
    %v2741 = vpack.c.b16 %v2709, %v2705
    %v2742 = vpack.c.b16 %v2710, %v2706
    %2775 = vmatpush.bf16.msra.mxu0 %v2739
    %2776 = vmatpush.bf16.msra.mxu0 %v2735
    %2777 = vmatpush.bf16.msra.mxu0 %v2731
    %2778 = vmatpush.bf16.msra.mxu0 %v2727
    %2779 = vmatpush.bf16.msra.mxu0 %v2723
    %2780 = vmatpush.bf16.msra.mxu0 %v2719
    %2781 = vmatpush.bf16.msra.mxu0 %v2715
    %2782 = vmatpush.bf16.msra.mxu0 %v2711
    %2783 = vmatmul.bf16.gmra.mxu0 %v2599
    %v2784 = vpop.f32.mrf.mxu0
    %v2785 = vadd.f32 %v2559, %v2784
    %v2786 = vpop.f32.mrf.mxu0
    %v2787 = vadd.f32 %v2559, %v2786
    %2788 = vmatmul.bf16.gmra.mxu0 %v2600
    %v2789 = vpop.f32.mrf.mxu0
    %v2790 = vadd.f32 %v2559, %v2789
    %v2791 = vpop.f32.mrf.mxu0
    %v2792 = vadd.f32 %v2559, %v2791
    %2793 = vmatmul.bf16.gmra.mxu0 %v2601
    %v2794 = vpop.f32.mrf.mxu0
    %v2795 = vadd.f32 %v2559, %v2794
    %v2796 = vpop.f32.mrf.mxu0
    %v2797 = vadd.f32 %v2559, %v2796
    %2798 = vmatmul.bf16.gmra.mxu0 %v2602
    %v2799 = vpop.f32.mrf.mxu0
    %v2800 = vadd.f32 %v2559, %v2799
    %v2801 = vpop.f32.mrf.mxu0
    %v2802 = vadd.f32 %v2559, %v2801
    %2803 = vmatmul.bf16.gmra.mxu0 %v2603
    %v2804 = vpop.f32.mrf.mxu0
    %v2805 = vadd.f32 %v2559, %v2804
    %v2806 = vpop.f32.mrf.mxu0
    %v2807 = vadd.f32 %v2559, %v2806
    %2808 = vmatmul.bf16.gmra.mxu0 %v2604
    %v2809 = vpop.f32.mrf.mxu0
    %v2810 = vadd.f32 %v2559, %v2809
    %v2811 = vpop.f32.mrf.mxu0
    %v2812 = vadd.f32 %v2559, %v2811
    %2813 = vmatmul.bf16.gmra.mxu0 %v2605
    %v2814 = vpop.f32.mrf.mxu0
    %v2815 = vadd.f32 %v2559, %v2814
    %v2816 = vpop.f32.mrf.mxu0
    %v2817 = vadd.f32 %v2559, %v2816
    %2818 = vmatmul.bf16.gmra.mxu0 %v2606
    %v2819 = vpop.f32.mrf.mxu0
    %v2820 = vadd.f32 %v2559, %v2819
    %v2821 = vpop.f32.mrf.mxu0
    %v2822 = vadd.f32 %v2559, %v2821
    %2823 = vdwg.mxu0
    %2824 = vmatpush.bf16.msra.mxu0 %v2740
    %2825 = vmatpush.bf16.msra.mxu0 %v2736
    %2826 = vmatpush.bf16.msra.mxu0 %v2732
    %2827 = vmatpush.bf16.msra.mxu0 %v2728
    %2828 = vmatpush.bf16.msra.mxu0 %v2724
    %2829 = vmatpush.bf16.msra.mxu0 %v2720
    %2830 = vmatpush.bf16.msra.mxu0 %v2716
    %2831 = vmatpush.bf16.msra.mxu0 %v2712
    %2832 = vmatmul.bf16.gmra.mxu0 %v2599
    %v2833 = vpop.f32.mrf.mxu0
    %v2834 = vadd.f32 %v2560, %v2833
    %v2835 = vpop.f32.mrf.mxu0
    %v2836 = vadd.f32 %v2560, %v2835
    %2837 = vmatmul.bf16.gmra.mxu0 %v2600
    %v2838 = vpop.f32.mrf.mxu0
    %v2839 = vadd.f32 %v2560, %v2838
    %v2840 = vpop.f32.mrf.mxu0
    %v2841 = vadd.f32 %v2560, %v2840
    %2842 = vmatmul.bf16.gmra.mxu0 %v2601
    %v2843 = vpop.f32.mrf.mxu0
    %v2844 = vadd.f32 %v2560, %v2843
    %v2845 = vpop.f32.mrf.mxu0
    %v2846 = vadd.f32 %v2560, %v2845
    %2847 = vmatmul.bf16.gmra.mxu0 %v2602
    %v2848 = vpop.f32.mrf.mxu0
    %v2849 = vadd.f32 %v2560, %v2848
    %v2850 = vpop.f32.mrf.mxu0
    %v2851 = vadd.f32 %v2560, %v2850
    %2852 = vmatmul.bf16.gmra.mxu0 %v2603
    %v2853 = vpop.f32.mrf.mxu0
    %v2854 = vadd.f32 %v2560, %v2853
    %v2855 = vpop.f32.mrf.mxu0
    %v2856 = vadd.f32 %v2560, %v2855
    %2857 = vmatmul.bf16.gmra.mxu0 %v2604
    %v2858 = vpop.f32.mrf.mxu0
    %v2859 = vadd.f32 %v2560, %v2858
    %v2860 = vpop.f32.mrf.mxu0
    %v2861 = vadd.f32 %v2560, %v2860
    %2862 = vmatmul.bf16.gmra.mxu0 %v2605
    %v2863 = vpop.f32.mrf.mxu0
    %v2864 = vadd.f32 %v2560, %v2863
    %v2865 = vpop.f32.mrf.mxu0
    %v2866 = vadd.f32 %v2560, %v2865
    %2867 = vmatmul.bf16.gmra.mxu0 %v2606
    %v2868 = vpop.f32.mrf.mxu0
    %v2869 = vadd.f32 %v2560, %v2868
    %v2870 = vpop.f32.mrf.mxu0
    %v2871 = vadd.f32 %v2560, %v2870
    %2872 = vdwg.mxu0
    %2873 = vmatpush.bf16.msra.mxu0 %v2741
    %2874 = vmatpush.bf16.msra.mxu0 %v2737
    %2875 = vmatpush.bf16.msra.mxu0 %v2733
    %2876 = vmatpush.bf16.msra.mxu0 %v2729
    %2877 = vmatpush.bf16.msra.mxu0 %v2725
    %2878 = vmatpush.bf16.msra.mxu0 %v2721
    %2879 = vmatpush.bf16.msra.mxu0 %v2717
    %2880 = vmatpush.bf16.msra.mxu0 %v2713
    %2881 = vmatmul.bf16.gmra.mxu0 %v2599
    %v2882 = vpop.f32.mrf.mxu0
    %v2883 = vadd.f32 %v2561, %v2882
    %v2884 = vpop.f32.mrf.mxu0
    %v2885 = vadd.f32 %v2561, %v2884
    %2886 = vmatmul.bf16.gmra.mxu0 %v2600
    %v2887 = vpop.f32.mrf.mxu0
    %v2888 = vadd.f32 %v2561, %v2887
    %v2889 = vpop.f32.mrf.mxu0
    %v2890 = vadd.f32 %v2561, %v2889
    %2891 = vmatmul.bf16.gmra.mxu0 %v2601
    %v2892 = vpop.f32.mrf.mxu0
    %v2893 = vadd.f32 %v2561, %v2892
    %v2894 = vpop.f32.mrf.mxu0
    %v2895 = vadd.f32 %v2561, %v2894
    %2896 = vmatmul.bf16.gmra.mxu0 %v2602
    %v2897 = vpop.f32.mrf.mxu0
    %v2898 = vadd.f32 %v2561, %v2897
    %v2899 = vpop.f32.mrf.mxu0
    %v2900 = vadd.f32 %v2561, %v2899
    %2901 = vmatmul.bf16.gmra.mxu0 %v2603
    %v2902 = vpop.f32.mrf.mxu0
    %v2903 = vadd.f32 %v2561, %v2902
    %v2904 = vpop.f32.mrf.mxu0
    %v2905 = vadd.f32 %v2561, %v2904
    %2906 = vmatmul.bf16.gmra.mxu0 %v2604
    %v2907 = vpop.f32.mrf.mxu0
    %v2908 = vadd.f32 %v2561, %v2907
    %v2909 = vpop.f32.mrf.mxu0
    %v2910 = vadd.f32 %v2561, %v2909
    %2911 = vmatmul.bf16.gmra.mxu0 %v2605
    %v2912 = vpop.f32.mrf.mxu0
    %v2913 = vadd.f32 %v2561, %v2912
    %v2914 = vpop.f32.mrf.mxu0
    %v2915 = vadd.f32 %v2561, %v2914
    %2916 = vmatmul.bf16.gmra.mxu0 %v2606
    %v2917 = vpop.f32.mrf.mxu0
    %v2918 = vadd.f32 %v2561, %v2917
    %v2919 = vpop.f32.mrf.mxu0
    %v2920 = vadd.f32 %v2561, %v2919
    %2921 = vdwg.mxu0
    %2922 = vmatpush.bf16.msra.mxu0 %v2742
    %2923 = vmatpush.bf16.msra.mxu0 %v2738
    %2924 = vmatpush.bf16.msra.mxu0 %v2734
    %2925 = vmatpush.bf16.msra.mxu0 %v2730
    %2926 = vmatpush.bf16.msra.mxu0 %v2726
    %2927 = vmatpush.bf16.msra.mxu0 %v2722
    %2928 = vmatpush.bf16.msra.mxu0 %v2718
    %2929 = vmatpush.bf16.msra.mxu0 %v2714
    %2930 = vmatmul.bf16.gmra.mxu0 %v2599
    %v2931 = vpop.f32.mrf.mxu0
    %v2932 = vadd.f32 %v2562, %v2931
    %v2933 = vpop.f32.mrf.mxu0
    %v2934 = vadd.f32 %v2562, %v2933
    %2935 = vmatmul.bf16.gmra.mxu0 %v2600
    %v2936 = vpop.f32.mrf.mxu0
    %v2937 = vadd.f32 %v2562, %v2936
    %v2938 = vpop.f32.mrf.mxu0
    %v2939 = vadd.f32 %v2562, %v2938
    %2940 = vmatmul.bf16.gmra.mxu0 %v2601
    %v2941 = vpop.f32.mrf.mxu0
    %v2942 = vadd.f32 %v2562, %v2941
    %v2943 = vpop.f32.mrf.mxu0
    %v2944 = vadd.f32 %v2562, %v2943
    %2945 = vmatmul.bf16.gmra.mxu0 %v2602
    %v2946 = vpop.f32.mrf.mxu0
    %v2947 = vadd.f32 %v2562, %v2946
    %v2948 = vpop.f32.mrf.mxu0
    %v2949 = vadd.f32 %v2562, %v2948
    %2950 = vmatmul.bf16.gmra.mxu0 %v2603
    %v2951 = vpop.f32.mrf.mxu0
    %v2952 = vadd.f32 %v2562, %v2951
    %v2953 = vpop.f32.mrf.mxu0
    %v2954 = vadd.f32 %v2562, %v2953
    %2955 = vmatmul.bf16.gmra.mxu0 %v2604
    %v2956 = vpop.f32.mrf.mxu0
    %v2957 = vadd.f32 %v2562, %v2956
    %v2958 = vpop.f32.mrf.mxu0
    %v2959 = vadd.f32 %v2562, %v2958
    %2960 = vmatmul.bf16.gmra.mxu0 %v2605
    %v2961 = vpop.f32.mrf.mxu0
    %v2962 = vadd.f32 %v2562, %v2961
    %v2963 = vpop.f32.mrf.mxu0
    %v2964 = vadd.f32 %v2562, %v2963
    %2965 = vmatmul.bf16.gmra.mxu0 %v2606
    %v2966 = vpop.f32.mrf.mxu0
    %v2967 = vadd.f32 %v2562, %v2966
    %v2968 = vpop.f32.mrf.mxu0
    %v2969 = vadd.f32 %v2562, %v2968
    %2970 = vdwg.mxu0
    %2971 = vst [vmem:[#allocation3] sm:$0xff] %v2785
    %2972 = vst [vmem:[#allocation3 + $0x8] sm:$0xff] %v2834
    %2973 = vst [vmem:[#allocation3 + $0x10] sm:$0xff] %v2883
    %2974 = vst [vmem:[#allocation3 + $0x18] sm:$0xff] %v2932
    %2975 = vst [vmem:[#allocation3 + $0x20] sm:$0xff] %v2787
    %2976 = vst [vmem:[#allocation3 + $0x28] sm:$0xff] %v2836
    %2977 = vst [vmem:[#allocation3 + $0x30] sm:$0xff] %v2885
    %2978 = vst [vmem:[#allocation3 + $0x38] sm:$0xff] %v2934
    %2979 = vst [vmem:[#allocation3 + $0x40] sm:$0xff] %v2790
    %2980 = vst [vmem:[#allocation3 + $0x48] sm:$0xff] %v2839
    %2981 = vst [vmem:[#allocation3 + $0x50] sm:$0xff] %v2888
    %2982 = vst [vmem:[#allocation3 + $0x58] sm:$0xff] %v2937
    %2983 = vst [vmem:[#allocation3 + $0x60] sm:$0xff] %v2792
    %2984 = vst [vmem:[#allocation3 + $0x68] sm:$0xff] %v2841
    %2985 = vst [vmem:[#allocation3 + $0x70] sm:$0xff] %v2890
    %2986 = vst [vmem:[#allocation3 + $0x78] sm:$0xff] %v2939
    %2987 = vst [vmem:[#allocation3 + $0x80] sm:$0xff] %v2795
    %2988 = vst [vmem:[#allocation3 + $0x88] sm:$0xff] %v2844
    %2989 = vst [vmem:[#allocation3 + $0x90] sm:$0xff] %v2893
    %2990 = vst [vmem:[#allocation3 + $0x98] sm:$0xff] %v2942
    %2991 = vst [vmem:[#allocation3 + $0xa0] sm:$0xff] %v2797
    %2992 = vst [vmem:[#allocation3 + $0xa8] sm:$0xff] %v2846
    %2993 = vst [vmem:[#allocation3 + $0xb0] sm:$0xff] %v2895
    %2994 = vst [vmem:[#allocation3 + $0xb8] sm:$0xff] %v2944
    %2995 = vst [vmem:[#allocation3 + $0xc0] sm:$0xff] %v2800
    %2996 = vst [vmem:[#allocation3 + $0xc8] sm:$0xff] %v2849
    %2997 = vst [vmem:[#allocation3 + $0xd0] sm:$0xff] %v2898
    %2998 = vst [vmem:[#allocation3 + $0xd8] sm:$0xff] %v2947
    %2999 = vst [vmem:[#allocation3 + $0xe0] sm:$0xff] %v2802
    %3000 = vst [vmem:[#allocation3 + $0xe8] sm:$0xff] %v2851
    %3001 = vst [vmem:[#allocation3 + $0xf0] sm:$0xff] %v2900
    %3002 = vst [vmem:[#allocation3 + $0xf8] sm:$0xff] %v2949
    %3003 = vst [vmem:[#allocation3 + $0x100] sm:$0xff] %v2805
    %3004 = vst [vmem:[#allocation3 + $0x108] sm:$0xff] %v2854
    %3005 = vst [vmem:[#allocation3 + $0x110] sm:$0xff] %v2903
    %3006 = vst [vmem:[#allocation3 + $0x118] sm:$0xff] %v2952
    %3007 = vst [vmem:[#allocation3 + $0x120] sm:$0xff] %v2807
    %3008 = vst [vmem:[#allocation3 + $0x128] sm:$0xff] %v2856
    %3009 = vst [vmem:[#allocation3 + $0x130] sm:$0xff] %v2905
    %3010 = vst [vmem:[#allocation3 + $0x138] sm:$0xff] %v2954
    %3011 = vst [vmem:[#allocation3 + $0x140] sm:$0xff] %v2810
    %3012 = vst [vmem:[#allocation3 + $0x148] sm:$0xff] %v2859
    %3013 = vst [vmem:[#allocation3 + $0x150] sm:$0xff] %v2908
    %3014 = vst [vmem:[#allocation3 + $0x158] sm:$0xff] %v2957
    %3015 = vst [vmem:[#allocation3 + $0x160] sm:$0xff] %v2812
    %3016 = vst [vmem:[#allocation3 + $0x168] sm:$0xff] %v2861
    %3017 = vst [vmem:[#allocation3 + $0x170] sm:$0xff] %v2910
    %3018 = vst [vmem:[#allocation3 + $0x178] sm:$0xff] %v2959
    %3019 = vst [vmem:[#allocation3 + $0x180] sm:$0xff] %v2815
    %3020 = vst [vmem:[#allocation3 + $0x188] sm:$0xff] %v2864
    %3021 = vst [vmem:[#allocation3 + $0x190] sm:$0xff] %v2913
    %3022 = vst [vmem:[#allocation3 + $0x198] sm:$0xff] %v2962
    %3023 = vst [vmem:[#allocation3 + $0x1a0] sm:$0xff] %v2817
    %3024 = vst [vmem:[#allocation3 + $0x1a8] sm:$0xff] %v2866
    %3025 = vst [vmem:[#allocation3 + $0x1b0] sm:$0xff] %v2915
    %3026 = vst [vmem:[#allocation3 + $0x1b8] sm:$0xff] %v2964
    %3027 = vst [vmem:[#allocation3 + $0x1c0] sm:$0xff] %v2820
    %3028 = vst [vmem:[#allocation3 + $0x1c8] sm:$0xff] %v2869
    %3029 = vst [vmem:[#allocation3 + $0x1d0] sm:$0xff] %v2918
    %3030 = vst [vmem:[#allocation3 + $0x1d8] sm:$0xff] %v2967
    %3031 = vst [vmem:[#allocation3 + $0x1e0] sm:$0xff] %v2822
    %3032 = vst [vmem:[#allocation3 + $0x1e8] sm:$0xff] %v2871
    %3033 = vst [vmem:[#allocation3 + $0x1f0] sm:$0xff] %v2920
    %3034 = vst [vmem:[#allocation3 + $0x1f8] sm:$0xff] %v2969
    %s3035 = scalar_lea.vmem [#allocation6], 256
    %v3036 = vld [vmem:[%s3035] sm:$0xff]
    %v3037 = vld [vmem:[%s3035 + $0x8] sm:$0xff]
    %v3038 = vld [vmem:[%s3035 + $0x10] sm:$0xff]
    %v3039 = vld [vmem:[%s3035 + $0x18] sm:$0xff]
    %v3040 = vld [vmem:[%s3035 + $0x20] sm:$0xff]
    %v3041 = vld [vmem:[%s3035 + $0x28] sm:$0xff]
    %v3042 = vld [vmem:[%s3035 + $0x30] sm:$0xff]
    %v3043 = vld [vmem:[%s3035 + $0x38] sm:$0xff]
    %v3044 = vld [vmem:[%s3035 + $0x40] sm:$0xff]
    %v3045 = vld [vmem:[%s3035 + $0x48] sm:$0xff]
    %v3046 = vld [vmem:[%s3035 + $0x50] sm:$0xff]
    %v3047 = vld [vmem:[%s3035 + $0x58] sm:$0xff]
    %v3048 = vld [vmem:[%s3035 + $0x60] sm:$0xff]
    %v3049 = vld [vmem:[%s3035 + $0x68] sm:$0xff]
    %v3050 = vld [vmem:[%s3035 + $0x70] sm:$0xff]
    %v3051 = vld [vmem:[%s3035 + $0x78] sm:$0xff]
    %v3052 = vld [vmem:[%s3035 + $0x80] sm:$0xff]
    %v3053 = vld [vmem:[%s3035 + $0x88] sm:$0xff]
    %v3054 = vld [vmem:[%s3035 + $0x90] sm:$0xff]
    %v3055 = vld [vmem:[%s3035 + $0x98] sm:$0xff]
    %v3056 = vld [vmem:[%s3035 + $0xa0] sm:$0xff]
    %v3057 = vld [vmem:[%s3035 + $0xa8] sm:$0xff]
    %v3058 = vld [vmem:[%s3035 + $0xb0] sm:$0xff]
    %v3059 = vld [vmem:[%s3035 + $0xb8] sm:$0xff]
    %v3060 = vld [vmem:[%s3035 + $0xc0] sm:$0xff]
    %v3061 = vld [vmem:[%s3035 + $0xc8] sm:$0xff]
    %v3062 = vld [vmem:[%s3035 + $0xd0] sm:$0xff]
    %v3063 = vld [vmem:[%s3035 + $0xd8] sm:$0xff]
    %v3064 = vld [vmem:[%s3035 + $0xe0] sm:$0xff]
    %v3065 = vld [vmem:[%s3035 + $0xe8] sm:$0xff]
    %v3066 = vld [vmem:[%s3035 + $0xf0] sm:$0xff]
    %v3067 = vld [vmem:[%s3035 + $0xf8] sm:$0xff]
    %v3100 = vunpack.c.l.b16 %v3036
    %v3101 = vunpack.c.h.b16 %v3036
    %v3102 = vunpack.c.l.b16 %v3037
    %v3103 = vunpack.c.h.b16 %v3037
    %v3104 = vunpack.c.l.b16 %v3038
    %v3105 = vunpack.c.h.b16 %v3038
    %v3106 = vunpack.c.l.b16 %v3039
    %v3107 = vunpack.c.h.b16 %v3039
    %v3108 = vunpack.c.l.b16 %v3040
    %v3109 = vunpack.c.h.b16 %v3040
    %v3110 = vunpack.c.l.b16 %v3041
    %v3111 = vunpack.c.h.b16 %v3041
    %v3112 = vunpack.c.l.b16 %v3042
    %v3113 = vunpack.c.h.b16 %v3042
    %v3114 = vunpack.c.l.b16 %v3043
    %v3115 = vunpack.c.h.b16 %v3043
    %v3116 = vunpack.c.l.b16 %v3044
    %v3117 = vunpack.c.h.b16 %v3044
    %v3118 = vunpack.c.l.b16 %v3045
    %v3119 = vunpack.c.h.b16 %v3045
    %v3120 = vunpack.c.l.b16 %v3046
    %v3121 = vunpack.c.h.b16 %v3046
    %v3122 = vunpack.c.l.b16 %v3047
    %v3123 = vunpack.c.h.b16 %v3047
    %v3124 = vunpack.c.l.b16 %v3048
    %v3125 = vunpack.c.h.b16 %v3048
    %v3126 = vunpack.c.l.b16 %v3049
    %v3127 = vunpack.c.h.b16 %v3049
    %v3128 = vunpack.c.l.b16 %v3050
    %v3129 = vunpack.c.h.b16 %v3050
    %v3130 = vunpack.c.l.b16 %v3051
    %v3131 = vunpack.c.h.b16 %v3051
    %v3132 = vunpack.c.l.b16 %v3052
    %v3133 = vunpack.c.h.b16 %v3052
    %v3134 = vunpack.c.l.b16 %v3053
    %v3135 = vunpack.c.h.b16 %v3053
    %v3136 = vunpack.c.l.b16 %v3054
    %v3137 = vunpack.c.h.b16 %v3054
    %v3138 = vunpack.c.l.b16 %v3055
    %v3139 = vunpack.c.h.b16 %v3055
    %v3140 = vunpack.c.l.b16 %v3056
    %v3141 = vunpack.c.h.b16 %v3056
    %v3142 = vunpack.c.l.b16 %v3057
    %v3143 = vunpack.c.h.b16 %v3057
    %v3144 = vunpack.c.l.b16 %v3058
    %v3145 = vunpack.c.h.b16 %v3058
    %v3146 = vunpack.c.l.b16 %v3059
    %v3147 = vunpack.c.h.b16 %v3059
    %v3148 = vunpack.c.l.b16 %v3060
    %v3149 = vunpack.c.h.b16 %v3060
    %v3150 = vunpack.c.l.b16 %v3061
    %v3151 = vunpack.c.h.b16 %v3061
    %v3152 = vunpack.c.l.b16 %v3062
    %v3153 = vunpack.c.h.b16 %v3062
    %v3154 = vunpack.c.l.b16 %v3063
    %v3155 = vunpack.c.h.b16 %v3063
    %v3156 = vunpack.c.l.b16 %v3064
    %v3157 = vunpack.c.h.b16 %v3064
    %v3158 = vunpack.c.l.b16 %v3065
    %v3159 = vunpack.c.h.b16 %v3065
    %v3160 = vunpack.c.l.b16 %v3066
    %v3161 = vunpack.c.h.b16 %v3066
    %v3162 = vunpack.c.l.b16 %v3067
    %v3163 = vunpack.c.h.b16 %v3067
    %v3164 = vpack.c.b16 %v3104, %v3100
    %v3165 = vpack.c.b16 %v3105, %v3101
    %v3166 = vpack.c.b16 %v3106, %v3102
    %v3167 = vpack.c.b16 %v3107, %v3103
    %v3168 = vpack.c.b16 %v3112, %v3108
    %v3169 = vpack.c.b16 %v3113, %v3109
    %v3170 = vpack.c.b16 %v3114, %v3110
    %v3171 = vpack.c.b16 %v3115, %v3111
    %v3172 = vpack.c.b16 %v3120, %v3116
    %v3173 = vpack.c.b16 %v3121, %v3117
    %v3174 = vpack.c.b16 %v3122, %v3118
    %v3175 = vpack.c.b16 %v3123, %v3119
    %v3176 = vpack.c.b16 %v3128, %v3124
    %v3177 = vpack.c.b16 %v3129, %v3125
    %v3178 = vpack.c.b16 %v3130, %v3126
    %v3179 = vpack.c.b16 %v3131, %v3127
    %v3180 = vpack.c.b16 %v3136, %v3132
    %v3181 = vpack.c.b16 %v3137, %v3133
    %v3182 = vpack.c.b16 %v3138, %v3134
    %v3183 = vpack.c.b16 %v3139, %v3135
    %v3184 = vpack.c.b16 %v3144, %v3140
    %v3185 = vpack.c.b16 %v3145, %v3141
    %v3186 = vpack.c.b16 %v3146, %v3142
    %v3187 = vpack.c.b16 %v3147, %v3143
    %v3188 = vpack.c.b16 %v3152, %v3148
    %v3189 = vpack.c.b16 %v3153, %v3149
    %v3190 = vpack.c.b16 %v3154, %v3150
    %v3191 = vpack.c.b16 %v3155, %v3151
    %v3192 = vpack.c.b16 %v3160, %v3156
    %v3193 = vpack.c.b16 %v3161, %v3157
    %v3194 = vpack.c.b16 %v3162, %v3158
    %v3195 = vpack.c.b16 %v3163, %v3159
    %3228 = vmatpush.bf16.msra.mxu0 %v3192
    %3229 = vmatpush.bf16.msra.mxu0 %v3188
    %3230 = vmatpush.bf16.msra.mxu0 %v3184
    %3231 = vmatpush.bf16.msra.mxu0 %v3180
    %3232 = vmatpush.bf16.msra.mxu0 %v3176
    %3233 = vmatpush.bf16.msra.mxu0 %v3172
    %3234 = vmatpush.bf16.msra.mxu0 %v3168
    %3235 = vmatpush.bf16.msra.mxu0 %v3164
    %3236 = vmatmul.bf16.gmra.mxu0 0
    %v3237 = vpop.f32.mrf.mxu0
    %v3238 = vadd.f32 0.0, %v3237
    %v3239 = vpop.f32.mrf.mxu0
    %v3240 = vadd.f32 0.0, %v3239
    %3241 = vdwg.mxu0
    %3242 = vmatpush.bf16.msra.mxu0 %v3193
    %3243 = vmatpush.bf16.msra.mxu0 %v3189
    %3244 = vmatpush.bf16.msra.mxu0 %v3185
    %3245 = vmatpush.bf16.msra.mxu0 %v3181
    %3246 = vmatpush.bf16.msra.mxu0 %v3177
    %3247 = vmatpush.bf16.msra.mxu0 %v3173
    %3248 = vmatpush.bf16.msra.mxu0 %v3169
    %3249 = vmatpush.bf16.msra.mxu0 %v3165
    %3250 = vmatmul.bf16.gmra.mxu0 0
    %v3251 = vpop.f32.mrf.mxu0
    %v3252 = vadd.f32 0.0, %v3251
    %v3253 = vpop.f32.mrf.mxu0
    %v3254 = vadd.f32 0.0, %v3253
    %3255 = vdwg.mxu0
    %3256 = vmatpush.bf16.msra.mxu0 %v3194
    %3257 = vmatpush.bf16.msra.mxu0 %v3190
    %3258 = vmatpush.bf16.msra.mxu0 %v3186
    %3259 = vmatpush.bf16.msra.mxu0 %v3182
    %3260 = vmatpush.bf16.msra.mxu0 %v3178
    %3261 = vmatpush.bf16.msra.mxu0 %v3174
    %3262 = vmatpush.bf16.msra.mxu0 %v3170
    %3263 = vmatpush.bf16.msra.mxu0 %v3166
    %3264 = vmatmul.bf16.gmra.mxu0 0
    %v3265 = vpop.f32.mrf.mxu0
    %v3266 = vadd.f32 0.0, %v3265
    %v3267 = vpop.f32.mrf.mxu0
    %v3268 = vadd.f32 0.0, %v3267
    %3269 = vdwg.mxu0
    %3270 = vmatpush.bf16.msra.mxu0 %v3195
    %3271 = vmatpush.bf16.msra.mxu0 %v3191
    %3272 = vmatpush.bf16.msra.mxu0 %v3187
    %3273 = vmatpush.bf16.msra.mxu0 %v3183
    %3274 = vmatpush.bf16.msra.mxu0 %v3179
    %3275 = vmatpush.bf16.msra.mxu0 %v3175
    %3276 = vmatpush.bf16.msra.mxu0 %v3171
    %3277 = vmatpush.bf16.msra.mxu0 %v3167
    %3278 = vmatmul.bf16.gmra.mxu0 0
    %v3279 = vpop.f32.mrf.mxu0
    %v3280 = vadd.f32 0.0, %v3279
    %v3281 = vpop.f32.mrf.mxu0
    %v3282 = vadd.f32 0.0, %v3281
    %3283 = vdwg.mxu0
    %v3284 = vld [vmem:[#allocation3] sm:$0xff]
    %v3285 = vld [vmem:[#allocation3 + $0x8] sm:$0xff]
    %v3286 = vld [vmem:[#allocation3 + $0x10] sm:$0xff]
    %v3287 = vld [vmem:[#allocation3 + $0x18] sm:$0xff]
    %v3288 = vld [vmem:[#allocation3 + $0x20] sm:$0xff]
    %v3289 = vld [vmem:[#allocation3 + $0x28] sm:$0xff]
    %v3290 = vld [vmem:[#allocation3 + $0x30] sm:$0xff]
    %v3291 = vld [vmem:[#allocation3 + $0x38] sm:$0xff]
    %v3292 = vadd.f32 %v3284, %v3238
    %v3293 = vadd.f32 %v3285, %v3252
    %v3294 = vadd.f32 %v3286, %v3266
    %v3295 = vadd.f32 %v3287, %v3280
    %v3296 = vadd.f32 %v3288, %v3240
    %v3297 = vadd.f32 %v3289, %v3254
    %v3298 = vadd.f32 %v3290, %v3268
    %v3299 = vadd.f32 %v3291, %v3282
    %v3300 = vxor.u32 %v3292, 2147483648
    %v3301 = vxor.u32 %v3296, 2147483648
    %v3302 = vmul.f32 %v3300, 1.442695
    %v3303 = vpow.pop %v3302
    %v3304 = vmul.f32 %v3301, 1.442695
    %v3305 = vpow.pop %v3304
    %v3306 = vadd.f32 %v3303, 1.0
    %v3307 = vadd.f32 %v3305, 1.0
    %v3308 = vrcp.pop %v3306
    %v3309 = vmul.f32 %v3306, %v3308
    %v3310 = vsub.f32 1.0, %v3309
    %v3311 = vmul.f32 %v3308, %v3310
    %v3312 = vadd.f32 %v3308, %v3311
    %vm3313 = vweird.f32 %v3306
    %vm3314 = vweird.f32 %v3308
    %vm3315 = vmor %vm3313, %vm3314
    %v3316 = vsel %vm3315, %v3308, %v3312
    %v3317 = vand.u32 2147483647, %v3306
    %vm3318 = vcmp.eq.f32.partialorder %v3317, 8.507059e+37
    %v3319 = vand.u32 %v3306, 2147483648
    %v3320 = vor.u32 1.1754944e-38, %v3319
    %v3321 = vsel %vm3318, %v3320, %v3316
    %v3322 = vmul.f32 1.0, %v3321
    %v3323 = vrcp.pop %v3307
    %v3324 = vmul.f32 %v3307, %v3323
    %v3325 = vsub.f32 1.0, %v3324
    %v3326 = vmul.f32 %v3323, %v3325
    %v3327 = vadd.f32 %v3323, %v3326
    %vm3328 = vweird.f32 %v3307
    %vm3329 = vweird.f32 %v3323
    %vm3330 = vmor %vm3328, %vm3329
    %v3331 = vsel %vm3330, %v3323, %v3327
    %v3332 = vand.u32 2147483647, %v3307
    %vm3333 = vcmp.eq.f32.partialorder %v3332, 8.507059e+37
    %v3334 = vand.u32 %v3307, 2147483648
    %v3335 = vor.u32 1.1754944e-38, %v3334
    %v3336 = vsel %vm3333, %v3335, %v3331
    %v3337 = vmul.f32 1.0, %v3336
    %v3338 = vxor.u32 %v3293, 2147483648
    %v3339 = vxor.u32 %v3297, 2147483648
    %v3340 = vmul.f32 %v3338, 1.442695
    %v3341 = vpow.pop %v3340
    %v3342 = vmul.f32 %v3339, 1.442695
    %v3343 = vpow.pop %v3342
    %v3344 = vadd.f32 %v3341, 1.0
    %v3345 = vadd.f32 %v3343, 1.0
    %v3346 = vrcp.pop %v3344
    %v3347 = vmul.f32 %v3344, %v3346
    %v3348 = vsub.f32 1.0, %v3347
    %v3349 = vmul.f32 %v3346, %v3348
    %v3350 = vadd.f32 %v3346, %v3349
    %vm3351 = vweird.f32 %v3344
    %vm3352 = vweird.f32 %v3346
    %vm3353 = vmor %vm3351, %vm3352
    %v3354 = vsel %vm3353, %v3346, %v3350
    %v3355 = vand.u32 2147483647, %v3344
    %vm3356 = vcmp.eq.f32.partialorder %v3355, 8.507059e+37
    %v3357 = vand.u32 %v3344, 2147483648
    %v3358 = vor.u32 1.1754944e-38, %v3357
    %v3359 = vsel %vm3356, %v3358, %v3354
    %v3360 = vmul.f32 1.0, %v3359
    %v3361 = vrcp.pop %v3345
    %v3362 = vmul.f32 %v3345, %v3361
    %v3363 = vsub.f32 1.0, %v3362
    %v3364 = vmul.f32 %v3361, %v3363
    %v3365 = vadd.f32 %v3361, %v3364
    %vm3366 = vweird.f32 %v3345
    %vm3367 = vweird.f32 %v3361
    %vm3368 = vmor %vm3366, %vm3367
    %v3369 = vsel %vm3368, %v3361, %v3365
    %v3370 = vand.u32 2147483647, %v3345
    %vm3371 = vcmp.eq.f32.partialorder %v3370, 8.507059e+37
    %v3372 = vand.u32 %v3345, 2147483648
    %v3373 = vor.u32 1.1754944e-38, %v3372
    %v3374 = vsel %vm3371, %v3373, %v3369
    %v3375 = vmul.f32 1.0, %v3374
    %v3376 = vtanh.pop %v3294
    %v3377 = vtanh.pop %v3298
    %v3378 = vxor.u32 %v3295, 2147483648
    %v3379 = vxor.u32 %v3299, 2147483648
    %v3380 = vmul.f32 %v3378, 1.442695
    %v3381 = vpow.pop %v3380
    %v3382 = vmul.f32 %v3379, 1.442695
    %v3383 = vpow.pop %v3382
    %v3384 = vadd.f32 %v3381, 1.0
    %v3385 = vadd.f32 %v3383, 1.0
    %v3386 = vrcp.pop %v3384
    %v3387 = vmul.f32 %v3384, %v3386
    %v3388 = vsub.f32 1.0, %v3387
    %v3389 = vmul.f32 %v3386, %v3388
    %v3390 = vadd.f32 %v3386, %v3389
    %vm3391 = vweird.f32 %v3384
    %vm3392 = vweird.f32 %v3386
    %vm3393 = vmor %vm3391, %vm3392
    %v3394 = vsel %vm3393, %v3386, %v3390
    %v3395 = vand.u32 2147483647, %v3384
    %vm3396 = vcmp.eq.f32.partialorder %v3395, 8.507059e+37
    %v3397 = vand.u32 %v3384, 2147483648
    %v3398 = vor.u32 1.1754944e-38, %v3397
    %v3399 = vsel %vm3396, %v3398, %v3394
    %v3400 = vmul.f32 1.0, %v3399
    %v3401 = vrcp.pop %v3385
    %v3402 = vmul.f32 %v3385, %v3401
    %v3403 = vsub.f32 1.0, %v3402
    %v3404 = vmul.f32 %v3401, %v3403
    %v3405 = vadd.f32 %v3401, %v3404
    %vm3406 = vweird.f32 %v3385
    %vm3407 = vweird.f32 %v3401
    %vm3408 = vmor %vm3406, %vm3407
    %v3409 = vsel %vm3408, %v3401, %v3405
    %v3410 = vand.u32 2147483647, %v3385
    %vm3411 = vcmp.eq.f32.partialorder %v3410, 8.507059e+37
    %v3412 = vand.u32 %v3385, 2147483648
    %v3413 = vor.u32 1.1754944e-38, %v3412
    %v3414 = vsel %vm3411, %v3413, %v3409
    %v3415 = vmul.f32 1.0, %v3414
    %v3416 = vmul.f32 %v3360, 0.0
    %v3417 = vmul.f32 %v3375, 0.0
    %v3418 = vmul.f32 %v3322, %v3376
    %v3419 = vmul.f32 %v3337, %v3377
    %v3420 = vadd.f32 %v3416, %v3418
    %v3421 = vadd.f32 %v3417, %v3419
    %v3422 = vtanh.pop %v3420
    %v3423 = vtanh.pop %v3421
    %v3424 = vmul.f32 %v3400, %v3422
    %v3425 = vmul.f32 %v3415, %v3423
    %v3426 = vpack.c.bf16 %v3425, %v3424
    %3427 = vmatpush.bf16.msra.mxu0 %v3192
    %3428 = vmatpush.bf16.msra.mxu0 %v3188
    %3429 = vmatpush.bf16.msra.mxu0 %v3184
    %3430 = vmatpush.bf16.msra.mxu0 %v3180
    %3431 = vmatpush.bf16.msra.mxu0 %v3176
    %3432 = vmatpush.bf16.msra.mxu0 %v3172
    %3433 = vmatpush.bf16.msra.mxu0 %v3168
    %3434 = vmatpush.bf16.msra.mxu0 %v3164
    %3435 = vmatmul.bf16.gmra.mxu0 %v3426
    %v3436 = vpop.f32.mrf.mxu0
    %v3437 = vadd.f32 0.0, %v3436
    %v3438 = vpop.f32.mrf.mxu0
    %v3439 = vadd.f32 0.0, %v3438
    %3440 = vdwg.mxu0
    %3441 = vmatpush.bf16.msra.mxu0 %v3193
    %3442 = vmatpush.bf16.msra.mxu0 %v3189
    %3443 = vmatpush.bf16.msra.mxu0 %v3185
    %3444 = vmatpush.bf16.msra.mxu0 %v3181
    %3445 = vmatpush.bf16.msra.mxu0 %v3177
    %3446 = vmatpush.bf16.msra.mxu0 %v3173
    %3447 = vmatpush.bf16.msra.mxu0 %v3169
    %3448 = vmatpush.bf16.msra.mxu0 %v3165
    %3449 = vmatmul.bf16.gmra.mxu0 %v3426
    %v3450 = vpop.f32.mrf.mxu0
    %v3451 = vadd.f32 0.0, %v3450
    %v3452 = vpop.f32.mrf.mxu0
    %v3453 = vadd.f32 0.0, %v3452
    %3454 = vdwg.mxu0
    %3455 = vmatpush.bf16.msra.mxu0 %v3194
    %3456 = vmatpush.bf16.msra.mxu0 %v3190
    %3457 = vmatpush.bf16.msra.mxu0 %v3186
    %3458 = vmatpush.bf16.msra.mxu0 %v3182
    %3459 = vmatpush.bf16.msra.mxu0 %v3178
    %3460 = vmatpush.bf16.msra.mxu0 %v3174
    %3461 = vmatpush.bf16.msra.mxu0 %v3170
    %3462 = vmatpush.bf16.msra.mxu0 %v3166
    %3463 = vmatmul.bf16.gmra.mxu0 %v3426
    %v3464 = vpop.f32.mrf.mxu0
    %v3465 = vadd.f32 0.0, %v3464
    %v3466 = vpop.f32.mrf.mxu0
    %v3467 = vadd.f32 0.0, %v3466
    %3468 = vdwg.mxu0
    %3469 = vmatpush.bf16.msra.mxu0 %v3195
    %3470 = vmatpush.bf16.msra.mxu0 %v3191
    %3471 = vmatpush.bf16.msra.mxu0 %v3187
    %3472 = vmatpush.bf16.msra.mxu0 %v3183
    %3473 = vmatpush.bf16.msra.mxu0 %v3179
    %3474 = vmatpush.bf16.msra.mxu0 %v3175
    %3475 = vmatpush.bf16.msra.mxu0 %v3171
    %3476 = vmatpush.bf16.msra.mxu0 %v3167
    %3477 = vmatmul.bf16.gmra.mxu0 %v3426
    %v3478 = vpop.f32.mrf.mxu0
    %v3479 = vadd.f32 0.0, %v3478
    %v3480 = vpop.f32.mrf.mxu0
    %v3481 = vadd.f32 0.0, %v3480
    %3482 = vdwg.mxu0
    %v3483 = vld [vmem:[%s1099] sm:$0xff]
    %v3484 = vld [vmem:[%s1099 + $0x8] sm:$0xff]
    %v3485 = vld [vmem:[%s1099 + $0x10] sm:$0xff]
    %v3486 = vld [vmem:[%s1099 + $0x18] sm:$0xff]
    %v3487 = vld [vmem:[%s1099 + $0x20] sm:$0xff]
    %v3488 = vld [vmem:[%s1099 + $0x28] sm:$0xff]
    %v3489 = vld [vmem:[%s1099 + $0x30] sm:$0xff]
    %v3490 = vld [vmem:[%s1099 + $0x38] sm:$0xff]
    %v3491 = vadd.f32 %v3483, %v3437
    %v3492 = vadd.f32 %v3484, %v3451
    %v3493 = vadd.f32 %v3485, %v3465
    %v3494 = vadd.f32 %v3486, %v3479
    %v3495 = vadd.f32 %v3487, %v3439
    %v3496 = vadd.f32 %v3488, %v3453
    %v3497 = vadd.f32 %v3489, %v3467
    %v3498 = vadd.f32 %v3490, %v3481
    %v3499 = vxor.u32 %v3491, 2147483648
    %v3500 = vxor.u32 %v3495, 2147483648
    %v3501 = vmul.f32 %v3499, 1.442695
    %v3502 = vpow.pop %v3501
    %v3503 = vmul.f32 %v3500, 1.442695
    %v3504 = vpow.pop %v3503
    %v3505 = vadd.f32 %v3502, 1.0
    %v3506 = vadd.f32 %v3504, 1.0
    %v3507 = vrcp.pop %v3505
    %v3508 = vmul.f32 %v3505, %v3507
    %v3509 = vsub.f32 1.0, %v3508
    %v3510 = vmul.f32 %v3507, %v3509
    %v3511 = vadd.f32 %v3507, %v3510
    %vm3512 = vweird.f32 %v3505
    %vm3513 = vweird.f32 %v3507
    %vm3514 = vmor %vm3512, %vm3513
    %v3515 = vsel %vm3514, %v3507, %v3511
    %v3516 = vand.u32 2147483647, %v3505
    %vm3517 = vcmp.eq.f32.partialorder %v3516, 8.507059e+37
    %v3518 = vand.u32 %v3505, 2147483648
    %v3519 = vor.u32 1.1754944e-38, %v3518
    %v3520 = vsel %vm3517, %v3519, %v3515
    %v3521 = vmul.f32 1.0, %v3520
    %v3522 = vrcp.pop %v3506
    %v3523 = vmul.f32 %v3506, %v3522
    %v3524 = vsub.f32 1.0, %v3523
    %v3525 = vmul.f32 %v3522, %v3524
    %v3526 = vadd.f32 %v3522, %v3525
    %vm3527 = vweird.f32 %v3506
    %vm3528 = vweird.f32 %v3522
    %vm3529 = vmor %vm3527, %vm3528
    %v3530 = vsel %vm3529, %v3522, %v3526
    %v3531 = vand.u32 2147483647, %v3506
    %vm3532 = vcmp.eq.f32.partialorder %v3531, 8.507059e+37
    %v3533 = vand.u32 %v3506, 2147483648
    %v3534 = vor.u32 1.1754944e-38, %v3533
    %v3535 = vsel %vm3532, %v3534, %v3530
    %v3536 = vmul.f32 1.0, %v3535
    %v3537 = vxor.u32 %v3492, 2147483648
    %v3538 = vxor.u32 %v3496, 2147483648
    %v3539 = vmul.f32 %v3537, 1.442695
    %v3540 = vpow.pop %v3539
    %v3541 = vmul.f32 %v3538, 1.442695
    %v3542 = vpow.pop %v3541
    %v3543 = vadd.f32 %v3540, 1.0
    %v3544 = vadd.f32 %v3542, 1.0
    %v3545 = vrcp.pop %v3543
    %v3546 = vmul.f32 %v3543, %v3545
    %v3547 = vsub.f32 1.0, %v3546
    %v3548 = vmul.f32 %v3545, %v3547
    %v3549 = vadd.f32 %v3545, %v3548
    %vm3550 = vweird.f32 %v3543
    %vm3551 = vweird.f32 %v3545
    %vm3552 = vmor %vm3550, %vm3551
    %v3553 = vsel %vm3552, %v3545, %v3549
    %v3554 = vand.u32 2147483647, %v3543
    %vm3555 = vcmp.eq.f32.partialorder %v3554, 8.507059e+37
    %v3556 = vand.u32 %v3543, 2147483648
    %v3557 = vor.u32 1.1754944e-38, %v3556
    %v3558 = vsel %vm3555, %v3557, %v3553
    %v3559 = vmul.f32 1.0, %v3558
    %v3560 = vrcp.pop %v3544
    %v3561 = vmul.f32 %v3544, %v3560
    %v3562 = vsub.f32 1.0, %v3561
    %v3563 = vmul.f32 %v3560, %v3562
    %v3564 = vadd.f32 %v3560, %v3563
    %vm3565 = vweird.f32 %v3544
    %vm3566 = vweird.f32 %v3560
    %vm3567 = vmor %vm3565, %vm3566
    %v3568 = vsel %vm3567, %v3560, %v3564
    %v3569 = vand.u32 2147483647, %v3544
    %vm3570 = vcmp.eq.f32.partialorder %v3569, 8.507059e+37
    %v3571 = vand.u32 %v3544, 2147483648
    %v3572 = vor.u32 1.1754944e-38, %v3571
    %v3573 = vsel %vm3570, %v3572, %v3568
    %v3574 = vmul.f32 1.0, %v3573
    %v3575 = vtanh.pop %v3493
    %v3576 = vtanh.pop %v3497
    %v3577 = vxor.u32 %v3494, 2147483648
    %v3578 = vxor.u32 %v3498, 2147483648
    %v3579 = vmul.f32 %v3577, 1.442695
    %v3580 = vpow.pop %v3579
    %v3581 = vmul.f32 %v3578, 1.442695
    %v3582 = vpow.pop %v3581
    %v3583 = vadd.f32 %v3580, 1.0
    %v3584 = vadd.f32 %v3582, 1.0
    %v3585 = vrcp.pop %v3583
    %v3586 = vmul.f32 %v3583, %v3585
    %v3587 = vsub.f32 1.0, %v3586
    %v3588 = vmul.f32 %v3585, %v3587
    %v3589 = vadd.f32 %v3585, %v3588
    %vm3590 = vweird.f32 %v3583
    %vm3591 = vweird.f32 %v3585
    %vm3592 = vmor %vm3590, %vm3591
    %v3593 = vsel %vm3592, %v3585, %v3589
    %v3594 = vand.u32 2147483647, %v3583
    %vm3595 = vcmp.eq.f32.partialorder %v3594, 8.507059e+37
    %v3596 = vand.u32 %v3583, 2147483648
    %v3597 = vor.u32 1.1754944e-38, %v3596
    %v3598 = vsel %vm3595, %v3597, %v3593
    %v3599 = vmul.f32 1.0, %v3598
    %v3600 = vrcp.pop %v3584
    %v3601 = vmul.f32 %v3584, %v3600
    %v3602 = vsub.f32 1.0, %v3601
    %v3603 = vmul.f32 %v3600, %v3602
    %v3604 = vadd.f32 %v3600, %v3603
    %vm3605 = vweird.f32 %v3584
    %vm3606 = vweird.f32 %v3600
    %vm3607 = vmor %vm3605, %vm3606
    %v3608 = vsel %vm3607, %v3600, %v3604
    %v3609 = vand.u32 2147483647, %v3584
    %vm3610 = vcmp.eq.f32.partialorder %v3609, 8.507059e+37
    %v3611 = vand.u32 %v3584, 2147483648
    %v3612 = vor.u32 1.1754944e-38, %v3611
    %v3613 = vsel %vm3610, %v3612, %v3608
    %v3614 = vmul.f32 1.0, %v3613
    %v3615 = vmul.f32 %v3559, %v3420
    %v3616 = vmul.f32 %v3574, %v3421
    %v3617 = vmul.f32 %v3521, %v3575
    %v3618 = vmul.f32 %v3536, %v3576
    %v3619 = vadd.f32 %v3615, %v3617
    %v3620 = vadd.f32 %v3616, %v3618
    %v3621 = vtanh.pop %v3619
    %v3622 = vtanh.pop %v3620
    %v3623 = vmul.f32 %v3599, %v3621
    %v3624 = vmul.f32 %v3614, %v3622
    %v3625 = vpack.c.bf16 %v3624, %v3623
    %3626 = vmatpush.bf16.msra.mxu0 %v3192
    %3627 = vmatpush.bf16.msra.mxu0 %v3188
    %3628 = vmatpush.bf16.msra.mxu0 %v3184
    %3629 = vmatpush.bf16.msra.mxu0 %v3180
    %3630 = vmatpush.bf16.msra.mxu0 %v3176
    %3631 = vmatpush.bf16.msra.mxu0 %v3172
    %3632 = vmatpush.bf16.msra.mxu0 %v3168
    %3633 = vmatpush.bf16.msra.mxu0 %v3164
    %3634 = vmatmul.bf16.gmra.mxu0 %v3625
    %v3635 = vpop.f32.mrf.mxu0
    %v3636 = vadd.f32 0.0, %v3635
    %v3637 = vpop.f32.mrf.mxu0
    %v3638 = vadd.f32 0.0, %v3637
    %3639 = vdwg.mxu0
    %3640 = vmatpush.bf16.msra.mxu0 %v3193
    %3641 = vmatpush.bf16.msra.mxu0 %v3189
    %3642 = vmatpush.bf16.msra.mxu0 %v3185
    %3643 = vmatpush.bf16.msra.mxu0 %v3181
    %3644 = vmatpush.bf16.msra.mxu0 %v3177
    %3645 = vmatpush.bf16.msra.mxu0 %v3173
    %3646 = vmatpush.bf16.msra.mxu0 %v3169
    %3647 = vmatpush.bf16.msra.mxu0 %v3165
    %3648 = vmatmul.bf16.gmra.mxu0 %v3625
    %v3649 = vpop.f32.mrf.mxu0
    %v3650 = vadd.f32 0.0, %v3649
    %v3651 = vpop.f32.mrf.mxu0
    %v3652 = vadd.f32 0.0, %v3651
    %3653 = vdwg.mxu0
    %3654 = vmatpush.bf16.msra.mxu0 %v3194
    %3655 = vmatpush.bf16.msra.mxu0 %v3190
    %3656 = vmatpush.bf16.msra.mxu0 %v3186
    %3657 = vmatpush.bf16.msra.mxu0 %v3182
    %3658 = vmatpush.bf16.msra.mxu0 %v3178
    %3659 = vmatpush.bf16.msra.mxu0 %v3174
    %3660 = vmatpush.bf16.msra.mxu0 %v3170
    %3661 = vmatpush.bf16.msra.mxu0 %v3166
    %3662 = vmatmul.bf16.gmra.mxu0 %v3625
    %v3663 = vpop.f32.mrf.mxu0
    %v3664 = vadd.f32 0.0, %v3663
    %v3665 = vpop.f32.mrf.mxu0
    %v3666 = vadd.f32 0.0, %v3665
    %3667 = vdwg.mxu0
    %3668 = vmatpush.bf16.msra.mxu0 %v3195
    %3669 = vmatpush.bf16.msra.mxu0 %v3191
    %3670 = vmatpush.bf16.msra.mxu0 %v3187
    %3671 = vmatpush.bf16.msra.mxu0 %v3183
    %3672 = vmatpush.bf16.msra.mxu0 %v3179
    %3673 = vmatpush.bf16.msra.mxu0 %v3175
    %3674 = vmatpush.bf16.msra.mxu0 %v3171
    %3675 = vmatpush.bf16.msra.mxu0 %v3167
    %3676 = vmatmul.bf16.gmra.mxu0 %v3625
    %v3677 = vpop.f32.mrf.mxu0
    %v3678 = vadd.f32 0.0, %v3677
    %v3679 = vpop.f32.mrf.mxu0
    %v3680 = vadd.f32 0.0, %v3679
    %3681 = vdwg.mxu0
    %v3682 = vld [vmem:[%s1309] sm:$0xff]
    %v3683 = vld [vmem:[%s1309 + $0x8] sm:$0xff]
    %v3684 = vld [vmem:[%s1309 + $0x10] sm:$0xff]
    %v3685 = vld [vmem:[%s1309 + $0x18] sm:$0xff]
    %v3686 = vld [vmem:[%s1309 + $0x20] sm:$0xff]
    %v3687 = vld [vmem:[%s1309 + $0x28] sm:$0xff]
    %v3688 = vld [vmem:[%s1309 + $0x30] sm:$0xff]
    %v3689 = vld [vmem:[%s1309 + $0x38] sm:$0xff]
    %v3690 = vadd.f32 %v3682, %v3636
    %v3691 = vadd.f32 %v3683, %v3650
    %v3692 = vadd.f32 %v3684, %v3664
    %v3693 = vadd.f32 %v3685, %v3678
    %v3694 = vadd.f32 %v3686, %v3638
    %v3695 = vadd.f32 %v3687, %v3652
    %v3696 = vadd.f32 %v3688, %v3666
    %v3697 = vadd.f32 %v3689, %v3680
    %v3698 = vxor.u32 %v3690, 2147483648
    %v3699 = vxor.u32 %v3694, 2147483648
    %v3700 = vmul.f32 %v3698, 1.442695
    %v3701 = vpow.pop %v3700
    %v3702 = vmul.f32 %v3699, 1.442695
    %v3703 = vpow.pop %v3702
    %v3704 = vadd.f32 %v3701, 1.0
    %v3705 = vadd.f32 %v3703, 1.0
    %v3706 = vrcp.pop %v3704
    %v3707 = vmul.f32 %v3704, %v3706
    %v3708 = vsub.f32 1.0, %v3707
    %v3709 = vmul.f32 %v3706, %v3708
    %v3710 = vadd.f32 %v3706, %v3709
    %vm3711 = vweird.f32 %v3704
    %vm3712 = vweird.f32 %v3706
    %vm3713 = vmor %vm3711, %vm3712
    %v3714 = vsel %vm3713, %v3706, %v3710
    %v3715 = vand.u32 2147483647, %v3704
    %vm3716 = vcmp.eq.f32.partialorder %v3715, 8.507059e+37
    %v3717 = vand.u32 %v3704, 2147483648
    %v3718 = vor.u32 1.1754944e-38, %v3717
    %v3719 = vsel %vm3716, %v3718, %v3714
    %v3720 = vmul.f32 1.0, %v3719
    %v3721 = vrcp.pop %v3705
    %v3722 = vmul.f32 %v3705, %v3721
    %v3723 = vsub.f32 1.0, %v3722
    %v3724 = vmul.f32 %v3721, %v3723
    %v3725 = vadd.f32 %v3721, %v3724
    %vm3726 = vweird.f32 %v3705
    %vm3727 = vweird.f32 %v3721
    %vm3728 = vmor %vm3726, %vm3727
    %v3729 = vsel %vm3728, %v3721, %v3725
    %v3730 = vand.u32 2147483647, %v3705
    %vm3731 = vcmp.eq.f32.partialorder %v3730, 8.507059e+37
    %v3732 = vand.u32 %v3705, 2147483648
    %v3733 = vor.u32 1.1754944e-38, %v3732
    %v3734 = vsel %vm3731, %v3733, %v3729
    %v3735 = vmul.f32 1.0, %v3734
    %v3736 = vxor.u32 %v3691, 2147483648
    %v3737 = vxor.u32 %v3695, 2147483648
    %v3738 = vmul.f32 %v3736, 1.442695
    %v3739 = vpow.pop %v3738
    %v3740 = vmul.f32 %v3737, 1.442695
    %v3741 = vpow.pop %v3740
    %v3742 = vadd.f32 %v3739, 1.0
    %v3743 = vadd.f32 %v3741, 1.0
    %v3744 = vrcp.pop %v3742
    %v3745 = vmul.f32 %v3742, %v3744
    %v3746 = vsub.f32 1.0, %v3745
    %v3747 = vmul.f32 %v3744, %v3746
    %v3748 = vadd.f32 %v3744, %v3747
    %vm3749 = vweird.f32 %v3742
    %vm3750 = vweird.f32 %v3744
    %vm3751 = vmor %vm3749, %vm3750
    %v3752 = vsel %vm3751, %v3744, %v3748
    %v3753 = vand.u32 2147483647, %v3742
    %vm3754 = vcmp.eq.f32.partialorder %v3753, 8.507059e+37
    %v3755 = vand.u32 %v3742, 2147483648
    %v3756 = vor.u32 1.1754944e-38, %v3755
    %v3757 = vsel %vm3754, %v3756, %v3752
    %v3758 = vmul.f32 1.0, %v3757
    %v3759 = vrcp.pop %v3743
    %v3760 = vmul.f32 %v3743, %v3759
    %v3761 = vsub.f32 1.0, %v3760
    %v3762 = vmul.f32 %v3759, %v3761
    %v3763 = vadd.f32 %v3759, %v3762
    %vm3764 = vweird.f32 %v3743
    %vm3765 = vweird.f32 %v3759
    %vm3766 = vmor %vm3764, %vm3765
    %v3767 = vsel %vm3766, %v3759, %v3763
    %v3768 = vand.u32 2147483647, %v3743
    %vm3769 = vcmp.eq.f32.partialorder %v3768, 8.507059e+37
    %v3770 = vand.u32 %v3743, 2147483648
    %v3771 = vor.u32 1.1754944e-38, %v3770
    %v3772 = vsel %vm3769, %v3771, %v3767
    %v3773 = vmul.f32 1.0, %v3772
    %v3774 = vtanh.pop %v3692
    %v3775 = vtanh.pop %v3696
    %v3776 = vxor.u32 %v3693, 2147483648
    %v3777 = vxor.u32 %v3697, 2147483648
    %v3778 = vmul.f32 %v3776, 1.442695
    %v3779 = vpow.pop %v3778
    %v3780 = vmul.f32 %v3777, 1.442695
    %v3781 = vpow.pop %v3780
    %v3782 = vadd.f32 %v3779, 1.0
    %v3783 = vadd.f32 %v3781, 1.0
    %v3784 = vrcp.pop %v3782
    %v3785 = vmul.f32 %v3782, %v3784
    %v3786 = vsub.f32 1.0, %v3785
    %v3787 = vmul.f32 %v3784, %v3786
    %v3788 = vadd.f32 %v3784, %v3787
    %vm3789 = vweird.f32 %v3782
    %vm3790 = vweird.f32 %v3784
    %vm3791 = vmor %vm3789, %vm3790
    %v3792 = vsel %vm3791, %v3784, %v3788
    %v3793 = vand.u32 2147483647, %v3782
    %vm3794 = vcmp.eq.f32.partialorder %v3793, 8.507059e+37
    %v3795 = vand.u32 %v3782, 2147483648
    %v3796 = vor.u32 1.1754944e-38, %v3795
    %v3797 = vsel %vm3794, %v3796, %v3792
    %v3798 = vmul.f32 1.0, %v3797
    %v3799 = vrcp.pop %v3783
    %v3800 = vmul.f32 %v3783, %v3799
    %v3801 = vsub.f32 1.0, %v3800
    %v3802 = vmul.f32 %v3799, %v3801
    %v3803 = vadd.f32 %v3799, %v3802
    %vm3804 = vweird.f32 %v3783
    %vm3805 = vweird.f32 %v3799
    %vm3806 = vmor %vm3804, %vm3805
    %v3807 = vsel %vm3806, %v3799, %v3803
    %v3808 = vand.u32 2147483647, %v3783
    %vm3809 = vcmp.eq.f32.partialorder %v3808, 8.507059e+37
    %v3810 = vand.u32 %v3783, 2147483648
    %v3811 = vor.u32 1.1754944e-38, %v3810
    %v3812 = vsel %vm3809, %v3811, %v3807
    %v3813 = vmul.f32 1.0, %v3812
    %v3814 = vmul.f32 %v3758, %v3619
    %v3815 = vmul.f32 %v3773, %v3620
    %v3816 = vmul.f32 %v3720, %v3774
    %v3817 = vmul.f32 %v3735, %v3775
    %v3818 = vadd.f32 %v3814, %v3816
    %v3819 = vadd.f32 %v3815, %v3817
    %v3820 = vtanh.pop %v3818
    %v3821 = vtanh.pop %v3819
    %v3822 = vmul.f32 %v3798, %v3820
    %v3823 = vmul.f32 %v3813, %v3821
    %v3824 = vpack.c.bf16 %v3823, %v3822
    %3825 = vmatpush.bf16.msra.mxu0 %v3192
    %3826 = vmatpush.bf16.msra.mxu0 %v3188
    %3827 = vmatpush.bf16.msra.mxu0 %v3184
    %3828 = vmatpush.bf16.msra.mxu0 %v3180
    %3829 = vmatpush.bf16.msra.mxu0 %v3176
    %3830 = vmatpush.bf16.msra.mxu0 %v3172
    %3831 = vmatpush.bf16.msra.mxu0 %v3168
    %3832 = vmatpush.bf16.msra.mxu0 %v3164
    %3833 = vmatmul.bf16.gmra.mxu0 %v3824
    %v3834 = vpop.f32.mrf.mxu0
    %v3835 = vadd.f32 0.0, %v3834
    %v3836 = vpop.f32.mrf.mxu0
    %v3837 = vadd.f32 0.0, %v3836
    %3838 = vdwg.mxu0
    %3839 = vmatpush.bf16.msra.mxu0 %v3193
    %3840 = vmatpush.bf16.msra.mxu0 %v3189
    %3841 = vmatpush.bf16.msra.mxu0 %v3185
    %3842 = vmatpush.bf16.msra.mxu0 %v3181
    %3843 = vmatpush.bf16.msra.mxu0 %v3177
    %3844 = vmatpush.bf16.msra.mxu0 %v3173
    %3845 = vmatpush.bf16.msra.mxu0 %v3169
    %3846 = vmatpush.bf16.msra.mxu0 %v3165
    %3847 = vmatmul.bf16.gmra.mxu0 %v3824
    %v3848 = vpop.f32.mrf.mxu0
    %v3849 = vadd.f32 0.0, %v3848
    %v3850 = vpop.f32.mrf.mxu0
    %v3851 = vadd.f32 0.0, %v3850
    %3852 = vdwg.mxu0
    %3853 = vmatpush.bf16.msra.mxu0 %v3194
    %3854 = vmatpush.bf16.msra.mxu0 %v3190
    %3855 = vmatpush.bf16.msra.mxu0 %v3186
    %3856 = vmatpush.bf16.msra.mxu0 %v3182
    %3857 = vmatpush.bf16.msra.mxu0 %v3178
    %3858 = vmatpush.bf16.msra.mxu0 %v3174
    %3859 = vmatpush.bf16.msra.mxu0 %v3170
    %3860 = vmatpush.bf16.msra.mxu0 %v3166
    %3861 = vmatmul.bf16.gmra.mxu0 %v3824
    %v3862 = vpop.f32.mrf.mxu0
    %v3863 = vadd.f32 0.0, %v3862
    %v3864 = vpop.f32.mrf.mxu0
    %v3865 = vadd.f32 0.0, %v3864
    %3866 = vdwg.mxu0
    %3867 = vmatpush.bf16.msra.mxu0 %v3195
    %3868 = vmatpush.bf16.msra.mxu0 %v3191
    %3869 = vmatpush.bf16.msra.mxu0 %v3187
    %3870 = vmatpush.bf16.msra.mxu0 %v3183
    %3871 = vmatpush.bf16.msra.mxu0 %v3179
    %3872 = vmatpush.bf16.msra.mxu0 %v3175
    %3873 = vmatpush.bf16.msra.mxu0 %v3171
    %3874 = vmatpush.bf16.msra.mxu0 %v3167
    %3875 = vmatmul.bf16.gmra.mxu0 %v3824
    %v3876 = vpop.f32.mrf.mxu0
    %v3877 = vadd.f32 0.0, %v3876
    %v3878 = vpop.f32.mrf.mxu0
    %v3879 = vadd.f32 0.0, %v3878
    %3880 = vdwg.mxu0
    %v3881 = vld [vmem:[%s1519] sm:$0xff]
    %v3882 = vld [vmem:[%s1519 + $0x8] sm:$0xff]
    %v3883 = vld [vmem:[%s1519 + $0x10] sm:$0xff]
    %v3884 = vld [vmem:[%s1519 + $0x18] sm:$0xff]
    %v3885 = vld [vmem:[%s1519 + $0x20] sm:$0xff]
    %v3886 = vld [vmem:[%s1519 + $0x28] sm:$0xff]
    %v3887 = vld [vmem:[%s1519 + $0x30] sm:$0xff]
    %v3888 = vld [vmem:[%s1519 + $0x38] sm:$0xff]
    %v3889 = vadd.f32 %v3881, %v3835
    %v3890 = vadd.f32 %v3882, %v3849
    %v3891 = vadd.f32 %v3883, %v3863
    %v3892 = vadd.f32 %v3884, %v3877
    %v3893 = vadd.f32 %v3885, %v3837
    %v3894 = vadd.f32 %v3886, %v3851
    %v3895 = vadd.f32 %v3887, %v3865
    %v3896 = vadd.f32 %v3888, %v3879
    %v3897 = vxor.u32 %v3889, 2147483648
    %v3898 = vxor.u32 %v3893, 2147483648
    %v3899 = vmul.f32 %v3897, 1.442695
    %v3900 = vpow.pop %v3899
    %v3901 = vmul.f32 %v3898, 1.442695
    %v3902 = vpow.pop %v3901
    %v3903 = vadd.f32 %v3900, 1.0
    %v3904 = vadd.f32 %v3902, 1.0
    %v3905 = vrcp.pop %v3903
    %v3906 = vmul.f32 %v3903, %v3905
    %v3907 = vsub.f32 1.0, %v3906
    %v3908 = vmul.f32 %v3905, %v3907
    %v3909 = vadd.f32 %v3905, %v3908
    %vm3910 = vweird.f32 %v3903
    %vm3911 = vweird.f32 %v3905
    %vm3912 = vmor %vm3910, %vm3911
    %v3913 = vsel %vm3912, %v3905, %v3909
    %v3914 = vand.u32 2147483647, %v3903
    %vm3915 = vcmp.eq.f32.partialorder %v3914, 8.507059e+37
    %v3916 = vand.u32 %v3903, 2147483648
    %v3917 = vor.u32 1.1754944e-38, %v3916
    %v3918 = vsel %vm3915, %v3917, %v3913
    %v3919 = vmul.f32 1.0, %v3918
    %v3920 = vrcp.pop %v3904
    %v3921 = vmul.f32 %v3904, %v3920
    %v3922 = vsub.f32 1.0, %v3921
    %v3923 = vmul.f32 %v3920, %v3922
    %v3924 = vadd.f32 %v3920, %v3923
    %vm3925 = vweird.f32 %v3904
    %vm3926 = vweird.f32 %v3920
    %vm3927 = vmor %vm3925, %vm3926
    %v3928 = vsel %vm3927, %v3920, %v3924
    %v3929 = vand.u32 2147483647, %v3904
    %vm3930 = vcmp.eq.f32.partialorder %v3929, 8.507059e+37
    %v3931 = vand.u32 %v3904, 2147483648
    %v3932 = vor.u32 1.1754944e-38, %v3931
    %v3933 = vsel %vm3930, %v3932, %v3928
    %v3934 = vmul.f32 1.0, %v3933
    %v3935 = vxor.u32 %v3890, 2147483648
    %v3936 = vxor.u32 %v3894, 2147483648
    %v3937 = vmul.f32 %v3935, 1.442695
    %v3938 = vpow.pop %v3937
    %v3939 = vmul.f32 %v3936, 1.442695
    %v3940 = vpow.pop %v3939
    %v3941 = vadd.f32 %v3938, 1.0
    %v3942 = vadd.f32 %v3940, 1.0
    %v3943 = vrcp.pop %v3941
    %v3944 = vmul.f32 %v3941, %v3943
    %v3945 = vsub.f32 1.0, %v3944
    %v3946 = vmul.f32 %v3943, %v3945
    %v3947 = vadd.f32 %v3943, %v3946
    %vm3948 = vweird.f32 %v3941
    %vm3949 = vweird.f32 %v3943
    %vm3950 = vmor %vm3948, %vm3949
    %v3951 = vsel %vm3950, %v3943, %v3947
    %v3952 = vand.u32 2147483647, %v3941
    %vm3953 = vcmp.eq.f32.partialorder %v3952, 8.507059e+37
    %v3954 = vand.u32 %v3941, 2147483648
    %v3955 = vor.u32 1.1754944e-38, %v3954
    %v3956 = vsel %vm3953, %v3955, %v3951
    %v3957 = vmul.f32 1.0, %v3956
    %v3958 = vrcp.pop %v3942
    %v3959 = vmul.f32 %v3942, %v3958
    %v3960 = vsub.f32 1.0, %v3959
    %v3961 = vmul.f32 %v3958, %v3960
    %v3962 = vadd.f32 %v3958, %v3961
    %vm3963 = vweird.f32 %v3942
    %vm3964 = vweird.f32 %v3958
    %vm3965 = vmor %vm3963, %vm3964
    %v3966 = vsel %vm3965, %v3958, %v3962
    %v3967 = vand.u32 2147483647, %v3942
    %vm3968 = vcmp.eq.f32.partialorder %v3967, 8.507059e+37
    %v3969 = vand.u32 %v3942, 2147483648
    %v3970 = vor.u32 1.1754944e-38, %v3969
    %v3971 = vsel %vm3968, %v3970, %v3966
    %v3972 = vmul.f32 1.0, %v3971
    %v3973 = vtanh.pop %v3891
    %v3974 = vtanh.pop %v3895
    %v3975 = vxor.u32 %v3892, 2147483648
    %v3976 = vxor.u32 %v3896, 2147483648
    %v3977 = vmul.f32 %v3975, 1.442695
    %v3978 = vpow.pop %v3977
    %v3979 = vmul.f32 %v3976, 1.442695
    %v3980 = vpow.pop %v3979
    %v3981 = vadd.f32 %v3978, 1.0
    %v3982 = vadd.f32 %v3980, 1.0
    %v3983 = vrcp.pop %v3981
    %v3984 = vmul.f32 %v3981, %v3983
    %v3985 = vsub.f32 1.0, %v3984
    %v3986 = vmul.f32 %v3983, %v3985
    %v3987 = vadd.f32 %v3983, %v3986
    %vm3988 = vweird.f32 %v3981
    %vm3989 = vweird.f32 %v3983
    %vm3990 = vmor %vm3988, %vm3989
    %v3991 = vsel %vm3990, %v3983, %v3987
    %v3992 = vand.u32 2147483647, %v3981
    %vm3993 = vcmp.eq.f32.partialorder %v3992, 8.507059e+37
    %v3994 = vand.u32 %v3981, 2147483648
    %v3995 = vor.u32 1.1754944e-38, %v3994
    %v3996 = vsel %vm3993, %v3995, %v3991
    %v3997 = vmul.f32 1.0, %v3996
    %v3998 = vrcp.pop %v3982
    %v3999 = vmul.f32 %v3982, %v3998
    %v4000 = vsub.f32 1.0, %v3999
    %v4001 = vmul.f32 %v3998, %v4000
    %v4002 = vadd.f32 %v3998, %v4001
    %vm4003 = vweird.f32 %v3982
    %vm4004 = vweird.f32 %v3998
    %vm4005 = vmor %vm4003, %vm4004
    %v4006 = vsel %vm4005, %v3998, %v4002
    %v4007 = vand.u32 2147483647, %v3982
    %vm4008 = vcmp.eq.f32.partialorder %v4007, 8.507059e+37
    %v4009 = vand.u32 %v3982, 2147483648
    %v4010 = vor.u32 1.1754944e-38, %v4009
    %v4011 = vsel %vm4008, %v4010, %v4006
    %v4012 = vmul.f32 1.0, %v4011
    %v4013 = vmul.f32 %v3957, %v3818
    %v4014 = vmul.f32 %v3972, %v3819
    %v4015 = vmul.f32 %v3919, %v3973
    %v4016 = vmul.f32 %v3934, %v3974
    %v4017 = vadd.f32 %v4013, %v4015
    %v4018 = vadd.f32 %v4014, %v4016
    %v4019 = vtanh.pop %v4017
    %v4020 = vtanh.pop %v4018
    %v4021 = vmul.f32 %v3997, %v4019
    %v4022 = vmul.f32 %v4012, %v4020
    %v4023 = vpack.c.bf16 %v4022, %v4021
    %4024 = vmatpush.bf16.msra.mxu0 %v3192
    %4025 = vmatpush.bf16.msra.mxu0 %v3188
    %4026 = vmatpush.bf16.msra.mxu0 %v3184
    %4027 = vmatpush.bf16.msra.mxu0 %v3180
    %4028 = vmatpush.bf16.msra.mxu0 %v3176
    %4029 = vmatpush.bf16.msra.mxu0 %v3172
    %4030 = vmatpush.bf16.msra.mxu0 %v3168
    %4031 = vmatpush.bf16.msra.mxu0 %v3164
    %4032 = vmatmul.bf16.gmra.mxu0 %v4023
    %v4033 = vpop.f32.mrf.mxu0
    %v4034 = vadd.f32 0.0, %v4033
    %v4035 = vpop.f32.mrf.mxu0
    %v4036 = vadd.f32 0.0, %v4035
    %4037 = vdwg.mxu0
    %4038 = vmatpush.bf16.msra.mxu0 %v3193
    %4039 = vmatpush.bf16.msra.mxu0 %v3189
    %4040 = vmatpush.bf16.msra.mxu0 %v3185
    %4041 = vmatpush.bf16.msra.mxu0 %v3181
    %4042 = vmatpush.bf16.msra.mxu0 %v3177
    %4043 = vmatpush.bf16.msra.mxu0 %v3173
    %4044 = vmatpush.bf16.msra.mxu0 %v3169
    %4045 = vmatpush.bf16.msra.mxu0 %v3165
    %4046 = vmatmul.bf16.gmra.mxu0 %v4023
    %v4047 = vpop.f32.mrf.mxu0
    %v4048 = vadd.f32 0.0, %v4047
    %v4049 = vpop.f32.mrf.mxu0
    %v4050 = vadd.f32 0.0, %v4049
    %4051 = vdwg.mxu0
    %4052 = vmatpush.bf16.msra.mxu0 %v3194
    %4053 = vmatpush.bf16.msra.mxu0 %v3190
    %4054 = vmatpush.bf16.msra.mxu0 %v3186
    %4055 = vmatpush.bf16.msra.mxu0 %v3182
    %4056 = vmatpush.bf16.msra.mxu0 %v3178
    %4057 = vmatpush.bf16.msra.mxu0 %v3174
    %4058 = vmatpush.bf16.msra.mxu0 %v3170
    %4059 = vmatpush.bf16.msra.mxu0 %v3166
    %4060 = vmatmul.bf16.gmra.mxu0 %v4023
    %v4061 = vpop.f32.mrf.mxu0
    %v4062 = vadd.f32 0.0, %v4061
    %v4063 = vpop.f32.mrf.mxu0
    %v4064 = vadd.f32 0.0, %v4063
    %4065 = vdwg.mxu0
    %4066 = vmatpush.bf16.msra.mxu0 %v3195
    %4067 = vmatpush.bf16.msra.mxu0 %v3191
    %4068 = vmatpush.bf16.msra.mxu0 %v3187
    %4069 = vmatpush.bf16.msra.mxu0 %v3183
    %4070 = vmatpush.bf16.msra.mxu0 %v3179
    %4071 = vmatpush.bf16.msra.mxu0 %v3175
    %4072 = vmatpush.bf16.msra.mxu0 %v3171
    %4073 = vmatpush.bf16.msra.mxu0 %v3167
    %4074 = vmatmul.bf16.gmra.mxu0 %v4023
    %v4075 = vpop.f32.mrf.mxu0
    %v4076 = vadd.f32 0.0, %v4075
    %v4077 = vpop.f32.mrf.mxu0
    %v4078 = vadd.f32 0.0, %v4077
    %4079 = vdwg.mxu0
    %v4080 = vld [vmem:[%s1729] sm:$0xff]
    %v4081 = vld [vmem:[%s1729 + $0x8] sm:$0xff]
    %v4082 = vld [vmem:[%s1729 + $0x10] sm:$0xff]
    %v4083 = vld [vmem:[%s1729 + $0x18] sm:$0xff]
    %v4084 = vld [vmem:[%s1729 + $0x20] sm:$0xff]
    %v4085 = vld [vmem:[%s1729 + $0x28] sm:$0xff]
    %v4086 = vld [vmem:[%s1729 + $0x30] sm:$0xff]
    %v4087 = vld [vmem:[%s1729 + $0x38] sm:$0xff]
    %v4088 = vadd.f32 %v4080, %v4034
    %v4089 = vadd.f32 %v4081, %v4048
    %v4090 = vadd.f32 %v4082, %v4062
    %v4091 = vadd.f32 %v4083, %v4076
    %v4092 = vadd.f32 %v4084, %v4036
    %v4093 = vadd.f32 %v4085, %v4050
    %v4094 = vadd.f32 %v4086, %v4064
    %v4095 = vadd.f32 %v4087, %v4078
    %v4096 = vxor.u32 %v4088, 2147483648
    %v4097 = vxor.u32 %v4092, 2147483648
    %v4098 = vmul.f32 %v4096, 1.442695
    %v4099 = vpow.pop %v4098
    %v4100 = vmul.f32 %v4097, 1.442695
    %v4101 = vpow.pop %v4100
    %v4102 = vadd.f32 %v4099, 1.0
    %v4103 = vadd.f32 %v4101, 1.0
    %v4104 = vrcp.pop %v4102
    %v4105 = vmul.f32 %v4102, %v4104
    %v4106 = vsub.f32 1.0, %v4105
    %v4107 = vmul.f32 %v4104, %v4106
    %v4108 = vadd.f32 %v4104, %v4107
    %vm4109 = vweird.f32 %v4102
    %vm4110 = vweird.f32 %v4104
    %vm4111 = vmor %vm4109, %vm4110
    %v4112 = vsel %vm4111, %v4104, %v4108
    %v4113 = vand.u32 2147483647, %v4102
    %vm4114 = vcmp.eq.f32.partialorder %v4113, 8.507059e+37
    %v4115 = vand.u32 %v4102, 2147483648
    %v4116 = vor.u32 1.1754944e-38, %v4115
    %v4117 = vsel %vm4114, %v4116, %v4112
    %v4118 = vmul.f32 1.0, %v4117
    %v4119 = vrcp.pop %v4103
    %v4120 = vmul.f32 %v4103, %v4119
    %v4121 = vsub.f32 1.0, %v4120
    %v4122 = vmul.f32 %v4119, %v4121
    %v4123 = vadd.f32 %v4119, %v4122
    %vm4124 = vweird.f32 %v4103
    %vm4125 = vweird.f32 %v4119
    %vm4126 = vmor %vm4124, %vm4125
    %v4127 = vsel %vm4126, %v4119, %v4123
    %v4128 = vand.u32 2147483647, %v4103
    %vm4129 = vcmp.eq.f32.partialorder %v4128, 8.507059e+37
    %v4130 = vand.u32 %v4103, 2147483648
    %v4131 = vor.u32 1.1754944e-38, %v4130
    %v4132 = vsel %vm4129, %v4131, %v4127
    %v4133 = vmul.f32 1.0, %v4132
    %v4134 = vxor.u32 %v4089, 2147483648
    %v4135 = vxor.u32 %v4093, 2147483648
    %v4136 = vmul.f32 %v4134, 1.442695
    %v4137 = vpow.pop %v4136
    %v4138 = vmul.f32 %v4135, 1.442695
    %v4139 = vpow.pop %v4138
    %v4140 = vadd.f32 %v4137, 1.0
    %v4141 = vadd.f32 %v4139, 1.0
    %v4142 = vrcp.pop %v4140
    %v4143 = vmul.f32 %v4140, %v4142
    %v4144 = vsub.f32 1.0, %v4143
    %v4145 = vmul.f32 %v4142, %v4144
    %v4146 = vadd.f32 %v4142, %v4145
    %vm4147 = vweird.f32 %v4140
    %vm4148 = vweird.f32 %v4142
    %vm4149 = vmor %vm4147, %vm4148
    %v4150 = vsel %vm4149, %v4142, %v4146
    %v4151 = vand.u32 2147483647, %v4140
    %vm4152 = vcmp.eq.f32.partialorder %v4151, 8.507059e+37
    %v4153 = vand.u32 %v4140, 2147483648
    %v4154 = vor.u32 1.1754944e-38, %v4153
    %v4155 = vsel %vm4152, %v4154, %v4150
    %v4156 = vmul.f32 1.0, %v4155
    %v4157 = vrcp.pop %v4141
    %v4158 = vmul.f32 %v4141, %v4157
    %v4159 = vsub.f32 1.0, %v4158
    %v4160 = vmul.f32 %v4157, %v4159
    %v4161 = vadd.f32 %v4157, %v4160
    %vm4162 = vweird.f32 %v4141
    %vm4163 = vweird.f32 %v4157
    %vm4164 = vmor %vm4162, %vm4163
    %v4165 = vsel %vm4164, %v4157, %v4161
    %v4166 = vand.u32 2147483647, %v4141
    %vm4167 = vcmp.eq.f32.partialorder %v4166, 8.507059e+37
    %v4168 = vand.u32 %v4141, 2147483648
    %v4169 = vor.u32 1.1754944e-38, %v4168
    %v4170 = vsel %vm4167, %v4169, %v4165
    %v4171 = vmul.f32 1.0, %v4170
    %v4172 = vtanh.pop %v4090
    %v4173 = vtanh.pop %v4094
    %v4174 = vxor.u32 %v4091, 2147483648
    %v4175 = vxor.u32 %v4095, 2147483648
    %v4176 = vmul.f32 %v4174, 1.442695
    %v4177 = vpow.pop %v4176
    %v4178 = vmul.f32 %v4175, 1.442695
    %v4179 = vpow.pop %v4178
    %v4180 = vadd.f32 %v4177, 1.0
    %v4181 = vadd.f32 %v4179, 1.0
    %v4182 = vrcp.pop %v4180
    %v4183 = vmul.f32 %v4180, %v4182
    %v4184 = vsub.f32 1.0, %v4183
    %v4185 = vmul.f32 %v4182, %v4184
    %v4186 = vadd.f32 %v4182, %v4185
    %vm4187 = vweird.f32 %v4180
    %vm4188 = vweird.f32 %v4182
    %vm4189 = vmor %vm4187, %vm4188
    %v4190 = vsel %vm4189, %v4182, %v4186
    %v4191 = vand.u32 2147483647, %v4180
    %vm4192 = vcmp.eq.f32.partialorder %v4191, 8.507059e+37
    %v4193 = vand.u32 %v4180, 2147483648
    %v4194 = vor.u32 1.1754944e-38, %v4193
    %v4195 = vsel %vm4192, %v4194, %v4190
    %v4196 = vmul.f32 1.0, %v4195
    %v4197 = vrcp.pop %v4181
    %v4198 = vmul.f32 %v4181, %v4197
    %v4199 = vsub.f32 1.0, %v4198
    %v4200 = vmul.f32 %v4197, %v4199
    %v4201 = vadd.f32 %v4197, %v4200
    %vm4202 = vweird.f32 %v4181
    %vm4203 = vweird.f32 %v4197
    %vm4204 = vmor %vm4202, %vm4203
    %v4205 = vsel %vm4204, %v4197, %v4201
    %v4206 = vand.u32 2147483647, %v4181
    %vm4207 = vcmp.eq.f32.partialorder %v4206, 8.507059e+37
    %v4208 = vand.u32 %v4181, 2147483648
    %v4209 = vor.u32 1.1754944e-38, %v4208
    %v4210 = vsel %vm4207, %v4209, %v4205
    %v4211 = vmul.f32 1.0, %v4210
    %v4212 = vmul.f32 %v4156, %v4017
    %v4213 = vmul.f32 %v4171, %v4018
    %v4214 = vmul.f32 %v4118, %v4172
    %v4215 = vmul.f32 %v4133, %v4173
    %v4216 = vadd.f32 %v4212, %v4214
    %v4217 = vadd.f32 %v4213, %v4215
    %v4218 = vtanh.pop %v4216
    %v4219 = vtanh.pop %v4217
    %v4220 = vmul.f32 %v4196, %v4218
    %v4221 = vmul.f32 %v4211, %v4219
    %v4222 = vpack.c.bf16 %v4221, %v4220
    %4223 = vmatpush.bf16.msra.mxu0 %v3192
    %4224 = vmatpush.bf16.msra.mxu0 %v3188
    %4225 = vmatpush.bf16.msra.mxu0 %v3184
    %4226 = vmatpush.bf16.msra.mxu0 %v3180
    %4227 = vmatpush.bf16.msra.mxu0 %v3176
    %4228 = vmatpush.bf16.msra.mxu0 %v3172
    %4229 = vmatpush.bf16.msra.mxu0 %v3168
    %4230 = vmatpush.bf16.msra.mxu0 %v3164
    %4231 = vmatmul.bf16.gmra.mxu0 %v4222
    %v4232 = vpop.f32.mrf.mxu0
    %v4233 = vadd.f32 0.0, %v4232
    %v4234 = vpop.f32.mrf.mxu0
    %v4235 = vadd.f32 0.0, %v4234
    %4236 = vdwg.mxu0
    %4237 = vmatpush.bf16.msra.mxu0 %v3193
    %4238 = vmatpush.bf16.msra.mxu0 %v3189
    %4239 = vmatpush.bf16.msra.mxu0 %v3185
    %4240 = vmatpush.bf16.msra.mxu0 %v3181
    %4241 = vmatpush.bf16.msra.mxu0 %v3177
    %4242 = vmatpush.bf16.msra.mxu0 %v3173
    %4243 = vmatpush.bf16.msra.mxu0 %v3169
    %4244 = vmatpush.bf16.msra.mxu0 %v3165
    %4245 = vmatmul.bf16.gmra.mxu0 %v4222
    %v4246 = vpop.f32.mrf.mxu0
    %v4247 = vadd.f32 0.0, %v4246
    %v4248 = vpop.f32.mrf.mxu0
    %v4249 = vadd.f32 0.0, %v4248
    %4250 = vdwg.mxu0
    %4251 = vmatpush.bf16.msra.mxu0 %v3194
    %4252 = vmatpush.bf16.msra.mxu0 %v3190
    %4253 = vmatpush.bf16.msra.mxu0 %v3186
    %4254 = vmatpush.bf16.msra.mxu0 %v3182
    %4255 = vmatpush.bf16.msra.mxu0 %v3178
    %4256 = vmatpush.bf16.msra.mxu0 %v3174
    %4257 = vmatpush.bf16.msra.mxu0 %v3170
    %4258 = vmatpush.bf16.msra.mxu0 %v3166
    %4259 = vmatmul.bf16.gmra.mxu0 %v4222
    %v4260 = vpop.f32.mrf.mxu0
    %v4261 = vadd.f32 0.0, %v4260
    %v4262 = vpop.f32.mrf.mxu0
    %v4263 = vadd.f32 0.0, %v4262
    %4264 = vdwg.mxu0
    %4265 = vmatpush.bf16.msra.mxu0 %v3195
    %4266 = vmatpush.bf16.msra.mxu0 %v3191
    %4267 = vmatpush.bf16.msra.mxu0 %v3187
    %4268 = vmatpush.bf16.msra.mxu0 %v3183
    %4269 = vmatpush.bf16.msra.mxu0 %v3179
    %4270 = vmatpush.bf16.msra.mxu0 %v3175
    %4271 = vmatpush.bf16.msra.mxu0 %v3171
    %4272 = vmatpush.bf16.msra.mxu0 %v3167
    %4273 = vmatmul.bf16.gmra.mxu0 %v4222
    %v4274 = vpop.f32.mrf.mxu0
    %v4275 = vadd.f32 0.0, %v4274
    %v4276 = vpop.f32.mrf.mxu0
    %v4277 = vadd.f32 0.0, %v4276
    %4278 = vdwg.mxu0
    %v4279 = vld [vmem:[%s1939] sm:$0xff]
    %v4280 = vld [vmem:[%s1939 + $0x8] sm:$0xff]
    %v4281 = vld [vmem:[%s1939 + $0x10] sm:$0xff]
    %v4282 = vld [vmem:[%s1939 + $0x18] sm:$0xff]
    %v4283 = vld [vmem:[%s1939 + $0x20] sm:$0xff]
    %v4284 = vld [vmem:[%s1939 + $0x28] sm:$0xff]
    %v4285 = vld [vmem:[%s1939 + $0x30] sm:$0xff]
    %v4286 = vld [vmem:[%s1939 + $0x38] sm:$0xff]
    %v4287 = vadd.f32 %v4279, %v4233
    %v4288 = vadd.f32 %v4280, %v4247
    %v4289 = vadd.f32 %v4281, %v4261
    %v4290 = vadd.f32 %v4282, %v4275
    %v4291 = vadd.f32 %v4283, %v4235
    %v4292 = vadd.f32 %v4284, %v4249
    %v4293 = vadd.f32 %v4285, %v4263
    %v4294 = vadd.f32 %v4286, %v4277
    %v4295 = vxor.u32 %v4287, 2147483648
    %v4296 = vxor.u32 %v4291, 2147483648
    %v4297 = vmul.f32 %v4295, 1.442695
    %v4298 = vpow.pop %v4297
    %v4299 = vmul.f32 %v4296, 1.442695
    %v4300 = vpow.pop %v4299
    %v4301 = vadd.f32 %v4298, 1.0
    %v4302 = vadd.f32 %v4300, 1.0
    %v4303 = vrcp.pop %v4301
    %v4304 = vmul.f32 %v4301, %v4303
    %v4305 = vsub.f32 1.0, %v4304
    %v4306 = vmul.f32 %v4303, %v4305
    %v4307 = vadd.f32 %v4303, %v4306
    %vm4308 = vweird.f32 %v4301
    %vm4309 = vweird.f32 %v4303
    %vm4310 = vmor %vm4308, %vm4309
    %v4311 = vsel %vm4310, %v4303, %v4307
    %v4312 = vand.u32 2147483647, %v4301
    %vm4313 = vcmp.eq.f32.partialorder %v4312, 8.507059e+37
    %v4314 = vand.u32 %v4301, 2147483648
    %v4315 = vor.u32 1.1754944e-38, %v4314
    %v4316 = vsel %vm4313, %v4315, %v4311
    %v4317 = vmul.f32 1.0, %v4316
    %v4318 = vrcp.pop %v4302
    %v4319 = vmul.f32 %v4302, %v4318
    %v4320 = vsub.f32 1.0, %v4319
    %v4321 = vmul.f32 %v4318, %v4320
    %v4322 = vadd.f32 %v4318, %v4321
    %vm4323 = vweird.f32 %v4302
    %vm4324 = vweird.f32 %v4318
    %vm4325 = vmor %vm4323, %vm4324
    %v4326 = vsel %vm4325, %v4318, %v4322
    %v4327 = vand.u32 2147483647, %v4302
    %vm4328 = vcmp.eq.f32.partialorder %v4327, 8.507059e+37
    %v4329 = vand.u32 %v4302, 2147483648
    %v4330 = vor.u32 1.1754944e-38, %v4329
    %v4331 = vsel %vm4328, %v4330, %v4326
    %v4332 = vmul.f32 1.0, %v4331
    %v4333 = vxor.u32 %v4288, 2147483648
    %v4334 = vxor.u32 %v4292, 2147483648
    %v4335 = vmul.f32 %v4333, 1.442695
    %v4336 = vpow.pop %v4335
    %v4337 = vmul.f32 %v4334, 1.442695
    %v4338 = vpow.pop %v4337
    %v4339 = vadd.f32 %v4336, 1.0
    %v4340 = vadd.f32 %v4338, 1.0
    %v4341 = vrcp.pop %v4339
    %v4342 = vmul.f32 %v4339, %v4341
    %v4343 = vsub.f32 1.0, %v4342
    %v4344 = vmul.f32 %v4341, %v4343
    %v4345 = vadd.f32 %v4341, %v4344
    %vm4346 = vweird.f32 %v4339
    %vm4347 = vweird.f32 %v4341
    %vm4348 = vmor %vm4346, %vm4347
    %v4349 = vsel %vm4348, %v4341, %v4345
    %v4350 = vand.u32 2147483647, %v4339
    %vm4351 = vcmp.eq.f32.partialorder %v4350, 8.507059e+37
    %v4352 = vand.u32 %v4339, 2147483648
    %v4353 = vor.u32 1.1754944e-38, %v4352
    %v4354 = vsel %vm4351, %v4353, %v4349
    %v4355 = vmul.f32 1.0, %v4354
    %v4356 = vrcp.pop %v4340
    %v4357 = vmul.f32 %v4340, %v4356
    %v4358 = vsub.f32 1.0, %v4357
    %v4359 = vmul.f32 %v4356, %v4358
    %v4360 = vadd.f32 %v4356, %v4359
    %vm4361 = vweird.f32 %v4340
    %vm4362 = vweird.f32 %v4356
    %vm4363 = vmor %vm4361, %vm4362
    %v4364 = vsel %vm4363, %v4356, %v4360
    %v4365 = vand.u32 2147483647, %v4340
    %vm4366 = vcmp.eq.f32.partialorder %v4365, 8.507059e+37
    %v4367 = vand.u32 %v4340, 2147483648
    %v4368 = vor.u32 1.1754944e-38, %v4367
    %v4369 = vsel %vm4366, %v4368, %v4364
    %v4370 = vmul.f32 1.0, %v4369
    %v4371 = vtanh.pop %v4289
    %v4372 = vtanh.pop %v4293
    %v4373 = vxor.u32 %v4290, 2147483648
    %v4374 = vxor.u32 %v4294, 2147483648
    %v4375 = vmul.f32 %v4373, 1.442695
    %v4376 = vpow.pop %v4375
    %v4377 = vmul.f32 %v4374, 1.442695
    %v4378 = vpow.pop %v4377
    %v4379 = vadd.f32 %v4376, 1.0
    %v4380 = vadd.f32 %v4378, 1.0
    %v4381 = vrcp.pop %v4379
    %v4382 = vmul.f32 %v4379, %v4381
    %v4383 = vsub.f32 1.0, %v4382
    %v4384 = vmul.f32 %v4381, %v4383
    %v4385 = vadd.f32 %v4381, %v4384
    %vm4386 = vweird.f32 %v4379
    %vm4387 = vweird.f32 %v4381
    %vm4388 = vmor %vm4386, %vm4387
    %v4389 = vsel %vm4388, %v4381, %v4385
    %v4390 = vand.u32 2147483647, %v4379
    %vm4391 = vcmp.eq.f32.partialorder %v4390, 8.507059e+37
    %v4392 = vand.u32 %v4379, 2147483648
    %v4393 = vor.u32 1.1754944e-38, %v4392
    %v4394 = vsel %vm4391, %v4393, %v4389
    %v4395 = vmul.f32 1.0, %v4394
    %v4396 = vrcp.pop %v4380
    %v4397 = vmul.f32 %v4380, %v4396
    %v4398 = vsub.f32 1.0, %v4397
    %v4399 = vmul.f32 %v4396, %v4398
    %v4400 = vadd.f32 %v4396, %v4399
    %vm4401 = vweird.f32 %v4380
    %vm4402 = vweird.f32 %v4396
    %vm4403 = vmor %vm4401, %vm4402
    %v4404 = vsel %vm4403, %v4396, %v4400
    %v4405 = vand.u32 2147483647, %v4380
    %vm4406 = vcmp.eq.f32.partialorder %v4405, 8.507059e+37
    %v4407 = vand.u32 %v4380, 2147483648
    %v4408 = vor.u32 1.1754944e-38, %v4407
    %v4409 = vsel %vm4406, %v4408, %v4404
    %v4410 = vmul.f32 1.0, %v4409
    %v4411 = vmul.f32 %v4355, %v4216
    %v4412 = vmul.f32 %v4370, %v4217
    %v4413 = vmul.f32 %v4317, %v4371
    %v4414 = vmul.f32 %v4332, %v4372
    %v4415 = vadd.f32 %v4411, %v4413
    %v4416 = vadd.f32 %v4412, %v4414
    %v4417 = vtanh.pop %v4415
    %v4418 = vtanh.pop %v4416
    %v4419 = vmul.f32 %v4395, %v4417
    %v4420 = vmul.f32 %v4410, %v4418
    %v4421 = vpack.c.bf16 %v4420, %v4419
    %4422 = vmatpush.bf16.msra.mxu0 %v3192
    %4423 = vmatpush.bf16.msra.mxu0 %v3188
    %4424 = vmatpush.bf16.msra.mxu0 %v3184
    %4425 = vmatpush.bf16.msra.mxu0 %v3180
    %4426 = vmatpush.bf16.msra.mxu0 %v3176
    %4427 = vmatpush.bf16.msra.mxu0 %v3172
    %4428 = vmatpush.bf16.msra.mxu0 %v3168
    %4429 = vmatpush.bf16.msra.mxu0 %v3164
    %4430 = vmatmul.bf16.gmra.mxu0 %v4421
    %v4431 = vpop.f32.mrf.mxu0
    %v4432 = vadd.f32 0.0, %v4431
    %v4433 = vpop.f32.mrf.mxu0
    %v4434 = vadd.f32 0.0, %v4433
    %4435 = vdwg.mxu0
    %4436 = vmatpush.bf16.msra.mxu0 %v3193
    %4437 = vmatpush.bf16.msra.mxu0 %v3189
    %4438 = vmatpush.bf16.msra.mxu0 %v3185
    %4439 = vmatpush.bf16.msra.mxu0 %v3181
    %4440 = vmatpush.bf16.msra.mxu0 %v3177
    %4441 = vmatpush.bf16.msra.mxu0 %v3173
    %4442 = vmatpush.bf16.msra.mxu0 %v3169
    %4443 = vmatpush.bf16.msra.mxu0 %v3165
    %4444 = vmatmul.bf16.gmra.mxu0 %v4421
    %v4445 = vpop.f32.mrf.mxu0
    %v4446 = vadd.f32 0.0, %v4445
    %v4447 = vpop.f32.mrf.mxu0
    %v4448 = vadd.f32 0.0, %v4447
    %4449 = vdwg.mxu0
    %4450 = vmatpush.bf16.msra.mxu0 %v3194
    %4451 = vmatpush.bf16.msra.mxu0 %v3190
    %4452 = vmatpush.bf16.msra.mxu0 %v3186
    %4453 = vmatpush.bf16.msra.mxu0 %v3182
    %4454 = vmatpush.bf16.msra.mxu0 %v3178
    %4455 = vmatpush.bf16.msra.mxu0 %v3174
    %4456 = vmatpush.bf16.msra.mxu0 %v3170
    %4457 = vmatpush.bf16.msra.mxu0 %v3166
    %4458 = vmatmul.bf16.gmra.mxu0 %v4421
    %v4459 = vpop.f32.mrf.mxu0
    %v4460 = vadd.f32 0.0, %v4459
    %v4461 = vpop.f32.mrf.mxu0
    %v4462 = vadd.f32 0.0, %v4461
    %4463 = vdwg.mxu0
    %4464 = vmatpush.bf16.msra.mxu0 %v3195
    %4465 = vmatpush.bf16.msra.mxu0 %v3191
    %4466 = vmatpush.bf16.msra.mxu0 %v3187
    %4467 = vmatpush.bf16.msra.mxu0 %v3183
    %4468 = vmatpush.bf16.msra.mxu0 %v3179
    %4469 = vmatpush.bf16.msra.mxu0 %v3175
    %4470 = vmatpush.bf16.msra.mxu0 %v3171
    %4471 = vmatpush.bf16.msra.mxu0 %v3167
    %4472 = vmatmul.bf16.gmra.mxu0 %v4421
    %v4473 = vpop.f32.mrf.mxu0
    %v4474 = vadd.f32 0.0, %v4473
    %v4475 = vpop.f32.mrf.mxu0
    %v4476 = vadd.f32 0.0, %v4475
    %4477 = vdwg.mxu0
    %v4478 = vld [vmem:[%s2149] sm:$0xff]
    %v4479 = vld [vmem:[%s2149 + $0x8] sm:$0xff]
    %v4480 = vld [vmem:[%s2149 + $0x10] sm:$0xff]
    %v4481 = vld [vmem:[%s2149 + $0x18] sm:$0xff]
    %v4482 = vld [vmem:[%s2149 + $0x20] sm:$0xff]
    %v4483 = vld [vmem:[%s2149 + $0x28] sm:$0xff]
    %v4484 = vld [vmem:[%s2149 + $0x30] sm:$0xff]
    %v4485 = vld [vmem:[%s2149 + $0x38] sm:$0xff]
    %v4486 = vadd.f32 %v4478, %v4432
    %v4487 = vadd.f32 %v4479, %v4446
    %v4488 = vadd.f32 %v4480, %v4460
    %v4489 = vadd.f32 %v4481, %v4474
    %v4490 = vadd.f32 %v4482, %v4434
    %v4491 = vadd.f32 %v4483, %v4448
    %v4492 = vadd.f32 %v4484, %v4462
    %v4493 = vadd.f32 %v4485, %v4476
    %v4494 = vxor.u32 %v4486, 2147483648
    %v4495 = vxor.u32 %v4490, 2147483648
    %v4496 = vmul.f32 %v4494, 1.442695
    %v4497 = vpow.pop %v4496
    %v4498 = vmul.f32 %v4495, 1.442695
    %v4499 = vpow.pop %v4498
    %v4500 = vadd.f32 %v4497, 1.0
    %v4501 = vadd.f32 %v4499, 1.0
    %v4502 = vrcp.pop %v4500
    %v4503 = vmul.f32 %v4500, %v4502
    %v4504 = vsub.f32 1.0, %v4503
    %v4505 = vmul.f32 %v4502, %v4504
    %v4506 = vadd.f32 %v4502, %v4505
    %vm4507 = vweird.f32 %v4500
    %vm4508 = vweird.f32 %v4502
    %vm4509 = vmor %vm4507, %vm4508
    %v4510 = vsel %vm4509, %v4502, %v4506
    %v4511 = vand.u32 2147483647, %v4500
    %vm4512 = vcmp.eq.f32.partialorder %v4511, 8.507059e+37
    %v4513 = vand.u32 %v4500, 2147483648
    %v4514 = vor.u32 1.1754944e-38, %v4513
    %v4515 = vsel %vm4512, %v4514, %v4510
    %v4516 = vmul.f32 1.0, %v4515
    %v4517 = vrcp.pop %v4501
    %v4518 = vmul.f32 %v4501, %v4517
    %v4519 = vsub.f32 1.0, %v4518
    %v4520 = vmul.f32 %v4517, %v4519
    %v4521 = vadd.f32 %v4517, %v4520
    %vm4522 = vweird.f32 %v4501
    %vm4523 = vweird.f32 %v4517
    %vm4524 = vmor %vm4522, %vm4523
    %v4525 = vsel %vm4524, %v4517, %v4521
    %v4526 = vand.u32 2147483647, %v4501
    %vm4527 = vcmp.eq.f32.partialorder %v4526, 8.507059e+37
    %v4528 = vand.u32 %v4501, 2147483648
    %v4529 = vor.u32 1.1754944e-38, %v4528
    %v4530 = vsel %vm4527, %v4529, %v4525
    %v4531 = vmul.f32 1.0, %v4530
    %v4532 = vxor.u32 %v4487, 2147483648
    %v4533 = vxor.u32 %v4491, 2147483648
    %v4534 = vmul.f32 %v4532, 1.442695
    %v4535 = vpow.pop %v4534
    %v4536 = vmul.f32 %v4533, 1.442695
    %v4537 = vpow.pop %v4536
    %v4538 = vadd.f32 %v4535, 1.0
    %v4539 = vadd.f32 %v4537, 1.0
    %v4540 = vrcp.pop %v4538
    %v4541 = vmul.f32 %v4538, %v4540
    %v4542 = vsub.f32 1.0, %v4541
    %v4543 = vmul.f32 %v4540, %v4542
    %v4544 = vadd.f32 %v4540, %v4543
    %vm4545 = vweird.f32 %v4538
    %vm4546 = vweird.f32 %v4540
    %vm4547 = vmor %vm4545, %vm4546
    %v4548 = vsel %vm4547, %v4540, %v4544
    %v4549 = vand.u32 2147483647, %v4538
    %vm4550 = vcmp.eq.f32.partialorder %v4549, 8.507059e+37
    %v4551 = vand.u32 %v4538, 2147483648
    %v4552 = vor.u32 1.1754944e-38, %v4551
    %v4553 = vsel %vm4550, %v4552, %v4548
    %v4554 = vmul.f32 1.0, %v4553
    %v4555 = vrcp.pop %v4539
    %v4556 = vmul.f32 %v4539, %v4555
    %v4557 = vsub.f32 1.0, %v4556
    %v4558 = vmul.f32 %v4555, %v4557
    %v4559 = vadd.f32 %v4555, %v4558
    %vm4560 = vweird.f32 %v4539
    %vm4561 = vweird.f32 %v4555
    %vm4562 = vmor %vm4560, %vm4561
    %v4563 = vsel %vm4562, %v4555, %v4559
    %v4564 = vand.u32 2147483647, %v4539
    %vm4565 = vcmp.eq.f32.partialorder %v4564, 8.507059e+37
    %v4566 = vand.u32 %v4539, 2147483648
    %v4567 = vor.u32 1.1754944e-38, %v4566
    %v4568 = vsel %vm4565, %v4567, %v4563
    %v4569 = vmul.f32 1.0, %v4568
    %v4570 = vtanh.pop %v4488
    %v4571 = vtanh.pop %v4492
    %v4572 = vxor.u32 %v4489, 2147483648
    %v4573 = vxor.u32 %v4493, 2147483648
    %v4574 = vmul.f32 %v4572, 1.442695
    %v4575 = vpow.pop %v4574
    %v4576 = vmul.f32 %v4573, 1.442695
    %v4577 = vpow.pop %v4576
    %v4578 = vadd.f32 %v4575, 1.0
    %v4579 = vadd.f32 %v4577, 1.0
    %v4580 = vrcp.pop %v4578
    %v4581 = vmul.f32 %v4578, %v4580
    %v4582 = vsub.f32 1.0, %v4581
    %v4583 = vmul.f32 %v4580, %v4582
    %v4584 = vadd.f32 %v4580, %v4583
    %vm4585 = vweird.f32 %v4578
    %vm4586 = vweird.f32 %v4580
    %vm4587 = vmor %vm4585, %vm4586
    %v4588 = vsel %vm4587, %v4580, %v4584
    %v4589 = vand.u32 2147483647, %v4578
    %vm4590 = vcmp.eq.f32.partialorder %v4589, 8.507059e+37
    %v4591 = vand.u32 %v4578, 2147483648
    %v4592 = vor.u32 1.1754944e-38, %v4591
    %v4593 = vsel %vm4590, %v4592, %v4588
    %v4594 = vmul.f32 1.0, %v4593
    %v4595 = vrcp.pop %v4579
    %v4596 = vmul.f32 %v4579, %v4595
    %v4597 = vsub.f32 1.0, %v4596
    %v4598 = vmul.f32 %v4595, %v4597
    %v4599 = vadd.f32 %v4595, %v4598
    %vm4600 = vweird.f32 %v4579
    %vm4601 = vweird.f32 %v4595
    %vm4602 = vmor %vm4600, %vm4601
    %v4603 = vsel %vm4602, %v4595, %v4599
    %v4604 = vand.u32 2147483647, %v4579
    %vm4605 = vcmp.eq.f32.partialorder %v4604, 8.507059e+37
    %v4606 = vand.u32 %v4579, 2147483648
    %v4607 = vor.u32 1.1754944e-38, %v4606
    %v4608 = vsel %vm4605, %v4607, %v4603
    %v4609 = vmul.f32 1.0, %v4608
    %v4610 = vmul.f32 %v4554, %v4415
    %v4611 = vmul.f32 %v4569, %v4416
    %v4612 = vmul.f32 %v4516, %v4570
    %v4613 = vmul.f32 %v4531, %v4571
    %v4614 = vadd.f32 %v4610, %v4612
    %v4615 = vadd.f32 %v4611, %v4613
    %v4616 = vtanh.pop %v4614
    %v4617 = vtanh.pop %v4615
    %v4618 = vmul.f32 %v4594, %v4616
    %v4619 = vmul.f32 %v4609, %v4617
    %v4620 = vpack.c.bf16 %v4619, %v4618
    %4621 = vmatpush.bf16.msra.mxu0 %v3192
    %4622 = vmatpush.bf16.msra.mxu0 %v3188
    %4623 = vmatpush.bf16.msra.mxu0 %v3184
    %4624 = vmatpush.bf16.msra.mxu0 %v3180
    %4625 = vmatpush.bf16.msra.mxu0 %v3176
    %4626 = vmatpush.bf16.msra.mxu0 %v3172
    %4627 = vmatpush.bf16.msra.mxu0 %v3168
    %4628 = vmatpush.bf16.msra.mxu0 %v3164
    %4629 = vmatmul.bf16.gmra.mxu0 %v4620
    %v4630 = vpop.f32.mrf.mxu0
    %v4631 = vadd.f32 0.0, %v4630
    %v4632 = vpop.f32.mrf.mxu0
    %v4633 = vadd.f32 0.0, %v4632
    %4634 = vdwg.mxu0
    %4635 = vmatpush.bf16.msra.mxu0 %v3193
    %4636 = vmatpush.bf16.msra.mxu0 %v3189
    %4637 = vmatpush.bf16.msra.mxu0 %v3185
    %4638 = vmatpush.bf16.msra.mxu0 %v3181
    %4639 = vmatpush.bf16.msra.mxu0 %v3177
    %4640 = vmatpush.bf16.msra.mxu0 %v3173
    %4641 = vmatpush.bf16.msra.mxu0 %v3169
    %4642 = vmatpush.bf16.msra.mxu0 %v3165
    %4643 = vmatmul.bf16.gmra.mxu0 %v4620
    %v4644 = vpop.f32.mrf.mxu0
    %v4645 = vadd.f32 0.0, %v4644
    %v4646 = vpop.f32.mrf.mxu0
    %v4647 = vadd.f32 0.0, %v4646
    %4648 = vdwg.mxu0
    %4649 = vmatpush.bf16.msra.mxu0 %v3194
    %4650 = vmatpush.bf16.msra.mxu0 %v3190
    %4651 = vmatpush.bf16.msra.mxu0 %v3186
    %4652 = vmatpush.bf16.msra.mxu0 %v3182
    %4653 = vmatpush.bf16.msra.mxu0 %v3178
    %4654 = vmatpush.bf16.msra.mxu0 %v3174
    %4655 = vmatpush.bf16.msra.mxu0 %v3170
    %4656 = vmatpush.bf16.msra.mxu0 %v3166
    %4657 = vmatmul.bf16.gmra.mxu0 %v4620
    %v4658 = vpop.f32.mrf.mxu0
    %v4659 = vadd.f32 0.0, %v4658
    %v4660 = vpop.f32.mrf.mxu0
    %v4661 = vadd.f32 0.0, %v4660
    %4662 = vdwg.mxu0
    %4663 = vmatpush.bf16.msra.mxu0 %v3195
    %4664 = vmatpush.bf16.msra.mxu0 %v3191
    %4665 = vmatpush.bf16.msra.mxu0 %v3187
    %4666 = vmatpush.bf16.msra.mxu0 %v3183
    %4667 = vmatpush.bf16.msra.mxu0 %v3179
    %4668 = vmatpush.bf16.msra.mxu0 %v3175
    %4669 = vmatpush.bf16.msra.mxu0 %v3171
    %4670 = vmatpush.bf16.msra.mxu0 %v3167
    %4671 = vmatmul.bf16.gmra.mxu0 %v4620
    %v4672 = vpop.f32.mrf.mxu0
    %v4673 = vadd.f32 0.0, %v4672
    %v4674 = vpop.f32.mrf.mxu0
    %v4675 = vadd.f32 0.0, %v4674
    %4676 = vdwg.mxu0
    %v4677 = vld [vmem:[%s2359] sm:$0xff]
    %v4678 = vld [vmem:[%s2359 + $0x8] sm:$0xff]
    %v4679 = vld [vmem:[%s2359 + $0x10] sm:$0xff]
    %v4680 = vld [vmem:[%s2359 + $0x18] sm:$0xff]
    %v4681 = vld [vmem:[%s2359 + $0x20] sm:$0xff]
    %v4682 = vld [vmem:[%s2359 + $0x28] sm:$0xff]
    %v4683 = vld [vmem:[%s2359 + $0x30] sm:$0xff]
    %v4684 = vld [vmem:[%s2359 + $0x38] sm:$0xff]
    %v4685 = vadd.f32 %v4677, %v4631
    %v4686 = vadd.f32 %v4678, %v4645
    %v4687 = vadd.f32 %v4679, %v4659
    %v4688 = vadd.f32 %v4680, %v4673
    %v4689 = vadd.f32 %v4681, %v4633
    %v4690 = vadd.f32 %v4682, %v4647
    %v4691 = vadd.f32 %v4683, %v4661
    %v4692 = vadd.f32 %v4684, %v4675
    %v4693 = vxor.u32 %v4685, 2147483648
    %v4694 = vxor.u32 %v4689, 2147483648
    %v4695 = vmul.f32 %v4693, 1.442695
    %v4696 = vpow.pop %v4695
    %v4697 = vmul.f32 %v4694, 1.442695
    %v4698 = vpow.pop %v4697
    %v4699 = vadd.f32 %v4696, 1.0
    %v4700 = vadd.f32 %v4698, 1.0
    %v4701 = vrcp.pop %v4699
    %v4702 = vmul.f32 %v4699, %v4701
    %v4703 = vsub.f32 1.0, %v4702
    %v4704 = vmul.f32 %v4701, %v4703
    %v4705 = vadd.f32 %v4701, %v4704
    %vm4706 = vweird.f32 %v4699
    %vm4707 = vweird.f32 %v4701
    %vm4708 = vmor %vm4706, %vm4707
    %v4709 = vsel %vm4708, %v4701, %v4705
    %v4710 = vand.u32 2147483647, %v4699
    %vm4711 = vcmp.eq.f32.partialorder %v4710, 8.507059e+37
    %v4712 = vand.u32 %v4699, 2147483648
    %v4713 = vor.u32 1.1754944e-38, %v4712
    %v4714 = vsel %vm4711, %v4713, %v4709
    %v4715 = vmul.f32 1.0, %v4714
    %v4716 = vrcp.pop %v4700
    %v4717 = vmul.f32 %v4700, %v4716
    %v4718 = vsub.f32 1.0, %v4717
    %v4719 = vmul.f32 %v4716, %v4718
    %v4720 = vadd.f32 %v4716, %v4719
    %vm4721 = vweird.f32 %v4700
    %vm4722 = vweird.f32 %v4716
    %vm4723 = vmor %vm4721, %vm4722
    %v4724 = vsel %vm4723, %v4716, %v4720
    %v4725 = vand.u32 2147483647, %v4700
    %vm4726 = vcmp.eq.f32.partialorder %v4725, 8.507059e+37
    %v4727 = vand.u32 %v4700, 2147483648
    %v4728 = vor.u32 1.1754944e-38, %v4727
    %v4729 = vsel %vm4726, %v4728, %v4724
    %v4730 = vmul.f32 1.0, %v4729
    %v4731 = vxor.u32 %v4686, 2147483648
    %v4732 = vxor.u32 %v4690, 2147483648
    %v4733 = vmul.f32 %v4731, 1.442695
    %v4734 = vpow.pop %v4733
    %v4735 = vmul.f32 %v4732, 1.442695
    %v4736 = vpow.pop %v4735
    %v4737 = vadd.f32 %v4734, 1.0
    %v4738 = vadd.f32 %v4736, 1.0
    %v4739 = vrcp.pop %v4737
    %v4740 = vmul.f32 %v4737, %v4739
    %v4741 = vsub.f32 1.0, %v4740
    %v4742 = vmul.f32 %v4739, %v4741
    %v4743 = vadd.f32 %v4739, %v4742
    %vm4744 = vweird.f32 %v4737
    %vm4745 = vweird.f32 %v4739
    %vm4746 = vmor %vm4744, %vm4745
    %v4747 = vsel %vm4746, %v4739, %v4743
    %v4748 = vand.u32 2147483647, %v4737
    %vm4749 = vcmp.eq.f32.partialorder %v4748, 8.507059e+37
    %v4750 = vand.u32 %v4737, 2147483648
    %v4751 = vor.u32 1.1754944e-38, %v4750
    %v4752 = vsel %vm4749, %v4751, %v4747
    %v4753 = vmul.f32 1.0, %v4752
    %v4754 = vrcp.pop %v4738
    %v4755 = vmul.f32 %v4738, %v4754
    %v4756 = vsub.f32 1.0, %v4755
    %v4757 = vmul.f32 %v4754, %v4756
    %v4758 = vadd.f32 %v4754, %v4757
    %vm4759 = vweird.f32 %v4738
    %vm4760 = vweird.f32 %v4754
    %vm4761 = vmor %vm4759, %vm4760
    %v4762 = vsel %vm4761, %v4754, %v4758
    %v4763 = vand.u32 2147483647, %v4738
    %vm4764 = vcmp.eq.f32.partialorder %v4763, 8.507059e+37
    %v4765 = vand.u32 %v4738, 2147483648
    %v4766 = vor.u32 1.1754944e-38, %v4765
    %v4767 = vsel %vm4764, %v4766, %v4762
    %v4768 = vmul.f32 1.0, %v4767
    %v4769 = vtanh.pop %v4687
    %v4770 = vtanh.pop %v4691
    %v4771 = vxor.u32 %v4688, 2147483648
    %v4772 = vxor.u32 %v4692, 2147483648
    %v4773 = vmul.f32 %v4771, 1.442695
    %v4774 = vpow.pop %v4773
    %v4775 = vmul.f32 %v4772, 1.442695
    %v4776 = vpow.pop %v4775
    %v4777 = vadd.f32 %v4774, 1.0
    %v4778 = vadd.f32 %v4776, 1.0
    %v4779 = vrcp.pop %v4777
    %v4780 = vmul.f32 %v4777, %v4779
    %v4781 = vsub.f32 1.0, %v4780
    %v4782 = vmul.f32 %v4779, %v4781
    %v4783 = vadd.f32 %v4779, %v4782
    %vm4784 = vweird.f32 %v4777
    %vm4785 = vweird.f32 %v4779
    %vm4786 = vmor %vm4784, %vm4785
    %v4787 = vsel %vm4786, %v4779, %v4783
    %v4788 = vand.u32 2147483647, %v4777
    %vm4789 = vcmp.eq.f32.partialorder %v4788, 8.507059e+37
    %v4790 = vand.u32 %v4777, 2147483648
    %v4791 = vor.u32 1.1754944e-38, %v4790
    %v4792 = vsel %vm4789, %v4791, %v4787
    %v4793 = vmul.f32 1.0, %v4792
    %v4794 = vrcp.pop %v4778
    %v4795 = vmul.f32 %v4778, %v4794
    %v4796 = vsub.f32 1.0, %v4795
    %v4797 = vmul.f32 %v4794, %v4796
    %v4798 = vadd.f32 %v4794, %v4797
    %vm4799 = vweird.f32 %v4778
    %vm4800 = vweird.f32 %v4794
    %vm4801 = vmor %vm4799, %vm4800
    %v4802 = vsel %vm4801, %v4794, %v4798
    %v4803 = vand.u32 2147483647, %v4778
    %vm4804 = vcmp.eq.f32.partialorder %v4803, 8.507059e+37
    %v4805 = vand.u32 %v4778, 2147483648
    %v4806 = vor.u32 1.1754944e-38, %v4805
    %v4807 = vsel %vm4804, %v4806, %v4802
    %v4808 = vmul.f32 1.0, %v4807
    %v4809 = vmul.f32 %v4753, %v4614
    %v4810 = vmul.f32 %v4768, %v4615
    %v4811 = vmul.f32 %v4715, %v4769
    %v4812 = vmul.f32 %v4730, %v4770
    %v4813 = vadd.f32 %v4809, %v4811
    %v4814 = vadd.f32 %v4810, %v4812
    %v4815 = vtanh.pop %v4813
    %v4816 = vtanh.pop %v4814
    %v4817 = vmul.f32 %v4793, %v4815
    %v4818 = vmul.f32 %v4808, %v4816
    %v4819 = vpack.c.bf16 %v4818, %v4817
    %v4820 = vld [vmem:[%s7] sm:$0xf]
    %v4821 = vld [vmem:[%s7 + $0x4] sm:$0xf]
    %v4822 = vld [vmem:[%s7 + $0x8] sm:$0xf]
    %v4823 = vld [vmem:[%s7 + $0xc] sm:$0xf]
    %v4824 = vld [vmem:[%s7 + $0x10] sm:$0xf]
    %v4825 = vld [vmem:[%s7 + $0x14] sm:$0xf]
    %v4826 = vld [vmem:[%s7 + $0x18] sm:$0xf]
    %v4827 = vld [vmem:[%s7 + $0x1c] sm:$0xf]
    %v4828 = vld [vmem:[%s7 + $0x20] sm:$0xf]
    %v4829 = vld [vmem:[%s7 + $0x24] sm:$0xf]
    %v4830 = vld [vmem:[%s7 + $0x28] sm:$0xf]
    %v4831 = vld [vmem:[%s7 + $0x2c] sm:$0xf]
    %v4832 = vld [vmem:[%s7 + $0x30] sm:$0xf]
    %v4833 = vld [vmem:[%s7 + $0x34] sm:$0xf]
    %v4834 = vld [vmem:[%s7 + $0x38] sm:$0xf]
    %v4835 = vld [vmem:[%s7 + $0x3c] sm:$0xf]
    %v4836 = vld [vmem:[%s8] sm:$0x1]
    %v4838 = vperm.slane %v4836, 0
    %v4856 = vunpack.c.l.b16 %v4820
    %v4857 = vunpack.c.l.b16 %v4821
    %v4858 = vunpack.c.l.b16 %v4822
    %v4859 = vunpack.c.l.b16 %v4823
    %v4860 = vunpack.c.l.b16 %v4824
    %v4861 = vunpack.c.l.b16 %v4825
    %v4862 = vunpack.c.l.b16 %v4826
    %v4863 = vunpack.c.l.b16 %v4827
    %v4864 = vunpack.c.l.b16 %v4828
    %v4865 = vunpack.c.l.b16 %v4829
    %v4866 = vunpack.c.l.b16 %v4830
    %v4867 = vunpack.c.l.b16 %v4831
    %v4868 = vunpack.c.l.b16 %v4832
    %v4869 = vunpack.c.l.b16 %v4833
    %v4870 = vunpack.c.l.b16 %v4834
    %v4871 = vunpack.c.l.b16 %v4835
    %v4872 = vpack.c.b16 %v4857, %v4856
    %v4873 = vpack.c.b16 %v4859, %v4858
    %v4874 = vpack.c.b16 %v4861, %v4860
    %v4875 = vpack.c.b16 %v4863, %v4862
    %v4876 = vpack.c.b16 %v4865, %v4864
    %v4877 = vpack.c.b16 %v4867, %v4866
    %v4878 = vpack.c.b16 %v4869, %v4868
    %v4879 = vpack.c.b16 %v4871, %v4870
    %4888 = vmatpush.bf16.msra.mxu0 %v4879
    %4889 = vmatpush.bf16.msra.mxu0 %v4878
    %4890 = vmatpush.bf16.msra.mxu0 %v4877
    %4891 = vmatpush.bf16.msra.mxu0 %v4876
    %4892 = vmatpush.bf16.msra.mxu0 %v4875
    %4893 = vmatpush.bf16.msra.mxu0 %v4874
    %4894 = vmatpush.bf16.msra.mxu0 %v4873
    %4895 = vmatpush.bf16.msra.mxu0 %v4872
    %4896 = vmatmul.bf16.gmra.mxu0 %v4819
    %v4897 = vpop.f32.mrf.mxu0
    %v4898 = vadd.f32 %v4838, %v4897
    %v4899 = vpop.f32.mrf.mxu0
    %v4900 = vadd.f32 %v4838, %v4899
    %4901 = vdwg.mxu0
    %v4902 = vpack.c.bf16 %v4900, %v4898
    %v4903 = vld [vmem:[#allocation8] sm:$0xff]
    %v4904 = vld [vmem:[#allocation8 + $0x8] sm:$0xff]
    %v4905 = vld [vmem:[#allocation8 + $0x10] sm:$0xff]
    %v4906 = vld [vmem:[#allocation8 + $0x18] sm:$0xff]
    %v4907 = vld [vmem:[#allocation8 + $0x20] sm:$0xff]
    %v4908 = vld [vmem:[#allocation8 + $0x28] sm:$0xff]
    %v4909 = vld [vmem:[#allocation8 + $0x30] sm:$0xff]
    %v4910 = vld [vmem:[#allocation8 + $0x38] sm:$0xff]
    %v4911 = vld [vmem:[#allocation8 + $0x40] sm:$0xff]
    %v4912 = vld [vmem:[#allocation8 + $0x48] sm:$0xff]
    %v4913 = vld [vmem:[#allocation8 + $0x50] sm:$0xff]
    %v4914 = vld [vmem:[#allocation8 + $0x58] sm:$0xff]
    %v4915 = vld [vmem:[#allocation8 + $0x60] sm:$0xff]
    %v4916 = vld [vmem:[#allocation8 + $0x68] sm:$0xff]
    %v4917 = vld [vmem:[#allocation8 + $0x70] sm:$0xff]
    %v4918 = vld [vmem:[#allocation8 + $0x78] sm:$0xff]
    %v4919 = vld [vmem:[#allocation8 + $0x80] sm:$0xff]
    %v4920 = vld [vmem:[#allocation8 + $0x88] sm:$0xff]
    %v4921 = vld [vmem:[#allocation8 + $0x90] sm:$0xff]
    %v4922 = vld [vmem:[#allocation8 + $0x98] sm:$0xff]
    %v4923 = vld [vmem:[#allocation8 + $0xa0] sm:$0xff]
    %v4924 = vld [vmem:[#allocation8 + $0xa8] sm:$0xff]
    %v4925 = vld [vmem:[#allocation8 + $0xb0] sm:$0xff]
    %v4926 = vld [vmem:[#allocation8 + $0xb8] sm:$0xff]
    %v4927 = vld [vmem:[#allocation8 + $0xc0] sm:$0xff]
    %v4928 = vld [vmem:[#allocation8 + $0xc8] sm:$0xff]
    %v4929 = vld [vmem:[#allocation8 + $0xd0] sm:$0xff]
    %v4930 = vld [vmem:[#allocation8 + $0xd8] sm:$0xff]
    %v4931 = vld [vmem:[#allocation8 + $0xe0] sm:$0xff]
    %v4932 = vld [vmem:[#allocation8 + $0xe8] sm:$0xff]
    %v4933 = vld [vmem:[#allocation8 + $0xf0] sm:$0xff]
    %v4934 = vld [vmem:[#allocation8 + $0xf8] sm:$0xff]
    %v4935 = vld [vmem:[%s6] sm:$0xf]
    %v4937 = vperm.slane %v4935, 0
    %v4938 = vperm.slane %v4935, 1
    %v4939 = vperm.slane %v4935, 2
    %v4940 = vperm.slane %v4935, 3
    %v4977 = vunpack.c.l.b16 %v4903
    %v4978 = vunpack.c.h.b16 %v4903
    %v4979 = vunpack.c.l.b16 %v4904
    %v4980 = vunpack.c.h.b16 %v4904
    %v4981 = vunpack.c.l.b16 %v4905
    %v4982 = vunpack.c.h.b16 %v4905
    %v4983 = vunpack.c.l.b16 %v4906
    %v4984 = vunpack.c.h.b16 %v4906
    %v4985 = vunpack.c.l.b16 %v4907
    %v4986 = vunpack.c.h.b16 %v4907
    %v4987 = vunpack.c.l.b16 %v4908
    %v4988 = vunpack.c.h.b16 %v4908
    %v4989 = vunpack.c.l.b16 %v4909
    %v4990 = vunpack.c.h.b16 %v4909
    %v4991 = vunpack.c.l.b16 %v4910
    %v4992 = vunpack.c.h.b16 %v4910
    %v4993 = vunpack.c.l.b16 %v4911
    %v4994 = vunpack.c.h.b16 %v4911
    %v4995 = vunpack.c.l.b16 %v4912
    %v4996 = vunpack.c.h.b16 %v4912
    %v4997 = vunpack.c.l.b16 %v4913
    %v4998 = vunpack.c.h.b16 %v4913
    %v4999 = vunpack.c.l.b16 %v4914
    %v5000 = vunpack.c.h.b16 %v4914
    %v5001 = vunpack.c.l.b16 %v4915
    %v5002 = vunpack.c.h.b16 %v4915
    %v5003 = vunpack.c.l.b16 %v4916
    %v5004 = vunpack.c.h.b16 %v4916
    %v5005 = vunpack.c.l.b16 %v4917
    %v5006 = vunpack.c.h.b16 %v4917
    %v5007 = vunpack.c.l.b16 %v4918
    %v5008 = vunpack.c.h.b16 %v4918
    %v5009 = vunpack.c.l.b16 %v4919
    %v5010 = vunpack.c.h.b16 %v4919
    %v5011 = vunpack.c.l.b16 %v4920
    %v5012 = vunpack.c.h.b16 %v4920
    %v5013 = vunpack.c.l.b16 %v4921
    %v5014 = vunpack.c.h.b16 %v4921
    %v5015 = vunpack.c.l.b16 %v4922
    %v5016 = vunpack.c.h.b16 %v4922
    %v5017 = vunpack.c.l.b16 %v4923
    %v5018 = vunpack.c.h.b16 %v4923
    %v5019 = vunpack.c.l.b16 %v4924
    %v5020 = vunpack.c.h.b16 %v4924
    %v5021 = vunpack.c.l.b16 %v4925
    %v5022 = vunpack.c.h.b16 %v4925
    %v5023 = vunpack.c.l.b16 %v4926
    %v5024 = vunpack.c.h.b16 %v4926
    %v5025 = vunpack.c.l.b16 %v4927
    %v5026 = vunpack.c.h.b16 %v4927
    %v5027 = vunpack.c.l.b16 %v4928
    %v5028 = vunpack.c.h.b16 %v4928
    %v5029 = vunpack.c.l.b16 %v4929
    %v5030 = vunpack.c.h.b16 %v4929
    %v5031 = vunpack.c.l.b16 %v4930
    %v5032 = vunpack.c.h.b16 %v4930
    %v5033 = vunpack.c.l.b16 %v4931
    %v5034 = vunpack.c.h.b16 %v4931
    %v5035 = vunpack.c.l.b16 %v4932
    %v5036 = vunpack.c.h.b16 %v4932
    %v5037 = vunpack.c.l.b16 %v4933
    %v5038 = vunpack.c.h.b16 %v4933
    %v5039 = vunpack.c.l.b16 %v4934
    %v5040 = vunpack.c.h.b16 %v4934
    %v5041 = vpack.c.b16 %v4981, %v4977
    %v5042 = vpack.c.b16 %v4982, %v4978
    %v5043 = vpack.c.b16 %v4983, %v4979
    %v5044 = vpack.c.b16 %v4984, %v4980
    %v5045 = vpack.c.b16 %v4989, %v4985
    %v5046 = vpack.c.b16 %v4990, %v4986
    %v5047 = vpack.c.b16 %v4991, %v4987
    %v5048 = vpack.c.b16 %v4992, %v4988
    %v5049 = vpack.c.b16 %v4997, %v4993
    %v5050 = vpack.c.b16 %v4998, %v4994
    %v5051 = vpack.c.b16 %v4999, %v4995
    %v5052 = vpack.c.b16 %v5000, %v4996
    %v5053 = vpack.c.b16 %v5005, %v5001
    %v5054 = vpack.c.b16 %v5006, %v5002
    %v5055 = vpack.c.b16 %v5007, %v5003
    %v5056 = vpack.c.b16 %v5008, %v5004
    %v5057 = vpack.c.b16 %v5013, %v5009
    %v5058 = vpack.c.b16 %v5014, %v5010
    %v5059 = vpack.c.b16 %v5015, %v5011
    %v5060 = vpack.c.b16 %v5016, %v5012
    %v5061 = vpack.c.b16 %v5021, %v5017
    %v5062 = vpack.c.b16 %v5022, %v5018
    %v5063 = vpack.c.b16 %v5023, %v5019
    %v5064 = vpack.c.b16 %v5024, %v5020
    %v5065 = vpack.c.b16 %v5029, %v5025
    %v5066 = vpack.c.b16 %v5030, %v5026
    %v5067 = vpack.c.b16 %v5031, %v5027
    %v5068 = vpack.c.b16 %v5032, %v5028
    %v5069 = vpack.c.b16 %v5037, %v5033
    %v5070 = vpack.c.b16 %v5038, %v5034
    %v5071 = vpack.c.b16 %v5039, %v5035
    %v5072 = vpack.c.b16 %v5040, %v5036
    %5105 = vmatpush.bf16.msra.mxu0 %v5069
    %5106 = vmatpush.bf16.msra.mxu0 %v5065
    %5107 = vmatpush.bf16.msra.mxu0 %v5061
    %5108 = vmatpush.bf16.msra.mxu0 %v5057
    %5109 = vmatpush.bf16.msra.mxu0 %v5053
    %5110 = vmatpush.bf16.msra.mxu0 %v5049
    %5111 = vmatpush.bf16.msra.mxu0 %v5045
    %5112 = vmatpush.bf16.msra.mxu0 %v5041
    %5113 = vmatmul.bf16.gmra.mxu0 %v4902
    %v5114 = vpop.f32.mrf.mxu0
    %v5115 = vadd.f32 %v4937, %v5114
    %v5116 = vpop.f32.mrf.mxu0
    %v5117 = vadd.f32 %v4937, %v5116
    %5118 = vdwg.mxu0
    %5119 = vmatpush.bf16.msra.mxu0 %v5070
    %5120 = vmatpush.bf16.msra.mxu0 %v5066
    %5121 = vmatpush.bf16.msra.mxu0 %v5062
    %5122 = vmatpush.bf16.msra.mxu0 %v5058
    %5123 = vmatpush.bf16.msra.mxu0 %v5054
    %5124 = vmatpush.bf16.msra.mxu0 %v5050
    %5125 = vmatpush.bf16.msra.mxu0 %v5046
    %5126 = vmatpush.bf16.msra.mxu0 %v5042
    %5127 = vmatmul.bf16.gmra.mxu0 %v4902
    %v5128 = vpop.f32.mrf.mxu0
    %v5129 = vadd.f32 %v4938, %v5128
    %v5130 = vpop.f32.mrf.mxu0
    %v5131 = vadd.f32 %v4938, %v5130
    %5132 = vdwg.mxu0
    %5133 = vmatpush.bf16.msra.mxu0 %v5071
    %5134 = vmatpush.bf16.msra.mxu0 %v5067
    %5135 = vmatpush.bf16.msra.mxu0 %v5063
    %5136 = vmatpush.bf16.msra.mxu0 %v5059
    %5137 = vmatpush.bf16.msra.mxu0 %v5055
    %5138 = vmatpush.bf16.msra.mxu0 %v5051
    %5139 = vmatpush.bf16.msra.mxu0 %v5047
    %5140 = vmatpush.bf16.msra.mxu0 %v5043
    %5141 = vmatmul.bf16.gmra.mxu0 %v4902
    %v5142 = vpop.f32.mrf.mxu0
    %v5143 = vadd.f32 %v4939, %v5142
    %v5144 = vpop.f32.mrf.mxu0
    %v5145 = vadd.f32 %v4939, %v5144
    %5146 = vdwg.mxu0
    %5147 = vmatpush.bf16.msra.mxu0 %v5072
    %5148 = vmatpush.bf16.msra.mxu0 %v5068
    %5149 = vmatpush.bf16.msra.mxu0 %v5064
    %5150 = vmatpush.bf16.msra.mxu0 %v5060
    %5151 = vmatpush.bf16.msra.mxu0 %v5056
    %5152 = vmatpush.bf16.msra.mxu0 %v5052
    %5153 = vmatpush.bf16.msra.mxu0 %v5048
    %5154 = vmatpush.bf16.msra.mxu0 %v5044
    %5155 = vmatmul.bf16.gmra.mxu0 %v4902
    %v5156 = vpop.f32.mrf.mxu0
    %v5157 = vadd.f32 %v4940, %v5156
    %v5158 = vpop.f32.mrf.mxu0
    %v5159 = vadd.f32 %v4940, %v5158
    %5160 = vdwg.mxu0
    %v5161 = vld [vmem:[#allocation9] sm:$0xff]
    %v5162 = vld [vmem:[#allocation9 + $0x8] sm:$0xff]
    %v5163 = vld [vmem:[#allocation9 + $0x10] sm:$0xff]
    %v5164 = vld [vmem:[#allocation9 + $0x18] sm:$0xff]
    %v5165 = vld [vmem:[#allocation9 + $0x20] sm:$0xff]
    %v5166 = vld [vmem:[#allocation9 + $0x28] sm:$0xff]
    %v5167 = vld [vmem:[#allocation9 + $0x30] sm:$0xff]
    %v5168 = vld [vmem:[#allocation9 + $0x38] sm:$0xff]
    %v5169 = vld [vmem:[#allocation9 + $0x40] sm:$0xff]
    %v5170 = vld [vmem:[#allocation9 + $0x48] sm:$0xff]
    %v5171 = vld [vmem:[#allocation9 + $0x50] sm:$0xff]
    %v5172 = vld [vmem:[#allocation9 + $0x58] sm:$0xff]
    %v5173 = vld [vmem:[#allocation9 + $0x60] sm:$0xff]
    %v5174 = vld [vmem:[#allocation9 + $0x68] sm:$0xff]
    %v5175 = vld [vmem:[#allocation9 + $0x70] sm:$0xff]
    %v5176 = vld [vmem:[#allocation9 + $0x78] sm:$0xff]
    %v5177 = vld [vmem:[#allocation9 + $0x80] sm:$0xff]
    %v5178 = vld [vmem:[#allocation9 + $0x88] sm:$0xff]
    %v5179 = vld [vmem:[#allocation9 + $0x90] sm:$0xff]
    %v5180 = vld [vmem:[#allocation9 + $0x98] sm:$0xff]
    %v5181 = vld [vmem:[#allocation9 + $0xa0] sm:$0xff]
    %v5182 = vld [vmem:[#allocation9 + $0xa8] sm:$0xff]
    %v5183 = vld [vmem:[#allocation9 + $0xb0] sm:$0xff]
    %v5184 = vld [vmem:[#allocation9 + $0xb8] sm:$0xff]
    %v5185 = vld [vmem:[#allocation9 + $0xc0] sm:$0xff]
    %v5186 = vld [vmem:[#allocation9 + $0xc8] sm:$0xff]
    %v5187 = vld [vmem:[#allocation9 + $0xd0] sm:$0xff]
    %v5188 = vld [vmem:[#allocation9 + $0xd8] sm:$0xff]
    %v5189 = vld [vmem:[#allocation9 + $0xe0] sm:$0xff]
    %v5190 = vld [vmem:[#allocation9 + $0xe8] sm:$0xff]
    %v5191 = vld [vmem:[#allocation9 + $0xf0] sm:$0xff]
    %v5192 = vld [vmem:[#allocation9 + $0xf8] sm:$0xff]
    %v5225 = vunpack.c.l.b16 %v5161
    %v5226 = vunpack.c.h.b16 %v5161
    %v5227 = vunpack.c.l.b16 %v5162
    %v5228 = vunpack.c.h.b16 %v5162
    %v5229 = vunpack.c.l.b16 %v5163
    %v5230 = vunpack.c.h.b16 %v5163
    %v5231 = vunpack.c.l.b16 %v5164
    %v5232 = vunpack.c.h.b16 %v5164
    %v5233 = vunpack.c.l.b16 %v5165
    %v5234 = vunpack.c.h.b16 %v5165
    %v5235 = vunpack.c.l.b16 %v5166
    %v5236 = vunpack.c.h.b16 %v5166
    %v5237 = vunpack.c.l.b16 %v5167
    %v5238 = vunpack.c.h.b16 %v5167
    %v5239 = vunpack.c.l.b16 %v5168
    %v5240 = vunpack.c.h.b16 %v5168
    %v5241 = vunpack.c.l.b16 %v5169
    %v5242 = vunpack.c.h.b16 %v5169
    %v5243 = vunpack.c.l.b16 %v5170
    %v5244 = vunpack.c.h.b16 %v5170
    %v5245 = vunpack.c.l.b16 %v5171
    %v5246 = vunpack.c.h.b16 %v5171
    %v5247 = vunpack.c.l.b16 %v5172
    %v5248 = vunpack.c.h.b16 %v5172
    %v5249 = vunpack.c.l.b16 %v5173
    %v5250 = vunpack.c.h.b16 %v5173
    %v5251 = vunpack.c.l.b16 %v5174
    %v5252 = vunpack.c.h.b16 %v5174
    %v5253 = vunpack.c.l.b16 %v5175
    %v5254 = vunpack.c.h.b16 %v5175
    %v5255 = vunpack.c.l.b16 %v5176
    %v5256 = vunpack.c.h.b16 %v5176
    %v5257 = vunpack.c.l.b16 %v5177
    %v5258 = vunpack.c.h.b16 %v5177
    %v5259 = vunpack.c.l.b16 %v5178
    %v5260 = vunpack.c.h.b16 %v5178
    %v5261 = vunpack.c.l.b16 %v5179
    %v5262 = vunpack.c.h.b16 %v5179
    %v5263 = vunpack.c.l.b16 %v5180
    %v5264 = vunpack.c.h.b16 %v5180
    %v5265 = vunpack.c.l.b16 %v5181
    %v5266 = vunpack.c.h.b16 %v5181
    %v5267 = vunpack.c.l.b16 %v5182
    %v5268 = vunpack.c.h.b16 %v5182
    %v5269 = vunpack.c.l.b16 %v5183
    %v5270 = vunpack.c.h.b16 %v5183
    %v5271 = vunpack.c.l.b16 %v5184
    %v5272 = vunpack.c.h.b16 %v5184
    %v5273 = vunpack.c.l.b16 %v5185
    %v5274 = vunpack.c.h.b16 %v5185
    %v5275 = vunpack.c.l.b16 %v5186
    %v5276 = vunpack.c.h.b16 %v5186
    %v5277 = vunpack.c.l.b16 %v5187
    %v5278 = vunpack.c.h.b16 %v5187
    %v5279 = vunpack.c.l.b16 %v5188
    %v5280 = vunpack.c.h.b16 %v5188
    %v5281 = vunpack.c.l.b16 %v5189
    %v5282 = vunpack.c.h.b16 %v5189
    %v5283 = vunpack.c.l.b16 %v5190
    %v5284 = vunpack.c.h.b16 %v5190
    %v5285 = vunpack.c.l.b16 %v5191
    %v5286 = vunpack.c.h.b16 %v5191
    %v5287 = vunpack.c.l.b16 %v5192
    %v5288 = vunpack.c.h.b16 %v5192
    %v5289 = vpack.c.b16 %v5229, %v5225
    %v5290 = vpack.c.b16 %v5230, %v5226
    %v5291 = vpack.c.b16 %v5231, %v5227
    %v5292 = vpack.c.b16 %v5232, %v5228
    %v5293 = vpack.c.b16 %v5237, %v5233
    %v5294 = vpack.c.b16 %v5238, %v5234
    %v5295 = vpack.c.b16 %v5239, %v5235
    %v5296 = vpack.c.b16 %v5240, %v5236
    %v5297 = vpack.c.b16 %v5245, %v5241
    %v5298 = vpack.c.b16 %v5246, %v5242
    %v5299 = vpack.c.b16 %v5247, %v5243
    %v5300 = vpack.c.b16 %v5248, %v5244
    %v5301 = vpack.c.b16 %v5253, %v5249
    %v5302 = vpack.c.b16 %v5254, %v5250
    %v5303 = vpack.c.b16 %v5255, %v5251
    %v5304 = vpack.c.b16 %v5256, %v5252
    %v5305 = vpack.c.b16 %v5261, %v5257
    %v5306 = vpack.c.b16 %v5262, %v5258
    %v5307 = vpack.c.b16 %v5263, %v5259
    %v5308 = vpack.c.b16 %v5264, %v5260
    %v5309 = vpack.c.b16 %v5269, %v5265
    %v5310 = vpack.c.b16 %v5270, %v5266
    %v5311 = vpack.c.b16 %v5271, %v5267
    %v5312 = vpack.c.b16 %v5272, %v5268
    %v5313 = vpack.c.b16 %v5277, %v5273
    %v5314 = vpack.c.b16 %v5278, %v5274
    %v5315 = vpack.c.b16 %v5279, %v5275
    %v5316 = vpack.c.b16 %v5280, %v5276
    %v5317 = vpack.c.b16 %v5285, %v5281
    %v5318 = vpack.c.b16 %v5286, %v5282
    %v5319 = vpack.c.b16 %v5287, %v5283
    %v5320 = vpack.c.b16 %v5288, %v5284
    %5353 = vmatpush.bf16.msra.mxu0 %v5317
    %5354 = vmatpush.bf16.msra.mxu0 %v5313
    %5355 = vmatpush.bf16.msra.mxu0 %v5309
    %5356 = vmatpush.bf16.msra.mxu0 %v5305
    %5357 = vmatpush.bf16.msra.mxu0 %v5301
    %5358 = vmatpush.bf16.msra.mxu0 %v5297
    %5359 = vmatpush.bf16.msra.mxu0 %v5293
    %5360 = vmatpush.bf16.msra.mxu0 %v5289
    %5361 = vmatmul.bf16.gmra.mxu0 0
    %v5362 = vpop.f32.mrf.mxu0
    %v5363 = vadd.f32 0.0, %v5362
    %v5364 = vpop.f32.mrf.mxu0
    %v5365 = vadd.f32 0.0, %v5364
    %5366 = vdwg.mxu0
    %5367 = vmatpush.bf16.msra.mxu0 %v5318
    %5368 = vmatpush.bf16.msra.mxu0 %v5314
    %5369 = vmatpush.bf16.msra.mxu0 %v5310
    %5370 = vmatpush.bf16.msra.mxu0 %v5306
    %5371 = vmatpush.bf16.msra.mxu0 %v5302
    %5372 = vmatpush.bf16.msra.mxu0 %v5298
    %5373 = vmatpush.bf16.msra.mxu0 %v5294
    %5374 = vmatpush.bf16.msra.mxu0 %v5290
    %5375 = vmatmul.bf16.gmra.mxu0 0
    %v5376 = vpop.f32.mrf.mxu0
    %v5377 = vadd.f32 0.0, %v5376
    %v5378 = vpop.f32.mrf.mxu0
    %v5379 = vadd.f32 0.0, %v5378
    %5380 = vdwg.mxu0
    %5381 = vmatpush.bf16.msra.mxu0 %v5319
    %5382 = vmatpush.bf16.msra.mxu0 %v5315
    %5383 = vmatpush.bf16.msra.mxu0 %v5311
    %5384 = vmatpush.bf16.msra.mxu0 %v5307
    %5385 = vmatpush.bf16.msra.mxu0 %v5303
    %5386 = vmatpush.bf16.msra.mxu0 %v5299
    %5387 = vmatpush.bf16.msra.mxu0 %v5295
    %5388 = vmatpush.bf16.msra.mxu0 %v5291
    %5389 = vmatmul.bf16.gmra.mxu0 0
    %v5390 = vpop.f32.mrf.mxu0
    %v5391 = vadd.f32 0.0, %v5390
    %v5392 = vpop.f32.mrf.mxu0
    %v5393 = vadd.f32 0.0, %v5392
    %5394 = vdwg.mxu0
    %5395 = vmatpush.bf16.msra.mxu0 %v5320
    %5396 = vmatpush.bf16.msra.mxu0 %v5316
    %5397 = vmatpush.bf16.msra.mxu0 %v5312
    %5398 = vmatpush.bf16.msra.mxu0 %v5308
    %5399 = vmatpush.bf16.msra.mxu0 %v5304
    %5400 = vmatpush.bf16.msra.mxu0 %v5300
    %5401 = vmatpush.bf16.msra.mxu0 %v5296
    %5402 = vmatpush.bf16.msra.mxu0 %v5292
    %5403 = vmatmul.bf16.gmra.mxu0 0
    %v5404 = vpop.f32.mrf.mxu0
    %v5405 = vadd.f32 0.0, %v5404
    %v5406 = vpop.f32.mrf.mxu0
    %v5407 = vadd.f32 0.0, %v5406
    %5408 = vdwg.mxu0
    %v5409 = vadd.f32 %v5115, %v5363
    %v5410 = vadd.f32 %v5129, %v5377
    %v5411 = vadd.f32 %v5143, %v5391
    %v5412 = vadd.f32 %v5157, %v5405
    %v5413 = vadd.f32 %v5117, %v5365
    %v5414 = vadd.f32 %v5131, %v5379
    %v5415 = vadd.f32 %v5145, %v5393
    %v5416 = vadd.f32 %v5159, %v5407
    %v5417 = vxor.u32 %v5409, 2147483648
    %v5418 = vxor.u32 %v5413, 2147483648
    %v5419 = vmul.f32 %v5417, 1.442695
    %v5420 = vpow.pop %v5419
    %v5421 = vmul.f32 %v5418, 1.442695
    %v5422 = vpow.pop %v5421
    %v5423 = vadd.f32 %v5420, 1.0
    %v5424 = vadd.f32 %v5422, 1.0
    %v5425 = vrcp.pop %v5423
    %v5426 = vmul.f32 %v5423, %v5425
    %v5427 = vsub.f32 1.0, %v5426
    %v5428 = vmul.f32 %v5425, %v5427
    %v5429 = vadd.f32 %v5425, %v5428
    %vm5430 = vweird.f32 %v5423
    %vm5431 = vweird.f32 %v5425
    %vm5432 = vmor %vm5430, %vm5431
    %v5433 = vsel %vm5432, %v5425, %v5429
    %v5434 = vand.u32 2147483647, %v5423
    %vm5435 = vcmp.eq.f32.partialorder %v5434, 8.507059e+37
    %v5436 = vand.u32 %v5423, 2147483648
    %v5437 = vor.u32 1.1754944e-38, %v5436
    %v5438 = vsel %vm5435, %v5437, %v5433
    %v5439 = vmul.f32 1.0, %v5438
    %v5440 = vrcp.pop %v5424
    %v5441 = vmul.f32 %v5424, %v5440
    %v5442 = vsub.f32 1.0, %v5441
    %v5443 = vmul.f32 %v5440, %v5442
    %v5444 = vadd.f32 %v5440, %v5443
    %vm5445 = vweird.f32 %v5424
    %vm5446 = vweird.f32 %v5440
    %vm5447 = vmor %vm5445, %vm5446
    %v5448 = vsel %vm5447, %v5440, %v5444
    %v5449 = vand.u32 2147483647, %v5424
    %vm5450 = vcmp.eq.f32.partialorder %v5449, 8.507059e+37
    %v5451 = vand.u32 %v5424, 2147483648
    %v5452 = vor.u32 1.1754944e-38, %v5451
    %v5453 = vsel %vm5450, %v5452, %v5448
    %v5454 = vmul.f32 1.0, %v5453
    %v5455 = vxor.u32 %v5410, 2147483648
    %v5456 = vxor.u32 %v5414, 2147483648
    %v5457 = vmul.f32 %v5455, 1.442695
    %v5458 = vpow.pop %v5457
    %v5459 = vmul.f32 %v5456, 1.442695
    %v5460 = vpow.pop %v5459
    %v5461 = vadd.f32 %v5458, 1.0
    %v5462 = vadd.f32 %v5460, 1.0
    %v5463 = vrcp.pop %v5461
    %v5464 = vmul.f32 %v5461, %v5463
    %v5465 = vsub.f32 1.0, %v5464
    %v5466 = vmul.f32 %v5463, %v5465
    %v5467 = vadd.f32 %v5463, %v5466
    %vm5468 = vweird.f32 %v5461
    %vm5469 = vweird.f32 %v5463
    %vm5470 = vmor %vm5468, %vm5469
    %v5471 = vsel %vm5470, %v5463, %v5467
    %v5472 = vand.u32 2147483647, %v5461
    %vm5473 = vcmp.eq.f32.partialorder %v5472, 8.507059e+37
    %v5474 = vand.u32 %v5461, 2147483648
    %v5475 = vor.u32 1.1754944e-38, %v5474
    %v5476 = vsel %vm5473, %v5475, %v5471
    %v5477 = vmul.f32 1.0, %v5476
    %v5478 = vrcp.pop %v5462
    %v5479 = vmul.f32 %v5462, %v5478
    %v5480 = vsub.f32 1.0, %v5479
    %v5481 = vmul.f32 %v5478, %v5480
    %v5482 = vadd.f32 %v5478, %v5481
    %vm5483 = vweird.f32 %v5462
    %vm5484 = vweird.f32 %v5478
    %vm5485 = vmor %vm5483, %vm5484
    %v5486 = vsel %vm5485, %v5478, %v5482
    %v5487 = vand.u32 2147483647, %v5462
    %vm5488 = vcmp.eq.f32.partialorder %v5487, 8.507059e+37
    %v5489 = vand.u32 %v5462, 2147483648
    %v5490 = vor.u32 1.1754944e-38, %v5489
    %v5491 = vsel %vm5488, %v5490, %v5486
    %v5492 = vmul.f32 1.0, %v5491
    %v5493 = vtanh.pop %v5411
    %v5494 = vtanh.pop %v5415
    %v5495 = vxor.u32 %v5412, 2147483648
    %v5496 = vxor.u32 %v5416, 2147483648
    %v5497 = vmul.f32 %v5495, 1.442695
    %v5498 = vpow.pop %v5497
    %v5499 = vmul.f32 %v5496, 1.442695
    %v5500 = vpow.pop %v5499
    %v5501 = vadd.f32 %v5498, 1.0
    %v5502 = vadd.f32 %v5500, 1.0
    %v5503 = vrcp.pop %v5501
    %v5504 = vmul.f32 %v5501, %v5503
    %v5505 = vsub.f32 1.0, %v5504
    %v5506 = vmul.f32 %v5503, %v5505
    %v5507 = vadd.f32 %v5503, %v5506
    %vm5508 = vweird.f32 %v5501
    %vm5509 = vweird.f32 %v5503
    %vm5510 = vmor %vm5508, %vm5509
    %v5511 = vsel %vm5510, %v5503, %v5507
    %v5512 = vand.u32 2147483647, %v5501
    %vm5513 = vcmp.eq.f32.partialorder %v5512, 8.507059e+37
    %v5514 = vand.u32 %v5501, 2147483648
    %v5515 = vor.u32 1.1754944e-38, %v5514
    %v5516 = vsel %vm5513, %v5515, %v5511
    %v5517 = vmul.f32 1.0, %v5516
    %v5518 = vrcp.pop %v5502
    %v5519 = vmul.f32 %v5502, %v5518
    %v5520 = vsub.f32 1.0, %v5519
    %v5521 = vmul.f32 %v5518, %v5520
    %v5522 = vadd.f32 %v5518, %v5521
    %vm5523 = vweird.f32 %v5502
    %vm5524 = vweird.f32 %v5518
    %vm5525 = vmor %vm5523, %vm5524
    %v5526 = vsel %vm5525, %v5518, %v5522
    %v5527 = vand.u32 2147483647, %v5502
    %vm5528 = vcmp.eq.f32.partialorder %v5527, 8.507059e+37
    %v5529 = vand.u32 %v5502, 2147483648
    %v5530 = vor.u32 1.1754944e-38, %v5529
    %v5531 = vsel %vm5528, %v5530, %v5526
    %v5532 = vmul.f32 1.0, %v5531
    %v5533 = vmul.f32 %v5477, 0.0
    %v5534 = vmul.f32 %v5492, 0.0
    %v5535 = vmul.f32 %v5439, %v5493
    %v5536 = vmul.f32 %v5454, %v5494
    %v5537 = vadd.f32 %v5533, %v5535
    %v5538 = vadd.f32 %v5534, %v5536
    %v5539 = vtanh.pop %v5537
    %v5540 = vtanh.pop %v5538
    %v5541 = vmul.f32 %v5517, %v5539
    %v5542 = vmul.f32 %v5532, %v5540
    %v5543 = vpack.c.bf16 %v5541, %v5541
    %v5544 = vpack.c.bf16 %v5542, %v5542
    %5545 = vst [vmem:[#allocation2] sm:$0xf] %v5543
    %5546 = vst [vmem:[#allocation2 + $0x4] sm:$0xf] %v5544
    %v5549 = vunpack.c.l.b16 %v5543
    %v5550 = vunpack.c.l.b16 %v5544
    %v5551 = vpack.c.b16 %v5550, %v5549
    %5553 = vmatpush.bf16.msra.mxu0 %v5317
    %5554 = vmatpush.bf16.msra.mxu0 %v5313
    %5555 = vmatpush.bf16.msra.mxu0 %v5309
    %5556 = vmatpush.bf16.msra.mxu0 %v5305
    %5557 = vmatpush.bf16.msra.mxu0 %v5301
    %5558 = vmatpush.bf16.msra.mxu0 %v5297
    %5559 = vmatpush.bf16.msra.mxu0 %v5293
    %5560 = vmatpush.bf16.msra.mxu0 %v5289
    %5561 = vmatmul.bf16.gmra.mxu0 %v5551
    %v5562 = vpop.f32.mrf.mxu0
    %v5563 = vadd.f32 0.0, %v5562
    %v5564 = vpop.f32.mrf.mxu0
    %v5565 = vadd.f32 0.0, %v5564
    %5566 = vdwg.mxu0
    %5567 = vmatpush.bf16.msra.mxu0 %v5318
    %5568 = vmatpush.bf16.msra.mxu0 %v5314
    %5569 = vmatpush.bf16.msra.mxu0 %v5310
    %5570 = vmatpush.bf16.msra.mxu0 %v5306
    %5571 = vmatpush.bf16.msra.mxu0 %v5302
    %5572 = vmatpush.bf16.msra.mxu0 %v5298
    %5573 = vmatpush.bf16.msra.mxu0 %v5294
    %5574 = vmatpush.bf16.msra.mxu0 %v5290
    %5575 = vmatmul.bf16.gmra.mxu0 %v5551
    %v5576 = vpop.f32.mrf.mxu0
    %v5577 = vadd.f32 0.0, %v5576
    %v5578 = vpop.f32.mrf.mxu0
    %v5579 = vadd.f32 0.0, %v5578
    %5580 = vdwg.mxu0
    %5581 = vmatpush.bf16.msra.mxu0 %v5319
    %5582 = vmatpush.bf16.msra.mxu0 %v5315
    %5583 = vmatpush.bf16.msra.mxu0 %v5311
    %5584 = vmatpush.bf16.msra.mxu0 %v5307
    %5585 = vmatpush.bf16.msra.mxu0 %v5303
    %5586 = vmatpush.bf16.msra.mxu0 %v5299
    %5587 = vmatpush.bf16.msra.mxu0 %v5295
    %5588 = vmatpush.bf16.msra.mxu0 %v5291
    %5589 = vmatmul.bf16.gmra.mxu0 %v5551
    %v5590 = vpop.f32.mrf.mxu0
    %v5591 = vadd.f32 0.0, %v5590
    %v5592 = vpop.f32.mrf.mxu0
    %v5593 = vadd.f32 0.0, %v5592
    %5594 = vdwg.mxu0
    %5595 = vmatpush.bf16.msra.mxu0 %v5320
    %5596 = vmatpush.bf16.msra.mxu0 %v5316
    %5597 = vmatpush.bf16.msra.mxu0 %v5312
    %5598 = vmatpush.bf16.msra.mxu0 %v5308
    %5599 = vmatpush.bf16.msra.mxu0 %v5304
    %5600 = vmatpush.bf16.msra.mxu0 %v5300
    %5601 = vmatpush.bf16.msra.mxu0 %v5296
    %5602 = vmatpush.bf16.msra.mxu0 %v5292
    %5603 = vmatmul.bf16.gmra.mxu0 %v5551
    %v5604 = vpop.f32.mrf.mxu0
    %v5605 = vadd.f32 0.0, %v5604
    %v5606 = vpop.f32.mrf.mxu0
    %v5607 = vadd.f32 0.0, %v5606
    %5608 = vdwg.mxu0
    %v5609 = vadd.f32 %v5115, %v5563
    %v5610 = vadd.f32 %v5129, %v5577
    %v5611 = vadd.f32 %v5143, %v5591
    %v5612 = vadd.f32 %v5157, %v5605
    %v5613 = vadd.f32 %v5117, %v5565
    %v5614 = vadd.f32 %v5131, %v5579
    %v5615 = vadd.f32 %v5145, %v5593
    %v5616 = vadd.f32 %v5159, %v5607
    %v5617 = vxor.u32 %v5609, 2147483648
    %v5618 = vxor.u32 %v5613, 2147483648
    %v5619 = vmul.f32 %v5617, 1.442695
    %v5620 = vpow.pop %v5619
    %v5621 = vmul.f32 %v5618, 1.442695
    %v5622 = vpow.pop %v5621
    %v5623 = vadd.f32 %v5620, 1.0
    %v5624 = vadd.f32 %v5622, 1.0
    %v5625 = vrcp.pop %v5623
    %v5626 = vmul.f32 %v5623, %v5625
    %v5627 = vsub.f32 1.0, %v5626
    %v5628 = vmul.f32 %v5625, %v5627
    %v5629 = vadd.f32 %v5625, %v5628
    %vm5630 = vweird.f32 %v5623
    %vm5631 = vweird.f32 %v5625
    %vm5632 = vmor %vm5630, %vm5631
    %v5633 = vsel %vm5632, %v5625, %v5629
    %v5634 = vand.u32 2147483647, %v5623
    %vm5635 = vcmp.eq.f32.partialorder %v5634, 8.507059e+37
    %v5636 = vand.u32 %v5623, 2147483648
    %v5637 = vor.u32 1.1754944e-38, %v5636
    %v5638 = vsel %vm5635, %v5637, %v5633
    %v5639 = vmul.f32 1.0, %v5638
    %v5640 = vrcp.pop %v5624
    %v5641 = vmul.f32 %v5624, %v5640
    %v5642 = vsub.f32 1.0, %v5641
    %v5643 = vmul.f32 %v5640, %v5642
    %v5644 = vadd.f32 %v5640, %v5643
    %vm5645 = vweird.f32 %v5624
    %vm5646 = vweird.f32 %v5640
    %vm5647 = vmor %vm5645, %vm5646
    %v5648 = vsel %vm5647, %v5640, %v5644
    %v5649 = vand.u32 2147483647, %v5624
    %vm5650 = vcmp.eq.f32.partialorder %v5649, 8.507059e+37
    %v5651 = vand.u32 %v5624, 2147483648
    %v5652 = vor.u32 1.1754944e-38, %v5651
    %v5653 = vsel %vm5650, %v5652, %v5648
    %v5654 = vmul.f32 1.0, %v5653
    %v5655 = vxor.u32 %v5610, 2147483648
    %v5656 = vxor.u32 %v5614, 2147483648
    %v5657 = vmul.f32 %v5655, 1.442695
    %v5658 = vpow.pop %v5657
    %v5659 = vmul.f32 %v5656, 1.442695
    %v5660 = vpow.pop %v5659
    %v5661 = vadd.f32 %v5658, 1.0
    %v5662 = vadd.f32 %v5660, 1.0
    %v5663 = vrcp.pop %v5661
    %v5664 = vmul.f32 %v5661, %v5663
    %v5665 = vsub.f32 1.0, %v5664
    %v5666 = vmul.f32 %v5663, %v5665
    %v5667 = vadd.f32 %v5663, %v5666
    %vm5668 = vweird.f32 %v5661
    %vm5669 = vweird.f32 %v5663
    %vm5670 = vmor %vm5668, %vm5669
    %v5671 = vsel %vm5670, %v5663, %v5667
    %v5672 = vand.u32 2147483647, %v5661
    %vm5673 = vcmp.eq.f32.partialorder %v5672, 8.507059e+37
    %v5674 = vand.u32 %v5661, 2147483648
    %v5675 = vor.u32 1.1754944e-38, %v5674
    %v5676 = vsel %vm5673, %v5675, %v5671
    %v5677 = vmul.f32 1.0, %v5676
    %v5678 = vrcp.pop %v5662
    %v5679 = vmul.f32 %v5662, %v5678
    %v5680 = vsub.f32 1.0, %v5679
    %v5681 = vmul.f32 %v5678, %v5680
    %v5682 = vadd.f32 %v5678, %v5681
    %vm5683 = vweird.f32 %v5662
    %vm5684 = vweird.f32 %v5678
    %vm5685 = vmor %vm5683, %vm5684
    %v5686 = vsel %vm5685, %v5678, %v5682
    %v5687 = vand.u32 2147483647, %v5662
    %vm5688 = vcmp.eq.f32.partialorder %v5687, 8.507059e+37
    %v5689 = vand.u32 %v5662, 2147483648
    %v5690 = vor.u32 1.1754944e-38, %v5689
    %v5691 = vsel %vm5688, %v5690, %v5686
    %v5692 = vmul.f32 1.0, %v5691
    %v5693 = vtanh.pop %v5611
    %v5694 = vtanh.pop %v5615
    %v5695 = vxor.u32 %v5612, 2147483648
    %v5696 = vxor.u32 %v5616, 2147483648
    %v5697 = vmul.f32 %v5695, 1.442695
    %v5698 = vpow.pop %v5697
    %v5699 = vmul.f32 %v5696, 1.442695
    %v5700 = vpow.pop %v5699
    %v5701 = vadd.f32 %v5698, 1.0
    %v5702 = vadd.f32 %v5700, 1.0
    %v5703 = vrcp.pop %v5701
    %v5704 = vmul.f32 %v5701, %v5703
    %v5705 = vsub.f32 1.0, %v5704
    %v5706 = vmul.f32 %v5703, %v5705
    %v5707 = vadd.f32 %v5703, %v5706
    %vm5708 = vweird.f32 %v5701
    %vm5709 = vweird.f32 %v5703
    %vm5710 = vmor %vm5708, %vm5709
    %v5711 = vsel %vm5710, %v5703, %v5707
    %v5712 = vand.u32 2147483647, %v5701
    %vm5713 = vcmp.eq.f32.partialorder %v5712, 8.507059e+37
    %v5714 = vand.u32 %v5701, 2147483648
    %v5715 = vor.u32 1.1754944e-38, %v5714
    %v5716 = vsel %vm5713, %v5715, %v5711
    %v5717 = vmul.f32 1.0, %v5716
    %v5718 = vrcp.pop %v5702
    %v5719 = vmul.f32 %v5702, %v5718
    %v5720 = vsub.f32 1.0, %v5719
    %v5721 = vmul.f32 %v5718, %v5720
    %v5722 = vadd.f32 %v5718, %v5721
    %vm5723 = vweird.f32 %v5702
    %vm5724 = vweird.f32 %v5718
    %vm5725 = vmor %vm5723, %vm5724
    %v5726 = vsel %vm5725, %v5718, %v5722
    %v5727 = vand.u32 2147483647, %v5702
    %vm5728 = vcmp.eq.f32.partialorder %v5727, 8.507059e+37
    %v5729 = vand.u32 %v5702, 2147483648
    %v5730 = vor.u32 1.1754944e-38, %v5729
    %v5731 = vsel %vm5728, %v5730, %v5726
    %v5732 = vmul.f32 1.0, %v5731
    %v5733 = vmul.f32 %v5677, %v5537
    %v5734 = vmul.f32 %v5692, %v5538
    %v5735 = vmul.f32 %v5639, %v5693
    %v5736 = vmul.f32 %v5654, %v5694
    %v5737 = vadd.f32 %v5733, %v5735
    %v5738 = vadd.f32 %v5734, %v5736
    %v5739 = vtanh.pop %v5737
    %v5740 = vtanh.pop %v5738
    %v5741 = vmul.f32 %v5717, %v5739
    %v5742 = vmul.f32 %v5732, %v5740
    %v5743 = vpack.c.bf16 %v5741, %v5741
    %v5744 = vpack.c.bf16 %v5742, %v5742
    %5745 = vst [vmem:[%s1244] sm:$0xf] %v5743
    %5746 = vst [vmem:[%s1244 + $0x4] sm:$0xf] %v5744
    %v5749 = vunpack.c.l.b16 %v5743
    %v5750 = vunpack.c.l.b16 %v5744
    %v5751 = vpack.c.b16 %v5750, %v5749
    %5753 = vmatpush.bf16.msra.mxu0 %v5317
    %5754 = vmatpush.bf16.msra.mxu0 %v5313
    %5755 = vmatpush.bf16.msra.mxu0 %v5309
    %5756 = vmatpush.bf16.msra.mxu0 %v5305
    %5757 = vmatpush.bf16.msra.mxu0 %v5301
    %5758 = vmatpush.bf16.msra.mxu0 %v5297
    %5759 = vmatpush.bf16.msra.mxu0 %v5293
    %5760 = vmatpush.bf16.msra.mxu0 %v5289
    %5761 = vmatmul.bf16.gmra.mxu0 %v5751
    %v5762 = vpop.f32.mrf.mxu0
    %v5763 = vadd.f32 0.0, %v5762
    %v5764 = vpop.f32.mrf.mxu0
    %v5765 = vadd.f32 0.0, %v5764
    %5766 = vdwg.mxu0
    %5767 = vmatpush.bf16.msra.mxu0 %v5318
    %5768 = vmatpush.bf16.msra.mxu0 %v5314
    %5769 = vmatpush.bf16.msra.mxu0 %v5310
    %5770 = vmatpush.bf16.msra.mxu0 %v5306
    %5771 = vmatpush.bf16.msra.mxu0 %v5302
    %5772 = vmatpush.bf16.msra.mxu0 %v5298
    %5773 = vmatpush.bf16.msra.mxu0 %v5294
    %5774 = vmatpush.bf16.msra.mxu0 %v5290
    %5775 = vmatmul.bf16.gmra.mxu0 %v5751
    %v5776 = vpop.f32.mrf.mxu0
    %v5777 = vadd.f32 0.0, %v5776
    %v5778 = vpop.f32.mrf.mxu0
    %v5779 = vadd.f32 0.0, %v5778
    %5780 = vdwg.mxu0
    %5781 = vmatpush.bf16.msra.mxu0 %v5319
    %5782 = vmatpush.bf16.msra.mxu0 %v5315
    %5783 = vmatpush.bf16.msra.mxu0 %v5311
    %5784 = vmatpush.bf16.msra.mxu0 %v5307
    %5785 = vmatpush.bf16.msra.mxu0 %v5303
    %5786 = vmatpush.bf16.msra.mxu0 %v5299
    %5787 = vmatpush.bf16.msra.mxu0 %v5295
    %5788 = vmatpush.bf16.msra.mxu0 %v5291
    %5789 = vmatmul.bf16.gmra.mxu0 %v5751
    %v5790 = vpop.f32.mrf.mxu0
    %v5791 = vadd.f32 0.0, %v5790
    %v5792 = vpop.f32.mrf.mxu0
    %v5793 = vadd.f32 0.0, %v5792
    %5794 = vdwg.mxu0
    %5795 = vmatpush.bf16.msra.mxu0 %v5320
    %5796 = vmatpush.bf16.msra.mxu0 %v5316
    %5797 = vmatpush.bf16.msra.mxu0 %v5312
    %5798 = vmatpush.bf16.msra.mxu0 %v5308
    %5799 = vmatpush.bf16.msra.mxu0 %v5304
    %5800 = vmatpush.bf16.msra.mxu0 %v5300
    %5801 = vmatpush.bf16.msra.mxu0 %v5296
    %5802 = vmatpush.bf16.msra.mxu0 %v5292
    %5803 = vmatmul.bf16.gmra.mxu0 %v5751
    %v5804 = vpop.f32.mrf.mxu0
    %v5805 = vadd.f32 0.0, %v5804
    %v5806 = vpop.f32.mrf.mxu0
    %v5807 = vadd.f32 0.0, %v5806
    %5808 = vdwg.mxu0
    %v5809 = vadd.f32 %v5115, %v5763
    %v5810 = vadd.f32 %v5129, %v5777
    %v5811 = vadd.f32 %v5143, %v5791
    %v5812 = vadd.f32 %v5157, %v5805
    %v5813 = vadd.f32 %v5117, %v5765
    %v5814 = vadd.f32 %v5131, %v5779
    %v5815 = vadd.f32 %v5145, %v5793
    %v5816 = vadd.f32 %v5159, %v5807
    %v5817 = vxor.u32 %v5809, 2147483648
    %v5818 = vxor.u32 %v5813, 2147483648
    %v5819 = vmul.f32 %v5817, 1.442695
    %v5820 = vpow.pop %v5819
    %v5821 = vmul.f32 %v5818, 1.442695
    %v5822 = vpow.pop %v5821
    %v5823 = vadd.f32 %v5820, 1.0
    %v5824 = vadd.f32 %v5822, 1.0
    %v5825 = vrcp.pop %v5823
    %v5826 = vmul.f32 %v5823, %v5825
    %v5827 = vsub.f32 1.0, %v5826
    %v5828 = vmul.f32 %v5825, %v5827
    %v5829 = vadd.f32 %v5825, %v5828
    %vm5830 = vweird.f32 %v5823
    %vm5831 = vweird.f32 %v5825
    %vm5832 = vmor %vm5830, %vm5831
    %v5833 = vsel %vm5832, %v5825, %v5829
    %v5834 = vand.u32 2147483647, %v5823
    %vm5835 = vcmp.eq.f32.partialorder %v5834, 8.507059e+37
    %v5836 = vand.u32 %v5823, 2147483648
    %v5837 = vor.u32 1.1754944e-38, %v5836
    %v5838 = vsel %vm5835, %v5837, %v5833
    %v5839 = vmul.f32 1.0, %v5838
    %v5840 = vrcp.pop %v5824
    %v5841 = vmul.f32 %v5824, %v5840
    %v5842 = vsub.f32 1.0, %v5841
    %v5843 = vmul.f32 %v5840, %v5842
    %v5844 = vadd.f32 %v5840, %v5843
    %vm5845 = vweird.f32 %v5824
    %vm5846 = vweird.f32 %v5840
    %vm5847 = vmor %vm5845, %vm5846
    %v5848 = vsel %vm5847, %v5840, %v5844
    %v5849 = vand.u32 2147483647, %v5824
    %vm5850 = vcmp.eq.f32.partialorder %v5849, 8.507059e+37
    %v5851 = vand.u32 %v5824, 2147483648
    %v5852 = vor.u32 1.1754944e-38, %v5851
    %v5853 = vsel %vm5850, %v5852, %v5848
    %v5854 = vmul.f32 1.0, %v5853
    %v5855 = vxor.u32 %v5810, 2147483648
    %v5856 = vxor.u32 %v5814, 2147483648
    %v5857 = vmul.f32 %v5855, 1.442695
    %v5858 = vpow.pop %v5857
    %v5859 = vmul.f32 %v5856, 1.442695
    %v5860 = vpow.pop %v5859
    %v5861 = vadd.f32 %v5858, 1.0
    %v5862 = vadd.f32 %v5860, 1.0
    %v5863 = vrcp.pop %v5861
    %v5864 = vmul.f32 %v5861, %v5863
    %v5865 = vsub.f32 1.0, %v5864
    %v5866 = vmul.f32 %v5863, %v5865
    %v5867 = vadd.f32 %v5863, %v5866
    %vm5868 = vweird.f32 %v5861
    %vm5869 = vweird.f32 %v5863
    %vm5870 = vmor %vm5868, %vm5869
    %v5871 = vsel %vm5870, %v5863, %v5867
    %v5872 = vand.u32 2147483647, %v5861
    %vm5873 = vcmp.eq.f32.partialorder %v5872, 8.507059e+37
    %v5874 = vand.u32 %v5861, 2147483648
    %v5875 = vor.u32 1.1754944e-38, %v5874
    %v5876 = vsel %vm5873, %v5875, %v5871
    %v5877 = vmul.f32 1.0, %v5876
    %v5878 = vrcp.pop %v5862
    %v5879 = vmul.f32 %v5862, %v5878
    %v5880 = vsub.f32 1.0, %v5879
    %v5881 = vmul.f32 %v5878, %v5880
    %v5882 = vadd.f32 %v5878, %v5881
    %vm5883 = vweird.f32 %v5862
    %vm5884 = vweird.f32 %v5878
    %vm5885 = vmor %vm5883, %vm5884
    %v5886 = vsel %vm5885, %v5878, %v5882
    %v5887 = vand.u32 2147483647, %v5862
    %vm5888 = vcmp.eq.f32.partialorder %v5887, 8.507059e+37
    %v5889 = vand.u32 %v5862, 2147483648
    %v5890 = vor.u32 1.1754944e-38, %v5889
    %v5891 = vsel %vm5888, %v5890, %v5886
    %v5892 = vmul.f32 1.0, %v5891
    %v5893 = vtanh.pop %v5811
    %v5894 = vtanh.pop %v5815
    %v5895 = vxor.u32 %v5812, 2147483648
    %v5896 = vxor.u32 %v5816, 2147483648
    %v5897 = vmul.f32 %v5895, 1.442695
    %v5898 = vpow.pop %v5897
    %v5899 = vmul.f32 %v5896, 1.442695
    %v5900 = vpow.pop %v5899
    %v5901 = vadd.f32 %v5898, 1.0
    %v5902 = vadd.f32 %v5900, 1.0
    %v5903 = vrcp.pop %v5901
    %v5904 = vmul.f32 %v5901, %v5903
    %v5905 = vsub.f32 1.0, %v5904
    %v5906 = vmul.f32 %v5903, %v5905
    %v5907 = vadd.f32 %v5903, %v5906
    %vm5908 = vweird.f32 %v5901
    %vm5909 = vweird.f32 %v5903
    %vm5910 = vmor %vm5908, %vm5909
    %v5911 = vsel %vm5910, %v5903, %v5907
    %v5912 = vand.u32 2147483647, %v5901
    %vm5913 = vcmp.eq.f32.partialorder %v5912, 8.507059e+37
    %v5914 = vand.u32 %v5901, 2147483648
    %v5915 = vor.u32 1.1754944e-38, %v5914
    %v5916 = vsel %vm5913, %v5915, %v5911
    %v5917 = vmul.f32 1.0, %v5916
    %v5918 = vrcp.pop %v5902
    %v5919 = vmul.f32 %v5902, %v5918
    %v5920 = vsub.f32 1.0, %v5919
    %v5921 = vmul.f32 %v5918, %v5920
    %v5922 = vadd.f32 %v5918, %v5921
    %vm5923 = vweird.f32 %v5902
    %vm5924 = vweird.f32 %v5918
    %vm5925 = vmor %vm5923, %vm5924
    %v5926 = vsel %vm5925, %v5918, %v5922
    %v5927 = vand.u32 2147483647, %v5902
    %vm5928 = vcmp.eq.f32.partialorder %v5927, 8.507059e+37
    %v5929 = vand.u32 %v5902, 2147483648
    %v5930 = vor.u32 1.1754944e-38, %v5929
    %v5931 = vsel %vm5928, %v5930, %v5926
    %v5932 = vmul.f32 1.0, %v5931
    %v5933 = vmul.f32 %v5877, %v5737
    %v5934 = vmul.f32 %v5892, %v5738
    %v5935 = vmul.f32 %v5839, %v5893
    %v5936 = vmul.f32 %v5854, %v5894
    %v5937 = vadd.f32 %v5933, %v5935
    %v5938 = vadd.f32 %v5934, %v5936
    %v5939 = vtanh.pop %v5937
    %v5940 = vtanh.pop %v5938
    %v5941 = vmul.f32 %v5917, %v5939
    %v5942 = vmul.f32 %v5932, %v5940
    %v5943 = vpack.c.bf16 %v5941, %v5941
    %v5944 = vpack.c.bf16 %v5942, %v5942
    %5945 = vst [vmem:[%s1454] sm:$0xf] %v5943
    %5946 = vst [vmem:[%s1454 + $0x4] sm:$0xf] %v5944
    %v5949 = vunpack.c.l.b16 %v5943
    %v5950 = vunpack.c.l.b16 %v5944
    %v5951 = vpack.c.b16 %v5950, %v5949
    %5953 = vmatpush.bf16.msra.mxu0 %v5317
    %5954 = vmatpush.bf16.msra.mxu0 %v5313
    %5955 = vmatpush.bf16.msra.mxu0 %v5309
    %5956 = vmatpush.bf16.msra.mxu0 %v5305
    %5957 = vmatpush.bf16.msra.mxu0 %v5301
    %5958 = vmatpush.bf16.msra.mxu0 %v5297
    %5959 = vmatpush.bf16.msra.mxu0 %v5293
    %5960 = vmatpush.bf16.msra.mxu0 %v5289
    %5961 = vmatmul.bf16.gmra.mxu0 %v5951
    %v5962 = vpop.f32.mrf.mxu0
    %v5963 = vadd.f32 0.0, %v5962
    %v5964 = vpop.f32.mrf.mxu0
    %v5965 = vadd.f32 0.0, %v5964
    %5966 = vdwg.mxu0
    %5967 = vmatpush.bf16.msra.mxu0 %v5318
    %5968 = vmatpush.bf16.msra.mxu0 %v5314
    %5969 = vmatpush.bf16.msra.mxu0 %v5310
    %5970 = vmatpush.bf16.msra.mxu0 %v5306
    %5971 = vmatpush.bf16.msra.mxu0 %v5302
    %5972 = vmatpush.bf16.msra.mxu0 %v5298
    %5973 = vmatpush.bf16.msra.mxu0 %v5294
    %5974 = vmatpush.bf16.msra.mxu0 %v5290
    %5975 = vmatmul.bf16.gmra.mxu0 %v5951
    %v5976 = vpop.f32.mrf.mxu0
    %v5977 = vadd.f32 0.0, %v5976
    %v5978 = vpop.f32.mrf.mxu0
    %v5979 = vadd.f32 0.0, %v5978
    %5980 = vdwg.mxu0
    %5981 = vmatpush.bf16.msra.mxu0 %v5319
    %5982 = vmatpush.bf16.msra.mxu0 %v5315
    %5983 = vmatpush.bf16.msra.mxu0 %v5311
    %5984 = vmatpush.bf16.msra.mxu0 %v5307
    %5985 = vmatpush.bf16.msra.mxu0 %v5303
    %5986 = vmatpush.bf16.msra.mxu0 %v5299
    %5987 = vmatpush.bf16.msra.mxu0 %v5295
    %5988 = vmatpush.bf16.msra.mxu0 %v5291
    %5989 = vmatmul.bf16.gmra.mxu0 %v5951
    %v5990 = vpop.f32.mrf.mxu0
    %v5991 = vadd.f32 0.0, %v5990
    %v5992 = vpop.f32.mrf.mxu0
    %v5993 = vadd.f32 0.0, %v5992
    %5994 = vdwg.mxu0
    %5995 = vmatpush.bf16.msra.mxu0 %v5320
    %5996 = vmatpush.bf16.msra.mxu0 %v5316
    %5997 = vmatpush.bf16.msra.mxu0 %v5312
    %5998 = vmatpush.bf16.msra.mxu0 %v5308
    %5999 = vmatpush.bf16.msra.mxu0 %v5304
    %6000 = vmatpush.bf16.msra.mxu0 %v5300
    %6001 = vmatpush.bf16.msra.mxu0 %v5296
    %6002 = vmatpush.bf16.msra.mxu0 %v5292
    %6003 = vmatmul.bf16.gmra.mxu0 %v5951
    %v6004 = vpop.f32.mrf.mxu0
    %v6005 = vadd.f32 0.0, %v6004
    %v6006 = vpop.f32.mrf.mxu0
    %v6007 = vadd.f32 0.0, %v6006
    %6008 = vdwg.mxu0
    %v6009 = vadd.f32 %v5115, %v5963
    %v6010 = vadd.f32 %v5129, %v5977
    %v6011 = vadd.f32 %v5143, %v5991
    %v6012 = vadd.f32 %v5157, %v6005
    %v6013 = vadd.f32 %v5117, %v5965
    %v6014 = vadd.f32 %v5131, %v5979
    %v6015 = vadd.f32 %v5145, %v5993
    %v6016 = vadd.f32 %v5159, %v6007
    %v6017 = vxor.u32 %v6009, 2147483648
    %v6018 = vxor.u32 %v6013, 2147483648
    %v6019 = vmul.f32 %v6017, 1.442695
    %v6020 = vpow.pop %v6019
    %v6021 = vmul.f32 %v6018, 1.442695
    %v6022 = vpow.pop %v6021
    %v6023 = vadd.f32 %v6020, 1.0
    %v6024 = vadd.f32 %v6022, 1.0
    %v6025 = vrcp.pop %v6023
    %v6026 = vmul.f32 %v6023, %v6025
    %v6027 = vsub.f32 1.0, %v6026
    %v6028 = vmul.f32 %v6025, %v6027
    %v6029 = vadd.f32 %v6025, %v6028
    %vm6030 = vweird.f32 %v6023
    %vm6031 = vweird.f32 %v6025
    %vm6032 = vmor %vm6030, %vm6031
    %v6033 = vsel %vm6032, %v6025, %v6029
    %v6034 = vand.u32 2147483647, %v6023
    %vm6035 = vcmp.eq.f32.partialorder %v6034, 8.507059e+37
    %v6036 = vand.u32 %v6023, 2147483648
    %v6037 = vor.u32 1.1754944e-38, %v6036
    %v6038 = vsel %vm6035, %v6037, %v6033
    %v6039 = vmul.f32 1.0, %v6038
    %v6040 = vrcp.pop %v6024
    %v6041 = vmul.f32 %v6024, %v6040
    %v6042 = vsub.f32 1.0, %v6041
    %v6043 = vmul.f32 %v6040, %v6042
    %v6044 = vadd.f32 %v6040, %v6043
    %vm6045 = vweird.f32 %v6024
    %vm6046 = vweird.f32 %v6040
    %vm6047 = vmor %vm6045, %vm6046
    %v6048 = vsel %vm6047, %v6040, %v6044
    %v6049 = vand.u32 2147483647, %v6024
    %vm6050 = vcmp.eq.f32.partialorder %v6049, 8.507059e+37
    %v6051 = vand.u32 %v6024, 2147483648
    %v6052 = vor.u32 1.1754944e-38, %v6051
    %v6053 = vsel %vm6050, %v6052, %v6048
    %v6054 = vmul.f32 1.0, %v6053
    %v6055 = vxor.u32 %v6010, 2147483648
    %v6056 = vxor.u32 %v6014, 2147483648
    %v6057 = vmul.f32 %v6055, 1.442695
    %v6058 = vpow.pop %v6057
    %v6059 = vmul.f32 %v6056, 1.442695
    %v6060 = vpow.pop %v6059
    %v6061 = vadd.f32 %v6058, 1.0
    %v6062 = vadd.f32 %v6060, 1.0
    %v6063 = vrcp.pop %v6061
    %v6064 = vmul.f32 %v6061, %v6063
    %v6065 = vsub.f32 1.0, %v6064
    %v6066 = vmul.f32 %v6063, %v6065
    %v6067 = vadd.f32 %v6063, %v6066
    %vm6068 = vweird.f32 %v6061
    %vm6069 = vweird.f32 %v6063
    %vm6070 = vmor %vm6068, %vm6069
    %v6071 = vsel %vm6070, %v6063, %v6067
    %v6072 = vand.u32 2147483647, %v6061
    %vm6073 = vcmp.eq.f32.partialorder %v6072, 8.507059e+37
    %v6074 = vand.u32 %v6061, 2147483648
    %v6075 = vor.u32 1.1754944e-38, %v6074
    %v6076 = vsel %vm6073, %v6075, %v6071
    %v6077 = vmul.f32 1.0, %v6076
    %v6078 = vrcp.pop %v6062
    %v6079 = vmul.f32 %v6062, %v6078
    %v6080 = vsub.f32 1.0, %v6079
    %v6081 = vmul.f32 %v6078, %v6080
    %v6082 = vadd.f32 %v6078, %v6081
    %vm6083 = vweird.f32 %v6062
    %vm6084 = vweird.f32 %v6078
    %vm6085 = vmor %vm6083, %vm6084
    %v6086 = vsel %vm6085, %v6078, %v6082
    %v6087 = vand.u32 2147483647, %v6062
    %vm6088 = vcmp.eq.f32.partialorder %v6087, 8.507059e+37
    %v6089 = vand.u32 %v6062, 2147483648
    %v6090 = vor.u32 1.1754944e-38, %v6089
    %v6091 = vsel %vm6088, %v6090, %v6086
    %v6092 = vmul.f32 1.0, %v6091
    %v6093 = vtanh.pop %v6011
    %v6094 = vtanh.pop %v6015
    %v6095 = vxor.u32 %v6012, 2147483648
    %v6096 = vxor.u32 %v6016, 2147483648
    %v6097 = vmul.f32 %v6095, 1.442695
    %v6098 = vpow.pop %v6097
    %v6099 = vmul.f32 %v6096, 1.442695
    %v6100 = vpow.pop %v6099
    %v6101 = vadd.f32 %v6098, 1.0
    %v6102 = vadd.f32 %v6100, 1.0
    %v6103 = vrcp.pop %v6101
    %v6104 = vmul.f32 %v6101, %v6103
    %v6105 = vsub.f32 1.0, %v6104
    %v6106 = vmul.f32 %v6103, %v6105
    %v6107 = vadd.f32 %v6103, %v6106
    %vm6108 = vweird.f32 %v6101
    %vm6109 = vweird.f32 %v6103
    %vm6110 = vmor %vm6108, %vm6109
    %v6111 = vsel %vm6110, %v6103, %v6107
    %v6112 = vand.u32 2147483647, %v6101
    %vm6113 = vcmp.eq.f32.partialorder %v6112, 8.507059e+37
    %v6114 = vand.u32 %v6101, 2147483648
    %v6115 = vor.u32 1.1754944e-38, %v6114
    %v6116 = vsel %vm6113, %v6115, %v6111
    %v6117 = vmul.f32 1.0, %v6116
    %v6118 = vrcp.pop %v6102
    %v6119 = vmul.f32 %v6102, %v6118
    %v6120 = vsub.f32 1.0, %v6119
    %v6121 = vmul.f32 %v6118, %v6120
    %v6122 = vadd.f32 %v6118, %v6121
    %vm6123 = vweird.f32 %v6102
    %vm6124 = vweird.f32 %v6118
    %vm6125 = vmor %vm6123, %vm6124
    %v6126 = vsel %vm6125, %v6118, %v6122
    %v6127 = vand.u32 2147483647, %v6102
    %vm6128 = vcmp.eq.f32.partialorder %v6127, 8.507059e+37
    %v6129 = vand.u32 %v6102, 2147483648
    %v6130 = vor.u32 1.1754944e-38, %v6129
    %v6131 = vsel %vm6128, %v6130, %v6126
    %v6132 = vmul.f32 1.0, %v6131
    %v6133 = vmul.f32 %v6077, %v5937
    %v6134 = vmul.f32 %v6092, %v5938
    %v6135 = vmul.f32 %v6039, %v6093
    %v6136 = vmul.f32 %v6054, %v6094
    %v6137 = vadd.f32 %v6133, %v6135
    %v6138 = vadd.f32 %v6134, %v6136
    %v6139 = vtanh.pop %v6137
    %v6140 = vtanh.pop %v6138
    %v6141 = vmul.f32 %v6117, %v6139
    %v6142 = vmul.f32 %v6132, %v6140
    %v6143 = vpack.c.bf16 %v6141, %v6141
    %v6144 = vpack.c.bf16 %v6142, %v6142
    %6145 = vst [vmem:[%s1664] sm:$0xf] %v6143
    %6146 = vst [vmem:[%s1664 + $0x4] sm:$0xf] %v6144
    %v6149 = vunpack.c.l.b16 %v6143
    %v6150 = vunpack.c.l.b16 %v6144
    %v6151 = vpack.c.b16 %v6150, %v6149
    %6153 = vmatpush.bf16.msra.mxu0 %v5317
    %6154 = vmatpush.bf16.msra.mxu0 %v5313
    %6155 = vmatpush.bf16.msra.mxu0 %v5309
    %6156 = vmatpush.bf16.msra.mxu0 %v5305
    %6157 = vmatpush.bf16.msra.mxu0 %v5301
    %6158 = vmatpush.bf16.msra.mxu0 %v5297
    %6159 = vmatpush.bf16.msra.mxu0 %v5293
    %6160 = vmatpush.bf16.msra.mxu0 %v5289
    %6161 = vmatmul.bf16.gmra.mxu0 %v6151
    %v6162 = vpop.f32.mrf.mxu0
    %v6163 = vadd.f32 0.0, %v6162
    %v6164 = vpop.f32.mrf.mxu0
    %v6165 = vadd.f32 0.0, %v6164
    %6166 = vdwg.mxu0
    %6167 = vmatpush.bf16.msra.mxu0 %v5318
    %6168 = vmatpush.bf16.msra.mxu0 %v5314
    %6169 = vmatpush.bf16.msra.mxu0 %v5310
    %6170 = vmatpush.bf16.msra.mxu0 %v5306
    %6171 = vmatpush.bf16.msra.mxu0 %v5302
    %6172 = vmatpush.bf16.msra.mxu0 %v5298
    %6173 = vmatpush.bf16.msra.mxu0 %v5294
    %6174 = vmatpush.bf16.msra.mxu0 %v5290
    %6175 = vmatmul.bf16.gmra.mxu0 %v6151
    %v6176 = vpop.f32.mrf.mxu0
    %v6177 = vadd.f32 0.0, %v6176
    %v6178 = vpop.f32.mrf.mxu0
    %v6179 = vadd.f32 0.0, %v6178
    %6180 = vdwg.mxu0
    %6181 = vmatpush.bf16.msra.mxu0 %v5319
    %6182 = vmatpush.bf16.msra.mxu0 %v5315
    %6183 = vmatpush.bf16.msra.mxu0 %v5311
    %6184 = vmatpush.bf16.msra.mxu0 %v5307
    %6185 = vmatpush.bf16.msra.mxu0 %v5303
    %6186 = vmatpush.bf16.msra.mxu0 %v5299
    %6187 = vmatpush.bf16.msra.mxu0 %v5295
    %6188 = vmatpush.bf16.msra.mxu0 %v5291
    %6189 = vmatmul.bf16.gmra.mxu0 %v6151
    %v6190 = vpop.f32.mrf.mxu0
    %v6191 = vadd.f32 0.0, %v6190
    %v6192 = vpop.f32.mrf.mxu0
    %v6193 = vadd.f32 0.0, %v6192
    %6194 = vdwg.mxu0
    %6195 = vmatpush.bf16.msra.mxu0 %v5320
    %6196 = vmatpush.bf16.msra.mxu0 %v5316
    %6197 = vmatpush.bf16.msra.mxu0 %v5312
    %6198 = vmatpush.bf16.msra.mxu0 %v5308
    %6199 = vmatpush.bf16.msra.mxu0 %v5304
    %6200 = vmatpush.bf16.msra.mxu0 %v5300
    %6201 = vmatpush.bf16.msra.mxu0 %v5296
    %6202 = vmatpush.bf16.msra.mxu0 %v5292
    %6203 = vmatmul.bf16.gmra.mxu0 %v6151
    %v6204 = vpop.f32.mrf.mxu0
    %v6205 = vadd.f32 0.0, %v6204
    %v6206 = vpop.f32.mrf.mxu0
    %v6207 = vadd.f32 0.0, %v6206
    %6208 = vdwg.mxu0
    %v6209 = vadd.f32 %v5115, %v6163
    %v6210 = vadd.f32 %v5129, %v6177
    %v6211 = vadd.f32 %v5143, %v6191
    %v6212 = vadd.f32 %v5157, %v6205
    %v6213 = vadd.f32 %v5117, %v6165
    %v6214 = vadd.f32 %v5131, %v6179
    %v6215 = vadd.f32 %v5145, %v6193
    %v6216 = vadd.f32 %v5159, %v6207
    %v6217 = vxor.u32 %v6209, 2147483648
    %v6218 = vxor.u32 %v6213, 2147483648
    %v6219 = vmul.f32 %v6217, 1.442695
    %v6220 = vpow.pop %v6219
    %v6221 = vmul.f32 %v6218, 1.442695
    %v6222 = vpow.pop %v6221
    %v6223 = vadd.f32 %v6220, 1.0
    %v6224 = vadd.f32 %v6222, 1.0
    %v6225 = vrcp.pop %v6223
    %v6226 = vmul.f32 %v6223, %v6225
    %v6227 = vsub.f32 1.0, %v6226
    %v6228 = vmul.f32 %v6225, %v6227
    %v6229 = vadd.f32 %v6225, %v6228
    %vm6230 = vweird.f32 %v6223
    %vm6231 = vweird.f32 %v6225
    %vm6232 = vmor %vm6230, %vm6231
    %v6233 = vsel %vm6232, %v6225, %v6229
    %v6234 = vand.u32 2147483647, %v6223
    %vm6235 = vcmp.eq.f32.partialorder %v6234, 8.507059e+37
    %v6236 = vand.u32 %v6223, 2147483648
    %v6237 = vor.u32 1.1754944e-38, %v6236
    %v6238 = vsel %vm6235, %v6237, %v6233
    %v6239 = vmul.f32 1.0, %v6238
    %v6240 = vrcp.pop %v6224
    %v6241 = vmul.f32 %v6224, %v6240
    %v6242 = vsub.f32 1.0, %v6241
    %v6243 = vmul.f32 %v6240, %v6242
    %v6244 = vadd.f32 %v6240, %v6243
    %vm6245 = vweird.f32 %v6224
    %vm6246 = vweird.f32 %v6240
    %vm6247 = vmor %vm6245, %vm6246
    %v6248 = vsel %vm6247, %v6240, %v6244
    %v6249 = vand.u32 2147483647, %v6224
    %vm6250 = vcmp.eq.f32.partialorder %v6249, 8.507059e+37
    %v6251 = vand.u32 %v6224, 2147483648
    %v6252 = vor.u32 1.1754944e-38, %v6251
    %v6253 = vsel %vm6250, %v6252, %v6248
    %v6254 = vmul.f32 1.0, %v6253
    %v6255 = vxor.u32 %v6210, 2147483648
    %v6256 = vxor.u32 %v6214, 2147483648
    %v6257 = vmul.f32 %v6255, 1.442695
    %v6258 = vpow.pop %v6257
    %v6259 = vmul.f32 %v6256, 1.442695
    %v6260 = vpow.pop %v6259
    %v6261 = vadd.f32 %v6258, 1.0
    %v6262 = vadd.f32 %v6260, 1.0
    %v6263 = vrcp.pop %v6261
    %v6264 = vmul.f32 %v6261, %v6263
    %v6265 = vsub.f32 1.0, %v6264
    %v6266 = vmul.f32 %v6263, %v6265
    %v6267 = vadd.f32 %v6263, %v6266
    %vm6268 = vweird.f32 %v6261
    %vm6269 = vweird.f32 %v6263
    %vm6270 = vmor %vm6268, %vm6269
    %v6271 = vsel %vm6270, %v6263, %v6267
    %v6272 = vand.u32 2147483647, %v6261
    %vm6273 = vcmp.eq.f32.partialorder %v6272, 8.507059e+37
    %v6274 = vand.u32 %v6261, 2147483648
    %v6275 = vor.u32 1.1754944e-38, %v6274
    %v6276 = vsel %vm6273, %v6275, %v6271
    %v6277 = vmul.f32 1.0, %v6276
    %v6278 = vrcp.pop %v6262
    %v6279 = vmul.f32 %v6262, %v6278
    %v6280 = vsub.f32 1.0, %v6279
    %v6281 = vmul.f32 %v6278, %v6280
    %v6282 = vadd.f32 %v6278, %v6281
    %vm6283 = vweird.f32 %v6262
    %vm6284 = vweird.f32 %v6278
    %vm6285 = vmor %vm6283, %vm6284
    %v6286 = vsel %vm6285, %v6278, %v6282
    %v6287 = vand.u32 2147483647, %v6262
    %vm6288 = vcmp.eq.f32.partialorder %v6287, 8.507059e+37
    %v6289 = vand.u32 %v6262, 2147483648
    %v6290 = vor.u32 1.1754944e-38, %v6289
    %v6291 = vsel %vm6288, %v6290, %v6286
    %v6292 = vmul.f32 1.0, %v6291
    %v6293 = vtanh.pop %v6211
    %v6294 = vtanh.pop %v6215
    %v6295 = vxor.u32 %v6212, 2147483648
    %v6296 = vxor.u32 %v6216, 2147483648
    %v6297 = vmul.f32 %v6295, 1.442695
    %v6298 = vpow.pop %v6297
    %v6299 = vmul.f32 %v6296, 1.442695
    %v6300 = vpow.pop %v6299
    %v6301 = vadd.f32 %v6298, 1.0
    %v6302 = vadd.f32 %v6300, 1.0
    %v6303 = vrcp.pop %v6301
    %v6304 = vmul.f32 %v6301, %v6303
    %v6305 = vsub.f32 1.0, %v6304
    %v6306 = vmul.f32 %v6303, %v6305
    %v6307 = vadd.f32 %v6303, %v6306
    %vm6308 = vweird.f32 %v6301
    %vm6309 = vweird.f32 %v6303
    %vm6310 = vmor %vm6308, %vm6309
    %v6311 = vsel %vm6310, %v6303, %v6307
    %v6312 = vand.u32 2147483647, %v6301
    %vm6313 = vcmp.eq.f32.partialorder %v6312, 8.507059e+37
    %v6314 = vand.u32 %v6301, 2147483648
    %v6315 = vor.u32 1.1754944e-38, %v6314
    %v6316 = vsel %vm6313, %v6315, %v6311
    %v6317 = vmul.f32 1.0, %v6316
    %v6318 = vrcp.pop %v6302
    %v6319 = vmul.f32 %v6302, %v6318
    %v6320 = vsub.f32 1.0, %v6319
    %v6321 = vmul.f32 %v6318, %v6320
    %v6322 = vadd.f32 %v6318, %v6321
    %vm6323 = vweird.f32 %v6302
    %vm6324 = vweird.f32 %v6318
    %vm6325 = vmor %vm6323, %vm6324
    %v6326 = vsel %vm6325, %v6318, %v6322
    %v6327 = vand.u32 2147483647, %v6302
    %vm6328 = vcmp.eq.f32.partialorder %v6327, 8.507059e+37
    %v6329 = vand.u32 %v6302, 2147483648
    %v6330 = vor.u32 1.1754944e-38, %v6329
    %v6331 = vsel %vm6328, %v6330, %v6326
    %v6332 = vmul.f32 1.0, %v6331
    %v6333 = vmul.f32 %v6277, %v6137
    %v6334 = vmul.f32 %v6292, %v6138
    %v6335 = vmul.f32 %v6239, %v6293
    %v6336 = vmul.f32 %v6254, %v6294
    %v6337 = vadd.f32 %v6333, %v6335
    %v6338 = vadd.f32 %v6334, %v6336
    %v6339 = vtanh.pop %v6337
    %v6340 = vtanh.pop %v6338
    %v6341 = vmul.f32 %v6317, %v6339
    %v6342 = vmul.f32 %v6332, %v6340
    %v6343 = vpack.c.bf16 %v6341, %v6341
    %v6344 = vpack.c.bf16 %v6342, %v6342
    %6345 = vst [vmem:[%s1874] sm:$0xf] %v6343
    %6346 = vst [vmem:[%s1874 + $0x4] sm:$0xf] %v6344
    %v6349 = vunpack.c.l.b16 %v6343
    %v6350 = vunpack.c.l.b16 %v6344
    %v6351 = vpack.c.b16 %v6350, %v6349
    %6353 = vmatpush.bf16.msra.mxu0 %v5317
    %6354 = vmatpush.bf16.msra.mxu0 %v5313
    %6355 = vmatpush.bf16.msra.mxu0 %v5309
    %6356 = vmatpush.bf16.msra.mxu0 %v5305
    %6357 = vmatpush.bf16.msra.mxu0 %v5301
    %6358 = vmatpush.bf16.msra.mxu0 %v5297
    %6359 = vmatpush.bf16.msra.mxu0 %v5293
    %6360 = vmatpush.bf16.msra.mxu0 %v5289
    %6361 = vmatmul.bf16.gmra.mxu0 %v6351
    %v6362 = vpop.f32.mrf.mxu0
    %v6363 = vadd.f32 0.0, %v6362
    %v6364 = vpop.f32.mrf.mxu0
    %v6365 = vadd.f32 0.0, %v6364
    %6366 = vdwg.mxu0
    %6367 = vmatpush.bf16.msra.mxu0 %v5318
    %6368 = vmatpush.bf16.msra.mxu0 %v5314
    %6369 = vmatpush.bf16.msra.mxu0 %v5310
    %6370 = vmatpush.bf16.msra.mxu0 %v5306
    %6371 = vmatpush.bf16.msra.mxu0 %v5302
    %6372 = vmatpush.bf16.msra.mxu0 %v5298
    %6373 = vmatpush.bf16.msra.mxu0 %v5294
    %6374 = vmatpush.bf16.msra.mxu0 %v5290
    %6375 = vmatmul.bf16.gmra.mxu0 %v6351
    %v6376 = vpop.f32.mrf.mxu0
    %v6377 = vadd.f32 0.0, %v6376
    %v6378 = vpop.f32.mrf.mxu0
    %v6379 = vadd.f32 0.0, %v6378
    %6380 = vdwg.mxu0
    %6381 = vmatpush.bf16.msra.mxu0 %v5319
    %6382 = vmatpush.bf16.msra.mxu0 %v5315
    %6383 = vmatpush.bf16.msra.mxu0 %v5311
    %6384 = vmatpush.bf16.msra.mxu0 %v5307
    %6385 = vmatpush.bf16.msra.mxu0 %v5303
    %6386 = vmatpush.bf16.msra.mxu0 %v5299
    %6387 = vmatpush.bf16.msra.mxu0 %v5295
    %6388 = vmatpush.bf16.msra.mxu0 %v5291
    %6389 = vmatmul.bf16.gmra.mxu0 %v6351
    %v6390 = vpop.f32.mrf.mxu0
    %v6391 = vadd.f32 0.0, %v6390
    %v6392 = vpop.f32.mrf.mxu0
    %v6393 = vadd.f32 0.0, %v6392
    %6394 = vdwg.mxu0
    %6395 = vmatpush.bf16.msra.mxu0 %v5320
    %6396 = vmatpush.bf16.msra.mxu0 %v5316
    %6397 = vmatpush.bf16.msra.mxu0 %v5312
    %6398 = vmatpush.bf16.msra.mxu0 %v5308
    %6399 = vmatpush.bf16.msra.mxu0 %v5304
    %6400 = vmatpush.bf16.msra.mxu0 %v5300
    %6401 = vmatpush.bf16.msra.mxu0 %v5296
    %6402 = vmatpush.bf16.msra.mxu0 %v5292
    %6403 = vmatmul.bf16.gmra.mxu0 %v6351
    %v6404 = vpop.f32.mrf.mxu0
    %v6405 = vadd.f32 0.0, %v6404
    %v6406 = vpop.f32.mrf.mxu0
    %v6407 = vadd.f32 0.0, %v6406
    %6408 = vdwg.mxu0
    %v6409 = vadd.f32 %v5115, %v6363
    %v6410 = vadd.f32 %v5129, %v6377
    %v6411 = vadd.f32 %v5143, %v6391
    %v6412 = vadd.f32 %v5157, %v6405
    %v6413 = vadd.f32 %v5117, %v6365
    %v6414 = vadd.f32 %v5131, %v6379
    %v6415 = vadd.f32 %v5145, %v6393
    %v6416 = vadd.f32 %v5159, %v6407
    %v6417 = vxor.u32 %v6409, 2147483648
    %v6418 = vxor.u32 %v6413, 2147483648
    %v6419 = vmul.f32 %v6417, 1.442695
    %v6420 = vpow.pop %v6419
    %v6421 = vmul.f32 %v6418, 1.442695
    %v6422 = vpow.pop %v6421
    %v6423 = vadd.f32 %v6420, 1.0
    %v6424 = vadd.f32 %v6422, 1.0
    %v6425 = vrcp.pop %v6423
    %v6426 = vmul.f32 %v6423, %v6425
    %v6427 = vsub.f32 1.0, %v6426
    %v6428 = vmul.f32 %v6425, %v6427
    %v6429 = vadd.f32 %v6425, %v6428
    %vm6430 = vweird.f32 %v6423
    %vm6431 = vweird.f32 %v6425
    %vm6432 = vmor %vm6430, %vm6431
    %v6433 = vsel %vm6432, %v6425, %v6429
    %v6434 = vand.u32 2147483647, %v6423
    %vm6435 = vcmp.eq.f32.partialorder %v6434, 8.507059e+37
    %v6436 = vand.u32 %v6423, 2147483648
    %v6437 = vor.u32 1.1754944e-38, %v6436
    %v6438 = vsel %vm6435, %v6437, %v6433
    %v6439 = vmul.f32 1.0, %v6438
    %v6440 = vrcp.pop %v6424
    %v6441 = vmul.f32 %v6424, %v6440
    %v6442 = vsub.f32 1.0, %v6441
    %v6443 = vmul.f32 %v6440, %v6442
    %v6444 = vadd.f32 %v6440, %v6443
    %vm6445 = vweird.f32 %v6424
    %vm6446 = vweird.f32 %v6440
    %vm6447 = vmor %vm6445, %vm6446
    %v6448 = vsel %vm6447, %v6440, %v6444
    %v6449 = vand.u32 2147483647, %v6424
    %vm6450 = vcmp.eq.f32.partialorder %v6449, 8.507059e+37
    %v6451 = vand.u32 %v6424, 2147483648
    %v6452 = vor.u32 1.1754944e-38, %v6451
    %v6453 = vsel %vm6450, %v6452, %v6448
    %v6454 = vmul.f32 1.0, %v6453
    %v6455 = vxor.u32 %v6410, 2147483648
    %v6456 = vxor.u32 %v6414, 2147483648
    %v6457 = vmul.f32 %v6455, 1.442695
    %v6458 = vpow.pop %v6457
    %v6459 = vmul.f32 %v6456, 1.442695
    %v6460 = vpow.pop %v6459
    %v6461 = vadd.f32 %v6458, 1.0
    %v6462 = vadd.f32 %v6460, 1.0
    %v6463 = vrcp.pop %v6461
    %v6464 = vmul.f32 %v6461, %v6463
    %v6465 = vsub.f32 1.0, %v6464
    %v6466 = vmul.f32 %v6463, %v6465
    %v6467 = vadd.f32 %v6463, %v6466
    %vm6468 = vweird.f32 %v6461
    %vm6469 = vweird.f32 %v6463
    %vm6470 = vmor %vm6468, %vm6469
    %v6471 = vsel %vm6470, %v6463, %v6467
    %v6472 = vand.u32 2147483647, %v6461
    %vm6473 = vcmp.eq.f32.partialorder %v6472, 8.507059e+37
    %v6474 = vand.u32 %v6461, 2147483648
    %v6475 = vor.u32 1.1754944e-38, %v6474
    %v6476 = vsel %vm6473, %v6475, %v6471
    %v6477 = vmul.f32 1.0, %v6476
    %v6478 = vrcp.pop %v6462
    %v6479 = vmul.f32 %v6462, %v6478
    %v6480 = vsub.f32 1.0, %v6479
    %v6481 = vmul.f32 %v6478, %v6480
    %v6482 = vadd.f32 %v6478, %v6481
    %vm6483 = vweird.f32 %v6462
    %vm6484 = vweird.f32 %v6478
    %vm6485 = vmor %vm6483, %vm6484
    %v6486 = vsel %vm6485, %v6478, %v6482
    %v6487 = vand.u32 2147483647, %v6462
    %vm6488 = vcmp.eq.f32.partialorder %v6487, 8.507059e+37
    %v6489 = vand.u32 %v6462, 2147483648
    %v6490 = vor.u32 1.1754944e-38, %v6489
    %v6491 = vsel %vm6488, %v6490, %v6486
    %v6492 = vmul.f32 1.0, %v6491
    %v6493 = vtanh.pop %v6411
    %v6494 = vtanh.pop %v6415
    %v6495 = vxor.u32 %v6412, 2147483648
    %v6496 = vxor.u32 %v6416, 2147483648
    %v6497 = vmul.f32 %v6495, 1.442695
    %v6498 = vpow.pop %v6497
    %v6499 = vmul.f32 %v6496, 1.442695
    %v6500 = vpow.pop %v6499
    %v6501 = vadd.f32 %v6498, 1.0
    %v6502 = vadd.f32 %v6500, 1.0
    %v6503 = vrcp.pop %v6501
    %v6504 = vmul.f32 %v6501, %v6503
    %v6505 = vsub.f32 1.0, %v6504
    %v6506 = vmul.f32 %v6503, %v6505
    %v6507 = vadd.f32 %v6503, %v6506
    %vm6508 = vweird.f32 %v6501
    %vm6509 = vweird.f32 %v6503
    %vm6510 = vmor %vm6508, %vm6509
    %v6511 = vsel %vm6510, %v6503, %v6507
    %v6512 = vand.u32 2147483647, %v6501
    %vm6513 = vcmp.eq.f32.partialorder %v6512, 8.507059e+37
    %v6514 = vand.u32 %v6501, 2147483648
    %v6515 = vor.u32 1.1754944e-38, %v6514
    %v6516 = vsel %vm6513, %v6515, %v6511
    %v6517 = vmul.f32 1.0, %v6516
    %v6518 = vrcp.pop %v6502
    %v6519 = vmul.f32 %v6502, %v6518
    %v6520 = vsub.f32 1.0, %v6519
    %v6521 = vmul.f32 %v6518, %v6520
    %v6522 = vadd.f32 %v6518, %v6521
    %vm6523 = vweird.f32 %v6502
    %vm6524 = vweird.f32 %v6518
    %vm6525 = vmor %vm6523, %vm6524
    %v6526 = vsel %vm6525, %v6518, %v6522
    %v6527 = vand.u32 2147483647, %v6502
    %vm6528 = vcmp.eq.f32.partialorder %v6527, 8.507059e+37
    %v6529 = vand.u32 %v6502, 2147483648
    %v6530 = vor.u32 1.1754944e-38, %v6529
    %v6531 = vsel %vm6528, %v6530, %v6526
    %v6532 = vmul.f32 1.0, %v6531
    %v6533 = vmul.f32 %v6477, %v6337
    %v6534 = vmul.f32 %v6492, %v6338
    %v6535 = vmul.f32 %v6439, %v6493
    %v6536 = vmul.f32 %v6454, %v6494
    %v6537 = vadd.f32 %v6533, %v6535
    %v6538 = vadd.f32 %v6534, %v6536
    %v6539 = vtanh.pop %v6537
    %v6540 = vtanh.pop %v6538
    %v6541 = vmul.f32 %v6517, %v6539
    %v6542 = vmul.f32 %v6532, %v6540
    %v6543 = vpack.c.bf16 %v6541, %v6541
    %v6544 = vpack.c.bf16 %v6542, %v6542
    %6545 = vst [vmem:[%s2084] sm:$0xf] %v6543
    %6546 = vst [vmem:[%s2084 + $0x4] sm:$0xf] %v6544
    %v6549 = vunpack.c.l.b16 %v6543
    %v6550 = vunpack.c.l.b16 %v6544
    %v6551 = vpack.c.b16 %v6550, %v6549
    %6553 = vmatpush.bf16.msra.mxu0 %v5317
    %6554 = vmatpush.bf16.msra.mxu0 %v5313
    %6555 = vmatpush.bf16.msra.mxu0 %v5309
    %6556 = vmatpush.bf16.msra.mxu0 %v5305
    %6557 = vmatpush.bf16.msra.mxu0 %v5301
    %6558 = vmatpush.bf16.msra.mxu0 %v5297
    %6559 = vmatpush.bf16.msra.mxu0 %v5293
    %6560 = vmatpush.bf16.msra.mxu0 %v5289
    %6561 = vmatmul.bf16.gmra.mxu0 %v6551
    %v6562 = vpop.f32.mrf.mxu0
    %v6563 = vadd.f32 0.0, %v6562
    %v6564 = vpop.f32.mrf.mxu0
    %v6565 = vadd.f32 0.0, %v6564
    %6566 = vdwg.mxu0
    %6567 = vmatpush.bf16.msra.mxu0 %v5318
    %6568 = vmatpush.bf16.msra.mxu0 %v5314
    %6569 = vmatpush.bf16.msra.mxu0 %v5310
    %6570 = vmatpush.bf16.msra.mxu0 %v5306
    %6571 = vmatpush.bf16.msra.mxu0 %v5302
    %6572 = vmatpush.bf16.msra.mxu0 %v5298
    %6573 = vmatpush.bf16.msra.mxu0 %v5294
    %6574 = vmatpush.bf16.msra.mxu0 %v5290
    %6575 = vmatmul.bf16.gmra.mxu0 %v6551
    %v6576 = vpop.f32.mrf.mxu0
    %v6577 = vadd.f32 0.0, %v6576
    %v6578 = vpop.f32.mrf.mxu0
    %v6579 = vadd.f32 0.0, %v6578
    %6580 = vdwg.mxu0
    %6581 = vmatpush.bf16.msra.mxu0 %v5319
    %6582 = vmatpush.bf16.msra.mxu0 %v5315
    %6583 = vmatpush.bf16.msra.mxu0 %v5311
    %6584 = vmatpush.bf16.msra.mxu0 %v5307
    %6585 = vmatpush.bf16.msra.mxu0 %v5303
    %6586 = vmatpush.bf16.msra.mxu0 %v5299
    %6587 = vmatpush.bf16.msra.mxu0 %v5295
    %6588 = vmatpush.bf16.msra.mxu0 %v5291
    %6589 = vmatmul.bf16.gmra.mxu0 %v6551
    %v6590 = vpop.f32.mrf.mxu0
    %v6591 = vadd.f32 0.0, %v6590
    %v6592 = vpop.f32.mrf.mxu0
    %v6593 = vadd.f32 0.0, %v6592
    %6594 = vdwg.mxu0
    %6595 = vmatpush.bf16.msra.mxu0 %v5320
    %6596 = vmatpush.bf16.msra.mxu0 %v5316
    %6597 = vmatpush.bf16.msra.mxu0 %v5312
    %6598 = vmatpush.bf16.msra.mxu0 %v5308
    %6599 = vmatpush.bf16.msra.mxu0 %v5304
    %6600 = vmatpush.bf16.msra.mxu0 %v5300
    %6601 = vmatpush.bf16.msra.mxu0 %v5296
    %6602 = vmatpush.bf16.msra.mxu0 %v5292
    %6603 = vmatmul.bf16.gmra.mxu0 %v6551
    %v6604 = vpop.f32.mrf.mxu0
    %v6605 = vadd.f32 0.0, %v6604
    %v6606 = vpop.f32.mrf.mxu0
    %v6607 = vadd.f32 0.0, %v6606
    %6608 = vdwg.mxu0
    %v6609 = vadd.f32 %v5115, %v6563
    %v6610 = vadd.f32 %v5129, %v6577
    %v6611 = vadd.f32 %v5143, %v6591
    %v6612 = vadd.f32 %v5157, %v6605
    %v6613 = vadd.f32 %v5117, %v6565
    %v6614 = vadd.f32 %v5131, %v6579
    %v6615 = vadd.f32 %v5145, %v6593
    %v6616 = vadd.f32 %v5159, %v6607
    %v6617 = vxor.u32 %v6609, 2147483648
    %v6618 = vxor.u32 %v6613, 2147483648
    %v6619 = vmul.f32 %v6617, 1.442695
    %v6620 = vpow.pop %v6619
    %v6621 = vmul.f32 %v6618, 1.442695
    %v6622 = vpow.pop %v6621
    %v6623 = vadd.f32 %v6620, 1.0
    %v6624 = vadd.f32 %v6622, 1.0
    %v6625 = vrcp.pop %v6623
    %v6626 = vmul.f32 %v6623, %v6625
    %v6627 = vsub.f32 1.0, %v6626
    %v6628 = vmul.f32 %v6625, %v6627
    %v6629 = vadd.f32 %v6625, %v6628
    %vm6630 = vweird.f32 %v6623
    %vm6631 = vweird.f32 %v6625
    %vm6632 = vmor %vm6630, %vm6631
    %v6633 = vsel %vm6632, %v6625, %v6629
    %v6634 = vand.u32 2147483647, %v6623
    %vm6635 = vcmp.eq.f32.partialorder %v6634, 8.507059e+37
    %v6636 = vand.u32 %v6623, 2147483648
    %v6637 = vor.u32 1.1754944e-38, %v6636
    %v6638 = vsel %vm6635, %v6637, %v6633
    %v6639 = vmul.f32 1.0, %v6638
    %v6640 = vrcp.pop %v6624
    %v6641 = vmul.f32 %v6624, %v6640
    %v6642 = vsub.f32 1.0, %v6641
    %v6643 = vmul.f32 %v6640, %v6642
    %v6644 = vadd.f32 %v6640, %v6643
    %vm6645 = vweird.f32 %v6624
    %vm6646 = vweird.f32 %v6640
    %vm6647 = vmor %vm6645, %vm6646
    %v6648 = vsel %vm6647, %v6640, %v6644
    %v6649 = vand.u32 2147483647, %v6624
    %vm6650 = vcmp.eq.f32.partialorder %v6649, 8.507059e+37
    %v6651 = vand.u32 %v6624, 2147483648
    %v6652 = vor.u32 1.1754944e-38, %v6651
    %v6653 = vsel %vm6650, %v6652, %v6648
    %v6654 = vmul.f32 1.0, %v6653
    %v6655 = vxor.u32 %v6610, 2147483648
    %v6656 = vxor.u32 %v6614, 2147483648
    %v6657 = vmul.f32 %v6655, 1.442695
    %v6658 = vpow.pop %v6657
    %v6659 = vmul.f32 %v6656, 1.442695
    %v6660 = vpow.pop %v6659
    %v6661 = vadd.f32 %v6658, 1.0
    %v6662 = vadd.f32 %v6660, 1.0
    %v6663 = vrcp.pop %v6661
    %v6664 = vmul.f32 %v6661, %v6663
    %v6665 = vsub.f32 1.0, %v6664
    %v6666 = vmul.f32 %v6663, %v6665
    %v6667 = vadd.f32 %v6663, %v6666
    %vm6668 = vweird.f32 %v6661
    %vm6669 = vweird.f32 %v6663
    %vm6670 = vmor %vm6668, %vm6669
    %v6671 = vsel %vm6670, %v6663, %v6667
    %v6672 = vand.u32 2147483647, %v6661
    %vm6673 = vcmp.eq.f32.partialorder %v6672, 8.507059e+37
    %v6674 = vand.u32 %v6661, 2147483648
    %v6675 = vor.u32 1.1754944e-38, %v6674
    %v6676 = vsel %vm6673, %v6675, %v6671
    %v6677 = vmul.f32 1.0, %v6676
    %v6678 = vrcp.pop %v6662
    %v6679 = vmul.f32 %v6662, %v6678
    %v6680 = vsub.f32 1.0, %v6679
    %v6681 = vmul.f32 %v6678, %v6680
    %v6682 = vadd.f32 %v6678, %v6681
    %vm6683 = vweird.f32 %v6662
    %vm6684 = vweird.f32 %v6678
    %vm6685 = vmor %vm6683, %vm6684
    %v6686 = vsel %vm6685, %v6678, %v6682
    %v6687 = vand.u32 2147483647, %v6662
    %vm6688 = vcmp.eq.f32.partialorder %v6687, 8.507059e+37
    %v6689 = vand.u32 %v6662, 2147483648
    %v6690 = vor.u32 1.1754944e-38, %v6689
    %v6691 = vsel %vm6688, %v6690, %v6686
    %v6692 = vmul.f32 1.0, %v6691
    %v6693 = vtanh.pop %v6611
    %v6694 = vtanh.pop %v6615
    %v6695 = vxor.u32 %v6612, 2147483648
    %v6696 = vxor.u32 %v6616, 2147483648
    %v6697 = vmul.f32 %v6695, 1.442695
    %v6698 = vpow.pop %v6697
    %v6699 = vmul.f32 %v6696, 1.442695
    %v6700 = vpow.pop %v6699
    %v6701 = vadd.f32 %v6698, 1.0
    %v6702 = vadd.f32 %v6700, 1.0
    %v6703 = vrcp.pop %v6701
    %v6704 = vmul.f32 %v6701, %v6703
    %v6705 = vsub.f32 1.0, %v6704
    %v6706 = vmul.f32 %v6703, %v6705
    %v6707 = vadd.f32 %v6703, %v6706
    %vm6708 = vweird.f32 %v6701
    %vm6709 = vweird.f32 %v6703
    %vm6710 = vmor %vm6708, %vm6709
    %v6711 = vsel %vm6710, %v6703, %v6707
    %v6712 = vand.u32 2147483647, %v6701
    %vm6713 = vcmp.eq.f32.partialorder %v6712, 8.507059e+37
    %v6714 = vand.u32 %v6701, 2147483648
    %v6715 = vor.u32 1.1754944e-38, %v6714
    %v6716 = vsel %vm6713, %v6715, %v6711
    %v6717 = vmul.f32 1.0, %v6716
    %v6718 = vrcp.pop %v6702
    %v6719 = vmul.f32 %v6702, %v6718
    %v6720 = vsub.f32 1.0, %v6719
    %v6721 = vmul.f32 %v6718, %v6720
    %v6722 = vadd.f32 %v6718, %v6721
    %vm6723 = vweird.f32 %v6702
    %vm6724 = vweird.f32 %v6718
    %vm6725 = vmor %vm6723, %vm6724
    %v6726 = vsel %vm6725, %v6718, %v6722
    %v6727 = vand.u32 2147483647, %v6702
    %vm6728 = vcmp.eq.f32.partialorder %v6727, 8.507059e+37
    %v6729 = vand.u32 %v6702, 2147483648
    %v6730 = vor.u32 1.1754944e-38, %v6729
    %v6731 = vsel %vm6728, %v6730, %v6726
    %v6732 = vmul.f32 1.0, %v6731
    %v6733 = vmul.f32 %v6677, %v6537
    %v6734 = vmul.f32 %v6692, %v6538
    %v6735 = vmul.f32 %v6639, %v6693
    %v6736 = vmul.f32 %v6654, %v6694
    %v6737 = vadd.f32 %v6733, %v6735
    %v6738 = vadd.f32 %v6734, %v6736
    %v6739 = vtanh.pop %v6737
    %v6740 = vtanh.pop %v6738
    %v6741 = vmul.f32 %v6717, %v6739
    %v6742 = vmul.f32 %v6732, %v6740
    %v6743 = vpack.c.bf16 %v6741, %v6741
    %v6744 = vpack.c.bf16 %v6742, %v6742
    %6745 = vst [vmem:[%s2294] sm:$0xf] %v6743
    %6746 = vst [vmem:[%s2294 + $0x4] sm:$0xf] %v6744
    %v6749 = vunpack.c.l.b16 %v6743
    %v6750 = vunpack.c.l.b16 %v6744
    %v6751 = vpack.c.b16 %v6750, %v6749
    %6753 = vmatpush.bf16.msra.mxu0 %v5317
    %6754 = vmatpush.bf16.msra.mxu0 %v5313
    %6755 = vmatpush.bf16.msra.mxu0 %v5309
    %6756 = vmatpush.bf16.msra.mxu0 %v5305
    %6757 = vmatpush.bf16.msra.mxu0 %v5301
    %6758 = vmatpush.bf16.msra.mxu0 %v5297
    %6759 = vmatpush.bf16.msra.mxu0 %v5293
    %6760 = vmatpush.bf16.msra.mxu0 %v5289
    %6761 = vmatmul.bf16.gmra.mxu0 %v6751
    %v6762 = vpop.f32.mrf.mxu0
    %v6763 = vadd.f32 0.0, %v6762
    %v6764 = vpop.f32.mrf.mxu0
    %v6765 = vadd.f32 0.0, %v6764
    %6766 = vdwg.mxu0
    %6767 = vmatpush.bf16.msra.mxu0 %v5318
    %6768 = vmatpush.bf16.msra.mxu0 %v5314
    %6769 = vmatpush.bf16.msra.mxu0 %v5310
    %6770 = vmatpush.bf16.msra.mxu0 %v5306
    %6771 = vmatpush.bf16.msra.mxu0 %v5302
    %6772 = vmatpush.bf16.msra.mxu0 %v5298
    %6773 = vmatpush.bf16.msra.mxu0 %v5294
    %6774 = vmatpush.bf16.msra.mxu0 %v5290
    %6775 = vmatmul.bf16.gmra.mxu0 %v6751
    %v6776 = vpop.f32.mrf.mxu0
    %v6777 = vadd.f32 0.0, %v6776
    %v6778 = vpop.f32.mrf.mxu0
    %v6779 = vadd.f32 0.0, %v6778
    %6780 = vdwg.mxu0
    %6781 = vmatpush.bf16.msra.mxu0 %v5319
    %6782 = vmatpush.bf16.msra.mxu0 %v5315
    %6783 = vmatpush.bf16.msra.mxu0 %v5311
    %6784 = vmatpush.bf16.msra.mxu0 %v5307
    %6785 = vmatpush.bf16.msra.mxu0 %v5303
    %6786 = vmatpush.bf16.msra.mxu0 %v5299
    %6787 = vmatpush.bf16.msra.mxu0 %v5295
    %6788 = vmatpush.bf16.msra.mxu0 %v5291
    %6789 = vmatmul.bf16.gmra.mxu0 %v6751
    %v6790 = vpop.f32.mrf.mxu0
    %v6791 = vadd.f32 0.0, %v6790
    %v6792 = vpop.f32.mrf.mxu0
    %v6793 = vadd.f32 0.0, %v6792
    %6794 = vdwg.mxu0
    %6795 = vmatpush.bf16.msra.mxu0 %v5320
    %6796 = vmatpush.bf16.msra.mxu0 %v5316
    %6797 = vmatpush.bf16.msra.mxu0 %v5312
    %6798 = vmatpush.bf16.msra.mxu0 %v5308
    %6799 = vmatpush.bf16.msra.mxu0 %v5304
    %6800 = vmatpush.bf16.msra.mxu0 %v5300
    %6801 = vmatpush.bf16.msra.mxu0 %v5296
    %6802 = vmatpush.bf16.msra.mxu0 %v5292
    %6803 = vmatmul.bf16.gmra.mxu0 %v6751
    %v6804 = vpop.f32.mrf.mxu0
    %v6805 = vadd.f32 0.0, %v6804
    %v6806 = vpop.f32.mrf.mxu0
    %v6807 = vadd.f32 0.0, %v6806
    %6808 = vdwg.mxu0
    %v6809 = vadd.f32 %v5115, %v6763
    %v6810 = vadd.f32 %v5129, %v6777
    %v6811 = vadd.f32 %v5143, %v6791
    %v6812 = vadd.f32 %v5157, %v6805
    %v6813 = vadd.f32 %v5117, %v6765
    %v6814 = vadd.f32 %v5131, %v6779
    %v6815 = vadd.f32 %v5145, %v6793
    %v6816 = vadd.f32 %v5159, %v6807
    %v6817 = vxor.u32 %v6809, 2147483648
    %v6818 = vxor.u32 %v6813, 2147483648
    %v6819 = vmul.f32 %v6817, 1.442695
    %v6820 = vpow.pop %v6819
    %v6821 = vmul.f32 %v6818, 1.442695
    %v6822 = vpow.pop %v6821
    %v6823 = vadd.f32 %v6820, 1.0
    %v6824 = vadd.f32 %v6822, 1.0
    %v6825 = vrcp.pop %v6823
    %v6826 = vmul.f32 %v6823, %v6825
    %v6827 = vsub.f32 1.0, %v6826
    %v6828 = vmul.f32 %v6825, %v6827
    %v6829 = vadd.f32 %v6825, %v6828
    %vm6830 = vweird.f32 %v6823
    %vm6831 = vweird.f32 %v6825
    %vm6832 = vmor %vm6830, %vm6831
    %v6833 = vsel %vm6832, %v6825, %v6829
    %v6834 = vand.u32 2147483647, %v6823
    %vm6835 = vcmp.eq.f32.partialorder %v6834, 8.507059e+37
    %v6836 = vand.u32 %v6823, 2147483648
    %v6837 = vor.u32 1.1754944e-38, %v6836
    %v6838 = vsel %vm6835, %v6837, %v6833
    %v6839 = vmul.f32 1.0, %v6838
    %v6840 = vrcp.pop %v6824
    %v6841 = vmul.f32 %v6824, %v6840
    %v6842 = vsub.f32 1.0, %v6841
    %v6843 = vmul.f32 %v6840, %v6842
    %v6844 = vadd.f32 %v6840, %v6843
    %vm6845 = vweird.f32 %v6824
    %vm6846 = vweird.f32 %v6840
    %vm6847 = vmor %vm6845, %vm6846
    %v6848 = vsel %vm6847, %v6840, %v6844
    %v6849 = vand.u32 2147483647, %v6824
    %vm6850 = vcmp.eq.f32.partialorder %v6849, 8.507059e+37
    %v6851 = vand.u32 %v6824, 2147483648
    %v6852 = vor.u32 1.1754944e-38, %v6851
    %v6853 = vsel %vm6850, %v6852, %v6848
    %v6854 = vmul.f32 1.0, %v6853
    %v6855 = vxor.u32 %v6810, 2147483648
    %v6856 = vxor.u32 %v6814, 2147483648
    %v6857 = vmul.f32 %v6855, 1.442695
    %v6858 = vpow.pop %v6857
    %v6859 = vmul.f32 %v6856, 1.442695
    %v6860 = vpow.pop %v6859
    %v6861 = vadd.f32 %v6858, 1.0
    %v6862 = vadd.f32 %v6860, 1.0
    %v6863 = vrcp.pop %v6861
    %v6864 = vmul.f32 %v6861, %v6863
    %v6865 = vsub.f32 1.0, %v6864
    %v6866 = vmul.f32 %v6863, %v6865
    %v6867 = vadd.f32 %v6863, %v6866
    %vm6868 = vweird.f32 %v6861
    %vm6869 = vweird.f32 %v6863
    %vm6870 = vmor %vm6868, %vm6869
    %v6871 = vsel %vm6870, %v6863, %v6867
    %v6872 = vand.u32 2147483647, %v6861
    %vm6873 = vcmp.eq.f32.partialorder %v6872, 8.507059e+37
    %v6874 = vand.u32 %v6861, 2147483648
    %v6875 = vor.u32 1.1754944e-38, %v6874
    %v6876 = vsel %vm6873, %v6875, %v6871
    %v6877 = vmul.f32 1.0, %v6876
    %v6878 = vrcp.pop %v6862
    %v6879 = vmul.f32 %v6862, %v6878
    %v6880 = vsub.f32 1.0, %v6879
    %v6881 = vmul.f32 %v6878, %v6880
    %v6882 = vadd.f32 %v6878, %v6881
    %vm6883 = vweird.f32 %v6862
    %vm6884 = vweird.f32 %v6878
    %vm6885 = vmor %vm6883, %vm6884
    %v6886 = vsel %vm6885, %v6878, %v6882
    %v6887 = vand.u32 2147483647, %v6862
    %vm6888 = vcmp.eq.f32.partialorder %v6887, 8.507059e+37
    %v6889 = vand.u32 %v6862, 2147483648
    %v6890 = vor.u32 1.1754944e-38, %v6889
    %v6891 = vsel %vm6888, %v6890, %v6886
    %v6892 = vmul.f32 1.0, %v6891
    %v6893 = vtanh.pop %v6811
    %v6894 = vtanh.pop %v6815
    %v6895 = vxor.u32 %v6812, 2147483648
    %v6896 = vxor.u32 %v6816, 2147483648
    %v6897 = vmul.f32 %v6895, 1.442695
    %v6898 = vpow.pop %v6897
    %v6899 = vmul.f32 %v6896, 1.442695
    %v6900 = vpow.pop %v6899
    %v6901 = vadd.f32 %v6898, 1.0
    %v6902 = vadd.f32 %v6900, 1.0
    %v6903 = vrcp.pop %v6901
    %v6904 = vmul.f32 %v6901, %v6903
    %v6905 = vsub.f32 1.0, %v6904
    %v6906 = vmul.f32 %v6903, %v6905
    %v6907 = vadd.f32 %v6903, %v6906
    %vm6908 = vweird.f32 %v6901
    %vm6909 = vweird.f32 %v6903
    %vm6910 = vmor %vm6908, %vm6909
    %v6911 = vsel %vm6910, %v6903, %v6907
    %v6912 = vand.u32 2147483647, %v6901
    %vm6913 = vcmp.eq.f32.partialorder %v6912, 8.507059e+37
    %v6914 = vand.u32 %v6901, 2147483648
    %v6915 = vor.u32 1.1754944e-38, %v6914
    %v6916 = vsel %vm6913, %v6915, %v6911
    %v6917 = vmul.f32 1.0, %v6916
    %v6918 = vrcp.pop %v6902
    %v6919 = vmul.f32 %v6902, %v6918
    %v6920 = vsub.f32 1.0, %v6919
    %v6921 = vmul.f32 %v6918, %v6920
    %v6922 = vadd.f32 %v6918, %v6921
    %vm6923 = vweird.f32 %v6902
    %vm6924 = vweird.f32 %v6918
    %vm6925 = vmor %vm6923, %vm6924
    %v6926 = vsel %vm6925, %v6918, %v6922
    %v6927 = vand.u32 2147483647, %v6902
    %vm6928 = vcmp.eq.f32.partialorder %v6927, 8.507059e+37
    %v6929 = vand.u32 %v6902, 2147483648
    %v6930 = vor.u32 1.1754944e-38, %v6929
    %v6931 = vsel %vm6928, %v6930, %v6926
    %v6932 = vmul.f32 1.0, %v6931
    %v6933 = vmul.f32 %v6877, %v6737
    %v6934 = vmul.f32 %v6892, %v6738
    %v6935 = vmul.f32 %v6839, %v6893
    %v6936 = vmul.f32 %v6854, %v6894
    %v6937 = vadd.f32 %v6933, %v6935
    %v6938 = vadd.f32 %v6934, %v6936
    %v6939 = vtanh.pop %v6937
    %v6940 = vtanh.pop %v6938
    %v6941 = vmul.f32 %v6917, %v6939
    %v6942 = vmul.f32 %v6932, %v6940
    %v6943 = vpack.c.bf16 %v6941, %v6941
    %v6944 = vpack.c.bf16 %v6942, %v6942
    %6945 = vst [vmem:[%s2504] sm:$0xf] %v6943
    %6946 = vst [vmem:[%s2504 + $0x4] sm:$0xf] %v6944
    %s6947 = scalar_lea.vmem [#allocation8], 256
    %v6948 = vld [vmem:[%s6947] sm:$0xff]
    %v6949 = vld [vmem:[%s6947 + $0x8] sm:$0xff]
    %v6950 = vld [vmem:[%s6947 + $0x10] sm:$0xff]
    %v6951 = vld [vmem:[%s6947 + $0x18] sm:$0xff]
    %v6952 = vld [vmem:[%s6947 + $0x20] sm:$0xff]
    %v6953 = vld [vmem:[%s6947 + $0x28] sm:$0xff]
    %v6954 = vld [vmem:[%s6947 + $0x30] sm:$0xff]
    %v6955 = vld [vmem:[%s6947 + $0x38] sm:$0xff]
    %v6956 = vld [vmem:[%s6947 + $0x40] sm:$0xff]
    %v6957 = vld [vmem:[%s6947 + $0x48] sm:$0xff]
    %v6958 = vld [vmem:[%s6947 + $0x50] sm:$0xff]
    %v6959 = vld [vmem:[%s6947 + $0x58] sm:$0xff]
    %v6960 = vld [vmem:[%s6947 + $0x60] sm:$0xff]
    %v6961 = vld [vmem:[%s6947 + $0x68] sm:$0xff]
    %v6962 = vld [vmem:[%s6947 + $0x70] sm:$0xff]
    %v6963 = vld [vmem:[%s6947 + $0x78] sm:$0xff]
    %v6964 = vld [vmem:[%s6947 + $0x80] sm:$0xff]
    %v6965 = vld [vmem:[%s6947 + $0x88] sm:$0xff]
    %v6966 = vld [vmem:[%s6947 + $0x90] sm:$0xff]
    %v6967 = vld [vmem:[%s6947 + $0x98] sm:$0xff]
    %v6968 = vld [vmem:[%s6947 + $0xa0] sm:$0xff]
    %v6969 = vld [vmem:[%s6947 + $0xa8] sm:$0xff]
    %v6970 = vld [vmem:[%s6947 + $0xb0] sm:$0xff]
    %v6971 = vld [vmem:[%s6947 + $0xb8] sm:$0xff]
    %v6972 = vld [vmem:[%s6947 + $0xc0] sm:$0xff]
    %v6973 = vld [vmem:[%s6947 + $0xc8] sm:$0xff]
    %v6974 = vld [vmem:[%s6947 + $0xd0] sm:$0xff]
    %v6975 = vld [vmem:[%s6947 + $0xd8] sm:$0xff]
    %v6976 = vld [vmem:[%s6947 + $0xe0] sm:$0xff]
    %v6977 = vld [vmem:[%s6947 + $0xe8] sm:$0xff]
    %v6978 = vld [vmem:[%s6947 + $0xf0] sm:$0xff]
    %v6979 = vld [vmem:[%s6947 + $0xf8] sm:$0xff]
    %s6980 = scalar_lea.vmem %s6, 4
    %v6981 = vld [vmem:[%s6980] sm:$0xf]
    %v6982 = vld [vmem:[#allocation2] sm:$0xf]
    %v6983 = vld [vmem:[#allocation2 + $0x4] sm:$0xf]
    %v6984 = vld [vmem:[#allocation2 + $0x8] sm:$0xf]
    %v6985 = vld [vmem:[#allocation2 + $0xc] sm:$0xf]
    %v6986 = vld [vmem:[#allocation2 + $0x10] sm:$0xf]
    %v6987 = vld [vmem:[#allocation2 + $0x14] sm:$0xf]
    %v6988 = vld [vmem:[#allocation2 + $0x18] sm:$0xf]
    %v6989 = vld [vmem:[#allocation2 + $0x1c] sm:$0xf]
    %v6990 = vld [vmem:[#allocation2 + $0x20] sm:$0xf]
    %v6991 = vld [vmem:[#allocation2 + $0x24] sm:$0xf]
    %v6992 = vld [vmem:[#allocation2 + $0x28] sm:$0xf]
    %v6993 = vld [vmem:[#allocation2 + $0x2c] sm:$0xf]
    %v6994 = vld [vmem:[#allocation2 + $0x30] sm:$0xf]
    %v6995 = vld [vmem:[#allocation2 + $0x34] sm:$0xf]
    %v6996 = vld [vmem:[#allocation2 + $0x38] sm:$0xf]
    %v6997 = vld [vmem:[#allocation2 + $0x3c] sm:$0xf]
    %v6999 = vperm.slane %v6981, 0
    %v7000 = vperm.slane %v6981, 1
    %v7001 = vperm.slane %v6981, 2
    %v7002 = vperm.slane %v6981, 3
    %v7023 = vunpack.c.l.b16 %v6982
    %v7024 = vunpack.c.l.b16 %v6983
    %v7025 = vunpack.c.l.b16 %v6984
    %v7026 = vunpack.c.l.b16 %v6985
    %v7027 = vunpack.c.l.b16 %v6986
    %v7028 = vunpack.c.l.b16 %v6987
    %v7029 = vunpack.c.l.b16 %v6988
    %v7030 = vunpack.c.l.b16 %v6989
    %v7031 = vunpack.c.l.b16 %v6990
    %v7032 = vunpack.c.l.b16 %v6991
    %v7033 = vunpack.c.l.b16 %v6992
    %v7034 = vunpack.c.l.b16 %v6993
    %v7035 = vunpack.c.l.b16 %v6994
    %v7036 = vunpack.c.l.b16 %v6995
    %v7037 = vunpack.c.l.b16 %v6996
    %v7038 = vunpack.c.l.b16 %v6997
    %v7039 = vpack.c.b16 %v7024, %v7023
    %v7040 = vpack.c.b16 %v7026, %v7025
    %v7041 = vpack.c.b16 %v7028, %v7027
    %v7042 = vpack.c.b16 %v7030, %v7029
    %v7043 = vpack.c.b16 %v7032, %v7031
    %v7044 = vpack.c.b16 %v7034, %v7033
    %v7045 = vpack.c.b16 %v7036, %v7035
    %v7046 = vpack.c.b16 %v7038, %v7037
    %v7087 = vunpack.c.l.b16 %v6948
    %v7088 = vunpack.c.h.b16 %v6948
    %v7089 = vunpack.c.l.b16 %v6949
    %v7090 = vunpack.c.h.b16 %v6949
    %v7091 = vunpack.c.l.b16 %v6950
    %v7092 = vunpack.c.h.b16 %v6950
    %v7093 = vunpack.c.l.b16 %v6951
    %v7094 = vunpack.c.h.b16 %v6951
    %v7095 = vunpack.c.l.b16 %v6952
    %v7096 = vunpack.c.h.b16 %v6952
    %v7097 = vunpack.c.l.b16 %v6953
    %v7098 = vunpack.c.h.b16 %v6953
    %v7099 = vunpack.c.l.b16 %v6954
    %v7100 = vunpack.c.h.b16 %v6954
    %v7101 = vunpack.c.l.b16 %v6955
    %v7102 = vunpack.c.h.b16 %v6955
    %v7103 = vunpack.c.l.b16 %v6956
    %v7104 = vunpack.c.h.b16 %v6956
    %v7105 = vunpack.c.l.b16 %v6957
    %v7106 = vunpack.c.h.b16 %v6957
    %v7107 = vunpack.c.l.b16 %v6958
    %v7108 = vunpack.c.h.b16 %v6958
    %v7109 = vunpack.c.l.b16 %v6959
    %v7110 = vunpack.c.h.b16 %v6959
    %v7111 = vunpack.c.l.b16 %v6960
    %v7112 = vunpack.c.h.b16 %v6960
    %v7113 = vunpack.c.l.b16 %v6961
    %v7114 = vunpack.c.h.b16 %v6961
    %v7115 = vunpack.c.l.b16 %v6962
    %v7116 = vunpack.c.h.b16 %v6962
    %v7117 = vunpack.c.l.b16 %v6963
    %v7118 = vunpack.c.h.b16 %v6963
    %v7119 = vunpack.c.l.b16 %v6964
    %v7120 = vunpack.c.h.b16 %v6964
    %v7121 = vunpack.c.l.b16 %v6965
    %v7122 = vunpack.c.h.b16 %v6965
    %v7123 = vunpack.c.l.b16 %v6966
    %v7124 = vunpack.c.h.b16 %v6966
    %v7125 = vunpack.c.l.b16 %v6967
    %v7126 = vunpack.c.h.b16 %v6967
    %v7127 = vunpack.c.l.b16 %v6968
    %v7128 = vunpack.c.h.b16 %v6968
    %v7129 = vunpack.c.l.b16 %v6969
    %v7130 = vunpack.c.h.b16 %v6969
    %v7131 = vunpack.c.l.b16 %v6970
    %v7132 = vunpack.c.h.b16 %v6970
    %v7133 = vunpack.c.l.b16 %v6971
    %v7134 = vunpack.c.h.b16 %v6971
    %v7135 = vunpack.c.l.b16 %v6972
    %v7136 = vunpack.c.h.b16 %v6972
    %v7137 = vunpack.c.l.b16 %v6973
    %v7138 = vunpack.c.h.b16 %v6973
    %v7139 = vunpack.c.l.b16 %v6974
    %v7140 = vunpack.c.h.b16 %v6974
    %v7141 = vunpack.c.l.b16 %v6975
    %v7142 = vunpack.c.h.b16 %v6975
    %v7143 = vunpack.c.l.b16 %v6976
    %v7144 = vunpack.c.h.b16 %v6976
    %v7145 = vunpack.c.l.b16 %v6977
    %v7146 = vunpack.c.h.b16 %v6977
    %v7147 = vunpack.c.l.b16 %v6978
    %v7148 = vunpack.c.h.b16 %v6978
    %v7149 = vunpack.c.l.b16 %v6979
    %v7150 = vunpack.c.h.b16 %v6979
    %v7151 = vpack.c.b16 %v7091, %v7087
    %v7152 = vpack.c.b16 %v7092, %v7088
    %v7153 = vpack.c.b16 %v7093, %v7089
    %v7154 = vpack.c.b16 %v7094, %v7090
    %v7155 = vpack.c.b16 %v7099, %v7095
    %v7156 = vpack.c.b16 %v7100, %v7096
    %v7157 = vpack.c.b16 %v7101, %v7097
    %v7158 = vpack.c.b16 %v7102, %v7098
    %v7159 = vpack.c.b16 %v7107, %v7103
    %v7160 = vpack.c.b16 %v7108, %v7104
    %v7161 = vpack.c.b16 %v7109, %v7105
    %v7162 = vpack.c.b16 %v7110, %v7106
    %v7163 = vpack.c.b16 %v7115, %v7111
    %v7164 = vpack.c.b16 %v7116, %v7112
    %v7165 = vpack.c.b16 %v7117, %v7113
    %v7166 = vpack.c.b16 %v7118, %v7114
    %v7167 = vpack.c.b16 %v7123, %v7119
    %v7168 = vpack.c.b16 %v7124, %v7120
    %v7169 = vpack.c.b16 %v7125, %v7121
    %v7170 = vpack.c.b16 %v7126, %v7122
    %v7171 = vpack.c.b16 %v7131, %v7127
    %v7172 = vpack.c.b16 %v7132, %v7128
    %v7173 = vpack.c.b16 %v7133, %v7129
    %v7174 = vpack.c.b16 %v7134, %v7130
    %v7175 = vpack.c.b16 %v7139, %v7135
    %v7176 = vpack.c.b16 %v7140, %v7136
    %v7177 = vpack.c.b16 %v7141, %v7137
    %v7178 = vpack.c.b16 %v7142, %v7138
    %v7179 = vpack.c.b16 %v7147, %v7143
    %v7180 = vpack.c.b16 %v7148, %v7144
    %v7181 = vpack.c.b16 %v7149, %v7145
    %v7182 = vpack.c.b16 %v7150, %v7146
    %7215 = vmatpush.bf16.msra.mxu0 %v7179
    %7216 = vmatpush.bf16.msra.mxu0 %v7175
    %7217 = vmatpush.bf16.msra.mxu0 %v7171
    %7218 = vmatpush.bf16.msra.mxu0 %v7167
    %7219 = vmatpush.bf16.msra.mxu0 %v7163
    %7220 = vmatpush.bf16.msra.mxu0 %v7159
    %7221 = vmatpush.bf16.msra.mxu0 %v7155
    %7222 = vmatpush.bf16.msra.mxu0 %v7151
    %7223 = vmatmul.bf16.gmra.mxu0 %v7039
    %v7224 = vpop.f32.mrf.mxu0
    %v7225 = vadd.f32 %v6999, %v7224
    %v7226 = vpop.f32.mrf.mxu0
    %v7227 = vadd.f32 %v6999, %v7226
    %7228 = vmatmul.bf16.gmra.mxu0 %v7040
    %v7229 = vpop.f32.mrf.mxu0
    %v7230 = vadd.f32 %v6999, %v7229
    %v7231 = vpop.f32.mrf.mxu0
    %v7232 = vadd.f32 %v6999, %v7231
    %7233 = vmatmul.bf16.gmra.mxu0 %v7041
    %v7234 = vpop.f32.mrf.mxu0
    %v7235 = vadd.f32 %v6999, %v7234
    %v7236 = vpop.f32.mrf.mxu0
    %v7237 = vadd.f32 %v6999, %v7236
    %7238 = vmatmul.bf16.gmra.mxu0 %v7042
    %v7239 = vpop.f32.mrf.mxu0
    %v7240 = vadd.f32 %v6999, %v7239
    %v7241 = vpop.f32.mrf.mxu0
    %v7242 = vadd.f32 %v6999, %v7241
    %7243 = vmatmul.bf16.gmra.mxu0 %v7043
    %v7244 = vpop.f32.mrf.mxu0
    %v7245 = vadd.f32 %v6999, %v7244
    %v7246 = vpop.f32.mrf.mxu0
    %v7247 = vadd.f32 %v6999, %v7246
    %7248 = vmatmul.bf16.gmra.mxu0 %v7044
    %v7249 = vpop.f32.mrf.mxu0
    %v7250 = vadd.f32 %v6999, %v7249
    %v7251 = vpop.f32.mrf.mxu0
    %v7252 = vadd.f32 %v6999, %v7251
    %7253 = vmatmul.bf16.gmra.mxu0 %v7045
    %v7254 = vpop.f32.mrf.mxu0
    %v7255 = vadd.f32 %v6999, %v7254
    %v7256 = vpop.f32.mrf.mxu0
    %v7257 = vadd.f32 %v6999, %v7256
    %7258 = vmatmul.bf16.gmra.mxu0 %v7046
    %v7259 = vpop.f32.mrf.mxu0
    %v7260 = vadd.f32 %v6999, %v7259
    %v7261 = vpop.f32.mrf.mxu0
    %v7262 = vadd.f32 %v6999, %v7261
    %7263 = vdwg.mxu0
    %7264 = vmatpush.bf16.msra.mxu0 %v7180
    %7265 = vmatpush.bf16.msra.mxu0 %v7176
    %7266 = vmatpush.bf16.msra.mxu0 %v7172
    %7267 = vmatpush.bf16.msra.mxu0 %v7168
    %7268 = vmatpush.bf16.msra.mxu0 %v7164
    %7269 = vmatpush.bf16.msra.mxu0 %v7160
    %7270 = vmatpush.bf16.msra.mxu0 %v7156
    %7271 = vmatpush.bf16.msra.mxu0 %v7152
    %7272 = vmatmul.bf16.gmra.mxu0 %v7039
    %v7273 = vpop.f32.mrf.mxu0
    %v7274 = vadd.f32 %v7000, %v7273
    %v7275 = vpop.f32.mrf.mxu0
    %v7276 = vadd.f32 %v7000, %v7275
    %7277 = vmatmul.bf16.gmra.mxu0 %v7040
    %v7278 = vpop.f32.mrf.mxu0
    %v7279 = vadd.f32 %v7000, %v7278
    %v7280 = vpop.f32.mrf.mxu0
    %v7281 = vadd.f32 %v7000, %v7280
    %7282 = vmatmul.bf16.gmra.mxu0 %v7041
    %v7283 = vpop.f32.mrf.mxu0
    %v7284 = vadd.f32 %v7000, %v7283
    %v7285 = vpop.f32.mrf.mxu0
    %v7286 = vadd.f32 %v7000, %v7285
    %7287 = vmatmul.bf16.gmra.mxu0 %v7042
    %v7288 = vpop.f32.mrf.mxu0
    %v7289 = vadd.f32 %v7000, %v7288
    %v7290 = vpop.f32.mrf.mxu0
    %v7291 = vadd.f32 %v7000, %v7290
    %7292 = vmatmul.bf16.gmra.mxu0 %v7043
    %v7293 = vpop.f32.mrf.mxu0
    %v7294 = vadd.f32 %v7000, %v7293
    %v7295 = vpop.f32.mrf.mxu0
    %v7296 = vadd.f32 %v7000, %v7295
    %7297 = vmatmul.bf16.gmra.mxu0 %v7044
    %v7298 = vpop.f32.mrf.mxu0
    %v7299 = vadd.f32 %v7000, %v7298
    %v7300 = vpop.f32.mrf.mxu0
    %v7301 = vadd.f32 %v7000, %v7300
    %7302 = vmatmul.bf16.gmra.mxu0 %v7045
    %v7303 = vpop.f32.mrf.mxu0
    %v7304 = vadd.f32 %v7000, %v7303
    %v7305 = vpop.f32.mrf.mxu0
    %v7306 = vadd.f32 %v7000, %v7305
    %7307 = vmatmul.bf16.gmra.mxu0 %v7046
    %v7308 = vpop.f32.mrf.mxu0
    %v7309 = vadd.f32 %v7000, %v7308
    %v7310 = vpop.f32.mrf.mxu0
    %v7311 = vadd.f32 %v7000, %v7310
    %7312 = vdwg.mxu0
    %7313 = vmatpush.bf16.msra.mxu0 %v7181
    %7314 = vmatpush.bf16.msra.mxu0 %v7177
    %7315 = vmatpush.bf16.msra.mxu0 %v7173
    %7316 = vmatpush.bf16.msra.mxu0 %v7169
    %7317 = vmatpush.bf16.msra.mxu0 %v7165
    %7318 = vmatpush.bf16.msra.mxu0 %v7161
    %7319 = vmatpush.bf16.msra.mxu0 %v7157
    %7320 = vmatpush.bf16.msra.mxu0 %v7153
    %7321 = vmatmul.bf16.gmra.mxu0 %v7039
    %v7322 = vpop.f32.mrf.mxu0
    %v7323 = vadd.f32 %v7001, %v7322
    %v7324 = vpop.f32.mrf.mxu0
    %v7325 = vadd.f32 %v7001, %v7324
    %7326 = vmatmul.bf16.gmra.mxu0 %v7040
    %v7327 = vpop.f32.mrf.mxu0
    %v7328 = vadd.f32 %v7001, %v7327
    %v7329 = vpop.f32.mrf.mxu0
    %v7330 = vadd.f32 %v7001, %v7329
    %7331 = vmatmul.bf16.gmra.mxu0 %v7041
    %v7332 = vpop.f32.mrf.mxu0
    %v7333 = vadd.f32 %v7001, %v7332
    %v7334 = vpop.f32.mrf.mxu0
    %v7335 = vadd.f32 %v7001, %v7334
    %7336 = vmatmul.bf16.gmra.mxu0 %v7042
    %v7337 = vpop.f32.mrf.mxu0
    %v7338 = vadd.f32 %v7001, %v7337
    %v7339 = vpop.f32.mrf.mxu0
    %v7340 = vadd.f32 %v7001, %v7339
    %7341 = vmatmul.bf16.gmra.mxu0 %v7043
    %v7342 = vpop.f32.mrf.mxu0
    %v7343 = vadd.f32 %v7001, %v7342
    %v7344 = vpop.f32.mrf.mxu0
    %v7345 = vadd.f32 %v7001, %v7344
    %7346 = vmatmul.bf16.gmra.mxu0 %v7044
    %v7347 = vpop.f32.mrf.mxu0
    %v7348 = vadd.f32 %v7001, %v7347
    %v7349 = vpop.f32.mrf.mxu0
    %v7350 = vadd.f32 %v7001, %v7349
    %7351 = vmatmul.bf16.gmra.mxu0 %v7045
    %v7352 = vpop.f32.mrf.mxu0
    %v7353 = vadd.f32 %v7001, %v7352
    %v7354 = vpop.f32.mrf.mxu0
    %v7355 = vadd.f32 %v7001, %v7354
    %7356 = vmatmul.bf16.gmra.mxu0 %v7046
    %v7357 = vpop.f32.mrf.mxu0
    %v7358 = vadd.f32 %v7001, %v7357
    %v7359 = vpop.f32.mrf.mxu0
    %v7360 = vadd.f32 %v7001, %v7359
    %7361 = vdwg.mxu0
    %7362 = vmatpush.bf16.msra.mxu0 %v7182
    %7363 = vmatpush.bf16.msra.mxu0 %v7178
    %7364 = vmatpush.bf16.msra.mxu0 %v7174
    %7365 = vmatpush.bf16.msra.mxu0 %v7170
    %7366 = vmatpush.bf16.msra.mxu0 %v7166
    %7367 = vmatpush.bf16.msra.mxu0 %v7162
    %7368 = vmatpush.bf16.msra.mxu0 %v7158
    %7369 = vmatpush.bf16.msra.mxu0 %v7154
    %7370 = vmatmul.bf16.gmra.mxu0 %v7039
    %v7371 = vpop.f32.mrf.mxu0
    %v7372 = vadd.f32 %v7002, %v7371
    %v7373 = vpop.f32.mrf.mxu0
    %v7374 = vadd.f32 %v7002, %v7373
    %7375 = vmatmul.bf16.gmra.mxu0 %v7040
    %v7376 = vpop.f32.mrf.mxu0
    %v7377 = vadd.f32 %v7002, %v7376
    %v7378 = vpop.f32.mrf.mxu0
    %v7379 = vadd.f32 %v7002, %v7378
    %7380 = vmatmul.bf16.gmra.mxu0 %v7041
    %v7381 = vpop.f32.mrf.mxu0
    %v7382 = vadd.f32 %v7002, %v7381
    %v7383 = vpop.f32.mrf.mxu0
    %v7384 = vadd.f32 %v7002, %v7383
    %7385 = vmatmul.bf16.gmra.mxu0 %v7042
    %v7386 = vpop.f32.mrf.mxu0
    %v7387 = vadd.f32 %v7002, %v7386
    %v7388 = vpop.f32.mrf.mxu0
    %v7389 = vadd.f32 %v7002, %v7388
    %7390 = vmatmul.bf16.gmra.mxu0 %v7043
    %v7391 = vpop.f32.mrf.mxu0
    %v7392 = vadd.f32 %v7002, %v7391
    %v7393 = vpop.f32.mrf.mxu0
    %v7394 = vadd.f32 %v7002, %v7393
    %7395 = vmatmul.bf16.gmra.mxu0 %v7044
    %v7396 = vpop.f32.mrf.mxu0
    %v7397 = vadd.f32 %v7002, %v7396
    %v7398 = vpop.f32.mrf.mxu0
    %v7399 = vadd.f32 %v7002, %v7398
    %7400 = vmatmul.bf16.gmra.mxu0 %v7045
    %v7401 = vpop.f32.mrf.mxu0
    %v7402 = vadd.f32 %v7002, %v7401
    %v7403 = vpop.f32.mrf.mxu0
    %v7404 = vadd.f32 %v7002, %v7403
    %7405 = vmatmul.bf16.gmra.mxu0 %v7046
    %v7406 = vpop.f32.mrf.mxu0
    %v7407 = vadd.f32 %v7002, %v7406
    %v7408 = vpop.f32.mrf.mxu0
    %v7409 = vadd.f32 %v7002, %v7408
    %7410 = vdwg.mxu0
    %7411 = vst [vmem:[#allocation3] sm:$0xff] %v7225
    %7412 = vst [vmem:[#allocation3 + $0x8] sm:$0xff] %v7274
    %7413 = vst [vmem:[#allocation3 + $0x10] sm:$0xff] %v7323
    %7414 = vst [vmem:[#allocation3 + $0x18] sm:$0xff] %v7372
    %7415 = vst [vmem:[#allocation3 + $0x20] sm:$0xff] %v7227
    %7416 = vst [vmem:[#allocation3 + $0x28] sm:$0xff] %v7276
    %7417 = vst [vmem:[#allocation3 + $0x30] sm:$0xff] %v7325
    %7418 = vst [vmem:[#allocation3 + $0x38] sm:$0xff] %v7374
    %7419 = vst [vmem:[#allocation3 + $0x40] sm:$0xff] %v7230
    %7420 = vst [vmem:[#allocation3 + $0x48] sm:$0xff] %v7279
    %7421 = vst [vmem:[#allocation3 + $0x50] sm:$0xff] %v7328
    %7422 = vst [vmem:[#allocation3 + $0x58] sm:$0xff] %v7377
    %7423 = vst [vmem:[#allocation3 + $0x60] sm:$0xff] %v7232
    %7424 = vst [vmem:[#allocation3 + $0x68] sm:$0xff] %v7281
    %7425 = vst [vmem:[#allocation3 + $0x70] sm:$0xff] %v7330
    %7426 = vst [vmem:[#allocation3 + $0x78] sm:$0xff] %v7379
    %7427 = vst [vmem:[#allocation3 + $0x80] sm:$0xff] %v7235
    %7428 = vst [vmem:[#allocation3 + $0x88] sm:$0xff] %v7284
    %7429 = vst [vmem:[#allocation3 + $0x90] sm:$0xff] %v7333
    %7430 = vst [vmem:[#allocation3 + $0x98] sm:$0xff] %v7382
    %7431 = vst [vmem:[#allocation3 + $0xa0] sm:$0xff] %v7237
    %7432 = vst [vmem:[#allocation3 + $0xa8] sm:$0xff] %v7286
    %7433 = vst [vmem:[#allocation3 + $0xb0] sm:$0xff] %v7335
    %7434 = vst [vmem:[#allocation3 + $0xb8] sm:$0xff] %v7384
    %7435 = vst [vmem:[#allocation3 + $0xc0] sm:$0xff] %v7240
    %7436 = vst [vmem:[#allocation3 + $0xc8] sm:$0xff] %v7289
    %7437 = vst [vmem:[#allocation3 + $0xd0] sm:$0xff] %v7338
    %7438 = vst [vmem:[#allocation3 + $0xd8] sm:$0xff] %v7387
    %7439 = vst [vmem:[#allocation3 + $0xe0] sm:$0xff] %v7242
    %7440 = vst [vmem:[#allocation3 + $0xe8] sm:$0xff] %v7291
    %7441 = vst [vmem:[#allocation3 + $0xf0] sm:$0xff] %v7340
    %7442 = vst [vmem:[#allocation3 + $0xf8] sm:$0xff] %v7389
    %7443 = vst [vmem:[#allocation3 + $0x100] sm:$0xff] %v7245
    %7444 = vst [vmem:[#allocation3 + $0x108] sm:$0xff] %v7294
    %7445 = vst [vmem:[#allocation3 + $0x110] sm:$0xff] %v7343
    %7446 = vst [vmem:[#allocation3 + $0x118] sm:$0xff] %v7392
    %7447 = vst [vmem:[#allocation3 + $0x120] sm:$0xff] %v7247
    %7448 = vst [vmem:[#allocation3 + $0x128] sm:$0xff] %v7296
    %7449 = vst [vmem:[#allocation3 + $0x130] sm:$0xff] %v7345
    %7450 = vst [vmem:[#allocation3 + $0x138] sm:$0xff] %v7394
    %7451 = vst [vmem:[#allocation3 + $0x140] sm:$0xff] %v7250
    %7452 = vst [vmem:[#allocation3 + $0x148] sm:$0xff] %v7299
    %7453 = vst [vmem:[#allocation3 + $0x150] sm:$0xff] %v7348
    %7454 = vst [vmem:[#allocation3 + $0x158] sm:$0xff] %v7397
    %7455 = vst [vmem:[#allocation3 + $0x160] sm:$0xff] %v7252
    %7456 = vst [vmem:[#allocation3 + $0x168] sm:$0xff] %v7301
    %7457 = vst [vmem:[#allocation3 + $0x170] sm:$0xff] %v7350
    %7458 = vst [vmem:[#allocation3 + $0x178] sm:$0xff] %v7399
    %7459 = vst [vmem:[#allocation3 + $0x180] sm:$0xff] %v7255
    %7460 = vst [vmem:[#allocation3 + $0x188] sm:$0xff] %v7304
    %7461 = vst [vmem:[#allocation3 + $0x190] sm:$0xff] %v7353
    %7462 = vst [vmem:[#allocation3 + $0x198] sm:$0xff] %v7402
    %7463 = vst [vmem:[#allocation3 + $0x1a0] sm:$0xff] %v7257
    %7464 = vst [vmem:[#allocation3 + $0x1a8] sm:$0xff] %v7306
    %7465 = vst [vmem:[#allocation3 + $0x1b0] sm:$0xff] %v7355
    %7466 = vst [vmem:[#allocation3 + $0x1b8] sm:$0xff] %v7404
    %7467 = vst [vmem:[#allocation3 + $0x1c0] sm:$0xff] %v7260
    %7468 = vst [vmem:[#allocation3 + $0x1c8] sm:$0xff] %v7309
    %7469 = vst [vmem:[#allocation3 + $0x1d0] sm:$0xff] %v7358
    %7470 = vst [vmem:[#allocation3 + $0x1d8] sm:$0xff] %v7407
    %7471 = vst [vmem:[#allocation3 + $0x1e0] sm:$0xff] %v7262
    %7472 = vst [vmem:[#allocation3 + $0x1e8] sm:$0xff] %v7311
    %7473 = vst [vmem:[#allocation3 + $0x1f0] sm:$0xff] %v7360
    %7474 = vst [vmem:[#allocation3 + $0x1f8] sm:$0xff] %v7409
    %s7475 = scalar_lea.vmem [#allocation9], 256
    %v7476 = vld [vmem:[%s7475] sm:$0xff]
    %v7477 = vld [vmem:[%s7475 + $0x8] sm:$0xff]
    %v7478 = vld [vmem:[%s7475 + $0x10] sm:$0xff]
    %v7479 = vld [vmem:[%s7475 + $0x18] sm:$0xff]
    %v7480 = vld [vmem:[%s7475 + $0x20] sm:$0xff]
    %v7481 = vld [vmem:[%s7475 + $0x28] sm:$0xff]
    %v7482 = vld [vmem:[%s7475 + $0x30] sm:$0xff]
    %v7483 = vld [vmem:[%s7475 + $0x38] sm:$0xff]
    %v7484 = vld [vmem:[%s7475 + $0x40] sm:$0xff]
    %v7485 = vld [vmem:[%s7475 + $0x48] sm:$0xff]
    %v7486 = vld [vmem:[%s7475 + $0x50] sm:$0xff]
    %v7487 = vld [vmem:[%s7475 + $0x58] sm:$0xff]
    %v7488 = vld [vmem:[%s7475 + $0x60] sm:$0xff]
    %v7489 = vld [vmem:[%s7475 + $0x68] sm:$0xff]
    %v7490 = vld [vmem:[%s7475 + $0x70] sm:$0xff]
    %v7491 = vld [vmem:[%s7475 + $0x78] sm:$0xff]
    %v7492 = vld [vmem:[%s7475 + $0x80] sm:$0xff]
    %v7493 = vld [vmem:[%s7475 + $0x88] sm:$0xff]
    %v7494 = vld [vmem:[%s7475 + $0x90] sm:$0xff]
    %v7495 = vld [vmem:[%s7475 + $0x98] sm:$0xff]
    %v7496 = vld [vmem:[%s7475 + $0xa0] sm:$0xff]
    %v7497 = vld [vmem:[%s7475 + $0xa8] sm:$0xff]
    %v7498 = vld [vmem:[%s7475 + $0xb0] sm:$0xff]
    %v7499 = vld [vmem:[%s7475 + $0xb8] sm:$0xff]
    %v7500 = vld [vmem:[%s7475 + $0xc0] sm:$0xff]
    %v7501 = vld [vmem:[%s7475 + $0xc8] sm:$0xff]
    %v7502 = vld [vmem:[%s7475 + $0xd0] sm:$0xff]
    %v7503 = vld [vmem:[%s7475 + $0xd8] sm:$0xff]
    %v7504 = vld [vmem:[%s7475 + $0xe0] sm:$0xff]
    %v7505 = vld [vmem:[%s7475 + $0xe8] sm:$0xff]
    %v7506 = vld [vmem:[%s7475 + $0xf0] sm:$0xff]
    %v7507 = vld [vmem:[%s7475 + $0xf8] sm:$0xff]
    %v7540 = vunpack.c.l.b16 %v7476
    %v7541 = vunpack.c.h.b16 %v7476
    %v7542 = vunpack.c.l.b16 %v7477
    %v7543 = vunpack.c.h.b16 %v7477
    %v7544 = vunpack.c.l.b16 %v7478
    %v7545 = vunpack.c.h.b16 %v7478
    %v7546 = vunpack.c.l.b16 %v7479
    %v7547 = vunpack.c.h.b16 %v7479
    %v7548 = vunpack.c.l.b16 %v7480
    %v7549 = vunpack.c.h.b16 %v7480
    %v7550 = vunpack.c.l.b16 %v7481
    %v7551 = vunpack.c.h.b16 %v7481
    %v7552 = vunpack.c.l.b16 %v7482
    %v7553 = vunpack.c.h.b16 %v7482
    %v7554 = vunpack.c.l.b16 %v7483
    %v7555 = vunpack.c.h.b16 %v7483
    %v7556 = vunpack.c.l.b16 %v7484
    %v7557 = vunpack.c.h.b16 %v7484
    %v7558 = vunpack.c.l.b16 %v7485
    %v7559 = vunpack.c.h.b16 %v7485
    %v7560 = vunpack.c.l.b16 %v7486
    %v7561 = vunpack.c.h.b16 %v7486
    %v7562 = vunpack.c.l.b16 %v7487
    %v7563 = vunpack.c.h.b16 %v7487
    %v7564 = vunpack.c.l.b16 %v7488
    %v7565 = vunpack.c.h.b16 %v7488
    %v7566 = vunpack.c.l.b16 %v7489
    %v7567 = vunpack.c.h.b16 %v7489
    %v7568 = vunpack.c.l.b16 %v7490
    %v7569 = vunpack.c.h.b16 %v7490
    %v7570 = vunpack.c.l.b16 %v7491
    %v7571 = vunpack.c.h.b16 %v7491
    %v7572 = vunpack.c.l.b16 %v7492
    %v7573 = vunpack.c.h.b16 %v7492
    %v7574 = vunpack.c.l.b16 %v7493
    %v7575 = vunpack.c.h.b16 %v7493
    %v7576 = vunpack.c.l.b16 %v7494
    %v7577 = vunpack.c.h.b16 %v7494
    %v7578 = vunpack.c.l.b16 %v7495
    %v7579 = vunpack.c.h.b16 %v7495
    %v7580 = vunpack.c.l.b16 %v7496
    %v7581 = vunpack.c.h.b16 %v7496
    %v7582 = vunpack.c.l.b16 %v7497
    %v7583 = vunpack.c.h.b16 %v7497
    %v7584 = vunpack.c.l.b16 %v7498
    %v7585 = vunpack.c.h.b16 %v7498
    %v7586 = vunpack.c.l.b16 %v7499
    %v7587 = vunpack.c.h.b16 %v7499
    %v7588 = vunpack.c.l.b16 %v7500
    %v7589 = vunpack.c.h.b16 %v7500
    %v7590 = vunpack.c.l.b16 %v7501
    %v7591 = vunpack.c.h.b16 %v7501
    %v7592 = vunpack.c.l.b16 %v7502
    %v7593 = vunpack.c.h.b16 %v7502
    %v7594 = vunpack.c.l.b16 %v7503
    %v7595 = vunpack.c.h.b16 %v7503
    %v7596 = vunpack.c.l.b16 %v7504
    %v7597 = vunpack.c.h.b16 %v7504
    %v7598 = vunpack.c.l.b16 %v7505
    %v7599 = vunpack.c.h.b16 %v7505
    %v7600 = vunpack.c.l.b16 %v7506
    %v7601 = vunpack.c.h.b16 %v7506
    %v7602 = vunpack.c.l.b16 %v7507
    %v7603 = vunpack.c.h.b16 %v7507
    %v7604 = vpack.c.b16 %v7544, %v7540
    %v7605 = vpack.c.b16 %v7545, %v7541
    %v7606 = vpack.c.b16 %v7546, %v7542
    %v7607 = vpack.c.b16 %v7547, %v7543
    %v7608 = vpack.c.b16 %v7552, %v7548
    %v7609 = vpack.c.b16 %v7553, %v7549
    %v7610 = vpack.c.b16 %v7554, %v7550
    %v7611 = vpack.c.b16 %v7555, %v7551
    %v7612 = vpack.c.b16 %v7560, %v7556
    %v7613 = vpack.c.b16 %v7561, %v7557
    %v7614 = vpack.c.b16 %v7562, %v7558
    %v7615 = vpack.c.b16 %v7563, %v7559
    %v7616 = vpack.c.b16 %v7568, %v7564
    %v7617 = vpack.c.b16 %v7569, %v7565
    %v7618 = vpack.c.b16 %v7570, %v7566
    %v7619 = vpack.c.b16 %v7571, %v7567
    %v7620 = vpack.c.b16 %v7576, %v7572
    %v7621 = vpack.c.b16 %v7577, %v7573
    %v7622 = vpack.c.b16 %v7578, %v7574
    %v7623 = vpack.c.b16 %v7579, %v7575
    %v7624 = vpack.c.b16 %v7584, %v7580
    %v7625 = vpack.c.b16 %v7585, %v7581
    %v7626 = vpack.c.b16 %v7586, %v7582
    %v7627 = vpack.c.b16 %v7587, %v7583
    %v7628 = vpack.c.b16 %v7592, %v7588
    %v7629 = vpack.c.b16 %v7593, %v7589
    %v7630 = vpack.c.b16 %v7594, %v7590
    %v7631 = vpack.c.b16 %v7595, %v7591
    %v7632 = vpack.c.b16 %v7600, %v7596
    %v7633 = vpack.c.b16 %v7601, %v7597
    %v7634 = vpack.c.b16 %v7602, %v7598
    %v7635 = vpack.c.b16 %v7603, %v7599
    %7668 = vmatpush.bf16.msra.mxu0 %v7632
    %7669 = vmatpush.bf16.msra.mxu0 %v7628
    %7670 = vmatpush.bf16.msra.mxu0 %v7624
    %7671 = vmatpush.bf16.msra.mxu0 %v7620
    %7672 = vmatpush.bf16.msra.mxu0 %v7616
    %7673 = vmatpush.bf16.msra.mxu0 %v7612
    %7674 = vmatpush.bf16.msra.mxu0 %v7608
    %7675 = vmatpush.bf16.msra.mxu0 %v7604
    %7676 = vmatmul.bf16.gmra.mxu0 0
    %v7677 = vpop.f32.mrf.mxu0
    %v7678 = vadd.f32 0.0, %v7677
    %v7679 = vpop.f32.mrf.mxu0
    %v7680 = vadd.f32 0.0, %v7679
    %7681 = vdwg.mxu0
    %7682 = vmatpush.bf16.msra.mxu0 %v7633
    %7683 = vmatpush.bf16.msra.mxu0 %v7629
    %7684 = vmatpush.bf16.msra.mxu0 %v7625
    %7685 = vmatpush.bf16.msra.mxu0 %v7621
    %7686 = vmatpush.bf16.msra.mxu0 %v7617
    %7687 = vmatpush.bf16.msra.mxu0 %v7613
    %7688 = vmatpush.bf16.msra.mxu0 %v7609
    %7689 = vmatpush.bf16.msra.mxu0 %v7605
    %7690 = vmatmul.bf16.gmra.mxu0 0
    %v7691 = vpop.f32.mrf.mxu0
    %v7692 = vadd.f32 0.0, %v7691
    %v7693 = vpop.f32.mrf.mxu0
    %v7694 = vadd.f32 0.0, %v7693
    %7695 = vdwg.mxu0
    %7696 = vmatpush.bf16.msra.mxu0 %v7634
    %7697 = vmatpush.bf16.msra.mxu0 %v7630
    %7698 = vmatpush.bf16.msra.mxu0 %v7626
    %7699 = vmatpush.bf16.msra.mxu0 %v7622
    %7700 = vmatpush.bf16.msra.mxu0 %v7618
    %7701 = vmatpush.bf16.msra.mxu0 %v7614
    %7702 = vmatpush.bf16.msra.mxu0 %v7610
    %7703 = vmatpush.bf16.msra.mxu0 %v7606
    %7704 = vmatmul.bf16.gmra.mxu0 0
    %v7705 = vpop.f32.mrf.mxu0
    %v7706 = vadd.f32 0.0, %v7705
    %v7707 = vpop.f32.mrf.mxu0
    %v7708 = vadd.f32 0.0, %v7707
    %7709 = vdwg.mxu0
    %7710 = vmatpush.bf16.msra.mxu0 %v7635
    %7711 = vmatpush.bf16.msra.mxu0 %v7631
    %7712 = vmatpush.bf16.msra.mxu0 %v7627
    %7713 = vmatpush.bf16.msra.mxu0 %v7623
    %7714 = vmatpush.bf16.msra.mxu0 %v7619
    %7715 = vmatpush.bf16.msra.mxu0 %v7615
    %7716 = vmatpush.bf16.msra.mxu0 %v7611
    %7717 = vmatpush.bf16.msra.mxu0 %v7607
    %7718 = vmatmul.bf16.gmra.mxu0 0
    %v7719 = vpop.f32.mrf.mxu0
    %v7720 = vadd.f32 0.0, %v7719
    %v7721 = vpop.f32.mrf.mxu0
    %v7722 = vadd.f32 0.0, %v7721
    %7723 = vdwg.mxu0
    %v7724 = vld [vmem:[#allocation3] sm:$0xff]
    %v7725 = vld [vmem:[#allocation3 + $0x8] sm:$0xff]
    %v7726 = vld [vmem:[#allocation3 + $0x10] sm:$0xff]
    %v7727 = vld [vmem:[#allocation3 + $0x18] sm:$0xff]
    %v7728 = vld [vmem:[#allocation3 + $0x20] sm:$0xff]
    %v7729 = vld [vmem:[#allocation3 + $0x28] sm:$0xff]
    %v7730 = vld [vmem:[#allocation3 + $0x30] sm:$0xff]
    %v7731 = vld [vmem:[#allocation3 + $0x38] sm:$0xff]
    %v7732 = vadd.f32 %v7724, %v7678
    %v7733 = vadd.f32 %v7725, %v7692
    %v7734 = vadd.f32 %v7726, %v7706
    %v7735 = vadd.f32 %v7727, %v7720
    %v7736 = vadd.f32 %v7728, %v7680
    %v7737 = vadd.f32 %v7729, %v7694
    %v7738 = vadd.f32 %v7730, %v7708
    %v7739 = vadd.f32 %v7731, %v7722
    %v7740 = vxor.u32 %v7732, 2147483648
    %v7741 = vxor.u32 %v7736, 2147483648
    %v7742 = vmul.f32 %v7740, 1.442695
    %v7743 = vpow.pop %v7742
    %v7744 = vmul.f32 %v7741, 1.442695
    %v7745 = vpow.pop %v7744
    %v7746 = vadd.f32 %v7743, 1.0
    %v7747 = vadd.f32 %v7745, 1.0
    %v7748 = vrcp.pop %v7746
    %v7749 = vmul.f32 %v7746, %v7748
    %v7750 = vsub.f32 1.0, %v7749
    %v7751 = vmul.f32 %v7748, %v7750
    %v7752 = vadd.f32 %v7748, %v7751
    %vm7753 = vweird.f32 %v7746
    %vm7754 = vweird.f32 %v7748
    %vm7755 = vmor %vm7753, %vm7754
    %v7756 = vsel %vm7755, %v7748, %v7752
    %v7757 = vand.u32 2147483647, %v7746
    %vm7758 = vcmp.eq.f32.partialorder %v7757, 8.507059e+37
    %v7759 = vand.u32 %v7746, 2147483648
    %v7760 = vor.u32 1.1754944e-38, %v7759
    %v7761 = vsel %vm7758, %v7760, %v7756
    %v7762 = vmul.f32 1.0, %v7761
    %v7763 = vrcp.pop %v7747
    %v7764 = vmul.f32 %v7747, %v7763
    %v7765 = vsub.f32 1.0, %v7764
    %v7766 = vmul.f32 %v7763, %v7765
    %v7767 = vadd.f32 %v7763, %v7766
    %vm7768 = vweird.f32 %v7747
    %vm7769 = vweird.f32 %v7763
    %vm7770 = vmor %vm7768, %vm7769
    %v7771 = vsel %vm7770, %v7763, %v7767
    %v7772 = vand.u32 2147483647, %v7747
    %vm7773 = vcmp.eq.f32.partialorder %v7772, 8.507059e+37
    %v7774 = vand.u32 %v7747, 2147483648
    %v7775 = vor.u32 1.1754944e-38, %v7774
    %v7776 = vsel %vm7773, %v7775, %v7771
    %v7777 = vmul.f32 1.0, %v7776
    %v7778 = vxor.u32 %v7733, 2147483648
    %v7779 = vxor.u32 %v7737, 2147483648
    %v7780 = vmul.f32 %v7778, 1.442695
    %v7781 = vpow.pop %v7780
    %v7782 = vmul.f32 %v7779, 1.442695
    %v7783 = vpow.pop %v7782
    %v7784 = vadd.f32 %v7781, 1.0
    %v7785 = vadd.f32 %v7783, 1.0
    %v7786 = vrcp.pop %v7784
    %v7787 = vmul.f32 %v7784, %v7786
    %v7788 = vsub.f32 1.0, %v7787
    %v7789 = vmul.f32 %v7786, %v7788
    %v7790 = vadd.f32 %v7786, %v7789
    %vm7791 = vweird.f32 %v7784
    %vm7792 = vweird.f32 %v7786
    %vm7793 = vmor %vm7791, %vm7792
    %v7794 = vsel %vm7793, %v7786, %v7790
    %v7795 = vand.u32 2147483647, %v7784
    %vm7796 = vcmp.eq.f32.partialorder %v7795, 8.507059e+37
    %v7797 = vand.u32 %v7784, 2147483648
    %v7798 = vor.u32 1.1754944e-38, %v7797
    %v7799 = vsel %vm7796, %v7798, %v7794
    %v7800 = vmul.f32 1.0, %v7799
    %v7801 = vrcp.pop %v7785
    %v7802 = vmul.f32 %v7785, %v7801
    %v7803 = vsub.f32 1.0, %v7802
    %v7804 = vmul.f32 %v7801, %v7803
    %v7805 = vadd.f32 %v7801, %v7804
    %vm7806 = vweird.f32 %v7785
    %vm7807 = vweird.f32 %v7801
    %vm7808 = vmor %vm7806, %vm7807
    %v7809 = vsel %vm7808, %v7801, %v7805
    %v7810 = vand.u32 2147483647, %v7785
    %vm7811 = vcmp.eq.f32.partialorder %v7810, 8.507059e+37
    %v7812 = vand.u32 %v7785, 2147483648
    %v7813 = vor.u32 1.1754944e-38, %v7812
    %v7814 = vsel %vm7811, %v7813, %v7809
    %v7815 = vmul.f32 1.0, %v7814
    %v7816 = vtanh.pop %v7734
    %v7817 = vtanh.pop %v7738
    %v7818 = vxor.u32 %v7735, 2147483648
    %v7819 = vxor.u32 %v7739, 2147483648
    %v7820 = vmul.f32 %v7818, 1.442695
    %v7821 = vpow.pop %v7820
    %v7822 = vmul.f32 %v7819, 1.442695
    %v7823 = vpow.pop %v7822
    %v7824 = vadd.f32 %v7821, 1.0
    %v7825 = vadd.f32 %v7823, 1.0
    %v7826 = vrcp.pop %v7824
    %v7827 = vmul.f32 %v7824, %v7826
    %v7828 = vsub.f32 1.0, %v7827
    %v7829 = vmul.f32 %v7826, %v7828
    %v7830 = vadd.f32 %v7826, %v7829
    %vm7831 = vweird.f32 %v7824
    %vm7832 = vweird.f32 %v7826
    %vm7833 = vmor %vm7831, %vm7832
    %v7834 = vsel %vm7833, %v7826, %v7830
    %v7835 = vand.u32 2147483647, %v7824
    %vm7836 = vcmp.eq.f32.partialorder %v7835, 8.507059e+37
    %v7837 = vand.u32 %v7824, 2147483648
    %v7838 = vor.u32 1.1754944e-38, %v7837
    %v7839 = vsel %vm7836, %v7838, %v7834
    %v7840 = vmul.f32 1.0, %v7839
    %v7841 = vrcp.pop %v7825
    %v7842 = vmul.f32 %v7825, %v7841
    %v7843 = vsub.f32 1.0, %v7842
    %v7844 = vmul.f32 %v7841, %v7843
    %v7845 = vadd.f32 %v7841, %v7844
    %vm7846 = vweird.f32 %v7825
    %vm7847 = vweird.f32 %v7841
    %vm7848 = vmor %vm7846, %vm7847
    %v7849 = vsel %vm7848, %v7841, %v7845
    %v7850 = vand.u32 2147483647, %v7825
    %vm7851 = vcmp.eq.f32.partialorder %v7850, 8.507059e+37
    %v7852 = vand.u32 %v7825, 2147483648
    %v7853 = vor.u32 1.1754944e-38, %v7852
    %v7854 = vsel %vm7851, %v7853, %v7849
    %v7855 = vmul.f32 1.0, %v7854
    %v7856 = vmul.f32 %v7800, 0.0
    %v7857 = vmul.f32 %v7815, 0.0
    %v7858 = vmul.f32 %v7762, %v7816
    %v7859 = vmul.f32 %v7777, %v7817
    %v7860 = vadd.f32 %v7856, %v7858
    %v7861 = vadd.f32 %v7857, %v7859
    %v7862 = vtanh.pop %v7860
    %v7863 = vtanh.pop %v7861
    %v7864 = vmul.f32 %v7840, %v7862
    %v7865 = vmul.f32 %v7855, %v7863
    %v7866 = vpack.c.bf16 %v7864, %v7864
    %v7867 = vpack.c.bf16 %v7865, %v7865
    %7868 = vst [vmem:[#allocation2] sm:$0xf] %v7866
    %7869 = vst [vmem:[#allocation2 + $0x4] sm:$0xf] %v7867
    %v7872 = vunpack.c.l.b16 %v7866
    %v7873 = vunpack.c.l.b16 %v7867
    %v7874 = vpack.c.b16 %v7873, %v7872
    %7876 = vmatpush.bf16.msra.mxu0 %v7632
    %7877 = vmatpush.bf16.msra.mxu0 %v7628
    %7878 = vmatpush.bf16.msra.mxu0 %v7624
    %7879 = vmatpush.bf16.msra.mxu0 %v7620
    %7880 = vmatpush.bf16.msra.mxu0 %v7616
    %7881 = vmatpush.bf16.msra.mxu0 %v7612
    %7882 = vmatpush.bf16.msra.mxu0 %v7608
    %7883 = vmatpush.bf16.msra.mxu0 %v7604
    %7884 = vmatmul.bf16.gmra.mxu0 %v7874
    %v7885 = vpop.f32.mrf.mxu0
    %v7886 = vadd.f32 0.0, %v7885
    %v7887 = vpop.f32.mrf.mxu0
    %v7888 = vadd.f32 0.0, %v7887
    %7889 = vdwg.mxu0
    %7890 = vmatpush.bf16.msra.mxu0 %v7633
    %7891 = vmatpush.bf16.msra.mxu0 %v7629
    %7892 = vmatpush.bf16.msra.mxu0 %v7625
    %7893 = vmatpush.bf16.msra.mxu0 %v7621
    %7894 = vmatpush.bf16.msra.mxu0 %v7617
    %7895 = vmatpush.bf16.msra.mxu0 %v7613
    %7896 = vmatpush.bf16.msra.mxu0 %v7609
    %7897 = vmatpush.bf16.msra.mxu0 %v7605
    %7898 = vmatmul.bf16.gmra.mxu0 %v7874
    %v7899 = vpop.f32.mrf.mxu0
    %v7900 = vadd.f32 0.0, %v7899
    %v7901 = vpop.f32.mrf.mxu0
    %v7902 = vadd.f32 0.0, %v7901
    %7903 = vdwg.mxu0
    %7904 = vmatpush.bf16.msra.mxu0 %v7634
    %7905 = vmatpush.bf16.msra.mxu0 %v7630
    %7906 = vmatpush.bf16.msra.mxu0 %v7626
    %7907 = vmatpush.bf16.msra.mxu0 %v7622
    %7908 = vmatpush.bf16.msra.mxu0 %v7618
    %7909 = vmatpush.bf16.msra.mxu0 %v7614
    %7910 = vmatpush.bf16.msra.mxu0 %v7610
    %7911 = vmatpush.bf16.msra.mxu0 %v7606
    %7912 = vmatmul.bf16.gmra.mxu0 %v7874
    %v7913 = vpop.f32.mrf.mxu0
    %v7914 = vadd.f32 0.0, %v7913
    %v7915 = vpop.f32.mrf.mxu0
    %v7916 = vadd.f32 0.0, %v7915
    %7917 = vdwg.mxu0
    %7918 = vmatpush.bf16.msra.mxu0 %v7635
    %7919 = vmatpush.bf16.msra.mxu0 %v7631
    %7920 = vmatpush.bf16.msra.mxu0 %v7627
    %7921 = vmatpush.bf16.msra.mxu0 %v7623
    %7922 = vmatpush.bf16.msra.mxu0 %v7619
    %7923 = vmatpush.bf16.msra.mxu0 %v7615
    %7924 = vmatpush.bf16.msra.mxu0 %v7611
    %7925 = vmatpush.bf16.msra.mxu0 %v7607
    %7926 = vmatmul.bf16.gmra.mxu0 %v7874
    %v7927 = vpop.f32.mrf.mxu0
    %v7928 = vadd.f32 0.0, %v7927
    %v7929 = vpop.f32.mrf.mxu0
    %v7930 = vadd.f32 0.0, %v7929
    %7931 = vdwg.mxu0
    %v7932 = vld [vmem:[%s1099] sm:$0xff]
    %v7933 = vld [vmem:[%s1099 + $0x8] sm:$0xff]
    %v7934 = vld [vmem:[%s1099 + $0x10] sm:$0xff]
    %v7935 = vld [vmem:[%s1099 + $0x18] sm:$0xff]
    %v7936 = vld [vmem:[%s1099 + $0x20] sm:$0xff]
    %v7937 = vld [vmem:[%s1099 + $0x28] sm:$0xff]
    %v7938 = vld [vmem:[%s1099 + $0x30] sm:$0xff]
    %v7939 = vld [vmem:[%s1099 + $0x38] sm:$0xff]
    %v7940 = vadd.f32 %v7932, %v7886
    %v7941 = vadd.f32 %v7933, %v7900
    %v7942 = vadd.f32 %v7934, %v7914
    %v7943 = vadd.f32 %v7935, %v7928
    %v7944 = vadd.f32 %v7936, %v7888
    %v7945 = vadd.f32 %v7937, %v7902
    %v7946 = vadd.f32 %v7938, %v7916
    %v7947 = vadd.f32 %v7939, %v7930
    %v7948 = vxor.u32 %v7940, 2147483648
    %v7949 = vxor.u32 %v7944, 2147483648
    %v7950 = vmul.f32 %v7948, 1.442695
    %v7951 = vpow.pop %v7950
    %v7952 = vmul.f32 %v7949, 1.442695
    %v7953 = vpow.pop %v7952
    %v7954 = vadd.f32 %v7951, 1.0
    %v7955 = vadd.f32 %v7953, 1.0
    %v7956 = vrcp.pop %v7954
    %v7957 = vmul.f32 %v7954, %v7956
    %v7958 = vsub.f32 1.0, %v7957
    %v7959 = vmul.f32 %v7956, %v7958
    %v7960 = vadd.f32 %v7956, %v7959
    %vm7961 = vweird.f32 %v7954
    %vm7962 = vweird.f32 %v7956
    %vm7963 = vmor %vm7961, %vm7962
    %v7964 = vsel %vm7963, %v7956, %v7960
    %v7965 = vand.u32 2147483647, %v7954
    %vm7966 = vcmp.eq.f32.partialorder %v7965, 8.507059e+37
    %v7967 = vand.u32 %v7954, 2147483648
    %v7968 = vor.u32 1.1754944e-38, %v7967
    %v7969 = vsel %vm7966, %v7968, %v7964
    %v7970 = vmul.f32 1.0, %v7969
    %v7971 = vrcp.pop %v7955
    %v7972 = vmul.f32 %v7955, %v7971
    %v7973 = vsub.f32 1.0, %v7972
    %v7974 = vmul.f32 %v7971, %v7973
    %v7975 = vadd.f32 %v7971, %v7974
    %vm7976 = vweird.f32 %v7955
    %vm7977 = vweird.f32 %v7971
    %vm7978 = vmor %vm7976, %vm7977
    %v7979 = vsel %vm7978, %v7971, %v7975
    %v7980 = vand.u32 2147483647, %v7955
    %vm7981 = vcmp.eq.f32.partialorder %v7980, 8.507059e+37
    %v7982 = vand.u32 %v7955, 2147483648
    %v7983 = vor.u32 1.1754944e-38, %v7982
    %v7984 = vsel %vm7981, %v7983, %v7979
    %v7985 = vmul.f32 1.0, %v7984
    %v7986 = vxor.u32 %v7941, 2147483648
    %v7987 = vxor.u32 %v7945, 2147483648
    %v7988 = vmul.f32 %v7986, 1.442695
    %v7989 = vpow.pop %v7988
    %v7990 = vmul.f32 %v7987, 1.442695
    %v7991 = vpow.pop %v7990
    %v7992 = vadd.f32 %v7989, 1.0
    %v7993 = vadd.f32 %v7991, 1.0
    %v7994 = vrcp.pop %v7992
    %v7995 = vmul.f32 %v7992, %v7994
    %v7996 = vsub.f32 1.0, %v7995
    %v7997 = vmul.f32 %v7994, %v7996
    %v7998 = vadd.f32 %v7994, %v7997
    %vm7999 = vweird.f32 %v7992
    %vm8000 = vweird.f32 %v7994
    %vm8001 = vmor %vm7999, %vm8000
    %v8002 = vsel %vm8001, %v7994, %v7998
    %v8003 = vand.u32 2147483647, %v7992
    %vm8004 = vcmp.eq.f32.partialorder %v8003, 8.507059e+37
    %v8005 = vand.u32 %v7992, 2147483648
    %v8006 = vor.u32 1.1754944e-38, %v8005
    %v8007 = vsel %vm8004, %v8006, %v8002
    %v8008 = vmul.f32 1.0, %v8007
    %v8009 = vrcp.pop %v7993
    %v8010 = vmul.f32 %v7993, %v8009
    %v8011 = vsub.f32 1.0, %v8010
    %v8012 = vmul.f32 %v8009, %v8011
    %v8013 = vadd.f32 %v8009, %v8012
    %vm8014 = vweird.f32 %v7993
    %vm8015 = vweird.f32 %v8009
    %vm8016 = vmor %vm8014, %vm8015
    %v8017 = vsel %vm8016, %v8009, %v8013
    %v8018 = vand.u32 2147483647, %v7993
    %vm8019 = vcmp.eq.f32.partialorder %v8018, 8.507059e+37
    %v8020 = vand.u32 %v7993, 2147483648
    %v8021 = vor.u32 1.1754944e-38, %v8020
    %v8022 = vsel %vm8019, %v8021, %v8017
    %v8023 = vmul.f32 1.0, %v8022
    %v8024 = vtanh.pop %v7942
    %v8025 = vtanh.pop %v7946
    %v8026 = vxor.u32 %v7943, 2147483648
    %v8027 = vxor.u32 %v7947, 2147483648
    %v8028 = vmul.f32 %v8026, 1.442695
    %v8029 = vpow.pop %v8028
    %v8030 = vmul.f32 %v8027, 1.442695
    %v8031 = vpow.pop %v8030
    %v8032 = vadd.f32 %v8029, 1.0
    %v8033 = vadd.f32 %v8031, 1.0
    %v8034 = vrcp.pop %v8032
    %v8035 = vmul.f32 %v8032, %v8034
    %v8036 = vsub.f32 1.0, %v8035
    %v8037 = vmul.f32 %v8034, %v8036
    %v8038 = vadd.f32 %v8034, %v8037
    %vm8039 = vweird.f32 %v8032
    %vm8040 = vweird.f32 %v8034
    %vm8041 = vmor %vm8039, %vm8040
    %v8042 = vsel %vm8041, %v8034, %v8038
    %v8043 = vand.u32 2147483647, %v8032
    %vm8044 = vcmp.eq.f32.partialorder %v8043, 8.507059e+37
    %v8045 = vand.u32 %v8032, 2147483648
    %v8046 = vor.u32 1.1754944e-38, %v8045
    %v8047 = vsel %vm8044, %v8046, %v8042
    %v8048 = vmul.f32 1.0, %v8047
    %v8049 = vrcp.pop %v8033
    %v8050 = vmul.f32 %v8033, %v8049
    %v8051 = vsub.f32 1.0, %v8050
    %v8052 = vmul.f32 %v8049, %v8051
    %v8053 = vadd.f32 %v8049, %v8052
    %vm8054 = vweird.f32 %v8033
    %vm8055 = vweird.f32 %v8049
    %vm8056 = vmor %vm8054, %vm8055
    %v8057 = vsel %vm8056, %v8049, %v8053
    %v8058 = vand.u32 2147483647, %v8033
    %vm8059 = vcmp.eq.f32.partialorder %v8058, 8.507059e+37
    %v8060 = vand.u32 %v8033, 2147483648
    %v8061 = vor.u32 1.1754944e-38, %v8060
    %v8062 = vsel %vm8059, %v8061, %v8057
    %v8063 = vmul.f32 1.0, %v8062
    %v8064 = vmul.f32 %v8008, %v7860
    %v8065 = vmul.f32 %v8023, %v7861
    %v8066 = vmul.f32 %v7970, %v8024
    %v8067 = vmul.f32 %v7985, %v8025
    %v8068 = vadd.f32 %v8064, %v8066
    %v8069 = vadd.f32 %v8065, %v8067
    %v8070 = vtanh.pop %v8068
    %v8071 = vtanh.pop %v8069
    %v8072 = vmul.f32 %v8048, %v8070
    %v8073 = vmul.f32 %v8063, %v8071
    %v8074 = vpack.c.bf16 %v8072, %v8072
    %v8075 = vpack.c.bf16 %v8073, %v8073
    %8076 = vst [vmem:[%s1244] sm:$0xf] %v8074
    %8077 = vst [vmem:[%s1244 + $0x4] sm:$0xf] %v8075
    %v8080 = vunpack.c.l.b16 %v8074
    %v8081 = vunpack.c.l.b16 %v8075
    %v8082 = vpack.c.b16 %v8081, %v8080
    %8084 = vmatpush.bf16.msra.mxu0 %v7632
    %8085 = vmatpush.bf16.msra.mxu0 %v7628
    %8086 = vmatpush.bf16.msra.mxu0 %v7624
    %8087 = vmatpush.bf16.msra.mxu0 %v7620
    %8088 = vmatpush.bf16.msra.mxu0 %v7616
    %8089 = vmatpush.bf16.msra.mxu0 %v7612
    %8090 = vmatpush.bf16.msra.mxu0 %v7608
    %8091 = vmatpush.bf16.msra.mxu0 %v7604
    %8092 = vmatmul.bf16.gmra.mxu0 %v8082
    %v8093 = vpop.f32.mrf.mxu0
    %v8094 = vadd.f32 0.0, %v8093
    %v8095 = vpop.f32.mrf.mxu0
    %v8096 = vadd.f32 0.0, %v8095
    %8097 = vdwg.mxu0
    %8098 = vmatpush.bf16.msra.mxu0 %v7633
    %8099 = vmatpush.bf16.msra.mxu0 %v7629
    %8100 = vmatpush.bf16.msra.mxu0 %v7625
    %8101 = vmatpush.bf16.msra.mxu0 %v7621
    %8102 = vmatpush.bf16.msra.mxu0 %v7617
    %8103 = vmatpush.bf16.msra.mxu0 %v7613
    %8104 = vmatpush.bf16.msra.mxu0 %v7609
    %8105 = vmatpush.bf16.msra.mxu0 %v7605
    %8106 = vmatmul.bf16.gmra.mxu0 %v8082
    %v8107 = vpop.f32.mrf.mxu0
    %v8108 = vadd.f32 0.0, %v8107
    %v8109 = vpop.f32.mrf.mxu0
    %v8110 = vadd.f32 0.0, %v8109
    %8111 = vdwg.mxu0
    %8112 = vmatpush.bf16.msra.mxu0 %v7634
    %8113 = vmatpush.bf16.msra.mxu0 %v7630
    %8114 = vmatpush.bf16.msra.mxu0 %v7626
    %8115 = vmatpush.bf16.msra.mxu0 %v7622
    %8116 = vmatpush.bf16.msra.mxu0 %v7618
    %8117 = vmatpush.bf16.msra.mxu0 %v7614
    %8118 = vmatpush.bf16.msra.mxu0 %v7610
    %8119 = vmatpush.bf16.msra.mxu0 %v7606
    %8120 = vmatmul.bf16.gmra.mxu0 %v8082
    %v8121 = vpop.f32.mrf.mxu0
    %v8122 = vadd.f32 0.0, %v8121
    %v8123 = vpop.f32.mrf.mxu0
    %v8124 = vadd.f32 0.0, %v8123
    %8125 = vdwg.mxu0
    %8126 = vmatpush.bf16.msra.mxu0 %v7635
    %8127 = vmatpush.bf16.msra.mxu0 %v7631
    %8128 = vmatpush.bf16.msra.mxu0 %v7627
    %8129 = vmatpush.bf16.msra.mxu0 %v7623
    %8130 = vmatpush.bf16.msra.mxu0 %v7619
    %8131 = vmatpush.bf16.msra.mxu0 %v7615
    %8132 = vmatpush.bf16.msra.mxu0 %v7611
    %8133 = vmatpush.bf16.msra.mxu0 %v7607
    %8134 = vmatmul.bf16.gmra.mxu0 %v8082
    %v8135 = vpop.f32.mrf.mxu0
    %v8136 = vadd.f32 0.0, %v8135
    %v8137 = vpop.f32.mrf.mxu0
    %v8138 = vadd.f32 0.0, %v8137
    %8139 = vdwg.mxu0
    %v8140 = vld [vmem:[%s1309] sm:$0xff]
    %v8141 = vld [vmem:[%s1309 + $0x8] sm:$0xff]
    %v8142 = vld [vmem:[%s1309 + $0x10] sm:$0xff]
    %v8143 = vld [vmem:[%s1309 + $0x18] sm:$0xff]
    %v8144 = vld [vmem:[%s1309 + $0x20] sm:$0xff]
    %v8145 = vld [vmem:[%s1309 + $0x28] sm:$0xff]
    %v8146 = vld [vmem:[%s1309 + $0x30] sm:$0xff]
    %v8147 = vld [vmem:[%s1309 + $0x38] sm:$0xff]
    %v8148 = vadd.f32 %v8140, %v8094
    %v8149 = vadd.f32 %v8141, %v8108
    %v8150 = vadd.f32 %v8142, %v8122
    %v8151 = vadd.f32 %v8143, %v8136
    %v8152 = vadd.f32 %v8144, %v8096
    %v8153 = vadd.f32 %v8145, %v8110
    %v8154 = vadd.f32 %v8146, %v8124
    %v8155 = vadd.f32 %v8147, %v8138
    %v8156 = vxor.u32 %v8148, 2147483648
    %v8157 = vxor.u32 %v8152, 2147483648
    %v8158 = vmul.f32 %v8156, 1.442695
    %v8159 = vpow.pop %v8158
    %v8160 = vmul.f32 %v8157, 1.442695
    %v8161 = vpow.pop %v8160
    %v8162 = vadd.f32 %v8159, 1.0
    %v8163 = vadd.f32 %v8161, 1.0
    %v8164 = vrcp.pop %v8162
    %v8165 = vmul.f32 %v8162, %v8164
    %v8166 = vsub.f32 1.0, %v8165
    %v8167 = vmul.f32 %v8164, %v8166
    %v8168 = vadd.f32 %v8164, %v8167
    %vm8169 = vweird.f32 %v8162
    %vm8170 = vweird.f32 %v8164
    %vm8171 = vmor %vm8169, %vm8170
    %v8172 = vsel %vm8171, %v8164, %v8168
    %v8173 = vand.u32 2147483647, %v8162
    %vm8174 = vcmp.eq.f32.partialorder %v8173, 8.507059e+37
    %v8175 = vand.u32 %v8162, 2147483648
    %v8176 = vor.u32 1.1754944e-38, %v8175
    %v8177 = vsel %vm8174, %v8176, %v8172
    %v8178 = vmul.f32 1.0, %v8177
    %v8179 = vrcp.pop %v8163
    %v8180 = vmul.f32 %v8163, %v8179
    %v8181 = vsub.f32 1.0, %v8180
    %v8182 = vmul.f32 %v8179, %v8181
    %v8183 = vadd.f32 %v8179, %v8182
    %vm8184 = vweird.f32 %v8163
    %vm8185 = vweird.f32 %v8179
    %vm8186 = vmor %vm8184, %vm8185
    %v8187 = vsel %vm8186, %v8179, %v8183
    %v8188 = vand.u32 2147483647, %v8163
    %vm8189 = vcmp.eq.f32.partialorder %v8188, 8.507059e+37
    %v8190 = vand.u32 %v8163, 2147483648
    %v8191 = vor.u32 1.1754944e-38, %v8190
    %v8192 = vsel %vm8189, %v8191, %v8187
    %v8193 = vmul.f32 1.0, %v8192
    %v8194 = vxor.u32 %v8149, 2147483648
    %v8195 = vxor.u32 %v8153, 2147483648
    %v8196 = vmul.f32 %v8194, 1.442695
    %v8197 = vpow.pop %v8196
    %v8198 = vmul.f32 %v8195, 1.442695
    %v8199 = vpow.pop %v8198
    %v8200 = vadd.f32 %v8197, 1.0
    %v8201 = vadd.f32 %v8199, 1.0
    %v8202 = vrcp.pop %v8200
    %v8203 = vmul.f32 %v8200, %v8202
    %v8204 = vsub.f32 1.0, %v8203
    %v8205 = vmul.f32 %v8202, %v8204
    %v8206 = vadd.f32 %v8202, %v8205
    %vm8207 = vweird.f32 %v8200
    %vm8208 = vweird.f32 %v8202
    %vm8209 = vmor %vm8207, %vm8208
    %v8210 = vsel %vm8209, %v8202, %v8206
    %v8211 = vand.u32 2147483647, %v8200
    %vm8212 = vcmp.eq.f32.partialorder %v8211, 8.507059e+37
    %v8213 = vand.u32 %v8200, 2147483648
    %v8214 = vor.u32 1.1754944e-38, %v8213
    %v8215 = vsel %vm8212, %v8214, %v8210
    %v8216 = vmul.f32 1.0, %v8215
    %v8217 = vrcp.pop %v8201
    %v8218 = vmul.f32 %v8201, %v8217
    %v8219 = vsub.f32 1.0, %v8218
    %v8220 = vmul.f32 %v8217, %v8219
    %v8221 = vadd.f32 %v8217, %v8220
    %vm8222 = vweird.f32 %v8201
    %vm8223 = vweird.f32 %v8217
    %vm8224 = vmor %vm8222, %vm8223
    %v8225 = vsel %vm8224, %v8217, %v8221
    %v8226 = vand.u32 2147483647, %v8201
    %vm8227 = vcmp.eq.f32.partialorder %v8226, 8.507059e+37
    %v8228 = vand.u32 %v8201, 2147483648
    %v8229 = vor.u32 1.1754944e-38, %v8228
    %v8230 = vsel %vm8227, %v8229, %v8225
    %v8231 = vmul.f32 1.0, %v8230
    %v8232 = vtanh.pop %v8150
    %v8233 = vtanh.pop %v8154
    %v8234 = vxor.u32 %v8151, 2147483648
    %v8235 = vxor.u32 %v8155, 2147483648
    %v8236 = vmul.f32 %v8234, 1.442695
    %v8237 = vpow.pop %v8236
    %v8238 = vmul.f32 %v8235, 1.442695
    %v8239 = vpow.pop %v8238
    %v8240 = vadd.f32 %v8237, 1.0
    %v8241 = vadd.f32 %v8239, 1.0
    %v8242 = vrcp.pop %v8240
    %v8243 = vmul.f32 %v8240, %v8242
    %v8244 = vsub.f32 1.0, %v8243
    %v8245 = vmul.f32 %v8242, %v8244
    %v8246 = vadd.f32 %v8242, %v8245
    %vm8247 = vweird.f32 %v8240
    %vm8248 = vweird.f32 %v8242
    %vm8249 = vmor %vm8247, %vm8248
    %v8250 = vsel %vm8249, %v8242, %v8246
    %v8251 = vand.u32 2147483647, %v8240
    %vm8252 = vcmp.eq.f32.partialorder %v8251, 8.507059e+37
    %v8253 = vand.u32 %v8240, 2147483648
    %v8254 = vor.u32 1.1754944e-38, %v8253
    %v8255 = vsel %vm8252, %v8254, %v8250
    %v8256 = vmul.f32 1.0, %v8255
    %v8257 = vrcp.pop %v8241
    %v8258 = vmul.f32 %v8241, %v8257
    %v8259 = vsub.f32 1.0, %v8258
    %v8260 = vmul.f32 %v8257, %v8259
    %v8261 = vadd.f32 %v8257, %v8260
    %vm8262 = vweird.f32 %v8241
    %vm8263 = vweird.f32 %v8257
    %vm8264 = vmor %vm8262, %vm8263
    %v8265 = vsel %vm8264, %v8257, %v8261
    %v8266 = vand.u32 2147483647, %v8241
    %vm8267 = vcmp.eq.f32.partialorder %v8266, 8.507059e+37
    %v8268 = vand.u32 %v8241, 2147483648
    %v8269 = vor.u32 1.1754944e-38, %v8268
    %v8270 = vsel %vm8267, %v8269, %v8265
    %v8271 = vmul.f32 1.0, %v8270
    %v8272 = vmul.f32 %v8216, %v8068
    %v8273 = vmul.f32 %v8231, %v8069
    %v8274 = vmul.f32 %v8178, %v8232
    %v8275 = vmul.f32 %v8193, %v8233
    %v8276 = vadd.f32 %v8272, %v8274
    %v8277 = vadd.f32 %v8273, %v8275
    %v8278 = vtanh.pop %v8276
    %v8279 = vtanh.pop %v8277
    %v8280 = vmul.f32 %v8256, %v8278
    %v8281 = vmul.f32 %v8271, %v8279
    %v8282 = vpack.c.bf16 %v8280, %v8280
    %v8283 = vpack.c.bf16 %v8281, %v8281
    %8284 = vst [vmem:[%s1454] sm:$0xf] %v8282
    %8285 = vst [vmem:[%s1454 + $0x4] sm:$0xf] %v8283
    %v8288 = vunpack.c.l.b16 %v8282
    %v8289 = vunpack.c.l.b16 %v8283
    %v8290 = vpack.c.b16 %v8289, %v8288
    %8292 = vmatpush.bf16.msra.mxu0 %v7632
    %8293 = vmatpush.bf16.msra.mxu0 %v7628
    %8294 = vmatpush.bf16.msra.mxu0 %v7624
    %8295 = vmatpush.bf16.msra.mxu0 %v7620
    %8296 = vmatpush.bf16.msra.mxu0 %v7616
    %8297 = vmatpush.bf16.msra.mxu0 %v7612
    %8298 = vmatpush.bf16.msra.mxu0 %v7608
    %8299 = vmatpush.bf16.msra.mxu0 %v7604
    %8300 = vmatmul.bf16.gmra.mxu0 %v8290
    %v8301 = vpop.f32.mrf.mxu0
    %v8302 = vadd.f32 0.0, %v8301
    %v8303 = vpop.f32.mrf.mxu0
    %v8304 = vadd.f32 0.0, %v8303
    %8305 = vdwg.mxu0
    %8306 = vmatpush.bf16.msra.mxu0 %v7633
    %8307 = vmatpush.bf16.msra.mxu0 %v7629
    %8308 = vmatpush.bf16.msra.mxu0 %v7625
    %8309 = vmatpush.bf16.msra.mxu0 %v7621
    %8310 = vmatpush.bf16.msra.mxu0 %v7617
    %8311 = vmatpush.bf16.msra.mxu0 %v7613
    %8312 = vmatpush.bf16.msra.mxu0 %v7609
    %8313 = vmatpush.bf16.msra.mxu0 %v7605
    %8314 = vmatmul.bf16.gmra.mxu0 %v8290
    %v8315 = vpop.f32.mrf.mxu0
    %v8316 = vadd.f32 0.0, %v8315
    %v8317 = vpop.f32.mrf.mxu0
    %v8318 = vadd.f32 0.0, %v8317
    %8319 = vdwg.mxu0
    %8320 = vmatpush.bf16.msra.mxu0 %v7634
    %8321 = vmatpush.bf16.msra.mxu0 %v7630
    %8322 = vmatpush.bf16.msra.mxu0 %v7626
    %8323 = vmatpush.bf16.msra.mxu0 %v7622
    %8324 = vmatpush.bf16.msra.mxu0 %v7618
    %8325 = vmatpush.bf16.msra.mxu0 %v7614
    %8326 = vmatpush.bf16.msra.mxu0 %v7610
    %8327 = vmatpush.bf16.msra.mxu0 %v7606
    %8328 = vmatmul.bf16.gmra.mxu0 %v8290
    %v8329 = vpop.f32.mrf.mxu0
    %v8330 = vadd.f32 0.0, %v8329
    %v8331 = vpop.f32.mrf.mxu0
    %v8332 = vadd.f32 0.0, %v8331
    %8333 = vdwg.mxu0
    %8334 = vmatpush.bf16.msra.mxu0 %v7635
    %8335 = vmatpush.bf16.msra.mxu0 %v7631
    %8336 = vmatpush.bf16.msra.mxu0 %v7627
    %8337 = vmatpush.bf16.msra.mxu0 %v7623
    %8338 = vmatpush.bf16.msra.mxu0 %v7619
    %8339 = vmatpush.bf16.msra.mxu0 %v7615
    %8340 = vmatpush.bf16.msra.mxu0 %v7611
    %8341 = vmatpush.bf16.msra.mxu0 %v7607
    %8342 = vmatmul.bf16.gmra.mxu0 %v8290
    %v8343 = vpop.f32.mrf.mxu0
    %v8344 = vadd.f32 0.0, %v8343
    %v8345 = vpop.f32.mrf.mxu0
    %v8346 = vadd.f32 0.0, %v8345
    %8347 = vdwg.mxu0
    %v8348 = vld [vmem:[%s1519] sm:$0xff]
    %v8349 = vld [vmem:[%s1519 + $0x8] sm:$0xff]
    %v8350 = vld [vmem:[%s1519 + $0x10] sm:$0xff]
    %v8351 = vld [vmem:[%s1519 + $0x18] sm:$0xff]
    %v8352 = vld [vmem:[%s1519 + $0x20] sm:$0xff]
    %v8353 = vld [vmem:[%s1519 + $0x28] sm:$0xff]
    %v8354 = vld [vmem:[%s1519 + $0x30] sm:$0xff]
    %v8355 = vld [vmem:[%s1519 + $0x38] sm:$0xff]
    %v8356 = vadd.f32 %v8348, %v8302
    %v8357 = vadd.f32 %v8349, %v8316
    %v8358 = vadd.f32 %v8350, %v8330
    %v8359 = vadd.f32 %v8351, %v8344
    %v8360 = vadd.f32 %v8352, %v8304
    %v8361 = vadd.f32 %v8353, %v8318
    %v8362 = vadd.f32 %v8354, %v8332
    %v8363 = vadd.f32 %v8355, %v8346
    %v8364 = vxor.u32 %v8356, 2147483648
    %v8365 = vxor.u32 %v8360, 2147483648
    %v8366 = vmul.f32 %v8364, 1.442695
    %v8367 = vpow.pop %v8366
    %v8368 = vmul.f32 %v8365, 1.442695
    %v8369 = vpow.pop %v8368
    %v8370 = vadd.f32 %v8367, 1.0
    %v8371 = vadd.f32 %v8369, 1.0
    %v8372 = vrcp.pop %v8370
    %v8373 = vmul.f32 %v8370, %v8372
    %v8374 = vsub.f32 1.0, %v8373
    %v8375 = vmul.f32 %v8372, %v8374
    %v8376 = vadd.f32 %v8372, %v8375
    %vm8377 = vweird.f32 %v8370
    %vm8378 = vweird.f32 %v8372
    %vm8379 = vmor %vm8377, %vm8378
    %v8380 = vsel %vm8379, %v8372, %v8376
    %v8381 = vand.u32 2147483647, %v8370
    %vm8382 = vcmp.eq.f32.partialorder %v8381, 8.507059e+37
    %v8383 = vand.u32 %v8370, 2147483648
    %v8384 = vor.u32 1.1754944e-38, %v8383
    %v8385 = vsel %vm8382, %v8384, %v8380
    %v8386 = vmul.f32 1.0, %v8385
    %v8387 = vrcp.pop %v8371
    %v8388 = vmul.f32 %v8371, %v8387
    %v8389 = vsub.f32 1.0, %v8388
    %v8390 = vmul.f32 %v8387, %v8389
    %v8391 = vadd.f32 %v8387, %v8390
    %vm8392 = vweird.f32 %v8371
    %vm8393 = vweird.f32 %v8387
    %vm8394 = vmor %vm8392, %vm8393
    %v8395 = vsel %vm8394, %v8387, %v8391
    %v8396 = vand.u32 2147483647, %v8371
    %vm8397 = vcmp.eq.f32.partialorder %v8396, 8.507059e+37
    %v8398 = vand.u32 %v8371, 2147483648
    %v8399 = vor.u32 1.1754944e-38, %v8398
    %v8400 = vsel %vm8397, %v8399, %v8395
    %v8401 = vmul.f32 1.0, %v8400
    %v8402 = vxor.u32 %v8357, 2147483648
    %v8403 = vxor.u32 %v8361, 2147483648
    %v8404 = vmul.f32 %v8402, 1.442695
    %v8405 = vpow.pop %v8404
    %v8406 = vmul.f32 %v8403, 1.442695
    %v8407 = vpow.pop %v8406
    %v8408 = vadd.f32 %v8405, 1.0
    %v8409 = vadd.f32 %v8407, 1.0
    %v8410 = vrcp.pop %v8408
    %v8411 = vmul.f32 %v8408, %v8410
    %v8412 = vsub.f32 1.0, %v8411
    %v8413 = vmul.f32 %v8410, %v8412
    %v8414 = vadd.f32 %v8410, %v8413
    %vm8415 = vweird.f32 %v8408
    %vm8416 = vweird.f32 %v8410
    %vm8417 = vmor %vm8415, %vm8416
    %v8418 = vsel %vm8417, %v8410, %v8414
    %v8419 = vand.u32 2147483647, %v8408
    %vm8420 = vcmp.eq.f32.partialorder %v8419, 8.507059e+37
    %v8421 = vand.u32 %v8408, 2147483648
    %v8422 = vor.u32 1.1754944e-38, %v8421
    %v8423 = vsel %vm8420, %v8422, %v8418
    %v8424 = vmul.f32 1.0, %v8423
    %v8425 = vrcp.pop %v8409
    %v8426 = vmul.f32 %v8409, %v8425
    %v8427 = vsub.f32 1.0, %v8426
    %v8428 = vmul.f32 %v8425, %v8427
    %v8429 = vadd.f32 %v8425, %v8428
    %vm8430 = vweird.f32 %v8409
    %vm8431 = vweird.f32 %v8425
    %vm8432 = vmor %vm8430, %vm8431
    %v8433 = vsel %vm8432, %v8425, %v8429
    %v8434 = vand.u32 2147483647, %v8409
    %vm8435 = vcmp.eq.f32.partialorder %v8434, 8.507059e+37
    %v8436 = vand.u32 %v8409, 2147483648
    %v8437 = vor.u32 1.1754944e-38, %v8436
    %v8438 = vsel %vm8435, %v8437, %v8433
    %v8439 = vmul.f32 1.0, %v8438
    %v8440 = vtanh.pop %v8358
    %v8441 = vtanh.pop %v8362
    %v8442 = vxor.u32 %v8359, 2147483648
    %v8443 = vxor.u32 %v8363, 2147483648
    %v8444 = vmul.f32 %v8442, 1.442695
    %v8445 = vpow.pop %v8444
    %v8446 = vmul.f32 %v8443, 1.442695
    %v8447 = vpow.pop %v8446
    %v8448 = vadd.f32 %v8445, 1.0
    %v8449 = vadd.f32 %v8447, 1.0
    %v8450 = vrcp.pop %v8448
    %v8451 = vmul.f32 %v8448, %v8450
    %v8452 = vsub.f32 1.0, %v8451
    %v8453 = vmul.f32 %v8450, %v8452
    %v8454 = vadd.f32 %v8450, %v8453
    %vm8455 = vweird.f32 %v8448
    %vm8456 = vweird.f32 %v8450
    %vm8457 = vmor %vm8455, %vm8456
    %v8458 = vsel %vm8457, %v8450, %v8454
    %v8459 = vand.u32 2147483647, %v8448
    %vm8460 = vcmp.eq.f32.partialorder %v8459, 8.507059e+37
    %v8461 = vand.u32 %v8448, 2147483648
    %v8462 = vor.u32 1.1754944e-38, %v8461
    %v8463 = vsel %vm8460, %v8462, %v8458
    %v8464 = vmul.f32 1.0, %v8463
    %v8465 = vrcp.pop %v8449
    %v8466 = vmul.f32 %v8449, %v8465
    %v8467 = vsub.f32 1.0, %v8466
    %v8468 = vmul.f32 %v8465, %v8467
    %v8469 = vadd.f32 %v8465, %v8468
    %vm8470 = vweird.f32 %v8449
    %vm8471 = vweird.f32 %v8465
    %vm8472 = vmor %vm8470, %vm8471
    %v8473 = vsel %vm8472, %v8465, %v8469
    %v8474 = vand.u32 2147483647, %v8449
    %vm8475 = vcmp.eq.f32.partialorder %v8474, 8.507059e+37
    %v8476 = vand.u32 %v8449, 2147483648
    %v8477 = vor.u32 1.1754944e-38, %v8476
    %v8478 = vsel %vm8475, %v8477, %v8473
    %v8479 = vmul.f32 1.0, %v8478
    %v8480 = vmul.f32 %v8424, %v8276
    %v8481 = vmul.f32 %v8439, %v8277
    %v8482 = vmul.f32 %v8386, %v8440
    %v8483 = vmul.f32 %v8401, %v8441
    %v8484 = vadd.f32 %v8480, %v8482
    %v8485 = vadd.f32 %v8481, %v8483
    %v8486 = vtanh.pop %v8484
    %v8487 = vtanh.pop %v8485
    %v8488 = vmul.f32 %v8464, %v8486
    %v8489 = vmul.f32 %v8479, %v8487
    %v8490 = vpack.c.bf16 %v8488, %v8488
    %v8491 = vpack.c.bf16 %v8489, %v8489
    %8492 = vst [vmem:[%s1664] sm:$0xf] %v8490
    %8493 = vst [vmem:[%s1664 + $0x4] sm:$0xf] %v8491
    %v8496 = vunpack.c.l.b16 %v8490
    %v8497 = vunpack.c.l.b16 %v8491
    %v8498 = vpack.c.b16 %v8497, %v8496
    %8500 = vmatpush.bf16.msra.mxu0 %v7632
    %8501 = vmatpush.bf16.msra.mxu0 %v7628
    %8502 = vmatpush.bf16.msra.mxu0 %v7624
    %8503 = vmatpush.bf16.msra.mxu0 %v7620
    %8504 = vmatpush.bf16.msra.mxu0 %v7616
    %8505 = vmatpush.bf16.msra.mxu0 %v7612
    %8506 = vmatpush.bf16.msra.mxu0 %v7608
    %8507 = vmatpush.bf16.msra.mxu0 %v7604
    %8508 = vmatmul.bf16.gmra.mxu0 %v8498
    %v8509 = vpop.f32.mrf.mxu0
    %v8510 = vadd.f32 0.0, %v8509
    %v8511 = vpop.f32.mrf.mxu0
    %v8512 = vadd.f32 0.0, %v8511
    %8513 = vdwg.mxu0
    %8514 = vmatpush.bf16.msra.mxu0 %v7633
    %8515 = vmatpush.bf16.msra.mxu0 %v7629
    %8516 = vmatpush.bf16.msra.mxu0 %v7625
    %8517 = vmatpush.bf16.msra.mxu0 %v7621
    %8518 = vmatpush.bf16.msra.mxu0 %v7617
    %8519 = vmatpush.bf16.msra.mxu0 %v7613
    %8520 = vmatpush.bf16.msra.mxu0 %v7609
    %8521 = vmatpush.bf16.msra.mxu0 %v7605
    %8522 = vmatmul.bf16.gmra.mxu0 %v8498
    %v8523 = vpop.f32.mrf.mxu0
    %v8524 = vadd.f32 0.0, %v8523
    %v8525 = vpop.f32.mrf.mxu0
    %v8526 = vadd.f32 0.0, %v8525
    %8527 = vdwg.mxu0
    %8528 = vmatpush.bf16.msra.mxu0 %v7634
    %8529 = vmatpush.bf16.msra.mxu0 %v7630
    %8530 = vmatpush.bf16.msra.mxu0 %v7626
    %8531 = vmatpush.bf16.msra.mxu0 %v7622
    %8532 = vmatpush.bf16.msra.mxu0 %v7618
    %8533 = vmatpush.bf16.msra.mxu0 %v7614
    %8534 = vmatpush.bf16.msra.mxu0 %v7610
    %8535 = vmatpush.bf16.msra.mxu0 %v7606
    %8536 = vmatmul.bf16.gmra.mxu0 %v8498
    %v8537 = vpop.f32.mrf.mxu0
    %v8538 = vadd.f32 0.0, %v8537
    %v8539 = vpop.f32.mrf.mxu0
    %v8540 = vadd.f32 0.0, %v8539
    %8541 = vdwg.mxu0
    %8542 = vmatpush.bf16.msra.mxu0 %v7635
    %8543 = vmatpush.bf16.msra.mxu0 %v7631
    %8544 = vmatpush.bf16.msra.mxu0 %v7627
    %8545 = vmatpush.bf16.msra.mxu0 %v7623
    %8546 = vmatpush.bf16.msra.mxu0 %v7619
    %8547 = vmatpush.bf16.msra.mxu0 %v7615
    %8548 = vmatpush.bf16.msra.mxu0 %v7611
    %8549 = vmatpush.bf16.msra.mxu0 %v7607
    %8550 = vmatmul.bf16.gmra.mxu0 %v8498
    %v8551 = vpop.f32.mrf.mxu0
    %v8552 = vadd.f32 0.0, %v8551
    %v8553 = vpop.f32.mrf.mxu0
    %v8554 = vadd.f32 0.0, %v8553
    %8555 = vdwg.mxu0
    %v8556 = vld [vmem:[%s1729] sm:$0xff]
    %v8557 = vld [vmem:[%s1729 + $0x8] sm:$0xff]
    %v8558 = vld [vmem:[%s1729 + $0x10] sm:$0xff]
    %v8559 = vld [vmem:[%s1729 + $0x18] sm:$0xff]
    %v8560 = vld [vmem:[%s1729 + $0x20] sm:$0xff]
    %v8561 = vld [vmem:[%s1729 + $0x28] sm:$0xff]
    %v8562 = vld [vmem:[%s1729 + $0x30] sm:$0xff]
    %v8563 = vld [vmem:[%s1729 + $0x38] sm:$0xff]
    %v8564 = vadd.f32 %v8556, %v8510
    %v8565 = vadd.f32 %v8557, %v8524
    %v8566 = vadd.f32 %v8558, %v8538
    %v8567 = vadd.f32 %v8559, %v8552
    %v8568 = vadd.f32 %v8560, %v8512
    %v8569 = vadd.f32 %v8561, %v8526
    %v8570 = vadd.f32 %v8562, %v8540
    %v8571 = vadd.f32 %v8563, %v8554
    %v8572 = vxor.u32 %v8564, 2147483648
    %v8573 = vxor.u32 %v8568, 2147483648
    %v8574 = vmul.f32 %v8572, 1.442695
    %v8575 = vpow.pop %v8574
    %v8576 = vmul.f32 %v8573, 1.442695
    %v8577 = vpow.pop %v8576
    %v8578 = vadd.f32 %v8575, 1.0
    %v8579 = vadd.f32 %v8577, 1.0
    %v8580 = vrcp.pop %v8578
    %v8581 = vmul.f32 %v8578, %v8580
    %v8582 = vsub.f32 1.0, %v8581
    %v8583 = vmul.f32 %v8580, %v8582
    %v8584 = vadd.f32 %v8580, %v8583
    %vm8585 = vweird.f32 %v8578
    %vm8586 = vweird.f32 %v8580
    %vm8587 = vmor %vm8585, %vm8586
    %v8588 = vsel %vm8587, %v8580, %v8584
    %v8589 = vand.u32 2147483647, %v8578
    %vm8590 = vcmp.eq.f32.partialorder %v8589, 8.507059e+37
    %v8591 = vand.u32 %v8578, 2147483648
    %v8592 = vor.u32 1.1754944e-38, %v8591
    %v8593 = vsel %vm8590, %v8592, %v8588
    %v8594 = vmul.f32 1.0, %v8593
    %v8595 = vrcp.pop %v8579
    %v8596 = vmul.f32 %v8579, %v8595
    %v8597 = vsub.f32 1.0, %v8596
    %v8598 = vmul.f32 %v8595, %v8597
    %v8599 = vadd.f32 %v8595, %v8598
    %vm8600 = vweird.f32 %v8579
    %vm8601 = vweird.f32 %v8595
    %vm8602 = vmor %vm8600, %vm8601
    %v8603 = vsel %vm8602, %v8595, %v8599
    %v8604 = vand.u32 2147483647, %v8579
    %vm8605 = vcmp.eq.f32.partialorder %v8604, 8.507059e+37
    %v8606 = vand.u32 %v8579, 2147483648
    %v8607 = vor.u32 1.1754944e-38, %v8606
    %v8608 = vsel %vm8605, %v8607, %v8603
    %v8609 = vmul.f32 1.0, %v8608
    %v8610 = vxor.u32 %v8565, 2147483648
    %v8611 = vxor.u32 %v8569, 2147483648
    %v8612 = vmul.f32 %v8610, 1.442695
    %v8613 = vpow.pop %v8612
    %v8614 = vmul.f32 %v8611, 1.442695
    %v8615 = vpow.pop %v8614
    %v8616 = vadd.f32 %v8613, 1.0
    %v8617 = vadd.f32 %v8615, 1.0
    %v8618 = vrcp.pop %v8616
    %v8619 = vmul.f32 %v8616, %v8618
    %v8620 = vsub.f32 1.0, %v8619
    %v8621 = vmul.f32 %v8618, %v8620
    %v8622 = vadd.f32 %v8618, %v8621
    %vm8623 = vweird.f32 %v8616
    %vm8624 = vweird.f32 %v8618
    %vm8625 = vmor %vm8623, %vm8624
    %v8626 = vsel %vm8625, %v8618, %v8622
    %v8627 = vand.u32 2147483647, %v8616
    %vm8628 = vcmp.eq.f32.partialorder %v8627, 8.507059e+37
    %v8629 = vand.u32 %v8616, 2147483648
    %v8630 = vor.u32 1.1754944e-38, %v8629
    %v8631 = vsel %vm8628, %v8630, %v8626
    %v8632 = vmul.f32 1.0, %v8631
    %v8633 = vrcp.pop %v8617
    %v8634 = vmul.f32 %v8617, %v8633
    %v8635 = vsub.f32 1.0, %v8634
    %v8636 = vmul.f32 %v8633, %v8635
    %v8637 = vadd.f32 %v8633, %v8636
    %vm8638 = vweird.f32 %v8617
    %vm8639 = vweird.f32 %v8633
    %vm8640 = vmor %vm8638, %vm8639
    %v8641 = vsel %vm8640, %v8633, %v8637
    %v8642 = vand.u32 2147483647, %v8617
    %vm8643 = vcmp.eq.f32.partialorder %v8642, 8.507059e+37
    %v8644 = vand.u32 %v8617, 2147483648
    %v8645 = vor.u32 1.1754944e-38, %v8644
    %v8646 = vsel %vm8643, %v8645, %v8641
    %v8647 = vmul.f32 1.0, %v8646
    %v8648 = vtanh.pop %v8566
    %v8649 = vtanh.pop %v8570
    %v8650 = vxor.u32 %v8567, 2147483648
    %v8651 = vxor.u32 %v8571, 2147483648
    %v8652 = vmul.f32 %v8650, 1.442695
    %v8653 = vpow.pop %v8652
    %v8654 = vmul.f32 %v8651, 1.442695
    %v8655 = vpow.pop %v8654
    %v8656 = vadd.f32 %v8653, 1.0
    %v8657 = vadd.f32 %v8655, 1.0
    %v8658 = vrcp.pop %v8656
    %v8659 = vmul.f32 %v8656, %v8658
    %v8660 = vsub.f32 1.0, %v8659
    %v8661 = vmul.f32 %v8658, %v8660
    %v8662 = vadd.f32 %v8658, %v8661
    %vm8663 = vweird.f32 %v8656
    %vm8664 = vweird.f32 %v8658
    %vm8665 = vmor %vm8663, %vm8664
    %v8666 = vsel %vm8665, %v8658, %v8662
    %v8667 = vand.u32 2147483647, %v8656
    %vm8668 = vcmp.eq.f32.partialorder %v8667, 8.507059e+37
    %v8669 = vand.u32 %v8656, 2147483648
    %v8670 = vor.u32 1.1754944e-38, %v8669
    %v8671 = vsel %vm8668, %v8670, %v8666
    %v8672 = vmul.f32 1.0, %v8671
    %v8673 = vrcp.pop %v8657
    %v8674 = vmul.f32 %v8657, %v8673
    %v8675 = vsub.f32 1.0, %v8674
    %v8676 = vmul.f32 %v8673, %v8675
    %v8677 = vadd.f32 %v8673, %v8676
    %vm8678 = vweird.f32 %v8657
    %vm8679 = vweird.f32 %v8673
    %vm8680 = vmor %vm8678, %vm8679
    %v8681 = vsel %vm8680, %v8673, %v8677
    %v8682 = vand.u32 2147483647, %v8657
    %vm8683 = vcmp.eq.f32.partialorder %v8682, 8.507059e+37
    %v8684 = vand.u32 %v8657, 2147483648
    %v8685 = vor.u32 1.1754944e-38, %v8684
    %v8686 = vsel %vm8683, %v8685, %v8681
    %v8687 = vmul.f32 1.0, %v8686
    %v8688 = vmul.f32 %v8632, %v8484
    %v8689 = vmul.f32 %v8647, %v8485
    %v8690 = vmul.f32 %v8594, %v8648
    %v8691 = vmul.f32 %v8609, %v8649
    %v8692 = vadd.f32 %v8688, %v8690
    %v8693 = vadd.f32 %v8689, %v8691
    %v8694 = vtanh.pop %v8692
    %v8695 = vtanh.pop %v8693
    %v8696 = vmul.f32 %v8672, %v8694
    %v8697 = vmul.f32 %v8687, %v8695
    %v8698 = vpack.c.bf16 %v8696, %v8696
    %v8699 = vpack.c.bf16 %v8697, %v8697
    %8700 = vst [vmem:[%s1874] sm:$0xf] %v8698
    %8701 = vst [vmem:[%s1874 + $0x4] sm:$0xf] %v8699
    %v8704 = vunpack.c.l.b16 %v8698
    %v8705 = vunpack.c.l.b16 %v8699
    %v8706 = vpack.c.b16 %v8705, %v8704
    %8708 = vmatpush.bf16.msra.mxu0 %v7632
    %8709 = vmatpush.bf16.msra.mxu0 %v7628
    %8710 = vmatpush.bf16.msra.mxu0 %v7624
    %8711 = vmatpush.bf16.msra.mxu0 %v7620
    %8712 = vmatpush.bf16.msra.mxu0 %v7616
    %8713 = vmatpush.bf16.msra.mxu0 %v7612
    %8714 = vmatpush.bf16.msra.mxu0 %v7608
    %8715 = vmatpush.bf16.msra.mxu0 %v7604
    %8716 = vmatmul.bf16.gmra.mxu0 %v8706
    %v8717 = vpop.f32.mrf.mxu0
    %v8718 = vadd.f32 0.0, %v8717
    %v8719 = vpop.f32.mrf.mxu0
    %v8720 = vadd.f32 0.0, %v8719
    %8721 = vdwg.mxu0
    %8722 = vmatpush.bf16.msra.mxu0 %v7633
    %8723 = vmatpush.bf16.msra.mxu0 %v7629
    %8724 = vmatpush.bf16.msra.mxu0 %v7625
    %8725 = vmatpush.bf16.msra.mxu0 %v7621
    %8726 = vmatpush.bf16.msra.mxu0 %v7617
    %8727 = vmatpush.bf16.msra.mxu0 %v7613
    %8728 = vmatpush.bf16.msra.mxu0 %v7609
    %8729 = vmatpush.bf16.msra.mxu0 %v7605
    %8730 = vmatmul.bf16.gmra.mxu0 %v8706
    %v8731 = vpop.f32.mrf.mxu0
    %v8732 = vadd.f32 0.0, %v8731
    %v8733 = vpop.f32.mrf.mxu0
    %v8734 = vadd.f32 0.0, %v8733
    %8735 = vdwg.mxu0
    %8736 = vmatpush.bf16.msra.mxu0 %v7634
    %8737 = vmatpush.bf16.msra.mxu0 %v7630
    %8738 = vmatpush.bf16.msra.mxu0 %v7626
    %8739 = vmatpush.bf16.msra.mxu0 %v7622
    %8740 = vmatpush.bf16.msra.mxu0 %v7618
    %8741 = vmatpush.bf16.msra.mxu0 %v7614
    %8742 = vmatpush.bf16.msra.mxu0 %v7610
    %8743 = vmatpush.bf16.msra.mxu0 %v7606
    %8744 = vmatmul.bf16.gmra.mxu0 %v8706
    %v8745 = vpop.f32.mrf.mxu0
    %v8746 = vadd.f32 0.0, %v8745
    %v8747 = vpop.f32.mrf.mxu0
    %v8748 = vadd.f32 0.0, %v8747
    %8749 = vdwg.mxu0
    %8750 = vmatpush.bf16.msra.mxu0 %v7635
    %8751 = vmatpush.bf16.msra.mxu0 %v7631
    %8752 = vmatpush.bf16.msra.mxu0 %v7627
    %8753 = vmatpush.bf16.msra.mxu0 %v7623
    %8754 = vmatpush.bf16.msra.mxu0 %v7619
    %8755 = vmatpush.bf16.msra.mxu0 %v7615
    %8756 = vmatpush.bf16.msra.mxu0 %v7611
    %8757 = vmatpush.bf16.msra.mxu0 %v7607
    %8758 = vmatmul.bf16.gmra.mxu0 %v8706
    %v8759 = vpop.f32.mrf.mxu0
    %v8760 = vadd.f32 0.0, %v8759
    %v8761 = vpop.f32.mrf.mxu0
    %v8762 = vadd.f32 0.0, %v8761
    %8763 = vdwg.mxu0
    %v8764 = vld [vmem:[%s1939] sm:$0xff]
    %v8765 = vld [vmem:[%s1939 + $0x8] sm:$0xff]
    %v8766 = vld [vmem:[%s1939 + $0x10] sm:$0xff]
    %v8767 = vld [vmem:[%s1939 + $0x18] sm:$0xff]
    %v8768 = vld [vmem:[%s1939 + $0x20] sm:$0xff]
    %v8769 = vld [vmem:[%s1939 + $0x28] sm:$0xff]
    %v8770 = vld [vmem:[%s1939 + $0x30] sm:$0xff]
    %v8771 = vld [vmem:[%s1939 + $0x38] sm:$0xff]
    %v8772 = vadd.f32 %v8764, %v8718
    %v8773 = vadd.f32 %v8765, %v8732
    %v8774 = vadd.f32 %v8766, %v8746
    %v8775 = vadd.f32 %v8767, %v8760
    %v8776 = vadd.f32 %v8768, %v8720
    %v8777 = vadd.f32 %v8769, %v8734
    %v8778 = vadd.f32 %v8770, %v8748
    %v8779 = vadd.f32 %v8771, %v8762
    %v8780 = vxor.u32 %v8772, 2147483648
    %v8781 = vxor.u32 %v8776, 2147483648
    %v8782 = vmul.f32 %v8780, 1.442695
    %v8783 = vpow.pop %v8782
    %v8784 = vmul.f32 %v8781, 1.442695
    %v8785 = vpow.pop %v8784
    %v8786 = vadd.f32 %v8783, 1.0
    %v8787 = vadd.f32 %v8785, 1.0
    %v8788 = vrcp.pop %v8786
    %v8789 = vmul.f32 %v8786, %v8788
    %v8790 = vsub.f32 1.0, %v8789
    %v8791 = vmul.f32 %v8788, %v8790
    %v8792 = vadd.f32 %v8788, %v8791
    %vm8793 = vweird.f32 %v8786
    %vm8794 = vweird.f32 %v8788
    %vm8795 = vmor %vm8793, %vm8794
    %v8796 = vsel %vm8795, %v8788, %v8792
    %v8797 = vand.u32 2147483647, %v8786
    %vm8798 = vcmp.eq.f32.partialorder %v8797, 8.507059e+37
    %v8799 = vand.u32 %v8786, 2147483648
    %v8800 = vor.u32 1.1754944e-38, %v8799
    %v8801 = vsel %vm8798, %v8800, %v8796
    %v8802 = vmul.f32 1.0, %v8801
    %v8803 = vrcp.pop %v8787
    %v8804 = vmul.f32 %v8787, %v8803
    %v8805 = vsub.f32 1.0, %v8804
    %v8806 = vmul.f32 %v8803, %v8805
    %v8807 = vadd.f32 %v8803, %v8806
    %vm8808 = vweird.f32 %v8787
    %vm8809 = vweird.f32 %v8803
    %vm8810 = vmor %vm8808, %vm8809
    %v8811 = vsel %vm8810, %v8803, %v8807
    %v8812 = vand.u32 2147483647, %v8787
    %vm8813 = vcmp.eq.f32.partialorder %v8812, 8.507059e+37
    %v8814 = vand.u32 %v8787, 2147483648
    %v8815 = vor.u32 1.1754944e-38, %v8814
    %v8816 = vsel %vm8813, %v8815, %v8811
    %v8817 = vmul.f32 1.0, %v8816
    %v8818 = vxor.u32 %v8773, 2147483648
    %v8819 = vxor.u32 %v8777, 2147483648
    %v8820 = vmul.f32 %v8818, 1.442695
    %v8821 = vpow.pop %v8820
    %v8822 = vmul.f32 %v8819, 1.442695
    %v8823 = vpow.pop %v8822
    %v8824 = vadd.f32 %v8821, 1.0
    %v8825 = vadd.f32 %v8823, 1.0
    %v8826 = vrcp.pop %v8824
    %v8827 = vmul.f32 %v8824, %v8826
    %v8828 = vsub.f32 1.0, %v8827
    %v8829 = vmul.f32 %v8826, %v8828
    %v8830 = vadd.f32 %v8826, %v8829
    %vm8831 = vweird.f32 %v8824
    %vm8832 = vweird.f32 %v8826
    %vm8833 = vmor %vm8831, %vm8832
    %v8834 = vsel %vm8833, %v8826, %v8830
    %v8835 = vand.u32 2147483647, %v8824
    %vm8836 = vcmp.eq.f32.partialorder %v8835, 8.507059e+37
    %v8837 = vand.u32 %v8824, 2147483648
    %v8838 = vor.u32 1.1754944e-38, %v8837
    %v8839 = vsel %vm8836, %v8838, %v8834
    %v8840 = vmul.f32 1.0, %v8839
    %v8841 = vrcp.pop %v8825
    %v8842 = vmul.f32 %v8825, %v8841
    %v8843 = vsub.f32 1.0, %v8842
    %v8844 = vmul.f32 %v8841, %v8843
    %v8845 = vadd.f32 %v8841, %v8844
    %vm8846 = vweird.f32 %v8825
    %vm8847 = vweird.f32 %v8841
    %vm8848 = vmor %vm8846, %vm8847
    %v8849 = vsel %vm8848, %v8841, %v8845
    %v8850 = vand.u32 2147483647, %v8825
    %vm8851 = vcmp.eq.f32.partialorder %v8850, 8.507059e+37
    %v8852 = vand.u32 %v8825, 2147483648
    %v8853 = vor.u32 1.1754944e-38, %v8852
    %v8854 = vsel %vm8851, %v8853, %v8849
    %v8855 = vmul.f32 1.0, %v8854
    %v8856 = vtanh.pop %v8774
    %v8857 = vtanh.pop %v8778
    %v8858 = vxor.u32 %v8775, 2147483648
    %v8859 = vxor.u32 %v8779, 2147483648
    %v8860 = vmul.f32 %v8858, 1.442695
    %v8861 = vpow.pop %v8860
    %v8862 = vmul.f32 %v8859, 1.442695
    %v8863 = vpow.pop %v8862
    %v8864 = vadd.f32 %v8861, 1.0
    %v8865 = vadd.f32 %v8863, 1.0
    %v8866 = vrcp.pop %v8864
    %v8867 = vmul.f32 %v8864, %v8866
    %v8868 = vsub.f32 1.0, %v8867
    %v8869 = vmul.f32 %v8866, %v8868
    %v8870 = vadd.f32 %v8866, %v8869
    %vm8871 = vweird.f32 %v8864
    %vm8872 = vweird.f32 %v8866
    %vm8873 = vmor %vm8871, %vm8872
    %v8874 = vsel %vm8873, %v8866, %v8870
    %v8875 = vand.u32 2147483647, %v8864
    %vm8876 = vcmp.eq.f32.partialorder %v8875, 8.507059e+37
    %v8877 = vand.u32 %v8864, 2147483648
    %v8878 = vor.u32 1.1754944e-38, %v8877
    %v8879 = vsel %vm8876, %v8878, %v8874
    %v8880 = vmul.f32 1.0, %v8879
    %v8881 = vrcp.pop %v8865
    %v8882 = vmul.f32 %v8865, %v8881
    %v8883 = vsub.f32 1.0, %v8882
    %v8884 = vmul.f32 %v8881, %v8883
    %v8885 = vadd.f32 %v8881, %v8884
    %vm8886 = vweird.f32 %v8865
    %vm8887 = vweird.f32 %v8881
    %vm8888 = vmor %vm8886, %vm8887
    %v8889 = vsel %vm8888, %v8881, %v8885
    %v8890 = vand.u32 2147483647, %v8865
    %vm8891 = vcmp.eq.f32.partialorder %v8890, 8.507059e+37
    %v8892 = vand.u32 %v8865, 2147483648
    %v8893 = vor.u32 1.1754944e-38, %v8892
    %v8894 = vsel %vm8891, %v8893, %v8889
    %v8895 = vmul.f32 1.0, %v8894
    %v8896 = vmul.f32 %v8840, %v8692
    %v8897 = vmul.f32 %v8855, %v8693
    %v8898 = vmul.f32 %v8802, %v8856
    %v8899 = vmul.f32 %v8817, %v8857
    %v8900 = vadd.f32 %v8896, %v8898
    %v8901 = vadd.f32 %v8897, %v8899
    %v8902 = vtanh.pop %v8900
    %v8903 = vtanh.pop %v8901
    %v8904 = vmul.f32 %v8880, %v8902
    %v8905 = vmul.f32 %v8895, %v8903
    %v8906 = vpack.c.bf16 %v8904, %v8904
    %v8907 = vpack.c.bf16 %v8905, %v8905
    %8908 = vst [vmem:[%s2084] sm:$0xf] %v8906
    %8909 = vst [vmem:[%s2084 + $0x4] sm:$0xf] %v8907
    %v8912 = vunpack.c.l.b16 %v8906
    %v8913 = vunpack.c.l.b16 %v8907
    %v8914 = vpack.c.b16 %v8913, %v8912
    %8916 = vmatpush.bf16.msra.mxu0 %v7632
    %8917 = vmatpush.bf16.msra.mxu0 %v7628
    %8918 = vmatpush.bf16.msra.mxu0 %v7624
    %8919 = vmatpush.bf16.msra.mxu0 %v7620
    %8920 = vmatpush.bf16.msra.mxu0 %v7616
    %8921 = vmatpush.bf16.msra.mxu0 %v7612
    %8922 = vmatpush.bf16.msra.mxu0 %v7608
    %8923 = vmatpush.bf16.msra.mxu0 %v7604
    %8924 = vmatmul.bf16.gmra.mxu0 %v8914
    %v8925 = vpop.f32.mrf.mxu0
    %v8926 = vadd.f32 0.0, %v8925
    %v8927 = vpop.f32.mrf.mxu0
    %v8928 = vadd.f32 0.0, %v8927
    %8929 = vdwg.mxu0
    %8930 = vmatpush.bf16.msra.mxu0 %v7633
    %8931 = vmatpush.bf16.msra.mxu0 %v7629
    %8932 = vmatpush.bf16.msra.mxu0 %v7625
    %8933 = vmatpush.bf16.msra.mxu0 %v7621
    %8934 = vmatpush.bf16.msra.mxu0 %v7617
    %8935 = vmatpush.bf16.msra.mxu0 %v7613
    %8936 = vmatpush.bf16.msra.mxu0 %v7609
    %8937 = vmatpush.bf16.msra.mxu0 %v7605
    %8938 = vmatmul.bf16.gmra.mxu0 %v8914
    %v8939 = vpop.f32.mrf.mxu0
    %v8940 = vadd.f32 0.0, %v8939
    %v8941 = vpop.f32.mrf.mxu0
    %v8942 = vadd.f32 0.0, %v8941
    %8943 = vdwg.mxu0
    %8944 = vmatpush.bf16.msra.mxu0 %v7634
    %8945 = vmatpush.bf16.msra.mxu0 %v7630
    %8946 = vmatpush.bf16.msra.mxu0 %v7626
    %8947 = vmatpush.bf16.msra.mxu0 %v7622
    %8948 = vmatpush.bf16.msra.mxu0 %v7618
    %8949 = vmatpush.bf16.msra.mxu0 %v7614
    %8950 = vmatpush.bf16.msra.mxu0 %v7610
    %8951 = vmatpush.bf16.msra.mxu0 %v7606
    %8952 = vmatmul.bf16.gmra.mxu0 %v8914
    %v8953 = vpop.f32.mrf.mxu0
    %v8954 = vadd.f32 0.0, %v8953
    %v8955 = vpop.f32.mrf.mxu0
    %v8956 = vadd.f32 0.0, %v8955
    %8957 = vdwg.mxu0
    %8958 = vmatpush.bf16.msra.mxu0 %v7635
    %8959 = vmatpush.bf16.msra.mxu0 %v7631
    %8960 = vmatpush.bf16.msra.mxu0 %v7627
    %8961 = vmatpush.bf16.msra.mxu0 %v7623
    %8962 = vmatpush.bf16.msra.mxu0 %v7619
    %8963 = vmatpush.bf16.msra.mxu0 %v7615
    %8964 = vmatpush.bf16.msra.mxu0 %v7611
    %8965 = vmatpush.bf16.msra.mxu0 %v7607
    %8966 = vmatmul.bf16.gmra.mxu0 %v8914
    %v8967 = vpop.f32.mrf.mxu0
    %v8968 = vadd.f32 0.0, %v8967
    %v8969 = vpop.f32.mrf.mxu0
    %v8970 = vadd.f32 0.0, %v8969
    %8971 = vdwg.mxu0
    %v8972 = vld [vmem:[%s2149] sm:$0xff]
    %v8973 = vld [vmem:[%s2149 + $0x8] sm:$0xff]
    %v8974 = vld [vmem:[%s2149 + $0x10] sm:$0xff]
    %v8975 = vld [vmem:[%s2149 + $0x18] sm:$0xff]
    %v8976 = vld [vmem:[%s2149 + $0x20] sm:$0xff]
    %v8977 = vld [vmem:[%s2149 + $0x28] sm:$0xff]
    %v8978 = vld [vmem:[%s2149 + $0x30] sm:$0xff]
    %v8979 = vld [vmem:[%s2149 + $0x38] sm:$0xff]
    %v8980 = vadd.f32 %v8972, %v8926
    %v8981 = vadd.f32 %v8973, %v8940
    %v8982 = vadd.f32 %v8974, %v8954
    %v8983 = vadd.f32 %v8975, %v8968
    %v8984 = vadd.f32 %v8976, %v8928
    %v8985 = vadd.f32 %v8977, %v8942
    %v8986 = vadd.f32 %v8978, %v8956
    %v8987 = vadd.f32 %v8979, %v8970
    %v8988 = vxor.u32 %v8980, 2147483648
    %v8989 = vxor.u32 %v8984, 2147483648
    %v8990 = vmul.f32 %v8988, 1.442695
    %v8991 = vpow.pop %v8990
    %v8992 = vmul.f32 %v8989, 1.442695
    %v8993 = vpow.pop %v8992
    %v8994 = vadd.f32 %v8991, 1.0
    %v8995 = vadd.f32 %v8993, 1.0
    %v8996 = vrcp.pop %v8994
    %v8997 = vmul.f32 %v8994, %v8996
    %v8998 = vsub.f32 1.0, %v8997
    %v8999 = vmul.f32 %v8996, %v8998
    %v9000 = vadd.f32 %v8996, %v8999
    %vm9001 = vweird.f32 %v8994
    %vm9002 = vweird.f32 %v8996
    %vm9003 = vmor %vm9001, %vm9002
    %v9004 = vsel %vm9003, %v8996, %v9000
    %v9005 = vand.u32 2147483647, %v8994
    %vm9006 = vcmp.eq.f32.partialorder %v9005, 8.507059e+37
    %v9007 = vand.u32 %v8994, 2147483648
    %v9008 = vor.u32 1.1754944e-38, %v9007
    %v9009 = vsel %vm9006, %v9008, %v9004
    %v9010 = vmul.f32 1.0, %v9009
    %v9011 = vrcp.pop %v8995
    %v9012 = vmul.f32 %v8995, %v9011
    %v9013 = vsub.f32 1.0, %v9012
    %v9014 = vmul.f32 %v9011, %v9013
    %v9015 = vadd.f32 %v9011, %v9014
    %vm9016 = vweird.f32 %v8995
    %vm9017 = vweird.f32 %v9011
    %vm9018 = vmor %vm9016, %vm9017
    %v9019 = vsel %vm9018, %v9011, %v9015
    %v9020 = vand.u32 2147483647, %v8995
    %vm9021 = vcmp.eq.f32.partialorder %v9020, 8.507059e+37
    %v9022 = vand.u32 %v8995, 2147483648
    %v9023 = vor.u32 1.1754944e-38, %v9022
    %v9024 = vsel %vm9021, %v9023, %v9019
    %v9025 = vmul.f32 1.0, %v9024
    %v9026 = vxor.u32 %v8981, 2147483648
    %v9027 = vxor.u32 %v8985, 2147483648
    %v9028 = vmul.f32 %v9026, 1.442695
    %v9029 = vpow.pop %v9028
    %v9030 = vmul.f32 %v9027, 1.442695
    %v9031 = vpow.pop %v9030
    %v9032 = vadd.f32 %v9029, 1.0
    %v9033 = vadd.f32 %v9031, 1.0
    %v9034 = vrcp.pop %v9032
    %v9035 = vmul.f32 %v9032, %v9034
    %v9036 = vsub.f32 1.0, %v9035
    %v9037 = vmul.f32 %v9034, %v9036
    %v9038 = vadd.f32 %v9034, %v9037
    %vm9039 = vweird.f32 %v9032
    %vm9040 = vweird.f32 %v9034
    %vm9041 = vmor %vm9039, %vm9040
    %v9042 = vsel %vm9041, %v9034, %v9038
    %v9043 = vand.u32 2147483647, %v9032
    %vm9044 = vcmp.eq.f32.partialorder %v9043, 8.507059e+37
    %v9045 = vand.u32 %v9032, 2147483648
    %v9046 = vor.u32 1.1754944e-38, %v9045
    %v9047 = vsel %vm9044, %v9046, %v9042
    %v9048 = vmul.f32 1.0, %v9047
    %v9049 = vrcp.pop %v9033
    %v9050 = vmul.f32 %v9033, %v9049
    %v9051 = vsub.f32 1.0, %v9050
    %v9052 = vmul.f32 %v9049, %v9051
    %v9053 = vadd.f32 %v9049, %v9052
    %vm9054 = vweird.f32 %v9033
    %vm9055 = vweird.f32 %v9049
    %vm9056 = vmor %vm9054, %vm9055
    %v9057 = vsel %vm9056, %v9049, %v9053
    %v9058 = vand.u32 2147483647, %v9033
    %vm9059 = vcmp.eq.f32.partialorder %v9058, 8.507059e+37
    %v9060 = vand.u32 %v9033, 2147483648
    %v9061 = vor.u32 1.1754944e-38, %v9060
    %v9062 = vsel %vm9059, %v9061, %v9057
    %v9063 = vmul.f32 1.0, %v9062
    %v9064 = vtanh.pop %v8982
    %v9065 = vtanh.pop %v8986
    %v9066 = vxor.u32 %v8983, 2147483648
    %v9067 = vxor.u32 %v8987, 2147483648
    %v9068 = vmul.f32 %v9066, 1.442695
    %v9069 = vpow.pop %v9068
    %v9070 = vmul.f32 %v9067, 1.442695
    %v9071 = vpow.pop %v9070
    %v9072 = vadd.f32 %v9069, 1.0
    %v9073 = vadd.f32 %v9071, 1.0
    %v9074 = vrcp.pop %v9072
    %v9075 = vmul.f32 %v9072, %v9074
    %v9076 = vsub.f32 1.0, %v9075
    %v9077 = vmul.f32 %v9074, %v9076
    %v9078 = vadd.f32 %v9074, %v9077
    %vm9079 = vweird.f32 %v9072
    %vm9080 = vweird.f32 %v9074
    %vm9081 = vmor %vm9079, %vm9080
    %v9082 = vsel %vm9081, %v9074, %v9078
    %v9083 = vand.u32 2147483647, %v9072
    %vm9084 = vcmp.eq.f32.partialorder %v9083, 8.507059e+37
    %v9085 = vand.u32 %v9072, 2147483648
    %v9086 = vor.u32 1.1754944e-38, %v9085
    %v9087 = vsel %vm9084, %v9086, %v9082
    %v9088 = vmul.f32 1.0, %v9087
    %v9089 = vrcp.pop %v9073
    %v9090 = vmul.f32 %v9073, %v9089
    %v9091 = vsub.f32 1.0, %v9090
    %v9092 = vmul.f32 %v9089, %v9091
    %v9093 = vadd.f32 %v9089, %v9092
    %vm9094 = vweird.f32 %v9073
    %vm9095 = vweird.f32 %v9089
    %vm9096 = vmor %vm9094, %vm9095
    %v9097 = vsel %vm9096, %v9089, %v9093
    %v9098 = vand.u32 2147483647, %v9073
    %vm9099 = vcmp.eq.f32.partialorder %v9098, 8.507059e+37
    %v9100 = vand.u32 %v9073, 2147483648
    %v9101 = vor.u32 1.1754944e-38, %v9100
    %v9102 = vsel %vm9099, %v9101, %v9097
    %v9103 = vmul.f32 1.0, %v9102
    %v9104 = vmul.f32 %v9048, %v8900
    %v9105 = vmul.f32 %v9063, %v8901
    %v9106 = vmul.f32 %v9010, %v9064
    %v9107 = vmul.f32 %v9025, %v9065
    %v9108 = vadd.f32 %v9104, %v9106
    %v9109 = vadd.f32 %v9105, %v9107
    %v9110 = vtanh.pop %v9108
    %v9111 = vtanh.pop %v9109
    %v9112 = vmul.f32 %v9088, %v9110
    %v9113 = vmul.f32 %v9103, %v9111
    %v9114 = vpack.c.bf16 %v9112, %v9112
    %v9115 = vpack.c.bf16 %v9113, %v9113
    %9116 = vst [vmem:[%s2294] sm:$0xf] %v9114
    %9117 = vst [vmem:[%s2294 + $0x4] sm:$0xf] %v9115
    %v9120 = vunpack.c.l.b16 %v9114
    %v9121 = vunpack.c.l.b16 %v9115
    %v9122 = vpack.c.b16 %v9121, %v9120
    %9124 = vmatpush.bf16.msra.mxu0 %v7632
    %9125 = vmatpush.bf16.msra.mxu0 %v7628
    %9126 = vmatpush.bf16.msra.mxu0 %v7624
    %9127 = vmatpush.bf16.msra.mxu0 %v7620
    %9128 = vmatpush.bf16.msra.mxu0 %v7616
    %9129 = vmatpush.bf16.msra.mxu0 %v7612
    %9130 = vmatpush.bf16.msra.mxu0 %v7608
    %9131 = vmatpush.bf16.msra.mxu0 %v7604
    %9132 = vmatmul.bf16.gmra.mxu0 %v9122
    %v9133 = vpop.f32.mrf.mxu0
    %v9134 = vadd.f32 0.0, %v9133
    %v9135 = vpop.f32.mrf.mxu0
    %v9136 = vadd.f32 0.0, %v9135
    %9137 = vdwg.mxu0
    %9138 = vmatpush.bf16.msra.mxu0 %v7633
    %9139 = vmatpush.bf16.msra.mxu0 %v7629
    %9140 = vmatpush.bf16.msra.mxu0 %v7625
    %9141 = vmatpush.bf16.msra.mxu0 %v7621
    %9142 = vmatpush.bf16.msra.mxu0 %v7617
    %9143 = vmatpush.bf16.msra.mxu0 %v7613
    %9144 = vmatpush.bf16.msra.mxu0 %v7609
    %9145 = vmatpush.bf16.msra.mxu0 %v7605
    %9146 = vmatmul.bf16.gmra.mxu0 %v9122
    %v9147 = vpop.f32.mrf.mxu0
    %v9148 = vadd.f32 0.0, %v9147
    %v9149 = vpop.f32.mrf.mxu0
    %v9150 = vadd.f32 0.0, %v9149
    %9151 = vdwg.mxu0
    %9152 = vmatpush.bf16.msra.mxu0 %v7634
    %9153 = vmatpush.bf16.msra.mxu0 %v7630
    %9154 = vmatpush.bf16.msra.mxu0 %v7626
    %9155 = vmatpush.bf16.msra.mxu0 %v7622
    %9156 = vmatpush.bf16.msra.mxu0 %v7618
    %9157 = vmatpush.bf16.msra.mxu0 %v7614
    %9158 = vmatpush.bf16.msra.mxu0 %v7610
    %9159 = vmatpush.bf16.msra.mxu0 %v7606
    %9160 = vmatmul.bf16.gmra.mxu0 %v9122
    %v9161 = vpop.f32.mrf.mxu0
    %v9162 = vadd.f32 0.0, %v9161
    %v9163 = vpop.f32.mrf.mxu0
    %v9164 = vadd.f32 0.0, %v9163
    %9165 = vdwg.mxu0
    %9166 = vmatpush.bf16.msra.mxu0 %v7635
    %9167 = vmatpush.bf16.msra.mxu0 %v7631
    %9168 = vmatpush.bf16.msra.mxu0 %v7627
    %9169 = vmatpush.bf16.msra.mxu0 %v7623
    %9170 = vmatpush.bf16.msra.mxu0 %v7619
    %9171 = vmatpush.bf16.msra.mxu0 %v7615
    %9172 = vmatpush.bf16.msra.mxu0 %v7611
    %9173 = vmatpush.bf16.msra.mxu0 %v7607
    %9174 = vmatmul.bf16.gmra.mxu0 %v9122
    %v9175 = vpop.f32.mrf.mxu0
    %v9176 = vadd.f32 0.0, %v9175
    %v9177 = vpop.f32.mrf.mxu0
    %v9178 = vadd.f32 0.0, %v9177
    %9179 = vdwg.mxu0
    %v9180 = vld [vmem:[%s2359] sm:$0xff]
    %v9181 = vld [vmem:[%s2359 + $0x8] sm:$0xff]
    %v9182 = vld [vmem:[%s2359 + $0x10] sm:$0xff]
    %v9183 = vld [vmem:[%s2359 + $0x18] sm:$0xff]
    %v9184 = vld [vmem:[%s2359 + $0x20] sm:$0xff]
    %v9185 = vld [vmem:[%s2359 + $0x28] sm:$0xff]
    %v9186 = vld [vmem:[%s2359 + $0x30] sm:$0xff]
    %v9187 = vld [vmem:[%s2359 + $0x38] sm:$0xff]
    %v9188 = vadd.f32 %v9180, %v9134
    %v9189 = vadd.f32 %v9181, %v9148
    %v9190 = vadd.f32 %v9182, %v9162
    %v9191 = vadd.f32 %v9183, %v9176
    %v9192 = vadd.f32 %v9184, %v9136
    %v9193 = vadd.f32 %v9185, %v9150
    %v9194 = vadd.f32 %v9186, %v9164
    %v9195 = vadd.f32 %v9187, %v9178
    %v9196 = vxor.u32 %v9188, 2147483648
    %v9197 = vxor.u32 %v9192, 2147483648
    %v9198 = vmul.f32 %v9196, 1.442695
    %v9199 = vpow.pop %v9198
    %v9200 = vmul.f32 %v9197, 1.442695
    %v9201 = vpow.pop %v9200
    %v9202 = vadd.f32 %v9199, 1.0
    %v9203 = vadd.f32 %v9201, 1.0
    %v9204 = vrcp.pop %v9202
    %v9205 = vmul.f32 %v9202, %v9204
    %v9206 = vsub.f32 1.0, %v9205
    %v9207 = vmul.f32 %v9204, %v9206
    %v9208 = vadd.f32 %v9204, %v9207
    %vm9209 = vweird.f32 %v9202
    %vm9210 = vweird.f32 %v9204
    %vm9211 = vmor %vm9209, %vm9210
    %v9212 = vsel %vm9211, %v9204, %v9208
    %v9213 = vand.u32 2147483647, %v9202
    %vm9214 = vcmp.eq.f32.partialorder %v9213, 8.507059e+37
    %v9215 = vand.u32 %v9202, 2147483648
    %v9216 = vor.u32 1.1754944e-38, %v9215
    %v9217 = vsel %vm9214, %v9216, %v9212
    %v9218 = vmul.f32 1.0, %v9217
    %v9219 = vrcp.pop %v9203
    %v9220 = vmul.f32 %v9203, %v9219
    %v9221 = vsub.f32 1.0, %v9220
    %v9222 = vmul.f32 %v9219, %v9221
    %v9223 = vadd.f32 %v9219, %v9222
    %vm9224 = vweird.f32 %v9203
    %vm9225 = vweird.f32 %v9219
    %vm9226 = vmor %vm9224, %vm9225
    %v9227 = vsel %vm9226, %v9219, %v9223
    %v9228 = vand.u32 2147483647, %v9203
    %vm9229 = vcmp.eq.f32.partialorder %v9228, 8.507059e+37
    %v9230 = vand.u32 %v9203, 2147483648
    %v9231 = vor.u32 1.1754944e-38, %v9230
    %v9232 = vsel %vm9229, %v9231, %v9227
    %v9233 = vmul.f32 1.0, %v9232
    %v9234 = vxor.u32 %v9189, 2147483648
    %v9235 = vxor.u32 %v9193, 2147483648
    %v9236 = vmul.f32 %v9234, 1.442695
    %v9237 = vpow.pop %v9236
    %v9238 = vmul.f32 %v9235, 1.442695
    %v9239 = vpow.pop %v9238
    %v9240 = vadd.f32 %v9237, 1.0
    %v9241 = vadd.f32 %v9239, 1.0
    %v9242 = vrcp.pop %v9240
    %v9243 = vmul.f32 %v9240, %v9242
    %v9244 = vsub.f32 1.0, %v9243
    %v9245 = vmul.f32 %v9242, %v9244
    %v9246 = vadd.f32 %v9242, %v9245
    %vm9247 = vweird.f32 %v9240
    %vm9248 = vweird.f32 %v9242
    %vm9249 = vmor %vm9247, %vm9248
    %v9250 = vsel %vm9249, %v9242, %v9246
    %v9251 = vand.u32 2147483647, %v9240
    %vm9252 = vcmp.eq.f32.partialorder %v9251, 8.507059e+37
    %v9253 = vand.u32 %v9240, 2147483648
    %v9254 = vor.u32 1.1754944e-38, %v9253
    %v9255 = vsel %vm9252, %v9254, %v9250
    %v9256 = vmul.f32 1.0, %v9255
    %v9257 = vrcp.pop %v9241
    %v9258 = vmul.f32 %v9241, %v9257
    %v9259 = vsub.f32 1.0, %v9258
    %v9260 = vmul.f32 %v9257, %v9259
    %v9261 = vadd.f32 %v9257, %v9260
    %vm9262 = vweird.f32 %v9241
    %vm9263 = vweird.f32 %v9257
    %vm9264 = vmor %vm9262, %vm9263
    %v9265 = vsel %vm9264, %v9257, %v9261
    %v9266 = vand.u32 2147483647, %v9241
    %vm9267 = vcmp.eq.f32.partialorder %v9266, 8.507059e+37
    %v9268 = vand.u32 %v9241, 2147483648
    %v9269 = vor.u32 1.1754944e-38, %v9268
    %v9270 = vsel %vm9267, %v9269, %v9265
    %v9271 = vmul.f32 1.0, %v9270
    %v9272 = vtanh.pop %v9190
    %v9273 = vtanh.pop %v9194
    %v9274 = vxor.u32 %v9191, 2147483648
    %v9275 = vxor.u32 %v9195, 2147483648
    %v9276 = vmul.f32 %v9274, 1.442695
    %v9277 = vpow.pop %v9276
    %v9278 = vmul.f32 %v9275, 1.442695
    %v9279 = vpow.pop %v9278
    %v9280 = vadd.f32 %v9277, 1.0
    %v9281 = vadd.f32 %v9279, 1.0
    %v9282 = vrcp.pop %v9280
    %v9283 = vmul.f32 %v9280, %v9282
    %v9284 = vsub.f32 1.0, %v9283
    %v9285 = vmul.f32 %v9282, %v9284
    %v9286 = vadd.f32 %v9282, %v9285
    %vm9287 = vweird.f32 %v9280
    %vm9288 = vweird.f32 %v9282
    %vm9289 = vmor %vm9287, %vm9288
    %v9290 = vsel %vm9289, %v9282, %v9286
    %v9291 = vand.u32 2147483647, %v9280
    %vm9292 = vcmp.eq.f32.partialorder %v9291, 8.507059e+37
    %v9293 = vand.u32 %v9280, 2147483648
    %v9294 = vor.u32 1.1754944e-38, %v9293
    %v9295 = vsel %vm9292, %v9294, %v9290
    %v9296 = vmul.f32 1.0, %v9295
    %v9297 = vrcp.pop %v9281
    %v9298 = vmul.f32 %v9281, %v9297
    %v9299 = vsub.f32 1.0, %v9298
    %v9300 = vmul.f32 %v9297, %v9299
    %v9301 = vadd.f32 %v9297, %v9300
    %vm9302 = vweird.f32 %v9281
    %vm9303 = vweird.f32 %v9297
    %vm9304 = vmor %vm9302, %vm9303
    %v9305 = vsel %vm9304, %v9297, %v9301
    %v9306 = vand.u32 2147483647, %v9281
    %vm9307 = vcmp.eq.f32.partialorder %v9306, 8.507059e+37
    %v9308 = vand.u32 %v9281, 2147483648
    %v9309 = vor.u32 1.1754944e-38, %v9308
    %v9310 = vsel %vm9307, %v9309, %v9305
    %v9311 = vmul.f32 1.0, %v9310
    %v9312 = vmul.f32 %v9256, %v9108
    %v9313 = vmul.f32 %v9271, %v9109
    %v9314 = vmul.f32 %v9218, %v9272
    %v9315 = vmul.f32 %v9233, %v9273
    %v9316 = vadd.f32 %v9312, %v9314
    %v9317 = vadd.f32 %v9313, %v9315
    %v9318 = vtanh.pop %v9316
    %v9319 = vtanh.pop %v9317
    %v9320 = vmul.f32 %v9296, %v9318
    %v9321 = vmul.f32 %v9311, %v9319
    %v9322 = vpack.c.bf16 %v9320, %v9320
    %v9323 = vpack.c.bf16 %v9321, %v9321
    %9324 = vst [vmem:[%s2504] sm:$0xf] %v9322
    %9325 = vst [vmem:[%s2504 + $0x4] sm:$0xf] %v9323
    %v9326 = vld [vmem:[#allocation2] sm:$0xf]
    %v9327 = vld [vmem:[#allocation2 + $0x4] sm:$0xf]
    %v9328 = vld [vmem:[#allocation2 + $0x8] sm:$0xf]
    %v9329 = vld [vmem:[#allocation2 + $0xc] sm:$0xf]
    %v9330 = vld [vmem:[#allocation2 + $0x10] sm:$0xf]
    %v9331 = vld [vmem:[#allocation2 + $0x14] sm:$0xf]
    %v9332 = vld [vmem:[#allocation2 + $0x18] sm:$0xf]
    %v9333 = vld [vmem:[#allocation2 + $0x1c] sm:$0xf]
    %v9334 = vld [vmem:[#allocation2 + $0x20] sm:$0xf]
    %v9335 = vld [vmem:[#allocation2 + $0x24] sm:$0xf]
    %v9336 = vld [vmem:[#allocation2 + $0x28] sm:$0xf]
    %v9337 = vld [vmem:[#allocation2 + $0x2c] sm:$0xf]
    %v9338 = vld [vmem:[#allocation2 + $0x30] sm:$0xf]
    %v9339 = vld [vmem:[#allocation2 + $0x34] sm:$0xf]
    %v9340 = vld [vmem:[#allocation2 + $0x38] sm:$0xf]
    %v9341 = vld [vmem:[#allocation2 + $0x3c] sm:$0xf]
    %v9342 = vld [vmem:[#allocation11] sm:$0xf]
    %v9343 = vld [vmem:[#allocation11 + $0x4] sm:$0xf]
    %v9344 = vld [vmem:[#allocation11 + $0x8] sm:$0xf]
    %v9345 = vld [vmem:[#allocation11 + $0xc] sm:$0xf]
    %v9346 = vld [vmem:[#allocation11 + $0x10] sm:$0xf]
    %v9347 = vld [vmem:[#allocation11 + $0x14] sm:$0xf]
    %v9348 = vld [vmem:[#allocation11 + $0x18] sm:$0xf]
    %v9349 = vld [vmem:[#allocation11 + $0x1c] sm:$0xf]
    %v9350 = vld [vmem:[#allocation11 + $0x20] sm:$0xf]
    %v9351 = vld [vmem:[#allocation11 + $0x24] sm:$0xf]
    %v9352 = vld [vmem:[#allocation11 + $0x28] sm:$0xf]
    %v9353 = vld [vmem:[#allocation11 + $0x2c] sm:$0xf]
    %v9354 = vld [vmem:[#allocation11 + $0x30] sm:$0xf]
    %v9355 = vld [vmem:[#allocation11 + $0x34] sm:$0xf]
    %v9356 = vld [vmem:[#allocation11 + $0x38] sm:$0xf]
    %v9357 = vld [vmem:[#allocation11 + $0x3c] sm:$0xf]
    %v9358 = vld [vmem:[%s10] sm:$0x1]
    %v9360 = vperm.slane %v9358, 0
    %v9378 = vunpack.c.l.b16 %v9326
    %v9379 = vunpack.c.l.b16 %v9327
    %v9380 = vunpack.c.l.b16 %v9328
    %v9381 = vunpack.c.l.b16 %v9329
    %v9382 = vunpack.c.l.b16 %v9330
    %v9383 = vunpack.c.l.b16 %v9331
    %v9384 = vunpack.c.l.b16 %v9332
    %v9385 = vunpack.c.l.b16 %v9333
    %v9386 = vunpack.c.l.b16 %v9334
    %v9387 = vunpack.c.l.b16 %v9335
    %v9388 = vunpack.c.l.b16 %v9336
    %v9389 = vunpack.c.l.b16 %v9337
    %v9390 = vunpack.c.l.b16 %v9338
    %v9391 = vunpack.c.l.b16 %v9339
    %v9392 = vunpack.c.l.b16 %v9340
    %v9393 = vunpack.c.l.b16 %v9341
    %v9394 = vpack.c.b16 %v9379, %v9378
    %v9395 = vpack.c.b16 %v9381, %v9380
    %v9396 = vpack.c.b16 %v9383, %v9382
    %v9397 = vpack.c.b16 %v9385, %v9384
    %v9398 = vpack.c.b16 %v9387, %v9386
    %v9399 = vpack.c.b16 %v9389, %v9388
    %v9400 = vpack.c.b16 %v9391, %v9390
    %v9401 = vpack.c.b16 %v9393, %v9392
    %v9426 = vunpack.c.l.b16 %v9342
    %v9427 = vunpack.c.l.b16 %v9343
    %v9428 = vunpack.c.l.b16 %v9344
    %v9429 = vunpack.c.l.b16 %v9345
    %v9430 = vunpack.c.l.b16 %v9346
    %v9431 = vunpack.c.l.b16 %v9347
    %v9432 = vunpack.c.l.b16 %v9348
    %v9433 = vunpack.c.l.b16 %v9349
    %v9434 = vunpack.c.l.b16 %v9350
    %v9435 = vunpack.c.l.b16 %v9351
    %v9436 = vunpack.c.l.b16 %v9352
    %v9437 = vunpack.c.l.b16 %v9353
    %v9438 = vunpack.c.l.b16 %v9354
    %v9439 = vunpack.c.l.b16 %v9355
    %v9440 = vunpack.c.l.b16 %v9356
    %v9441 = vunpack.c.l.b16 %v9357
    %v9442 = vpack.c.b16 %v9427, %v9426
    %v9443 = vpack.c.b16 %v9429, %v9428
    %v9444 = vpack.c.b16 %v9431, %v9430
    %v9445 = vpack.c.b16 %v9433, %v9432
    %v9446 = vpack.c.b16 %v9435, %v9434
    %v9447 = vpack.c.b16 %v9437, %v9436
    %v9448 = vpack.c.b16 %v9439, %v9438
    %v9449 = vpack.c.b16 %v9441, %v9440
    %9458 = vmatpush.bf16.msra.mxu0 %v9449
    %9459 = vmatpush.bf16.msra.mxu0 %v9448
    %9460 = vmatpush.bf16.msra.mxu0 %v9447
    %9461 = vmatpush.bf16.msra.mxu0 %v9446
    %9462 = vmatpush.bf16.msra.mxu0 %v9445
    %9463 = vmatpush.bf16.msra.mxu0 %v9444
    %9464 = vmatpush.bf16.msra.mxu0 %v9443
    %9465 = vmatpush.bf16.msra.mxu0 %v9442
    %9466 = vmatmul.bf16.gmra.mxu0 %v9394
    %v9467 = vpop.f32.mrf.mxu0
    %v9468 = vadd.f32 %v9360, %v9467
    %v9469 = vpop.f32.mrf.mxu0
    %v9470 = vadd.f32 %v9360, %v9469
    %9471 = vmatmul.bf16.gmra.mxu0 %v9395
    %v9472 = vpop.f32.mrf.mxu0
    %v9473 = vadd.f32 %v9360, %v9472
    %v9474 = vpop.f32.mrf.mxu0
    %v9475 = vadd.f32 %v9360, %v9474
    %9476 = vmatmul.bf16.gmra.mxu0 %v9396
    %v9477 = vpop.f32.mrf.mxu0
    %v9478 = vadd.f32 %v9360, %v9477
    %v9479 = vpop.f32.mrf.mxu0
    %v9480 = vadd.f32 %v9360, %v9479
    %9481 = vmatmul.bf16.gmra.mxu0 %v9397
    %v9482 = vpop.f32.mrf.mxu0
    %v9483 = vadd.f32 %v9360, %v9482
    %v9484 = vpop.f32.mrf.mxu0
    %v9485 = vadd.f32 %v9360, %v9484
    %9486 = vmatmul.bf16.gmra.mxu0 %v9398
    %v9487 = vpop.f32.mrf.mxu0
    %v9488 = vadd.f32 %v9360, %v9487
    %v9489 = vpop.f32.mrf.mxu0
    %v9490 = vadd.f32 %v9360, %v9489
    %9491 = vmatmul.bf16.gmra.mxu0 %v9399
    %v9492 = vpop.f32.mrf.mxu0
    %v9493 = vadd.f32 %v9360, %v9492
    %v9494 = vpop.f32.mrf.mxu0
    %v9495 = vadd.f32 %v9360, %v9494
    %9496 = vmatmul.bf16.gmra.mxu0 %v9400
    %v9497 = vpop.f32.mrf.mxu0
    %v9498 = vadd.f32 %v9360, %v9497
    %v9499 = vpop.f32.mrf.mxu0
    %v9500 = vadd.f32 %v9360, %v9499
    %9501 = vmatmul.bf16.gmra.mxu0 %v9401
    %v9502 = vpop.f32.mrf.mxu0
    %v9503 = vadd.f32 %v9360, %v9502
    %v9504 = vpop.f32.mrf.mxu0
    %v9505 = vadd.f32 %v9360, %v9504
    %9506 = vdwg.mxu0
    %9507 = vst [vmem:[%s11] sm:$0xff] %v9468
    %9508 = vst [vmem:[%s11 + $0x8] sm:$0xff] %v9470
    %9509 = vst [vmem:[%s11 + $0x10] sm:$0xff] %v9473
    %9510 = vst [vmem:[%s11 + $0x18] sm:$0xff] %v9475
    %9511 = vst [vmem:[%s11 + $0x20] sm:$0xff] %v9478
    %9512 = vst [vmem:[%s11 + $0x28] sm:$0xff] %v9480
    %9513 = vst [vmem:[%s11 + $0x30] sm:$0xff] %v9483
    %9514 = vst [vmem:[%s11 + $0x38] sm:$0xff] %v9485
    %9515 = vst [vmem:[%s11 + $0x40] sm:$0xff] %v9488
    %9516 = vst [vmem:[%s11 + $0x48] sm:$0xff] %v9490
    %9517 = vst [vmem:[%s11 + $0x50] sm:$0xff] %v9493
    %9518 = vst [vmem:[%s11 + $0x58] sm:$0xff] %v9495
    %9519 = vst [vmem:[%s11 + $0x60] sm:$0xff] %v9498
    %9520 = vst [vmem:[%s11 + $0x68] sm:$0xff] %v9500
    %9521 = vst [vmem:[%s11 + $0x70] sm:$0xff] %v9503
    %9522 = vst [vmem:[%s11 + $0x78] sm:$0xff] %v9505
    // Predicated region
    $region66: #{lstm_autoencoder_forward.1} parent=1 // pred_check
      _
    $region67: #{lstm_autoencoder_forward.1} parent=1 // pred_check_branch
      %9524 = sbr.rel (0) target = $region69
    $region68: #{lstm_autoencoder_forward.1} parent=1 // pred_region
      _
    $region69: #{lstm_autoencoder_forward.1} parent=1 // pred_fallthru
      _
    // Predicated region
    $region70: #{lstm_autoencoder_forward.1} parent=1 // pred_check
      _
    $region71: #{lstm_autoencoder_forward.1} parent=1 // pred_check_branch
      %9526 = sbr.rel (0) target = $region73
    $region72: #{lstm_autoencoder_forward.1} parent=1 // pred_region
      _
    $region73: #{lstm_autoencoder_forward.1} parent=1 // pred_fallthru
      _
    %9527 = vsyncpa [#allocation5], 1
    %9528 = vsyncpa [#allocation7], 1
    %9529 = vsyncpa [#allocation10], 1

</llo_original>
